<compile_context>
chip_gen: v5e
topology: v5e:2x2
jax: 0.10.0
libtpu: 0.0.40
codegen_flags: <defaults>
</compile_context>

<pallas_src>
import jax
import jax.numpy as jnp
from jax.experimental import pallas as pl
from jax.experimental.pallas import tpu as pltpu  # noqa: F401  (TPU backend assumed)

# ---- small synthetic config ----
B = 2            # batch
L = 16           # seq_len / max_seq_len
M = 4            # feat_dim
PATCH = 8        # patch_size
STRIDE = 8       # stride
D_MODEL = 32
N_HEAD = 4
HEAD_DIM = D_MODEL // N_HEAD
D_FF = 4 * D_MODEL
GPT_LAYERS = 6
NUM_CLASSES = 3
PATCH_NUM = (L - PATCH) // STRIDE + 1 + 1    # +1 from ReplicationPad1d((0, stride))
TOKENS = B * PATCH_NUM                        # batch folded into the row (sublane) axis
LN_EPS = 1e-5
NEG_INF = -1e9


def _layernorm(x, g, b):
    mu = jnp.mean(x, axis=-1, keepdims=True)
    var = jnp.mean((x - mu) ** 2, axis=-1, keepdims=True)
    return (x - mu) * jax.lax.rsqrt(var + LN_EPS) * g + b


# --------------- fully fused forward kernel ---------------
def fused_forward_kernel(
        patches_ref, tt_ref, pos_ref, enc_w_ref,
        w_qkv_ref, b_qkv_ref, w_ao_ref, w_fc_ref, b_fc_ref, w_mo_ref,
        lvec_ref, head_ref, w_out_ref, outmask_ref, collapse_ref,
        o_ref):
    # ---- synthetic encoder projection + GPT-2 positional embedding ----
    # TODO(synk): the pretrained CausalCNN encoder (self.encoder.load(...)) cannot be
    # loaded here; replaced by a deterministic linear patch -> d_model projection.
    # pos_ref already contains wpe tiled over batch with the encoder bias folded in.
    h = jnp.dot(patches_ref[...], enc_w_ref[...],
                preferred_element_type=jnp.float32) + pos_ref[...]          # (T, D) f32

    attn_bias = tt_ref[0]            # (T, T) block-diagonal causal additive bias

    for l in range(GPT_LAYERS):
        lv = lvec_ref[l]             # (6, D): ln1_g, ln1_b, ln2_g, ln2_b, b_attn_proj, b_mlp_proj

        # ---- causal multi-head self-attention (head-batched, no lane slicing) ----
        xn = _layernorm(h, lv[0:1, :], lv[1:2, :]).astype(jnp.bfloat16)     # (T, D)
        xh = jnp.broadcast_to(xn[None], (3 * N_HEAD, TOKENS, D_MODEL))
        qkv = jax.lax.dot_general(
            xh, w_qkv_ref[l],
            (((2,), (1,)), ((0,), (0,))),
            preferred_element_type=jnp.float32) + b_qkv_ref[l]              # (3H, T, hd)
        qh = qkv[:N_HEAD].astype(jnp.bfloat16)          # 1/sqrt(hd) folded into w_q / b_q
        kh = qkv[N_HEAD:2 * N_HEAD].astype(jnp.bfloat16)
        vh = qkv[2 * N_HEAD:].astype(jnp.bfloat16)

        s = jax.lax.dot_general(qh, kh, (((2,), (2,)), ((0,), (0,))),
                                preferred_element_type=jnp.float32)         # (H, T, T)
        s = s + attn_bias[None]
        s = s - jnp.max(s, axis=-1, keepdims=True)
        p = jnp.exp(s)
        p = p * pl.reciprocal(jnp.sum(p, axis=-1, keepdims=True), approx=True)

        oh = jax.lax.dot_general(p.astype(jnp.bfloat16), vh,
                                 (((2,), (1,)), ((0,), (0,))),
                                 preferred_element_type=jnp.float32)        # (H, T, hd)
        att = jax.lax.dot_general(oh.astype(jnp.bfloat16), w_ao_ref[l],
                                  (((2,), (1,)), ((0,), (0,))),
                                  preferred_element_type=jnp.float32)       # (H, T, D)
        h = h + jnp.sum(att, axis=0) + lv[4:5, :]       # heads reduced along the leading axis

        # ---- MLP ----
        xn2 = _layernorm(h, lv[2:3, :], lv[3:4, :]).astype(jnp.bfloat16)
        mid = jnp.dot(xn2, w_fc_ref[l],
                      preferred_element_type=jnp.float32) + b_fc_ref[l]     # (T, D_FF)
        mid = jax.nn.gelu(mid, approximate=True).astype(jnp.bfloat16)       # GPT-2 "gelu_new"
        h = h + jnp.dot(mid, w_mo_ref[l],
                        preferred_element_type=jnp.float32) + lv[5:6, :]

    # ---- ln_f followed by self.act = gelu ----
    # TODO(synk): F.gelu default (exact erf) approximated with the tanh form for
    # robust Mosaic lowering; numerical difference is ~1e-3.
    h = jax.nn.gelu(_layernorm(h, head_ref[0:1, :], head_ref[1:2, :]), approximate=True)

    # ---- classification head, kept in the folded (T, D) layout (no reshapes) ----
    # per-batch LayerNorm over the flattened (N*D) features via a pooling matmul
    rs = jnp.sum(h, axis=-1, keepdims=True)                                 # (T, 1)
    mu = jnp.dot(tt_ref[1], rs, preferred_element_type=jnp.float32)         # per-batch mean per row
    d = h - mu
    var = jnp.dot(tt_ref[1], jnp.sum(d * d, axis=-1, keepdims=True),
                  preferred_element_type=jnp.float32)
    xb = (d * jax.lax.rsqrt(var + LN_EPS) * head_ref[2:2 + TOKENS, :]
          + head_ref[2 + TOKENS:2 + 2 * TOKENS, :])                         # (T, D)

    # out_layer as one batched contraction: logits of every (patch-slot, class)
    # per token, keep each token's own slot, collapse slots, pool tokens -> batches.
    full = jnp.dot(xb.astype(jnp.bfloat16), w_out_ref[...],
                   preferred_element_type=jnp.float32)                      # (T, N*C)
    tok_logits = jnp.dot(full * outmask_ref[...], collapse_ref[...],
                         preferred_element_type=jnp.float32)                # (T, C)
    logits = jnp.dot(tt_ref[2], tok_logits,
                     preferred_element_type=jnp.float32)                    # (T, C), rows >= B zero
    o_ref[...] = logits[0:B, :] + head_ref[2 + 2 * TOKENS:3 + 2 * TOKENS, 0:NUM_CLASSES]


# --------------- parameter init (deterministic, synthetic) ---------------
def init_params(key):
    keys = jax.random.split(key, 8 + GPT_LAYERS)

    def nrm(k, shape):
        return (0.02 * jax.random.normal(k, shape)).astype(jnp.float32)

    scale = 1.0 / (HEAD_DIM ** 0.5)

    # ---- (T, T) constant matrices, packed into one array ----
    r = jnp.arange(TOKENS)
    batch_id = r // PATCH_NUM
    same = batch_id[:, None] == batch_id[None, :]
    causal = r[None, :] <= r[:, None]
    attn_bias = jnp.where(same & causal, 0.0, NEG_INF)                       # additive mask
    pool_mean = jnp.where(same, 1.0 / (PATCH_NUM * D_MODEL), 0.0)            # per-batch mean pool
    poolB = (batch_id[None, :] == r[:, None]).astype(jnp.float32)            # batch pooling (padded)
    tt_mats = jnp.stack([attn_bias, pool_mean, poolB]).astype(jnp.float32)   # (3, T, T)

    # ---- encoder projection + positions (wpe tiled over batch, enc bias folded) ----
    enc_w = nrm(keys[0], (M * PATCH, D_MODEL)).astype(jnp.bfloat16)
    enc_b = nrm(keys[1], (1, D_MODEL))
    wpe = nrm(keys[2], (PATCH_NUM, D_MODEL))
    pos = (jnp.tile(wpe, (B, 1)) + enc_b).astype(jnp.float32)                # (T, D)

    # ---- classification head constants ----
    w_out = nrm(keys[3], (PATCH_NUM * D_MODEL, NUM_CLASSES))
    out_b = nrm(keys[4], (1, NUM_CLASSES))
    w_out_all = (w_out.reshape(PATCH_NUM, D_MODEL, NUM_CLASSES)
                 .transpose(1, 0, 2)
                 .reshape(D_MODEL, PATCH_NUM * NUM_CLASSES)).astype(jnp.bfloat16)
    n_of_t = jnp.tile(jnp.arange(PATCH_NUM), B)                    # patch index of each token row
    col_n = jnp.repeat(jnp.arange(PATCH_NUM), NUM_CLASSES)         # patch index of each packed column
    outmask = (n_of_t[:, None] == col_n[None, :]).astype(jnp.float32)        # (T, N*C)
    collapse = jnp.tile(jnp.eye(NUM_CLASSES, dtype=jnp.float32), (PATCH_NUM, 1))  # (N*C, C)

    lnf_g = jnp.ones((1, D_MODEL), jnp.float32)
    lnf_b = jnp.zeros((1, D_MODEL), jnp.float32)
    lnp_g = jnp.ones((PATCH_NUM, D_MODEL), jnp.float32)
    lnp_b = jnp.zeros((PATCH_NUM, D_MODEL), jnp.float32)
    out_b_row = jnp.zeros((1, D_MODEL), jnp.float32).at[0, :NUM_CLASSES].set(out_b[0])
    head_vec = jnp.concatenate(
        [lnf_g, lnf_b, jnp.tile(lnp_g, (B, 1)), jnp.tile(lnp_b, (B, 1)), out_b_row],
        axis=0)                                                              # (2 + 2T + 1, D)

    # ---- per-layer GPT-2 block weights, head-batched layouts ----
    w_qkv, b_qkv, w_ao, w_fc, b_fc, w_mo, lvec = [], [], [], [], [], [], []
    for l in range(GPT_LAYERS):
        lk = jax.random.split(keys[5 + l], 8)
        wq = nrm(lk[0], (D_MODEL, 3 * D_MODEL))
        bq = nrm(lk[1], (3 * D_MODEL,))
        # fold 1/sqrt(head_dim) into the q projection: weights AND bias
        wq = wq.at[:, :D_MODEL].multiply(scale)
        bq = bq.at[:D_MODEL].multiply(scale)
        w_qkv.append(wq.reshape(D_MODEL, 3, N_HEAD, HEAD_DIM)
                       .transpose(1, 2, 0, 3)
                       .reshape(3 * N_HEAD, D_MODEL, HEAD_DIM))              # (3H, D, hd)
        b_qkv.append(jnp.broadcast_to(
            bq.reshape(3 * N_HEAD, 1, HEAD_DIM),
            (3 * N_HEAD, TOKENS, HEAD_DIM)))                                 # pre-broadcast over T
        w_ao.append(nrm(lk[2], (D_MODEL, D_MODEL))
                    .reshape(N_HEAD, HEAD_DIM, D_MODEL))                     # (H, hd, D)
        w_fc.append(nrm(lk[3], (D_MODEL, D_FF)))
        b_fc.append(nrm(lk[4], (1, D_FF)))
        w_mo.append(nrm(lk[5], (D_FF, D_MODEL)))
        b_ao = nrm(lk[6], (1, D_MODEL))
        b_mo = nrm(lk[7], (1, D_MODEL))
        ln1_g = jnp.ones((1, D_MODEL), jnp.float32)
        ln1_b = jnp.zeros((1, D_MODEL), jnp.float32)
        ln2_g = jnp.ones((1, D_MODEL), jnp.float32)
        ln2_b = jnp.zeros((1, D_MODEL), jnp.float32)
        lvec.append(jnp.concatenate([ln1_g, ln1_b, ln2_g, ln2_b, b_ao, b_mo], axis=0))

    return {
        "tt_mats": tt_mats,
        "pos": pos,
        "enc_w": enc_w,
        "w_qkv": jnp.stack(w_qkv).astype(jnp.bfloat16),
        "b_qkv": jnp.stack(b_qkv).astype(jnp.float32),
        "w_ao": jnp.stack(w_ao).astype(jnp.bfloat16),
        "w_fc": jnp.stack(w_fc).astype(jnp.bfloat16),
        "b_fc": jnp.stack(b_fc).astype(jnp.float32),
        "w_mo": jnp.stack(w_mo).astype(jnp.bfloat16),
        "lvec": jnp.stack(lvec).astype(jnp.float32),
        "head_vec": head_vec,
        "w_out_all": w_out_all,
        "outmask": outmask,
        "collapse": collapse,
    }


# --------------- patch extraction (tiny, stays in XLA) ---------------
def make_patches(x_enc):
    # TODO(synk): in-kernel patch extraction would need a time-axis -> lane transpose;
    # at this size the handful of XLA ops below is cheaper and safer.
    xt = jnp.transpose(x_enc, (0, 2, 1))                                  # 'b l m -> b m l'
    xp = jnp.concatenate([xt, jnp.repeat(xt[..., -1:], STRIDE, axis=-1)], axis=-1)
    windows = jnp.stack(                                                  # unfold -> (B,M,N,P)
        [xp[..., i * STRIDE:i * STRIDE + PATCH] for i in range(PATCH_NUM)], axis=2)
    # 'b m n p -> (b n) (m p)'  (feature-major, time-within-patch minor), bf16 MXU operand
    return (jnp.transpose(windows, (0, 2, 1, 3))
            .reshape(B * PATCH_NUM, M * PATCH).astype(jnp.bfloat16))


ARG_ORDER = ("tt_mats", "pos", "enc_w",
             "w_qkv", "b_qkv", "w_ao", "w_fc", "b_fc", "w_mo",
             "lvec", "head_vec", "w_out_all", "outmask", "collapse")


# --------------- full forward: single fused pallas_call ---------------
def forward(params, x_enc, x_mark_enc=None):
    del x_mark_enc            # unused by the reference forward as well
    patches = make_patches(x_enc)                                         # (B*N, M*P) bf16
    return pl.pallas_call(
        fused_forward_kernel,
        out_shape=jax.ShapeDtypeStruct((B, NUM_CLASSES), jnp.float32),
    )(patches, *[params[k] for k in ARG_ORDER])


if __name__ == "__main__":
    key = jax.random.PRNGKey(0)
    kp, kx = jax.random.split(key)
    params = init_params(kp)
    x_enc = jax.random.normal(kx, (B, L, M), jnp.float32)
    x_mark_enc = jnp.zeros((B, L, 1), jnp.float32)   # unused by forward, as in reference

    out = jax.jit(forward)(params, x_enc, x_mark_enc)
    jax.block_until_ready(out)
    assert out.shape == (B, NUM_CLASSES)
    print("KERNEL_OK")
</pallas_src>

<mosaic_0001>
module attributes {stable_mosaic.version = 11 : i64} {
  func.func @fused_forward_kernel(%arg0: memref<6x32xbf16, #tpu.memory_space<vmem>>, %arg1: memref<3x6x6xf32, #tpu.memory_space<vmem>>, %arg2: memref<6x32xf32, #tpu.memory_space<vmem>>, %arg3: memref<32x32xbf16, #tpu.memory_space<vmem>>, %arg4: memref<6x12x32x8xbf16, #tpu.memory_space<vmem>>, %arg5: memref<6x12x6x8xf32, #tpu.memory_space<vmem>>, %arg6: memref<6x4x8x32xbf16, #tpu.memory_space<vmem>>, %arg7: memref<6x32x128xbf16, #tpu.memory_space<vmem>>, %arg8: memref<6x1x128xf32, #tpu.memory_space<vmem>>, %arg9: memref<6x128x32xbf16, #tpu.memory_space<vmem>>, %arg10: memref<6x6x32xf32, #tpu.memory_space<vmem>>, %arg11: memref<15x32xf32, #tpu.memory_space<vmem>>, %arg12: memref<32x9xbf16, #tpu.memory_space<vmem>>, %arg13: memref<6x9xf32, #tpu.memory_space<vmem>>, %arg14: memref<9x3xf32, #tpu.memory_space<vmem>>, %arg15: memref<2x3xf32, #tpu.memory_space<vmem>>) attributes {dimension_semantics = [], scalar_prefetch = 0 : i64, scratch_operands = 0 : i64, tpu.core_type = #tpu.core_type<tc>} {
    %c0 = arith.constant 0 : index
    %c0_0 = arith.constant 0 : index
    %0 = vector.load %arg0[%c0, %c0_0] : memref<6x32xbf16, #tpu.memory_space<vmem>>, vector<6x32xbf16>
    %c0_1 = arith.constant 0 : index
    %c0_2 = arith.constant 0 : index
    %1 = vector.load %arg3[%c0_1, %c0_2] : memref<32x32xbf16, #tpu.memory_space<vmem>>, vector<32x32xbf16>
    %cst = arith.constant dense<0.000000e+00> : vector<6x32xf32>
    %2 = tpu.matmul %0, %1, %cst {dimension_numbers = #tpu.dot_dimension_numbers<[1], [0], [0], [1], [0, 0, 1, 1], [], []>} : vector<6x32xbf16>, vector<32x32xbf16>, vector<6x32xf32> -> vector<6x32xf32>
    %c0_3 = arith.constant 0 : index
    %c0_4 = arith.constant 0 : index
    %3 = vector.load %arg2[%c0_3, %c0_4] : memref<6x32xf32, #tpu.memory_space<vmem>>, vector<6x32xf32>
    %4 = arith.addf %2, %3 : vector<6x32xf32>
    %c0_5 = arith.constant 0 : index
    %c0_6 = arith.constant 0 : index
    %c0_7 = arith.constant 0 : index
    %5 = vector.load %arg1[%c0_5, %c0_6, %c0_7] : memref<3x6x6xf32, #tpu.memory_space<vmem>>, vector<1x6x6xf32>
    %6 = vector.shape_cast %5 : vector<1x6x6xf32> to vector<6x6xf32>
    %c0_8 = arith.constant 0 : index
    %c0_9 = arith.constant 0 : index
    %c0_10 = arith.constant 0 : index
    %7 = vector.load %arg10[%c0_8, %c0_9, %c0_10] : memref<6x6x32xf32, #tpu.memory_space<vmem>>, vector<1x6x32xf32>
    %8 = vector.shape_cast %7 : vector<1x6x32xf32> to vector<6x32xf32>
    %9 = vector.extract_strided_slice %8 {offsets = [0, 0], sizes = [1, 32], strides = [1, 1]} : vector<6x32xf32> to vector<1x32xf32>
    %10 = vector.extract_strided_slice %8 {offsets = [1, 0], sizes = [1, 32], strides = [1, 1]} : vector<6x32xf32> to vector<1x32xf32>
    %cst_11 = arith.constant dense<0.000000e+00> : vector<6xf32>
    %11 = vector.multi_reduction <add>, %4, %cst_11 [1] : vector<6x32xf32> to vector<6xf32>
    %12 = vector.shape_cast %11 : vector<6xf32> to vector<6x1xf32>
    %cst_12 = arith.constant 3.200000e+01 : f32
    %13 = vector.broadcast %cst_12 : f32 to vector<6x1xf32>
    %14 = arith.divf %12, %13 : vector<6x1xf32>
    %15 = vector.broadcast %14 : vector<6x1xf32> to vector<6x32xf32>
    %16 = arith.subf %4, %15 : vector<6x32xf32>
    %17 = arith.mulf %16, %16 : vector<6x32xf32>
    %cst_13 = arith.constant dense<0.000000e+00> : vector<6xf32>
    %18 = vector.multi_reduction <add>, %17, %cst_13 [1] : vector<6x32xf32> to vector<6xf32>
    %19 = vector.shape_cast %18 : vector<6xf32> to vector<6x1xf32>
    %cst_14 = arith.constant 3.200000e+01 : f32
    %20 = vector.broadcast %cst_14 : f32 to vector<6x1xf32>
    %21 = arith.divf %19, %20 : vector<6x1xf32>
    %22 = vector.broadcast %14 : vector<6x1xf32> to vector<6x32xf32>
    %23 = arith.subf %4, %22 : vector<6x32xf32>
    %cst_15 = arith.constant 9.99999974E-6 : f32
    %24 = vector.broadcast %cst_15 : f32 to vector<6x1xf32>
    %25 = arith.addf %21, %24 : vector<6x1xf32>
    %26 = math.rsqrt %25 : vector<6x1xf32>
    %27 = vector.broadcast %26 : vector<6x1xf32> to vector<6x32xf32>
    %28 = arith.mulf %23, %27 : vector<6x32xf32>
    %29 = vector.broadcast %9 : vector<1x32xf32> to vector<6x32xf32>
    %30 = arith.mulf %28, %29 : vector<6x32xf32>
    %31 = vector.broadcast %10 : vector<1x32xf32> to vector<6x32xf32>
    %32 = arith.addf %30, %31 : vector<6x32xf32>
    %33 = arith.truncf %32 : vector<6x32xf32> to vector<6x32xbf16>
    %34 = vector.shape_cast %33 : vector<6x32xbf16> to vector<1x6x32xbf16>
    %35 = vector.shape_cast %34 : vector<1x6x32xbf16> to vector<1x6x32xbf16>
    %36 = vector.broadcast %35 : vector<1x6x32xbf16> to vector<12x6x32xbf16>
    %c0_16 = arith.constant 0 : index
    %c0_17 = arith.constant 0 : index
    %c0_18 = arith.constant 0 : index
    %c0_19 = arith.constant 0 : index
    %37 = vector.load %arg4[%c0_16, %c0_17, %c0_18, %c0_19] : memref<6x12x32x8xbf16, #tpu.memory_space<vmem>>, vector<1x12x32x8xbf16>
    %38 = vector.shape_cast %37 : vector<1x12x32x8xbf16> to vector<12x32x8xbf16>
    %cst_20 = arith.constant dense<0.000000e+00> : vector<12x6x8xf32>
    %39 = tpu.matmul %36, %38, %cst_20 {dimension_numbers = #tpu.dot_dimension_numbers<[2], [1], [1], [2], [0, 0, 0, 1, 1, 2], [0], [0]>} : vector<12x6x32xbf16>, vector<12x32x8xbf16>, vector<12x6x8xf32> -> vector<12x6x8xf32>
    %c0_21 = arith.constant 0 : index
    %c0_22 = arith.constant 0 : index
    %c0_23 = arith.constant 0 : index
    %c0_24 = arith.constant 0 : index
    %40 = vector.load %arg5[%c0_21, %c0_22, %c0_23, %c0_24] : memref<6x12x6x8xf32, #tpu.memory_space<vmem>>, vector<1x12x6x8xf32>
    %41 = vector.shape_cast %40 : vector<1x12x6x8xf32> to vector<12x6x8xf32>
    %42 = arith.addf %39, %41 : vector<12x6x8xf32>
    %43 = vector.extract_strided_slice %42 {offsets = [0, 0, 0], sizes = [4, 6, 8], strides = [1, 1, 1]} : vector<12x6x8xf32> to vector<4x6x8xf32>
    %44 = arith.truncf %43 : vector<4x6x8xf32> to vector<4x6x8xbf16>
    %45 = vector.extract_strided_slice %42 {offsets = [4, 0, 0], sizes = [4, 6, 8], strides = [1, 1, 1]} : vector<12x6x8xf32> to vector<4x6x8xf32>
    %46 = arith.truncf %45 : vector<4x6x8xf32> to vector<4x6x8xbf16>
    %47 = vector.extract_strided_slice %42 {offsets = [8, 0, 0], sizes = [4, 6, 8], strides = [1, 1, 1]} : vector<12x6x8xf32> to vector<4x6x8xf32>
    %48 = arith.truncf %47 : vector<4x6x8xf32> to vector<4x6x8xbf16>
    %cst_25 = arith.constant dense<0.000000e+00> : vector<4x6x6xf32>
    %49 = tpu.matmul %44, %46, %cst_25 {dimension_numbers = #tpu.dot_dimension_numbers<[2], [2], [1], [1], [0, 0, 0, 1, 1, 1], [0], [0]>} : vector<4x6x8xbf16>, vector<4x6x8xbf16>, vector<4x6x6xf32> -> vector<4x6x6xf32>
    %50 = vector.shape_cast %6 : vector<6x6xf32> to vector<1x6x6xf32>
    %51 = vector.broadcast %50 : vector<1x6x6xf32> to vector<4x6x6xf32>
    %52 = arith.addf %49, %51 : vector<4x6x6xf32>
    %cst_26 = arith.constant dense<0xFF800000> : vector<4x6xf32>
    %53 = vector.multi_reduction <maximumf>, %52, %cst_26 [2] : vector<4x6x6xf32> to vector<4x6xf32>
    %54 = vector.shape_cast %53 : vector<4x6xf32> to vector<4x6x1xf32>
    %55 = vector.broadcast %54 : vector<4x6x1xf32> to vector<4x6x6xf32>
    %56 = arith.subf %52, %55 : vector<4x6x6xf32>
    %57 = math.exp %56 : vector<4x6x6xf32>
    %cst_27 = arith.constant dense<0.000000e+00> : vector<4x6xf32>
    %58 = vector.multi_reduction <add>, %57, %cst_27 [2] : vector<4x6x6xf32> to vector<4x6xf32>
    %59 = vector.shape_cast %58 : vector<4x6xf32> to vector<4x6x1xf32>
    %60 = tpu.reciprocal %59 {approx = true} : vector<4x6x1xf32> -> vector<4x6x1xf32>
    %61 = vector.broadcast %60 : vector<4x6x1xf32> to vector<4x6x6xf32>
    %62 = arith.mulf %57, %61 : vector<4x6x6xf32>
    %63 = arith.truncf %62 : vector<4x6x6xf32> to vector<4x6x6xbf16>
    %cst_28 = arith.constant dense<0.000000e+00> : vector<4x6x8xf32>
    %64 = tpu.matmul %63, %48, %cst_28 {dimension_numbers = #tpu.dot_dimension_numbers<[2], [1], [1], [2], [0, 0, 0, 1, 1, 2], [0], [0]>} : vector<4x6x6xbf16>, vector<4x6x8xbf16>, vector<4x6x8xf32> -> vector<4x6x8xf32>
    %65 = arith.truncf %64 : vector<4x6x8xf32> to vector<4x6x8xbf16>
    %c0_29 = arith.constant 0 : index
    %c0_30 = arith.constant 0 : index
    %c0_31 = arith.constant 0 : index
    %c0_32 = arith.constant 0 : index
    %66 = vector.load %arg6[%c0_29, %c0_30, %c0_31, %c0_32] : memref<6x4x8x32xbf16, #tpu.memory_space<vmem>>, vector<1x4x8x32xbf16>
    %67 = vector.shape_cast %66 : vector<1x4x8x32xbf16> to vector<4x8x32xbf16>
    %cst_33 = arith.constant dense<0.000000e+00> : vector<4x6x32xf32>
    %68 = tpu.matmul %65, %67, %cst_33 {dimension_numbers = #tpu.dot_dimension_numbers<[2], [1], [1], [2], [0, 0, 0, 1, 1, 2], [0], [0]>} : vector<4x6x8xbf16>, vector<4x8x32xbf16>, vector<4x6x32xf32> -> vector<4x6x32xf32>
    %cst_34 = arith.constant dense<0.000000e+00> : vector<6x32xf32>
    %69 = vector.multi_reduction <add>, %68, %cst_34 [0] : vector<4x6x32xf32> to vector<6x32xf32>
    %70 = arith.addf %4, %69 : vector<6x32xf32>
    %71 = vector.extract_strided_slice %8 {offsets = [4, 0], sizes = [1, 32], strides = [1, 1]} : vector<6x32xf32> to vector<1x32xf32>
    %72 = vector.broadcast %71 : vector<1x32xf32> to vector<6x32xf32>
    %73 = arith.addf %70, %72 : vector<6x32xf32>
    %74 = vector.extract_strided_slice %8 {offsets = [2, 0], sizes = [1, 32], strides = [1, 1]} : vector<6x32xf32> to vector<1x32xf32>
    %75 = vector.extract_strided_slice %8 {offsets = [3, 0], sizes = [1, 32], strides = [1, 1]} : vector<6x32xf32> to vector<1x32xf32>
    %cst_35 = arith.constant dense<0.000000e+00> : vector<6xf32>
    %76 = vector.multi_reduction <add>, %73, %cst_35 [1] : vector<6x32xf32> to vector<6xf32>
    %77 = vector.shape_cast %76 : vector<6xf32> to vector<6x1xf32>
    %cst_36 = arith.constant 3.200000e+01 : f32
    %78 = vector.broadcast %cst_36 : f32 to vector<6x1xf32>
    %79 = arith.divf %77, %78 : vector<6x1xf32>
    %80 = vector.broadcast %79 : vector<6x1xf32> to vector<6x32xf32>
    %81 = arith.subf %73, %80 : vector<6x32xf32>
    %82 = arith.mulf %81, %81 : vector<6x32xf32>
    %cst_37 = arith.constant dense<0.000000e+00> : vector<6xf32>
    %83 = vector.multi_reduction <add>, %82, %cst_37 [1] : vector<6x32xf32> to vector<6xf32>
    %84 = vector.shape_cast %83 : vector<6xf32> to vector<6x1xf32>
    %cst_38 = arith.constant 3.200000e+01 : f32
    %85 = vector.broadcast %cst_38 : f32 to vector<6x1xf32>
    %86 = arith.divf %84, %85 : vector<6x1xf32>
    %87 = vector.broadcast %79 : vector<6x1xf32> to vector<6x32xf32>
    %88 = arith.subf %73, %87 : vector<6x32xf32>
    %cst_39 = arith.constant 9.99999974E-6 : f32
    %89 = vector.broadcast %cst_39 : f32 to vector<6x1xf32>
    %90 = arith.addf %86, %89 : vector<6x1xf32>
    %91 = math.rsqrt %90 : vector<6x1xf32>
    %92 = vector.broadcast %91 : vector<6x1xf32> to vector<6x32xf32>
    %93 = arith.mulf %88, %92 : vector<6x32xf32>
    %94 = vector.broadcast %74 : vector<1x32xf32> to vector<6x32xf32>
    %95 = arith.mulf %93, %94 : vector<6x32xf32>
    %96 = vector.broadcast %75 : vector<1x32xf32> to vector<6x32xf32>
    %97 = arith.addf %95, %96 : vector<6x32xf32>
    %98 = arith.truncf %97 : vector<6x32xf32> to vector<6x32xbf16>
    %c0_40 = arith.constant 0 : index
    %c0_41 = arith.constant 0 : index
    %c0_42 = arith.constant 0 : index
    %99 = vector.load %arg7[%c0_40, %c0_41, %c0_42] : memref<6x32x128xbf16, #tpu.memory_space<vmem>>, vector<1x32x128xbf16>
    %100 = vector.shape_cast %99 : vector<1x32x128xbf16> to vector<32x128xbf16>
    %cst_43 = arith.constant dense<0.000000e+00> : vector<6x128xf32>
    %101 = tpu.matmul %98, %100, %cst_43 {dimension_numbers = #tpu.dot_dimension_numbers<[1], [0], [0], [1], [0, 0, 1, 1], [], []>} : vector<6x32xbf16>, vector<32x128xbf16>, vector<6x128xf32> -> vector<6x128xf32>
    %c0_44 = arith.constant 0 : index
    %c0_45 = arith.constant 0 : index
    %c0_46 = arith.constant 0 : index
    %102 = vector.load %arg8[%c0_44, %c0_45, %c0_46] : memref<6x1x128xf32, #tpu.memory_space<vmem>>, vector<1x1x128xf32>
    %103 = vector.shape_cast %102 : vector<1x1x128xf32> to vector<1x128xf32>
    %104 = vector.broadcast %103 : vector<1x128xf32> to vector<6x128xf32>
    %105 = arith.addf %101, %104 : vector<6x128xf32>
    %106 = arith.mulf %105, %105 : vector<6x128xf32>
    %107 = arith.mulf %105, %106 : vector<6x128xf32>
    %cst_47 = arith.constant 4.471500e-02 : f32
    %108 = vector.broadcast %cst_47 : f32 to vector<6x128xf32>
    %109 = arith.mulf %108, %107 : vector<6x128xf32>
    %110 = arith.addf %105, %109 : vector<6x128xf32>
    %cst_48 = arith.constant 0.797884583 : f32
    %111 = vector.broadcast %cst_48 : f32 to vector<6x128xf32>
    %112 = arith.mulf %111, %110 : vector<6x128xf32>
    %113 = math.tanh %112 : vector<6x128xf32>
    %cst_49 = arith.constant 1.000000e+00 : f32
    %114 = vector.broadcast %cst_49 : f32 to vector<6x128xf32>
    %115 = arith.addf %114, %113 : vector<6x128xf32>
    %cst_50 = arith.constant 5.000000e-01 : f32
    %116 = vector.broadcast %cst_50 : f32 to vector<6x128xf32>
    %117 = arith.mulf %116, %115 : vector<6x128xf32>
    %118 = arith.mulf %105, %117 : vector<6x128xf32>
    %119 = arith.truncf %118 : vector<6x128xf32> to vector<6x128xbf16>
    %c0_51 = arith.constant 0 : index
    %c0_52 = arith.constant 0 : index
    %c0_53 = arith.constant 0 : index
    %120 = vector.load %arg9[%c0_51, %c0_52, %c0_53] : memref<6x128x32xbf16, #tpu.memory_space<vmem>>, vector<1x128x32xbf16>
    %121 = vector.shape_cast %120 : vector<1x128x32xbf16> to vector<128x32xbf16>
    %cst_54 = arith.constant dense<0.000000e+00> : vector<6x32xf32>
    %122 = tpu.matmul %119, %121, %cst_54 {dimension_numbers = #tpu.dot_dimension_numbers<[1], [0], [0], [1], [0, 0, 1, 1], [], []>} : vector<6x128xbf16>, vector<128x32xbf16>, vector<6x32xf32> -> vector<6x32xf32>
    %123 = arith.addf %73, %122 : vector<6x32xf32>
    %124 = vector.extract_strided_slice %8 {offsets = [5, 0], sizes = [1, 32], strides = [1, 1]} : vector<6x32xf32> to vector<1x32xf32>
    %125 = vector.broadcast %124 : vector<1x32xf32> to vector<6x32xf32>
    %126 = arith.addf %123, %125 : vector<6x32xf32>
    %c1 = arith.constant 1 : index
    %c0_55 = arith.constant 0 : index
    %c0_56 = arith.constant 0 : index
    %127 = vector.load %arg10[%c1, %c0_55, %c0_56] : memref<6x6x32xf32, #tpu.memory_space<vmem>>, vector<1x6x32xf32>
    %128 = vector.shape_cast %127 : vector<1x6x32xf32> to vector<6x32xf32>
    %129 = vector.extract_strided_slice %128 {offsets = [0, 0], sizes = [1, 32], strides = [1, 1]} : vector<6x32xf32> to vector<1x32xf32>
    %130 = vector.extract_strided_slice %128 {offsets = [1, 0], sizes = [1, 32], strides = [1, 1]} : vector<6x32xf32> to vector<1x32xf32>
    %cst_57 = arith.constant dense<0.000000e+00> : vector<6xf32>
    %131 = vector.multi_reduction <add>, %126, %cst_57 [1] : vector<6x32xf32> to vector<6xf32>
    %132 = vector.shape_cast %131 : vector<6xf32> to vector<6x1xf32>
    %cst_58 = arith.constant 3.200000e+01 : f32
    %133 = vector.broadcast %cst_58 : f32 to vector<6x1xf32>
    %134 = arith.divf %132, %133 : vector<6x1xf32>
    %135 = vector.broadcast %134 : vector<6x1xf32> to vector<6x32xf32>
    %136 = arith.subf %126, %135 : vector<6x32xf32>
    %137 = arith.mulf %136, %136 : vector<6x32xf32>
    %cst_59 = arith.constant dense<0.000000e+00> : vector<6xf32>
    %138 = vector.multi_reduction <add>, %137, %cst_59 [1] : vector<6x32xf32> to vector<6xf32>
    %139 = vector.shape_cast %138 : vector<6xf32> to vector<6x1xf32>
    %cst_60 = arith.constant 3.200000e+01 : f32
    %140 = vector.broadcast %cst_60 : f32 to vector<6x1xf32>
    %141 = arith.divf %139, %140 : vector<6x1xf32>
    %142 = vector.broadcast %134 : vector<6x1xf32> to vector<6x32xf32>
    %143 = arith.subf %126, %142 : vector<6x32xf32>
    %cst_61 = arith.constant 9.99999974E-6 : f32
    %144 = vector.broadcast %cst_61 : f32 to vector<6x1xf32>
    %145 = arith.addf %141, %144 : vector<6x1xf32>
    %146 = math.rsqrt %145 : vector<6x1xf32>
    %147 = vector.broadcast %146 : vector<6x1xf32> to vector<6x32xf32>
    %148 = arith.mulf %143, %147 : vector<6x32xf32>
    %149 = vector.broadcast %129 : vector<1x32xf32> to vector<6x32xf32>
    %150 = arith.mulf %148, %149 : vector<6x32xf32>
    %151 = vector.broadcast %130 : vector<1x32xf32> to vector<6x32xf32>
    %152 = arith.addf %150, %151 : vector<6x32xf32>
    %153 = arith.truncf %152 : vector<6x32xf32> to vector<6x32xbf16>
    %154 = vector.shape_cast %153 : vector<6x32xbf16> to vector<1x6x32xbf16>
    %155 = vector.shape_cast %154 : vector<1x6x32xbf16> to vector<1x6x32xbf16>
    %156 = vector.broadcast %155 : vector<1x6x32xbf16> to vector<12x6x32xbf16>
    %c1_62 = arith.constant 1 : index
    %c0_63 = arith.constant 0 : index
    %c0_64 = arith.constant 0 : index
    %c0_65 = arith.constant 0 : index
    %157 = vector.load %arg4[%c1_62, %c0_63, %c0_64, %c0_65] : memref<6x12x32x8xbf16, #tpu.memory_space<vmem>>, vector<1x12x32x8xbf16>
    %158 = vector.shape_cast %157 : vector<1x12x32x8xbf16> to vector<12x32x8xbf16>
    %cst_66 = arith.constant dense<0.000000e+00> : vector<12x6x8xf32>
    %159 = tpu.matmul %156, %158, %cst_66 {dimension_numbers = #tpu.dot_dimension_numbers<[2], [1], [1], [2], [0, 0, 0, 1, 1, 2], [0], [0]>} : vector<12x6x32xbf16>, vector<12x32x8xbf16>, vector<12x6x8xf32> -> vector<12x6x8xf32>
    %c1_67 = arith.constant 1 : index
    %c0_68 = arith.constant 0 : index
    %c0_69 = arith.constant 0 : index
    %c0_70 = arith.constant 0 : index
    %160 = vector.load %arg5[%c1_67, %c0_68, %c0_69, %c0_70] : memref<6x12x6x8xf32, #tpu.memory_space<vmem>>, vector<1x12x6x8xf32>
    %161 = vector.shape_cast %160 : vector<1x12x6x8xf32> to vector<12x6x8xf32>
    %162 = arith.addf %159, %161 : vector<12x6x8xf32>
    %163 = vector.extract_strided_slice %162 {offsets = [0, 0, 0], sizes = [4, 6, 8], strides = [1, 1, 1]} : vector<12x6x8xf32> to vector<4x6x8xf32>
    %164 = arith.truncf %163 : vector<4x6x8xf32> to vector<4x6x8xbf16>
    %165 = vector.extract_strided_slice %162 {offsets = [4, 0, 0], sizes = [4, 6, 8], strides = [1, 1, 1]} : vector<12x6x8xf32> to vector<4x6x8xf32>
    %166 = arith.truncf %165 : vector<4x6x8xf32> to vector<4x6x8xbf16>
    %167 = vector.extract_strided_slice %162 {offsets = [8, 0, 0], sizes = [4, 6, 8], strides = [1, 1, 1]} : vector<12x6x8xf32> to vector<4x6x8xf32>
    %168 = arith.truncf %167 : vector<4x6x8xf32> to vector<4x6x8xbf16>
    %cst_71 = arith.constant dense<0.000000e+00> : vector<4x6x6xf32>
    %169 = tpu.matmul %164, %166, %cst_71 {dimension_numbers = #tpu.dot_dimension_numbers<[2], [2], [1], [1], [0, 0, 0, 1, 1, 1], [0], [0]>} : vector<4x6x8xbf16>, vector<4x6x8xbf16>, vector<4x6x6xf32> -> vector<4x6x6xf32>
    %170 = vector.shape_cast %6 : vector<6x6xf32> to vector<1x6x6xf32>
    %171 = vector.broadcast %170 : vector<1x6x6xf32> to vector<4x6x6xf32>
    %172 = arith.addf %169, %171 : vector<4x6x6xf32>
    %cst_72 = arith.constant dense<0xFF800000> : vector<4x6xf32>
    %173 = vector.multi_reduction <maximumf>, %172, %cst_72 [2] : vector<4x6x6xf32> to vector<4x6xf32>
    %174 = vector.shape_cast %173 : vector<4x6xf32> to vector<4x6x1xf32>
    %175 = vector.broadcast %174 : vector<4x6x1xf32> to vector<4x6x6xf32>
    %176 = arith.subf %172, %175 : vector<4x6x6xf32>
    %177 = math.exp %176 : vector<4x6x6xf32>
    %cst_73 = arith.constant dense<0.000000e+00> : vector<4x6xf32>
    %178 = vector.multi_reduction <add>, %177, %cst_73 [2] : vector<4x6x6xf32> to vector<4x6xf32>
    %179 = vector.shape_cast %178 : vector<4x6xf32> to vector<4x6x1xf32>
    %180 = tpu.reciprocal %179 {approx = true} : vector<4x6x1xf32> -> vector<4x6x1xf32>
    %181 = vector.broadcast %180 : vector<4x6x1xf32> to vector<4x6x6xf32>
    %182 = arith.mulf %177, %181 : vector<4x6x6xf32>
    %183 = arith.truncf %182 : vector<4x6x6xf32> to vector<4x6x6xbf16>
    %cst_74 = arith.constant dense<0.000000e+00> : vector<4x6x8xf32>
    %184 = tpu.matmul %183, %168, %cst_74 {dimension_numbers = #tpu.dot_dimension_numbers<[2], [1], [1], [2], [0, 0, 0, 1, 1, 2], [0], [0]>} : vector<4x6x6xbf16>, vector<4x6x8xbf16>, vector<4x6x8xf32> -> vector<4x6x8xf32>
    %185 = arith.truncf %184 : vector<4x6x8xf32> to vector<4x6x8xbf16>
    %c1_75 = arith.constant 1 : index
    %c0_76 = arith.constant 0 : index
    %c0_77 = arith.constant 0 : index
    %c0_78 = arith.constant 0 : index
    %186 = vector.load %arg6[%c1_75, %c0_76, %c0_77, %c0_78] : memref<6x4x8x32xbf16, #tpu.memory_space<vmem>>, vector<1x4x8x32xbf16>
    %187 = vector.shape_cast %186 : vector<1x4x8x32xbf16> to vector<4x8x32xbf16>
    %cst_79 = arith.constant dense<0.000000e+00> : vector<4x6x32xf32>
    %188 = tpu.matmul %185, %187, %cst_79 {dimension_numbers = #tpu.dot_dimension_numbers<[2], [1], [1], [2], [0, 0, 0, 1, 1, 2], [0], [0]>} : vector<4x6x8xbf16>, vector<4x8x32xbf16>, vector<4x6x32xf32> -> vector<4x6x32xf32>
    %cst_80 = arith.constant dense<0.000000e+00> : vector<6x32xf32>
    %189 = vector.multi_reduction <add>, %188, %cst_80 [0] : vector<4x6x32xf32> to vector<6x32xf32>
    %190 = arith.addf %126, %189 : vector<6x32xf32>
    %191 = vector.extract_strided_slice %128 {offsets = [4, 0], sizes = [1, 32], strides = [1, 1]} : vector<6x32xf32> to vector<1x32xf32>
    %192 = vector.broadcast %191 : vector<1x32xf32> to vector<6x32xf32>
    %193 = arith.addf %190, %192 : vector<6x32xf32>
    %194 = vector.extract_strided_slice %128 {offsets = [2, 0], sizes = [1, 32], strides = [1, 1]} : vector<6x32xf32> to vector<1x32xf32>
    %195 = vector.extract_strided_slice %128 {offsets = [3, 0], sizes = [1, 32], strides = [1, 1]} : vector<6x32xf32> to vector<1x32xf32>
    %cst_81 = arith.constant dense<0.000000e+00> : vector<6xf32>
    %196 = vector.multi_reduction <add>, %193, %cst_81 [1] : vector<6x32xf32> to vector<6xf32>
    %197 = vector.shape_cast %196 : vector<6xf32> to vector<6x1xf32>
    %cst_82 = arith.constant 3.200000e+01 : f32
    %198 = vector.broadcast %cst_82 : f32 to vector<6x1xf32>
    %199 = arith.divf %197, %198 : vector<6x1xf32>
    %200 = vector.broadcast %199 : vector<6x1xf32> to vector<6x32xf32>
    %201 = arith.subf %193, %200 : vector<6x32xf32>
    %202 = arith.mulf %201, %201 : vector<6x32xf32>
    %cst_83 = arith.constant dense<0.000000e+00> : vector<6xf32>
    %203 = vector.multi_reduction <add>, %202, %cst_83 [1] : vector<6x32xf32> to vector<6xf32>
    %204 = vector.shape_cast %203 : vector<6xf32> to vector<6x1xf32>
    %cst_84 = arith.constant 3.200000e+01 : f32
    %205 = vector.broadcast %cst_84 : f32 to vector<6x1xf32>
    %206 = arith.divf %204, %205 : vector<6x1xf32>
    %207 = vector.broadcast %199 : vector<6x1xf32> to vector<6x32xf32>
    %208 = arith.subf %193, %207 : vector<6x32xf32>
    %cst_85 = arith.constant 9.99999974E-6 : f32
    %209 = vector.broadcast %cst_85 : f32 to vector<6x1xf32>
    %210 = arith.addf %206, %209 : vector<6x1xf32>
    %211 = math.rsqrt %210 : vector<6x1xf32>
    %212 = vector.broadcast %211 : vector<6x1xf32> to vector<6x32xf32>
    %213 = arith.mulf %208, %212 : vector<6x32xf32>
    %214 = vector.broadcast %194 : vector<1x32xf32> to vector<6x32xf32>
    %215 = arith.mulf %213, %214 : vector<6x32xf32>
    %216 = vector.broadcast %195 : vector<1x32xf32> to vector<6x32xf32>
    %217 = arith.addf %215, %216 : vector<6x32xf32>
    %218 = arith.truncf %217 : vector<6x32xf32> to vector<6x32xbf16>
    %c1_86 = arith.constant 1 : index
    %c0_87 = arith.constant 0 : index
    %c0_88 = arith.constant 0 : index
    %219 = vector.load %arg7[%c1_86, %c0_87, %c0_88] : memref<6x32x128xbf16, #tpu.memory_space<vmem>>, vector<1x32x128xbf16>
    %220 = vector.shape_cast %219 : vector<1x32x128xbf16> to vector<32x128xbf16>
    %cst_89 = arith.constant dense<0.000000e+00> : vector<6x128xf32>
    %221 = tpu.matmul %218, %220, %cst_89 {dimension_numbers = #tpu.dot_dimension_numbers<[1], [0], [0], [1], [0, 0, 1, 1], [], []>} : vector<6x32xbf16>, vector<32x128xbf16>, vector<6x128xf32> -> vector<6x128xf32>
    %c1_90 = arith.constant 1 : index
    %c0_91 = arith.constant 0 : index
    %c0_92 = arith.constant 0 : index
    %222 = vector.load %arg8[%c1_90, %c0_91, %c0_92] : memref<6x1x128xf32, #tpu.memory_space<vmem>>, vector<1x1x128xf32>
    %223 = vector.shape_cast %222 : vector<1x1x128xf32> to vector<1x128xf32>
    %224 = vector.broadcast %223 : vector<1x128xf32> to vector<6x128xf32>
    %225 = arith.addf %221, %224 : vector<6x128xf32>
    %226 = arith.mulf %225, %225 : vector<6x128xf32>
    %227 = arith.mulf %225, %226 : vector<6x128xf32>
    %cst_93 = arith.constant 4.471500e-02 : f32
    %228 = vector.broadcast %cst_93 : f32 to vector<6x128xf32>
    %229 = arith.mulf %228, %227 : vector<6x128xf32>
    %230 = arith.addf %225, %229 : vector<6x128xf32>
    %cst_94 = arith.constant 0.797884583 : f32
    %231 = vector.broadcast %cst_94 : f32 to vector<6x128xf32>
    %232 = arith.mulf %231, %230 : vector<6x128xf32>
    %233 = math.tanh %232 : vector<6x128xf32>
    %cst_95 = arith.constant 1.000000e+00 : f32
    %234 = vector.broadcast %cst_95 : f32 to vector<6x128xf32>
    %235 = arith.addf %234, %233 : vector<6x128xf32>
    %cst_96 = arith.constant 5.000000e-01 : f32
    %236 = vector.broadcast %cst_96 : f32 to vector<6x128xf32>
    %237 = arith.mulf %236, %235 : vector<6x128xf32>
    %238 = arith.mulf %225, %237 : vector<6x128xf32>
    %239 = arith.truncf %238 : vector<6x128xf32> to vector<6x128xbf16>
    %c1_97 = arith.constant 1 : index
    %c0_98 = arith.constant 0 : index
    %c0_99 = arith.constant 0 : index
    %240 = vector.load %arg9[%c1_97, %c0_98, %c0_99] : memref<6x128x32xbf16, #tpu.memory_space<vmem>>, vector<1x128x32xbf16>
    %241 = vector.shape_cast %240 : vector<1x128x32xbf16> to vector<128x32xbf16>
    %cst_100 = arith.constant dense<0.000000e+00> : vector<6x32xf32>
    %242 = tpu.matmul %239, %241, %cst_100 {dimension_numbers = #tpu.dot_dimension_numbers<[1], [0], [0], [1], [0, 0, 1, 1], [], []>} : vector<6x128xbf16>, vector<128x32xbf16>, vector<6x32xf32> -> vector<6x32xf32>
    %243 = arith.addf %193, %242 : vector<6x32xf32>
    %244 = vector.extract_strided_slice %128 {offsets = [5, 0], sizes = [1, 32], strides = [1, 1]} : vector<6x32xf32> to vector<1x32xf32>
    %245 = vector.broadcast %244 : vector<1x32xf32> to vector<6x32xf32>
    %246 = arith.addf %243, %245 : vector<6x32xf32>
    %c2 = arith.constant 2 : index
    %c0_101 = arith.constant 0 : index
    %c0_102 = arith.constant 0 : index
    %247 = vector.load %arg10[%c2, %c0_101, %c0_102] : memref<6x6x32xf32, #tpu.memory_space<vmem>>, vector<1x6x32xf32>
    %248 = vector.shape_cast %247 : vector<1x6x32xf32> to vector<6x32xf32>
    %249 = vector.extract_strided_slice %248 {offsets = [0, 0], sizes = [1, 32], strides = [1, 1]} : vector<6x32xf32> to vector<1x32xf32>
    %250 = vector.extract_strided_slice %248 {offsets = [1, 0], sizes = [1, 32], strides = [1, 1]} : vector<6x32xf32> to vector<1x32xf32>
    %cst_103 = arith.constant dense<0.000000e+00> : vector<6xf32>
    %251 = vector.multi_reduction <add>, %246, %cst_103 [1] : vector<6x32xf32> to vector<6xf32>
    %252 = vector.shape_cast %251 : vector<6xf32> to vector<6x1xf32>
    %cst_104 = arith.constant 3.200000e+01 : f32
    %253 = vector.broadcast %cst_104 : f32 to vector<6x1xf32>
    %254 = arith.divf %252, %253 : vector<6x1xf32>
    %255 = vector.broadcast %254 : vector<6x1xf32> to vector<6x32xf32>
    %256 = arith.subf %246, %255 : vector<6x32xf32>
    %257 = arith.mulf %256, %256 : vector<6x32xf32>
    %cst_105 = arith.constant dense<0.000000e+00> : vector<6xf32>
    %258 = vector.multi_reduction <add>, %257, %cst_105 [1] : vector<6x32xf32> to vector<6xf32>
    %259 = vector.shape_cast %258 : vector<6xf32> to vector<6x1xf32>
    %cst_106 = arith.constant 3.200000e+01 : f32
    %260 = vector.broadcast %cst_106 : f32 to vector<6x1xf32>
    %261 = arith.divf %259, %260 : vector<6x1xf32>
    %262 = vector.broadcast %254 : vector<6x1xf32> to vector<6x32xf32>
    %263 = arith.subf %246, %262 : vector<6x32xf32>
    %cst_107 = arith.constant 9.99999974E-6 : f32
    %264 = vector.broadcast %cst_107 : f32 to vector<6x1xf32>
    %265 = arith.addf %261, %264 : vector<6x1xf32>
    %266 = math.rsqrt %265 : vector<6x1xf32>
    %267 = vector.broadcast %266 : vector<6x1xf32> to vector<6x32xf32>
    %268 = arith.mulf %263, %267 : vector<6x32xf32>
    %269 = vector.broadcast %249 : vector<1x32xf32> to vector<6x32xf32>
    %270 = arith.mulf %268, %269 : vector<6x32xf32>
    %271 = vector.broadcast %250 : vector<1x32xf32> to vector<6x32xf32>
    %272 = arith.addf %270, %271 : vector<6x32xf32>
    %273 = arith.truncf %272 : vector<6x32xf32> to vector<6x32xbf16>
    %274 = vector.shape_cast %273 : vector<6x32xbf16> to vector<1x6x32xbf16>
    %275 = vector.shape_cast %274 : vector<1x6x32xbf16> to vector<1x6x32xbf16>
    %276 = vector.broadcast %275 : vector<1x6x32xbf16> to vector<12x6x32xbf16>
    %c2_108 = arith.constant 2 : index
    %c0_109 = arith.constant 0 : index
    %c0_110 = arith.constant 0 : index
    %c0_111 = arith.constant 0 : index
    %277 = vector.load %arg4[%c2_108, %c0_109, %c0_110, %c0_111] : memref<6x12x32x8xbf16, #tpu.memory_space<vmem>>, vector<1x12x32x8xbf16>
    %278 = vector.shape_cast %277 : vector<1x12x32x8xbf16> to vector<12x32x8xbf16>
    %cst_112 = arith.constant dense<0.000000e+00> : vector<12x6x8xf32>
    %279 = tpu.matmul %276, %278, %cst_112 {dimension_numbers = #tpu.dot_dimension_numbers<[2], [1], [1], [2], [0, 0, 0, 1, 1, 2], [0], [0]>} : vector<12x6x32xbf16>, vector<12x32x8xbf16>, vector<12x6x8xf32> -> vector<12x6x8xf32>
    %c2_113 = arith.constant 2 : index
    %c0_114 = arith.constant 0 : index
    %c0_115 = arith.constant 0 : index
    %c0_116 = arith.constant 0 : index
    %280 = vector.load %arg5[%c2_113, %c0_114, %c0_115, %c0_116] : memref<6x12x6x8xf32, #tpu.memory_space<vmem>>, vector<1x12x6x8xf32>
    %281 = vector.shape_cast %280 : vector<1x12x6x8xf32> to vector<12x6x8xf32>
    %282 = arith.addf %279, %281 : vector<12x6x8xf32>
    %283 = vector.extract_strided_slice %282 {offsets = [0, 0, 0], sizes = [4, 6, 8], strides = [1, 1, 1]} : vector<12x6x8xf32> to vector<4x6x8xf32>
    %284 = arith.truncf %283 : vector<4x6x8xf32> to vector<4x6x8xbf16>
    %285 = vector.extract_strided_slice %282 {offsets = [4, 0, 0], sizes = [4, 6, 8], strides = [1, 1, 1]} : vector<12x6x8xf32> to vector<4x6x8xf32>
    %286 = arith.truncf %285 : vector<4x6x8xf32> to vector<4x6x8xbf16>
    %287 = vector.extract_strided_slice %282 {offsets = [8, 0, 0], sizes = [4, 6, 8], strides = [1, 1, 1]} : vector<12x6x8xf32> to vector<4x6x8xf32>
    %288 = arith.truncf %287 : vector<4x6x8xf32> to vector<4x6x8xbf16>
    %cst_117 = arith.constant dense<0.000000e+00> : vector<4x6x6xf32>
    %289 = tpu.matmul %284, %286, %cst_117 {dimension_numbers = #tpu.dot_dimension_numbers<[2], [2], [1], [1], [0, 0, 0, 1, 1, 1], [0], [0]>} : vector<4x6x8xbf16>, vector<4x6x8xbf16>, vector<4x6x6xf32> -> vector<4x6x6xf32>
    %290 = vector.shape_cast %6 : vector<6x6xf32> to vector<1x6x6xf32>
    %291 = vector.broadcast %290 : vector<1x6x6xf32> to vector<4x6x6xf32>
    %292 = arith.addf %289, %291 : vector<4x6x6xf32>
    %cst_118 = arith.constant dense<0xFF800000> : vector<4x6xf32>
    %293 = vector.multi_reduction <maximumf>, %292, %cst_118 [2] : vector<4x6x6xf32> to vector<4x6xf32>
    %294 = vector.shape_cast %293 : vector<4x6xf32> to vector<4x6x1xf32>
    %295 = vector.broadcast %294 : vector<4x6x1xf32> to vector<4x6x6xf32>
    %296 = arith.subf %292, %295 : vector<4x6x6xf32>
    %297 = math.exp %296 : vector<4x6x6xf32>
    %cst_119 = arith.constant dense<0.000000e+00> : vector<4x6xf32>
    %298 = vector.multi_reduction <add>, %297, %cst_119 [2] : vector<4x6x6xf32> to vector<4x6xf32>
    %299 = vector.shape_cast %298 : vector<4x6xf32> to vector<4x6x1xf32>
    %300 = tpu.reciprocal %299 {approx = true} : vector<4x6x1xf32> -> vector<4x6x1xf32>
    %301 = vector.broadcast %300 : vector<4x6x1xf32> to vector<4x6x6xf32>
    %302 = arith.mulf %297, %301 : vector<4x6x6xf32>
    %303 = arith.truncf %302 : vector<4x6x6xf32> to vector<4x6x6xbf16>
    %cst_120 = arith.constant dense<0.000000e+00> : vector<4x6x8xf32>
    %304 = tpu.matmul %303, %288, %cst_120 {dimension_numbers = #tpu.dot_dimension_numbers<[2], [1], [1], [2], [0, 0, 0, 1, 1, 2], [0], [0]>} : vector<4x6x6xbf16>, vector<4x6x8xbf16>, vector<4x6x8xf32> -> vector<4x6x8xf32>
    %305 = arith.truncf %304 : vector<4x6x8xf32> to vector<4x6x8xbf16>
    %c2_121 = arith.constant 2 : index
    %c0_122 = arith.constant 0 : index
    %c0_123 = arith.constant 0 : index
    %c0_124 = arith.constant 0 : index
    %306 = vector.load %arg6[%c2_121, %c0_122, %c0_123, %c0_124] : memref<6x4x8x32xbf16, #tpu.memory_space<vmem>>, vector<1x4x8x32xbf16>
    %307 = vector.shape_cast %306 : vector<1x4x8x32xbf16> to vector<4x8x32xbf16>
    %cst_125 = arith.constant dense<0.000000e+00> : vector<4x6x32xf32>
    %308 = tpu.matmul %305, %307, %cst_125 {dimension_numbers = #tpu.dot_dimension_numbers<[2], [1], [1], [2], [0, 0, 0, 1, 1, 2], [0], [0]>} : vector<4x6x8xbf16>, vector<4x8x32xbf16>, vector<4x6x32xf32> -> vector<4x6x32xf32>
    %cst_126 = arith.constant dense<0.000000e+00> : vector<6x32xf32>
    %309 = vector.multi_reduction <add>, %308, %cst_126 [0] : vector<4x6x32xf32> to vector<6x32xf32>
    %310 = arith.addf %246, %309 : vector<6x32xf32>
    %311 = vector.extract_strided_slice %248 {offsets = [4, 0], sizes = [1, 32], strides = [1, 1]} : vector<6x32xf32> to vector<1x32xf32>
    %312 = vector.broadcast %311 : vector<1x32xf32> to vector<6x32xf32>
    %313 = arith.addf %310, %312 : vector<6x32xf32>
    %314 = vector.extract_strided_slice %248 {offsets = [2, 0], sizes = [1, 32], strides = [1, 1]} : vector<6x32xf32> to vector<1x32xf32>
    %315 = vector.extract_strided_slice %248 {offsets = [3, 0], sizes = [1, 32], strides = [1, 1]} : vector<6x32xf32> to vector<1x32xf32>
    %cst_127 = arith.constant dense<0.000000e+00> : vector<6xf32>
    %316 = vector.multi_reduction <add>, %313, %cst_127 [1] : vector<6x32xf32> to vector<6xf32>
    %317 = vector.shape_cast %316 : vector<6xf32> to vector<6x1xf32>
    %cst_128 = arith.constant 3.200000e+01 : f32
    %318 = vector.broadcast %cst_128 : f32 to vector<6x1xf32>
    %319 = arith.divf %317, %318 : vector<6x1xf32>
    %320 = vector.broadcast %319 : vector<6x1xf32> to vector<6x32xf32>
    %321 = arith.subf %313, %320 : vector<6x32xf32>
    %322 = arith.mulf %321, %321 : vector<6x32xf32>
    %cst_129 = arith.constant dense<0.000000e+00> : vector<6xf32>
    %323 = vector.multi_reduction <add>, %322, %cst_129 [1] : vector<6x32xf32> to vector<6xf32>
    %324 = vector.shape_cast %323 : vector<6xf32> to vector<6x1xf32>
    %cst_130 = arith.constant 3.200000e+01 : f32
    %325 = vector.broadcast %cst_130 : f32 to vector<6x1xf32>
    %326 = arith.divf %324, %325 : vector<6x1xf32>
    %327 = vector.broadcast %319 : vector<6x1xf32> to vector<6x32xf32>
    %328 = arith.subf %313, %327 : vector<6x32xf32>
    %cst_131 = arith.constant 9.99999974E-6 : f32
    %329 = vector.broadcast %cst_131 : f32 to vector<6x1xf32>
    %330 = arith.addf %326, %329 : vector<6x1xf32>
    %331 = math.rsqrt %330 : vector<6x1xf32>
    %332 = vector.broadcast %331 : vector<6x1xf32> to vector<6x32xf32>
    %333 = arith.mulf %328, %332 : vector<6x32xf32>
    %334 = vector.broadcast %314 : vector<1x32xf32> to vector<6x32xf32>
    %335 = arith.mulf %333, %334 : vector<6x32xf32>
    %336 = vector.broadcast %315 : vector<1x32xf32> to vector<6x32xf32>
    %337 = arith.addf %335, %336 : vector<6x32xf32>
    %338 = arith.truncf %337 : vector<6x32xf32> to vector<6x32xbf16>
    %c2_132 = arith.constant 2 : index
    %c0_133 = arith.constant 0 : index
    %c0_134 = arith.constant 0 : index
    %339 = vector.load %arg7[%c2_132, %c0_133, %c0_134] : memref<6x32x128xbf16, #tpu.memory_space<vmem>>, vector<1x32x128xbf16>
    %340 = vector.shape_cast %339 : vector<1x32x128xbf16> to vector<32x128xbf16>
    %cst_135 = arith.constant dense<0.000000e+00> : vector<6x128xf32>
    %341 = tpu.matmul %338, %340, %cst_135 {dimension_numbers = #tpu.dot_dimension_numbers<[1], [0], [0], [1], [0, 0, 1, 1], [], []>} : vector<6x32xbf16>, vector<32x128xbf16>, vector<6x128xf32> -> vector<6x128xf32>
    %c2_136 = arith.constant 2 : index
    %c0_137 = arith.constant 0 : index
    %c0_138 = arith.constant 0 : index
    %342 = vector.load %arg8[%c2_136, %c0_137, %c0_138] : memref<6x1x128xf32, #tpu.memory_space<vmem>>, vector<1x1x128xf32>
    %343 = vector.shape_cast %342 : vector<1x1x128xf32> to vector<1x128xf32>
    %344 = vector.broadcast %343 : vector<1x128xf32> to vector<6x128xf32>
    %345 = arith.addf %341, %344 : vector<6x128xf32>
    %346 = arith.mulf %345, %345 : vector<6x128xf32>
    %347 = arith.mulf %345, %346 : vector<6x128xf32>
    %cst_139 = arith.constant 4.471500e-02 : f32
    %348 = vector.broadcast %cst_139 : f32 to vector<6x128xf32>
    %349 = arith.mulf %348, %347 : vector<6x128xf32>
    %350 = arith.addf %345, %349 : vector<6x128xf32>
    %cst_140 = arith.constant 0.797884583 : f32
    %351 = vector.broadcast %cst_140 : f32 to vector<6x128xf32>
    %352 = arith.mulf %351, %350 : vector<6x128xf32>
    %353 = math.tanh %352 : vector<6x128xf32>
    %cst_141 = arith.constant 1.000000e+00 : f32
    %354 = vector.broadcast %cst_141 : f32 to vector<6x128xf32>
    %355 = arith.addf %354, %353 : vector<6x128xf32>
    %cst_142 = arith.constant 5.000000e-01 : f32
    %356 = vector.broadcast %cst_142 : f32 to vector<6x128xf32>
    %357 = arith.mulf %356, %355 : vector<6x128xf32>
    %358 = arith.mulf %345, %357 : vector<6x128xf32>
    %359 = arith.truncf %358 : vector<6x128xf32> to vector<6x128xbf16>
    %c2_143 = arith.constant 2 : index
    %c0_144 = arith.constant 0 : index
    %c0_145 = arith.constant 0 : index
    %360 = vector.load %arg9[%c2_143, %c0_144, %c0_145] : memref<6x128x32xbf16, #tpu.memory_space<vmem>>, vector<1x128x32xbf16>
    %361 = vector.shape_cast %360 : vector<1x128x32xbf16> to vector<128x32xbf16>
    %cst_146 = arith.constant dense<0.000000e+00> : vector<6x32xf32>
    %362 = tpu.matmul %359, %361, %cst_146 {dimension_numbers = #tpu.dot_dimension_numbers<[1], [0], [0], [1], [0, 0, 1, 1], [], []>} : vector<6x128xbf16>, vector<128x32xbf16>, vector<6x32xf32> -> vector<6x32xf32>
    %363 = arith.addf %313, %362 : vector<6x32xf32>
    %364 = vector.extract_strided_slice %248 {offsets = [5, 0], sizes = [1, 32], strides = [1, 1]} : vector<6x32xf32> to vector<1x32xf32>
    %365 = vector.broadcast %364 : vector<1x32xf32> to vector<6x32xf32>
    %366 = arith.addf %363, %365 : vector<6x32xf32>
    %c3 = arith.constant 3 : index
    %c0_147 = arith.constant 0 : index
    %c0_148 = arith.constant 0 : index
    %367 = vector.load %arg10[%c3, %c0_147, %c0_148] : memref<6x6x32xf32, #tpu.memory_space<vmem>>, vector<1x6x32xf32>
    %368 = vector.shape_cast %367 : vector<1x6x32xf32> to vector<6x32xf32>
    %369 = vector.extract_strided_slice %368 {offsets = [0, 0], sizes = [1, 32], strides = [1, 1]} : vector<6x32xf32> to vector<1x32xf32>
    %370 = vector.extract_strided_slice %368 {offsets = [1, 0], sizes = [1, 32], strides = [1, 1]} : vector<6x32xf32> to vector<1x32xf32>
    %cst_149 = arith.constant dense<0.000000e+00> : vector<6xf32>
    %371 = vector.multi_reduction <add>, %366, %cst_149 [1] : vector<6x32xf32> to vector<6xf32>
    %372 = vector.shape_cast %371 : vector<6xf32> to vector<6x1xf32>
    %cst_150 = arith.constant 3.200000e+01 : f32
    %373 = vector.broadcast %cst_150 : f32 to vector<6x1xf32>
    %374 = arith.divf %372, %373 : vector<6x1xf32>
    %375 = vector.broadcast %374 : vector<6x1xf32> to vector<6x32xf32>
    %376 = arith.subf %366, %375 : vector<6x32xf32>
    %377 = arith.mulf %376, %376 : vector<6x32xf32>
    %cst_151 = arith.constant dense<0.000000e+00> : vector<6xf32>
    %378 = vector.multi_reduction <add>, %377, %cst_151 [1] : vector<6x32xf32> to vector<6xf32>
    %379 = vector.shape_cast %378 : vector<6xf32> to vector<6x1xf32>
    %cst_152 = arith.constant 3.200000e+01 : f32
    %380 = vector.broadcast %cst_152 : f32 to vector<6x1xf32>
    %381 = arith.divf %379, %380 : vector<6x1xf32>
    %382 = vector.broadcast %374 : vector<6x1xf32> to vector<6x32xf32>
    %383 = arith.subf %366, %382 : vector<6x32xf32>
    %cst_153 = arith.constant 9.99999974E-6 : f32
    %384 = vector.broadcast %cst_153 : f32 to vector<6x1xf32>
    %385 = arith.addf %381, %384 : vector<6x1xf32>
    %386 = math.rsqrt %385 : vector<6x1xf32>
    %387 = vector.broadcast %386 : vector<6x1xf32> to vector<6x32xf32>
    %388 = arith.mulf %383, %387 : vector<6x32xf32>
    %389 = vector.broadcast %369 : vector<1x32xf32> to vector<6x32xf32>
    %390 = arith.mulf %388, %389 : vector<6x32xf32>
    %391 = vector.broadcast %370 : vector<1x32xf32> to vector<6x32xf32>
    %392 = arith.addf %390, %391 : vector<6x32xf32>
    %393 = arith.truncf %392 : vector<6x32xf32> to vector<6x32xbf16>
    %394 = vector.shape_cast %393 : vector<6x32xbf16> to vector<1x6x32xbf16>
    %395 = vector.shape_cast %394 : vector<1x6x32xbf16> to vector<1x6x32xbf16>
    %396 = vector.broadcast %395 : vector<1x6x32xbf16> to vector<12x6x32xbf16>
    %c3_154 = arith.constant 3 : index
    %c0_155 = arith.constant 0 : index
    %c0_156 = arith.constant 0 : index
    %c0_157 = arith.constant 0 : index
    %397 = vector.load %arg4[%c3_154, %c0_155, %c0_156, %c0_157] : memref<6x12x32x8xbf16, #tpu.memory_space<vmem>>, vector<1x12x32x8xbf16>
    %398 = vector.shape_cast %397 : vector<1x12x32x8xbf16> to vector<12x32x8xbf16>
    %cst_158 = arith.constant dense<0.000000e+00> : vector<12x6x8xf32>
    %399 = tpu.matmul %396, %398, %cst_158 {dimension_numbers = #tpu.dot_dimension_numbers<[2], [1], [1], [2], [0, 0, 0, 1, 1, 2], [0], [0]>} : vector<12x6x32xbf16>, vector<12x32x8xbf16>, vector<12x6x8xf32> -> vector<12x6x8xf32>
    %c3_159 = arith.constant 3 : index
    %c0_160 = arith.constant 0 : index
    %c0_161 = arith.constant 0 : index
    %c0_162 = arith.constant 0 : index
    %400 = vector.load %arg5[%c3_159, %c0_160, %c0_161, %c0_162] : memref<6x12x6x8xf32, #tpu.memory_space<vmem>>, vector<1x12x6x8xf32>
    %401 = vector.shape_cast %400 : vector<1x12x6x8xf32> to vector<12x6x8xf32>
    %402 = arith.addf %399, %401 : vector<12x6x8xf32>
    %403 = vector.extract_strided_slice %402 {offsets = [0, 0, 0], sizes = [4, 6, 8], strides = [1, 1, 1]} : vector<12x6x8xf32> to vector<4x6x8xf32>
    %404 = arith.truncf %403 : vector<4x6x8xf32> to vector<4x6x8xbf16>
    %405 = vector.extract_strided_slice %402 {offsets = [4, 0, 0], sizes = [4, 6, 8], strides = [1, 1, 1]} : vector<12x6x8xf32> to vector<4x6x8xf32>
    %406 = arith.truncf %405 : vector<4x6x8xf32> to vector<4x6x8xbf16>
    %407 = vector.extract_strided_slice %402 {offsets = [8, 0, 0], sizes = [4, 6, 8], strides = [1, 1, 1]} : vector<12x6x8xf32> to vector<4x6x8xf32>
    %408 = arith.truncf %407 : vector<4x6x8xf32> to vector<4x6x8xbf16>
    %cst_163 = arith.constant dense<0.000000e+00> : vector<4x6x6xf32>
    %409 = tpu.matmul %404, %406, %cst_163 {dimension_numbers = #tpu.dot_dimension_numbers<[2], [2], [1], [1], [0, 0, 0, 1, 1, 1], [0], [0]>} : vector<4x6x8xbf16>, vector<4x6x8xbf16>, vector<4x6x6xf32> -> vector<4x6x6xf32>
    %410 = vector.shape_cast %6 : vector<6x6xf32> to vector<1x6x6xf32>
    %411 = vector.broadcast %410 : vector<1x6x6xf32> to vector<4x6x6xf32>
    %412 = arith.addf %409, %411 : vector<4x6x6xf32>
    %cst_164 = arith.constant dense<0xFF800000> : vector<4x6xf32>
    %413 = vector.multi_reduction <maximumf>, %412, %cst_164 [2] : vector<4x6x6xf32> to vector<4x6xf32>
    %414 = vector.shape_cast %413 : vector<4x6xf32> to vector<4x6x1xf32>
    %415 = vector.broadcast %414 : vector<4x6x1xf32> to vector<4x6x6xf32>
    %416 = arith.subf %412, %415 : vector<4x6x6xf32>
    %417 = math.exp %416 : vector<4x6x6xf32>
    %cst_165 = arith.constant dense<0.000000e+00> : vector<4x6xf32>
    %418 = vector.multi_reduction <add>, %417, %cst_165 [2] : vector<4x6x6xf32> to vector<4x6xf32>
    %419 = vector.shape_cast %418 : vector<4x6xf32> to vector<4x6x1xf32>
    %420 = tpu.reciprocal %419 {approx = true} : vector<4x6x1xf32> -> vector<4x6x1xf32>
    %421 = vector.broadcast %420 : vector<4x6x1xf32> to vector<4x6x6xf32>
    %422 = arith.mulf %417, %421 : vector<4x6x6xf32>
    %423 = arith.truncf %422 : vector<4x6x6xf32> to vector<4x6x6xbf16>
    %cst_166 = arith.constant dense<0.000000e+00> : vector<4x6x8xf32>
    %424 = tpu.matmul %423, %408, %cst_166 {dimension_numbers = #tpu.dot_dimension_numbers<[2], [1], [1], [2], [0, 0, 0, 1, 1, 2], [0], [0]>} : vector<4x6x6xbf16>, vector<4x6x8xbf16>, vector<4x6x8xf32> -> vector<4x6x8xf32>
    %425 = arith.truncf %424 : vector<4x6x8xf32> to vector<4x6x8xbf16>
    %c3_167 = arith.constant 3 : index
    %c0_168 = arith.constant 0 : index
    %c0_169 = arith.constant 0 : index
    %c0_170 = arith.constant 0 : index
    %426 = vector.load %arg6[%c3_167, %c0_168, %c0_169, %c0_170] : memref<6x4x8x32xbf16, #tpu.memory_space<vmem>>, vector<1x4x8x32xbf16>
    %427 = vector.shape_cast %426 : vector<1x4x8x32xbf16> to vector<4x8x32xbf16>
    %cst_171 = arith.constant dense<0.000000e+00> : vector<4x6x32xf32>
    %428 = tpu.matmul %425, %427, %cst_171 {dimension_numbers = #tpu.dot_dimension_numbers<[2], [1], [1], [2], [0, 0, 0, 1, 1, 2], [0], [0]>} : vector<4x6x8xbf16>, vector<4x8x32xbf16>, vector<4x6x32xf32> -> vector<4x6x32xf32>
    %cst_172 = arith.constant dense<0.000000e+00> : vector<6x32xf32>
    %429 = vector.multi_reduction <add>, %428, %cst_172 [0] : vector<4x6x32xf32> to vector<6x32xf32>
    %430 = arith.addf %366, %429 : vector<6x32xf32>
    %431 = vector.extract_strided_slice %368 {offsets = [4, 0], sizes = [1, 32], strides = [1, 1]} : vector<6x32xf32> to vector<1x32xf32>
    %432 = vector.broadcast %431 : vector<1x32xf32> to vector<6x32xf32>
    %433 = arith.addf %430, %432 : vector<6x32xf32>
    %434 = vector.extract_strided_slice %368 {offsets = [2, 0], sizes = [1, 32], strides = [1, 1]} : vector<6x32xf32> to vector<1x32xf32>
    %435 = vector.extract_strided_slice %368 {offsets = [3, 0], sizes = [1, 32], strides = [1, 1]} : vector<6x32xf32> to vector<1x32xf32>
    %cst_173 = arith.constant dense<0.000000e+00> : vector<6xf32>
    %436 = vector.multi_reduction <add>, %433, %cst_173 [1] : vector<6x32xf32> to vector<6xf32>
    %437 = vector.shape_cast %436 : vector<6xf32> to vector<6x1xf32>
    %cst_174 = arith.constant 3.200000e+01 : f32
    %438 = vector.broadcast %cst_174 : f32 to vector<6x1xf32>
    %439 = arith.divf %437, %438 : vector<6x1xf32>
    %440 = vector.broadcast %439 : vector<6x1xf32> to vector<6x32xf32>
    %441 = arith.subf %433, %440 : vector<6x32xf32>
    %442 = arith.mulf %441, %441 : vector<6x32xf32>
    %cst_175 = arith.constant dense<0.000000e+00> : vector<6xf32>
    %443 = vector.multi_reduction <add>, %442, %cst_175 [1] : vector<6x32xf32> to vector<6xf32>
    %444 = vector.shape_cast %443 : vector<6xf32> to vector<6x1xf32>
    %cst_176 = arith.constant 3.200000e+01 : f32
    %445 = vector.broadcast %cst_176 : f32 to vector<6x1xf32>
    %446 = arith.divf %444, %445 : vector<6x1xf32>
    %447 = vector.broadcast %439 : vector<6x1xf32> to vector<6x32xf32>
    %448 = arith.subf %433, %447 : vector<6x32xf32>
    %cst_177 = arith.constant 9.99999974E-6 : f32
    %449 = vector.broadcast %cst_177 : f32 to vector<6x1xf32>
    %450 = arith.addf %446, %449 : vector<6x1xf32>
    %451 = math.rsqrt %450 : vector<6x1xf32>
    %452 = vector.broadcast %451 : vector<6x1xf32> to vector<6x32xf32>
    %453 = arith.mulf %448, %452 : vector<6x32xf32>
    %454 = vector.broadcast %434 : vector<1x32xf32> to vector<6x32xf32>
    %455 = arith.mulf %453, %454 : vector<6x32xf32>
    %456 = vector.broadcast %435 : vector<1x32xf32> to vector<6x32xf32>
    %457 = arith.addf %455, %456 : vector<6x32xf32>
    %458 = arith.truncf %457 : vector<6x32xf32> to vector<6x32xbf16>
    %c3_178 = arith.constant 3 : index
    %c0_179 = arith.constant 0 : index
    %c0_180 = arith.constant 0 : index
    %459 = vector.load %arg7[%c3_178, %c0_179, %c0_180] : memref<6x32x128xbf16, #tpu.memory_space<vmem>>, vector<1x32x128xbf16>
    %460 = vector.shape_cast %459 : vector<1x32x128xbf16> to vector<32x128xbf16>
    %cst_181 = arith.constant dense<0.000000e+00> : vector<6x128xf32>
    %461 = tpu.matmul %458, %460, %cst_181 {dimension_numbers = #tpu.dot_dimension_numbers<[1], [0], [0], [1], [0, 0, 1, 1], [], []>} : vector<6x32xbf16>, vector<32x128xbf16>, vector<6x128xf32> -> vector<6x128xf32>
    %c3_182 = arith.constant 3 : index
    %c0_183 = arith.constant 0 : index
    %c0_184 = arith.constant 0 : index
    %462 = vector.load %arg8[%c3_182, %c0_183, %c0_184] : memref<6x1x128xf32, #tpu.memory_space<vmem>>, vector<1x1x128xf32>
    %463 = vector.shape_cast %462 : vector<1x1x128xf32> to vector<1x128xf32>
    %464 = vector.broadcast %463 : vector<1x128xf32> to vector<6x128xf32>
    %465 = arith.addf %461, %464 : vector<6x128xf32>
    %466 = arith.mulf %465, %465 : vector<6x128xf32>
    %467 = arith.mulf %465, %466 : vector<6x128xf32>
    %cst_185 = arith.constant 4.471500e-02 : f32
    %468 = vector.broadcast %cst_185 : f32 to vector<6x128xf32>
    %469 = arith.mulf %468, %467 : vector<6x128xf32>
    %470 = arith.addf %465, %469 : vector<6x128xf32>
    %cst_186 = arith.constant 0.797884583 : f32
    %471 = vector.broadcast %cst_186 : f32 to vector<6x128xf32>
    %472 = arith.mulf %471, %470 : vector<6x128xf32>
    %473 = math.tanh %472 : vector<6x128xf32>
    %cst_187 = arith.constant 1.000000e+00 : f32
    %474 = vector.broadcast %cst_187 : f32 to vector<6x128xf32>
    %475 = arith.addf %474, %473 : vector<6x128xf32>
    %cst_188 = arith.constant 5.000000e-01 : f32
    %476 = vector.broadcast %cst_188 : f32 to vector<6x128xf32>
    %477 = arith.mulf %476, %475 : vector<6x128xf32>
    %478 = arith.mulf %465, %477 : vector<6x128xf32>
    %479 = arith.truncf %478 : vector<6x128xf32> to vector<6x128xbf16>
    %c3_189 = arith.constant 3 : index
    %c0_190 = arith.constant 0 : index
    %c0_191 = arith.constant 0 : index
    %480 = vector.load %arg9[%c3_189, %c0_190, %c0_191] : memref<6x128x32xbf16, #tpu.memory_space<vmem>>, vector<1x128x32xbf16>
    %481 = vector.shape_cast %480 : vector<1x128x32xbf16> to vector<128x32xbf16>
    %cst_192 = arith.constant dense<0.000000e+00> : vector<6x32xf32>
    %482 = tpu.matmul %479, %481, %cst_192 {dimension_numbers = #tpu.dot_dimension_numbers<[1], [0], [0], [1], [0, 0, 1, 1], [], []>} : vector<6x128xbf16>, vector<128x32xbf16>, vector<6x32xf32> -> vector<6x32xf32>
    %483 = arith.addf %433, %482 : vector<6x32xf32>
    %484 = vector.extract_strided_slice %368 {offsets = [5, 0], sizes = [1, 32], strides = [1, 1]} : vector<6x32xf32> to vector<1x32xf32>
    %485 = vector.broadcast %484 : vector<1x32xf32> to vector<6x32xf32>
    %486 = arith.addf %483, %485 : vector<6x32xf32>
    %c4 = arith.constant 4 : index
    %c0_193 = arith.constant 0 : index
    %c0_194 = arith.constant 0 : index
    %487 = vector.load %arg10[%c4, %c0_193, %c0_194] : memref<6x6x32xf32, #tpu.memory_space<vmem>>, vector<1x6x32xf32>
    %488 = vector.shape_cast %487 : vector<1x6x32xf32> to vector<6x32xf32>
    %489 = vector.extract_strided_slice %488 {offsets = [0, 0], sizes = [1, 32], strides = [1, 1]} : vector<6x32xf32> to vector<1x32xf32>
    %490 = vector.extract_strided_slice %488 {offsets = [1, 0], sizes = [1, 32], strides = [1, 1]} : vector<6x32xf32> to vector<1x32xf32>
    %cst_195 = arith.constant dense<0.000000e+00> : vector<6xf32>
    %491 = vector.multi_reduction <add>, %486, %cst_195 [1] : vector<6x32xf32> to vector<6xf32>
    %492 = vector.shape_cast %491 : vector<6xf32> to vector<6x1xf32>
    %cst_196 = arith.constant 3.200000e+01 : f32
    %493 = vector.broadcast %cst_196 : f32 to vector<6x1xf32>
    %494 = arith.divf %492, %493 : vector<6x1xf32>
    %495 = vector.broadcast %494 : vector<6x1xf32> to vector<6x32xf32>
    %496 = arith.subf %486, %495 : vector<6x32xf32>
    %497 = arith.mulf %496, %496 : vector<6x32xf32>
    %cst_197 = arith.constant dense<0.000000e+00> : vector<6xf32>
    %498 = vector.multi_reduction <add>, %497, %cst_197 [1] : vector<6x32xf32> to vector<6xf32>
    %499 = vector.shape_cast %498 : vector<6xf32> to vector<6x1xf32>
    %cst_198 = arith.constant 3.200000e+01 : f32
    %500 = vector.broadcast %cst_198 : f32 to vector<6x1xf32>
    %501 = arith.divf %499, %500 : vector<6x1xf32>
    %502 = vector.broadcast %494 : vector<6x1xf32> to vector<6x32xf32>
    %503 = arith.subf %486, %502 : vector<6x32xf32>
    %cst_199 = arith.constant 9.99999974E-6 : f32
    %504 = vector.broadcast %cst_199 : f32 to vector<6x1xf32>
    %505 = arith.addf %501, %504 : vector<6x1xf32>
    %506 = math.rsqrt %505 : vector<6x1xf32>
    %507 = vector.broadcast %506 : vector<6x1xf32> to vector<6x32xf32>
    %508 = arith.mulf %503, %507 : vector<6x32xf32>
    %509 = vector.broadcast %489 : vector<1x32xf32> to vector<6x32xf32>
    %510 = arith.mulf %508, %509 : vector<6x32xf32>
    %511 = vector.broadcast %490 : vector<1x32xf32> to vector<6x32xf32>
    %512 = arith.addf %510, %511 : vector<6x32xf32>
    %513 = arith.truncf %512 : vector<6x32xf32> to vector<6x32xbf16>
    %514 = vector.shape_cast %513 : vector<6x32xbf16> to vector<1x6x32xbf16>
    %515 = vector.shape_cast %514 : vector<1x6x32xbf16> to vector<1x6x32xbf16>
    %516 = vector.broadcast %515 : vector<1x6x32xbf16> to vector<12x6x32xbf16>
    %c4_200 = arith.constant 4 : index
    %c0_201 = arith.constant 0 : index
    %c0_202 = arith.constant 0 : index
    %c0_203 = arith.constant 0 : index
    %517 = vector.load %arg4[%c4_200, %c0_201, %c0_202, %c0_203] : memref<6x12x32x8xbf16, #tpu.memory_space<vmem>>, vector<1x12x32x8xbf16>
    %518 = vector.shape_cast %517 : vector<1x12x32x8xbf16> to vector<12x32x8xbf16>
    %cst_204 = arith.constant dense<0.000000e+00> : vector<12x6x8xf32>
    %519 = tpu.matmul %516, %518, %cst_204 {dimension_numbers = #tpu.dot_dimension_numbers<[2], [1], [1], [2], [0, 0, 0, 1, 1, 2], [0], [0]>} : vector<12x6x32xbf16>, vector<12x32x8xbf16>, vector<12x6x8xf32> -> vector<12x6x8xf32>
    %c4_205 = arith.constant 4 : index
    %c0_206 = arith.constant 0 : index
    %c0_207 = arith.constant 0 : index
    %c0_208 = arith.constant 0 : index
    %520 = vector.load %arg5[%c4_205, %c0_206, %c0_207, %c0_208] : memref<6x12x6x8xf32, #tpu.memory_space<vmem>>, vector<1x12x6x8xf32>
    %521 = vector.shape_cast %520 : vector<1x12x6x8xf32> to vector<12x6x8xf32>
    %522 = arith.addf %519, %521 : vector<12x6x8xf32>
    %523 = vector.extract_strided_slice %522 {offsets = [0, 0, 0], sizes = [4, 6, 8], strides = [1, 1, 1]} : vector<12x6x8xf32> to vector<4x6x8xf32>
    %524 = arith.truncf %523 : vector<4x6x8xf32> to vector<4x6x8xbf16>
    %525 = vector.extract_strided_slice %522 {offsets = [4, 0, 0], sizes = [4, 6, 8], strides = [1, 1, 1]} : vector<12x6x8xf32> to vector<4x6x8xf32>
    %526 = arith.truncf %525 : vector<4x6x8xf32> to vector<4x6x8xbf16>
    %527 = vector.extract_strided_slice %522 {offsets = [8, 0, 0], sizes = [4, 6, 8], strides = [1, 1, 1]} : vector<12x6x8xf32> to vector<4x6x8xf32>
    %528 = arith.truncf %527 : vector<4x6x8xf32> to vector<4x6x8xbf16>
    %cst_209 = arith.constant dense<0.000000e+00> : vector<4x6x6xf32>
    %529 = tpu.matmul %524, %526, %cst_209 {dimension_numbers = #tpu.dot_dimension_numbers<[2], [2], [1], [1], [0, 0, 0, 1, 1, 1], [0], [0]>} : vector<4x6x8xbf16>, vector<4x6x8xbf16>, vector<4x6x6xf32> -> vector<4x6x6xf32>
    %530 = vector.shape_cast %6 : vector<6x6xf32> to vector<1x6x6xf32>
    %531 = vector.broadcast %530 : vector<1x6x6xf32> to vector<4x6x6xf32>
    %532 = arith.addf %529, %531 : vector<4x6x6xf32>
    %cst_210 = arith.constant dense<0xFF800000> : vector<4x6xf32>
    %533 = vector.multi_reduction <maximumf>, %532, %cst_210 [2] : vector<4x6x6xf32> to vector<4x6xf32>
    %534 = vector.shape_cast %533 : vector<4x6xf32> to vector<4x6x1xf32>
    %535 = vector.broadcast %534 : vector<4x6x1xf32> to vector<4x6x6xf32>
    %536 = arith.subf %532, %535 : vector<4x6x6xf32>
    %537 = math.exp %536 : vector<4x6x6xf32>
    %cst_211 = arith.constant dense<0.000000e+00> : vector<4x6xf32>
    %538 = vector.multi_reduction <add>, %537, %cst_211 [2] : vector<4x6x6xf32> to vector<4x6xf32>
    %539 = vector.shape_cast %538 : vector<4x6xf32> to vector<4x6x1xf32>
    %540 = tpu.reciprocal %539 {approx = true} : vector<4x6x1xf32> -> vector<4x6x1xf32>
    %541 = vector.broadcast %540 : vector<4x6x1xf32> to vector<4x6x6xf32>
    %542 = arith.mulf %537, %541 : vector<4x6x6xf32>
    %543 = arith.truncf %542 : vector<4x6x6xf32> to vector<4x6x6xbf16>
    %cst_212 = arith.constant dense<0.000000e+00> : vector<4x6x8xf32>
    %544 = tpu.matmul %543, %528, %cst_212 {dimension_numbers = #tpu.dot_dimension_numbers<[2], [1], [1], [2], [0, 0, 0, 1, 1, 2], [0], [0]>} : vector<4x6x6xbf16>, vector<4x6x8xbf16>, vector<4x6x8xf32> -> vector<4x6x8xf32>
    %545 = arith.truncf %544 : vector<4x6x8xf32> to vector<4x6x8xbf16>
    %c4_213 = arith.constant 4 : index
    %c0_214 = arith.constant 0 : index
    %c0_215 = arith.constant 0 : index
    %c0_216 = arith.constant 0 : index
    %546 = vector.load %arg6[%c4_213, %c0_214, %c0_215, %c0_216] : memref<6x4x8x32xbf16, #tpu.memory_space<vmem>>, vector<1x4x8x32xbf16>
    %547 = vector.shape_cast %546 : vector<1x4x8x32xbf16> to vector<4x8x32xbf16>
    %cst_217 = arith.constant dense<0.000000e+00> : vector<4x6x32xf32>
    %548 = tpu.matmul %545, %547, %cst_217 {dimension_numbers = #tpu.dot_dimension_numbers<[2], [1], [1], [2], [0, 0, 0, 1, 1, 2], [0], [0]>} : vector<4x6x8xbf16>, vector<4x8x32xbf16>, vector<4x6x32xf32> -> vector<4x6x32xf32>
    %cst_218 = arith.constant dense<0.000000e+00> : vector<6x32xf32>
    %549 = vector.multi_reduction <add>, %548, %cst_218 [0] : vector<4x6x32xf32> to vector<6x32xf32>
    %550 = arith.addf %486, %549 : vector<6x32xf32>
    %551 = vector.extract_strided_slice %488 {offsets = [4, 0], sizes = [1, 32], strides = [1, 1]} : vector<6x32xf32> to vector<1x32xf32>
    %552 = vector.broadcast %551 : vector<1x32xf32> to vector<6x32xf32>
    %553 = arith.addf %550, %552 : vector<6x32xf32>
    %554 = vector.extract_strided_slice %488 {offsets = [2, 0], sizes = [1, 32], strides = [1, 1]} : vector<6x32xf32> to vector<1x32xf32>
    %555 = vector.extract_strided_slice %488 {offsets = [3, 0], sizes = [1, 32], strides = [1, 1]} : vector<6x32xf32> to vector<1x32xf32>
    %cst_219 = arith.constant dense<0.000000e+00> : vector<6xf32>
    %556 = vector.multi_reduction <add>, %553, %cst_219 [1] : vector<6x32xf32> to vector<6xf32>
    %557 = vector.shape_cast %556 : vector<6xf32> to vector<6x1xf32>
    %cst_220 = arith.constant 3.200000e+01 : f32
    %558 = vector.broadcast %cst_220 : f32 to vector<6x1xf32>
    %559 = arith.divf %557, %558 : vector<6x1xf32>
    %560 = vector.broadcast %559 : vector<6x1xf32> to vector<6x32xf32>
    %561 = arith.subf %553, %560 : vector<6x32xf32>
    %562 = arith.mulf %561, %561 : vector<6x32xf32>
    %cst_221 = arith.constant dense<0.000000e+00> : vector<6xf32>
    %563 = vector.multi_reduction <add>, %562, %cst_221 [1] : vector<6x32xf32> to vector<6xf32>
    %564 = vector.shape_cast %563 : vector<6xf32> to vector<6x1xf32>
    %cst_222 = arith.constant 3.200000e+01 : f32
    %565 = vector.broadcast %cst_222 : f32 to vector<6x1xf32>
    %566 = arith.divf %564, %565 : vector<6x1xf32>
    %567 = vector.broadcast %559 : vector<6x1xf32> to vector<6x32xf32>
    %568 = arith.subf %553, %567 : vector<6x32xf32>
    %cst_223 = arith.constant 9.99999974E-6 : f32
    %569 = vector.broadcast %cst_223 : f32 to vector<6x1xf32>
    %570 = arith.addf %566, %569 : vector<6x1xf32>
    %571 = math.rsqrt %570 : vector<6x1xf32>
    %572 = vector.broadcast %571 : vector<6x1xf32> to vector<6x32xf32>
    %573 = arith.mulf %568, %572 : vector<6x32xf32>
    %574 = vector.broadcast %554 : vector<1x32xf32> to vector<6x32xf32>
    %575 = arith.mulf %573, %574 : vector<6x32xf32>
    %576 = vector.broadcast %555 : vector<1x32xf32> to vector<6x32xf32>
    %577 = arith.addf %575, %576 : vector<6x32xf32>
    %578 = arith.truncf %577 : vector<6x32xf32> to vector<6x32xbf16>
    %c4_224 = arith.constant 4 : index
    %c0_225 = arith.constant 0 : index
    %c0_226 = arith.constant 0 : index
    %579 = vector.load %arg7[%c4_224, %c0_225, %c0_226] : memref<6x32x128xbf16, #tpu.memory_space<vmem>>, vector<1x32x128xbf16>
    %580 = vector.shape_cast %579 : vector<1x32x128xbf16> to vector<32x128xbf16>
    %cst_227 = arith.constant dense<0.000000e+00> : vector<6x128xf32>
    %581 = tpu.matmul %578, %580, %cst_227 {dimension_numbers = #tpu.dot_dimension_numbers<[1], [0], [0], [1], [0, 0, 1, 1], [], []>} : vector<6x32xbf16>, vector<32x128xbf16>, vector<6x128xf32> -> vector<6x128xf32>
    %c4_228 = arith.constant 4 : index
    %c0_229 = arith.constant 0 : index
    %c0_230 = arith.constant 0 : index
    %582 = vector.load %arg8[%c4_228, %c0_229, %c0_230] : memref<6x1x128xf32, #tpu.memory_space<vmem>>, vector<1x1x128xf32>
    %583 = vector.shape_cast %582 : vector<1x1x128xf32> to vector<1x128xf32>
    %584 = vector.broadcast %583 : vector<1x128xf32> to vector<6x128xf32>
    %585 = arith.addf %581, %584 : vector<6x128xf32>
    %586 = arith.mulf %585, %585 : vector<6x128xf32>
    %587 = arith.mulf %585, %586 : vector<6x128xf32>
    %cst_231 = arith.constant 4.471500e-02 : f32
    %588 = vector.broadcast %cst_231 : f32 to vector<6x128xf32>
    %589 = arith.mulf %588, %587 : vector<6x128xf32>
    %590 = arith.addf %585, %589 : vector<6x128xf32>
    %cst_232 = arith.constant 0.797884583 : f32
    %591 = vector.broadcast %cst_232 : f32 to vector<6x128xf32>
    %592 = arith.mulf %591, %590 : vector<6x128xf32>
    %593 = math.tanh %592 : vector<6x128xf32>
    %cst_233 = arith.constant 1.000000e+00 : f32
    %594 = vector.broadcast %cst_233 : f32 to vector<6x128xf32>
    %595 = arith.addf %594, %593 : vector<6x128xf32>
    %cst_234 = arith.constant 5.000000e-01 : f32
    %596 = vector.broadcast %cst_234 : f32 to vector<6x128xf32>
    %597 = arith.mulf %596, %595 : vector<6x128xf32>
    %598 = arith.mulf %585, %597 : vector<6x128xf32>
    %599 = arith.truncf %598 : vector<6x128xf32> to vector<6x128xbf16>
    %c4_235 = arith.constant 4 : index
    %c0_236 = arith.constant 0 : index
    %c0_237 = arith.constant 0 : index
    %600 = vector.load %arg9[%c4_235, %c0_236, %c0_237] : memref<6x128x32xbf16, #tpu.memory_space<vmem>>, vector<1x128x32xbf16>
    %601 = vector.shape_cast %600 : vector<1x128x32xbf16> to vector<128x32xbf16>
    %cst_238 = arith.constant dense<0.000000e+00> : vector<6x32xf32>
    %602 = tpu.matmul %599, %601, %cst_238 {dimension_numbers = #tpu.dot_dimension_numbers<[1], [0], [0], [1], [0, 0, 1, 1], [], []>} : vector<6x128xbf16>, vector<128x32xbf16>, vector<6x32xf32> -> vector<6x32xf32>
    %603 = arith.addf %553, %602 : vector<6x32xf32>
    %604 = vector.extract_strided_slice %488 {offsets = [5, 0], sizes = [1, 32], strides = [1, 1]} : vector<6x32xf32> to vector<1x32xf32>
    %605 = vector.broadcast %604 : vector<1x32xf32> to vector<6x32xf32>
    %606 = arith.addf %603, %605 : vector<6x32xf32>
    %c5 = arith.constant 5 : index
    %c0_239 = arith.constant 0 : index
    %c0_240 = arith.constant 0 : index
    %607 = vector.load %arg10[%c5, %c0_239, %c0_240] : memref<6x6x32xf32, #tpu.memory_space<vmem>>, vector<1x6x32xf32>
    %608 = vector.shape_cast %607 : vector<1x6x32xf32> to vector<6x32xf32>
    %609 = vector.extract_strided_slice %608 {offsets = [0, 0], sizes = [1, 32], strides = [1, 1]} : vector<6x32xf32> to vector<1x32xf32>
    %610 = vector.extract_strided_slice %608 {offsets = [1, 0], sizes = [1, 32], strides = [1, 1]} : vector<6x32xf32> to vector<1x32xf32>
    %cst_241 = arith.constant dense<0.000000e+00> : vector<6xf32>
    %611 = vector.multi_reduction <add>, %606, %cst_241 [1] : vector<6x32xf32> to vector<6xf32>
    %612 = vector.shape_cast %611 : vector<6xf32> to vector<6x1xf32>
    %cst_242 = arith.constant 3.200000e+01 : f32
    %613 = vector.broadcast %cst_242 : f32 to vector<6x1xf32>
    %614 = arith.divf %612, %613 : vector<6x1xf32>
    %615 = vector.broadcast %614 : vector<6x1xf32> to vector<6x32xf32>
    %616 = arith.subf %606, %615 : vector<6x32xf32>
    %617 = arith.mulf %616, %616 : vector<6x32xf32>
    %cst_243 = arith.constant dense<0.000000e+00> : vector<6xf32>
    %618 = vector.multi_reduction <add>, %617, %cst_243 [1] : vector<6x32xf32> to vector<6xf32>
    %619 = vector.shape_cast %618 : vector<6xf32> to vector<6x1xf32>
    %cst_244 = arith.constant 3.200000e+01 : f32
    %620 = vector.broadcast %cst_244 : f32 to vector<6x1xf32>
    %621 = arith.divf %619, %620 : vector<6x1xf32>
    %622 = vector.broadcast %614 : vector<6x1xf32> to vector<6x32xf32>
    %623 = arith.subf %606, %622 : vector<6x32xf32>
    %cst_245 = arith.constant 9.99999974E-6 : f32
    %624 = vector.broadcast %cst_245 : f32 to vector<6x1xf32>
    %625 = arith.addf %621, %624 : vector<6x1xf32>
    %626 = math.rsqrt %625 : vector<6x1xf32>
    %627 = vector.broadcast %626 : vector<6x1xf32> to vector<6x32xf32>
    %628 = arith.mulf %623, %627 : vector<6x32xf32>
    %629 = vector.broadcast %609 : vector<1x32xf32> to vector<6x32xf32>
    %630 = arith.mulf %628, %629 : vector<6x32xf32>
    %631 = vector.broadcast %610 : vector<1x32xf32> to vector<6x32xf32>
    %632 = arith.addf %630, %631 : vector<6x32xf32>
    %633 = arith.truncf %632 : vector<6x32xf32> to vector<6x32xbf16>
    %634 = vector.shape_cast %633 : vector<6x32xbf16> to vector<1x6x32xbf16>
    %635 = vector.shape_cast %634 : vector<1x6x32xbf16> to vector<1x6x32xbf16>
    %636 = vector.broadcast %635 : vector<1x6x32xbf16> to vector<12x6x32xbf16>
    %c5_246 = arith.constant 5 : index
    %c0_247 = arith.constant 0 : index
    %c0_248 = arith.constant 0 : index
    %c0_249 = arith.constant 0 : index
    %637 = vector.load %arg4[%c5_246, %c0_247, %c0_248, %c0_249] : memref<6x12x32x8xbf16, #tpu.memory_space<vmem>>, vector<1x12x32x8xbf16>
    %638 = vector.shape_cast %637 : vector<1x12x32x8xbf16> to vector<12x32x8xbf16>
    %cst_250 = arith.constant dense<0.000000e+00> : vector<12x6x8xf32>
    %639 = tpu.matmul %636, %638, %cst_250 {dimension_numbers = #tpu.dot_dimension_numbers<[2], [1], [1], [2], [0, 0, 0, 1, 1, 2], [0], [0]>} : vector<12x6x32xbf16>, vector<12x32x8xbf16>, vector<12x6x8xf32> -> vector<12x6x8xf32>
    %c5_251 = arith.constant 5 : index
    %c0_252 = arith.constant 0 : index
    %c0_253 = arith.constant 0 : index
    %c0_254 = arith.constant 0 : index
    %640 = vector.load %arg5[%c5_251, %c0_252, %c0_253, %c0_254] : memref<6x12x6x8xf32, #tpu.memory_space<vmem>>, vector<1x12x6x8xf32>
    %641 = vector.shape_cast %640 : vector<1x12x6x8xf32> to vector<12x6x8xf32>
    %642 = arith.addf %639, %641 : vector<12x6x8xf32>
    %643 = vector.extract_strided_slice %642 {offsets = [0, 0, 0], sizes = [4, 6, 8], strides = [1, 1, 1]} : vector<12x6x8xf32> to vector<4x6x8xf32>
    %644 = arith.truncf %643 : vector<4x6x8xf32> to vector<4x6x8xbf16>
    %645 = vector.extract_strided_slice %642 {offsets = [4, 0, 0], sizes = [4, 6, 8], strides = [1, 1, 1]} : vector<12x6x8xf32> to vector<4x6x8xf32>
    %646 = arith.truncf %645 : vector<4x6x8xf32> to vector<4x6x8xbf16>
    %647 = vector.extract_strided_slice %642 {offsets = [8, 0, 0], sizes = [4, 6, 8], strides = [1, 1, 1]} : vector<12x6x8xf32> to vector<4x6x8xf32>
    %648 = arith.truncf %647 : vector<4x6x8xf32> to vector<4x6x8xbf16>
    %cst_255 = arith.constant dense<0.000000e+00> : vector<4x6x6xf32>
    %649 = tpu.matmul %644, %646, %cst_255 {dimension_numbers = #tpu.dot_dimension_numbers<[2], [2], [1], [1], [0, 0, 0, 1, 1, 1], [0], [0]>} : vector<4x6x8xbf16>, vector<4x6x8xbf16>, vector<4x6x6xf32> -> vector<4x6x6xf32>
    %650 = vector.shape_cast %6 : vector<6x6xf32> to vector<1x6x6xf32>
    %651 = vector.broadcast %650 : vector<1x6x6xf32> to vector<4x6x6xf32>
    %652 = arith.addf %649, %651 : vector<4x6x6xf32>
    %cst_256 = arith.constant dense<0xFF800000> : vector<4x6xf32>
    %653 = vector.multi_reduction <maximumf>, %652, %cst_256 [2] : vector<4x6x6xf32> to vector<4x6xf32>
    %654 = vector.shape_cast %653 : vector<4x6xf32> to vector<4x6x1xf32>
    %655 = vector.broadcast %654 : vector<4x6x1xf32> to vector<4x6x6xf32>
    %656 = arith.subf %652, %655 : vector<4x6x6xf32>
    %657 = math.exp %656 : vector<4x6x6xf32>
    %cst_257 = arith.constant dense<0.000000e+00> : vector<4x6xf32>
    %658 = vector.multi_reduction <add>, %657, %cst_257 [2] : vector<4x6x6xf32> to vector<4x6xf32>
    %659 = vector.shape_cast %658 : vector<4x6xf32> to vector<4x6x1xf32>
    %660 = tpu.reciprocal %659 {approx = true} : vector<4x6x1xf32> -> vector<4x6x1xf32>
    %661 = vector.broadcast %660 : vector<4x6x1xf32> to vector<4x6x6xf32>
    %662 = arith.mulf %657, %661 : vector<4x6x6xf32>
    %663 = arith.truncf %662 : vector<4x6x6xf32> to vector<4x6x6xbf16>
    %cst_258 = arith.constant dense<0.000000e+00> : vector<4x6x8xf32>
    %664 = tpu.matmul %663, %648, %cst_258 {dimension_numbers = #tpu.dot_dimension_numbers<[2], [1], [1], [2], [0, 0, 0, 1, 1, 2], [0], [0]>} : vector<4x6x6xbf16>, vector<4x6x8xbf16>, vector<4x6x8xf32> -> vector<4x6x8xf32>
    %665 = arith.truncf %664 : vector<4x6x8xf32> to vector<4x6x8xbf16>
    %c5_259 = arith.constant 5 : index
    %c0_260 = arith.constant 0 : index
    %c0_261 = arith.constant 0 : index
    %c0_262 = arith.constant 0 : index
    %666 = vector.load %arg6[%c5_259, %c0_260, %c0_261, %c0_262] : memref<6x4x8x32xbf16, #tpu.memory_space<vmem>>, vector<1x4x8x32xbf16>
    %667 = vector.shape_cast %666 : vector<1x4x8x32xbf16> to vector<4x8x32xbf16>
    %cst_263 = arith.constant dense<0.000000e+00> : vector<4x6x32xf32>
    %668 = tpu.matmul %665, %667, %cst_263 {dimension_numbers = #tpu.dot_dimension_numbers<[2], [1], [1], [2], [0, 0, 0, 1, 1, 2], [0], [0]>} : vector<4x6x8xbf16>, vector<4x8x32xbf16>, vector<4x6x32xf32> -> vector<4x6x32xf32>
    %cst_264 = arith.constant dense<0.000000e+00> : vector<6x32xf32>
    %669 = vector.multi_reduction <add>, %668, %cst_264 [0] : vector<4x6x32xf32> to vector<6x32xf32>
    %670 = arith.addf %606, %669 : vector<6x32xf32>
    %671 = vector.extract_strided_slice %608 {offsets = [4, 0], sizes = [1, 32], strides = [1, 1]} : vector<6x32xf32> to vector<1x32xf32>
    %672 = vector.broadcast %671 : vector<1x32xf32> to vector<6x32xf32>
    %673 = arith.addf %670, %672 : vector<6x32xf32>
    %674 = vector.extract_strided_slice %608 {offsets = [2, 0], sizes = [1, 32], strides = [1, 1]} : vector<6x32xf32> to vector<1x32xf32>
    %675 = vector.extract_strided_slice %608 {offsets = [3, 0], sizes = [1, 32], strides = [1, 1]} : vector<6x32xf32> to vector<1x32xf32>
    %cst_265 = arith.constant dense<0.000000e+00> : vector<6xf32>
    %676 = vector.multi_reduction <add>, %673, %cst_265 [1] : vector<6x32xf32> to vector<6xf32>
    %677 = vector.shape_cast %676 : vector<6xf32> to vector<6x1xf32>
    %cst_266 = arith.constant 3.200000e+01 : f32
    %678 = vector.broadcast %cst_266 : f32 to vector<6x1xf32>
    %679 = arith.divf %677, %678 : vector<6x1xf32>
    %680 = vector.broadcast %679 : vector<6x1xf32> to vector<6x32xf32>
    %681 = arith.subf %673, %680 : vector<6x32xf32>
    %682 = arith.mulf %681, %681 : vector<6x32xf32>
    %cst_267 = arith.constant dense<0.000000e+00> : vector<6xf32>
    %683 = vector.multi_reduction <add>, %682, %cst_267 [1] : vector<6x32xf32> to vector<6xf32>
    %684 = vector.shape_cast %683 : vector<6xf32> to vector<6x1xf32>
    %cst_268 = arith.constant 3.200000e+01 : f32
    %685 = vector.broadcast %cst_268 : f32 to vector<6x1xf32>
    %686 = arith.divf %684, %685 : vector<6x1xf32>
    %687 = vector.broadcast %679 : vector<6x1xf32> to vector<6x32xf32>
    %688 = arith.subf %673, %687 : vector<6x32xf32>
    %cst_269 = arith.constant 9.99999974E-6 : f32
    %689 = vector.broadcast %cst_269 : f32 to vector<6x1xf32>
    %690 = arith.addf %686, %689 : vector<6x1xf32>
    %691 = math.rsqrt %690 : vector<6x1xf32>
    %692 = vector.broadcast %691 : vector<6x1xf32> to vector<6x32xf32>
    %693 = arith.mulf %688, %692 : vector<6x32xf32>
    %694 = vector.broadcast %674 : vector<1x32xf32> to vector<6x32xf32>
    %695 = arith.mulf %693, %694 : vector<6x32xf32>
    %696 = vector.broadcast %675 : vector<1x32xf32> to vector<6x32xf32>
    %697 = arith.addf %695, %696 : vector<6x32xf32>
    %698 = arith.truncf %697 : vector<6x32xf32> to vector<6x32xbf16>
    %c5_270 = arith.constant 5 : index
    %c0_271 = arith.constant 0 : index
    %c0_272 = arith.constant 0 : index
    %699 = vector.load %arg7[%c5_270, %c0_271, %c0_272] : memref<6x32x128xbf16, #tpu.memory_space<vmem>>, vector<1x32x128xbf16>
    %700 = vector.shape_cast %699 : vector<1x32x128xbf16> to vector<32x128xbf16>
    %cst_273 = arith.constant dense<0.000000e+00> : vector<6x128xf32>
    %701 = tpu.matmul %698, %700, %cst_273 {dimension_numbers = #tpu.dot_dimension_numbers<[1], [0], [0], [1], [0, 0, 1, 1], [], []>} : vector<6x32xbf16>, vector<32x128xbf16>, vector<6x128xf32> -> vector<6x128xf32>
    %c5_274 = arith.constant 5 : index
    %c0_275 = arith.constant 0 : index
    %c0_276 = arith.constant 0 : index
    %702 = vector.load %arg8[%c5_274, %c0_275, %c0_276] : memref<6x1x128xf32, #tpu.memory_space<vmem>>, vector<1x1x128xf32>
    %703 = vector.shape_cast %702 : vector<1x1x128xf32> to vector<1x128xf32>
    %704 = vector.broadcast %703 : vector<1x128xf32> to vector<6x128xf32>
    %705 = arith.addf %701, %704 : vector<6x128xf32>
    %706 = arith.mulf %705, %705 : vector<6x128xf32>
    %707 = arith.mulf %705, %706 : vector<6x128xf32>
    %cst_277 = arith.constant 4.471500e-02 : f32
    %708 = vector.broadcast %cst_277 : f32 to vector<6x128xf32>
    %709 = arith.mulf %708, %707 : vector<6x128xf32>
    %710 = arith.addf %705, %709 : vector<6x128xf32>
    %cst_278 = arith.constant 0.797884583 : f32
    %711 = vector.broadcast %cst_278 : f32 to vector<6x128xf32>
    %712 = arith.mulf %711, %710 : vector<6x128xf32>
    %713 = math.tanh %712 : vector<6x128xf32>
    %cst_279 = arith.constant 1.000000e+00 : f32
    %714 = vector.broadcast %cst_279 : f32 to vector<6x128xf32>
    %715 = arith.addf %714, %713 : vector<6x128xf32>
    %cst_280 = arith.constant 5.000000e-01 : f32
    %716 = vector.broadcast %cst_280 : f32 to vector<6x128xf32>
    %717 = arith.mulf %716, %715 : vector<6x128xf32>
    %718 = arith.mulf %705, %717 : vector<6x128xf32>
    %719 = arith.truncf %718 : vector<6x128xf32> to vector<6x128xbf16>
    %c5_281 = arith.constant 5 : index
    %c0_282 = arith.constant 0 : index
    %c0_283 = arith.constant 0 : index
    %720 = vector.load %arg9[%c5_281, %c0_282, %c0_283] : memref<6x128x32xbf16, #tpu.memory_space<vmem>>, vector<1x128x32xbf16>
    %721 = vector.shape_cast %720 : vector<1x128x32xbf16> to vector<128x32xbf16>
    %cst_284 = arith.constant dense<0.000000e+00> : vector<6x32xf32>
    %722 = tpu.matmul %719, %721, %cst_284 {dimension_numbers = #tpu.dot_dimension_numbers<[1], [0], [0], [1], [0, 0, 1, 1], [], []>} : vector<6x128xbf16>, vector<128x32xbf16>, vector<6x32xf32> -> vector<6x32xf32>
    %723 = arith.addf %673, %722 : vector<6x32xf32>
    %724 = vector.extract_strided_slice %608 {offsets = [5, 0], sizes = [1, 32], strides = [1, 1]} : vector<6x32xf32> to vector<1x32xf32>
    %725 = vector.broadcast %724 : vector<1x32xf32> to vector<6x32xf32>
    %726 = arith.addf %723, %725 : vector<6x32xf32>
    %c0_285 = arith.constant 0 : index
    %c0_286 = arith.constant 0 : index
    %727 = vector.load %arg11[%c0_285, %c0_286] : memref<15x32xf32, #tpu.memory_space<vmem>>, vector<1x32xf32>
    %c1_287 = arith.constant 1 : index
    %c0_288 = arith.constant 0 : index
    %728 = vector.load %arg11[%c1_287, %c0_288] : memref<15x32xf32, #tpu.memory_space<vmem>>, vector<1x32xf32>
    %cst_289 = arith.constant dense<0.000000e+00> : vector<6xf32>
    %729 = vector.multi_reduction <add>, %726, %cst_289 [1] : vector<6x32xf32> to vector<6xf32>
    %730 = vector.shape_cast %729 : vector<6xf32> to vector<6x1xf32>
    %cst_290 = arith.constant 3.200000e+01 : f32
    %731 = vector.broadcast %cst_290 : f32 to vector<6x1xf32>
    %732 = arith.divf %730, %731 : vector<6x1xf32>
    %733 = vector.broadcast %732 : vector<6x1xf32> to vector<6x32xf32>
    %734 = arith.subf %726, %733 : vector<6x32xf32>
    %735 = arith.mulf %734, %734 : vector<6x32xf32>
    %cst_291 = arith.constant dense<0.000000e+00> : vector<6xf32>
    %736 = vector.multi_reduction <add>, %735, %cst_291 [1] : vector<6x32xf32> to vector<6xf32>
    %737 = vector.shape_cast %736 : vector<6xf32> to vector<6x1xf32>
    %cst_292 = arith.constant 3.200000e+01 : f32
    %738 = vector.broadcast %cst_292 : f32 to vector<6x1xf32>
    %739 = arith.divf %737, %738 : vector<6x1xf32>
    %740 = vector.broadcast %732 : vector<6x1xf32> to vector<6x32xf32>
    %741 = arith.subf %726, %740 : vector<6x32xf32>
    %cst_293 = arith.constant 9.99999974E-6 : f32
    %742 = vector.broadcast %cst_293 : f32 to vector<6x1xf32>
    %743 = arith.addf %739, %742 : vector<6x1xf32>
    %744 = math.rsqrt %743 : vector<6x1xf32>
    %745 = vector.broadcast %744 : vector<6x1xf32> to vector<6x32xf32>
    %746 = arith.mulf %741, %745 : vector<6x32xf32>
    %747 = vector.broadcast %727 : vector<1x32xf32> to vector<6x32xf32>
    %748 = arith.mulf %746, %747 : vector<6x32xf32>
    %749 = vector.broadcast %728 : vector<1x32xf32> to vector<6x32xf32>
    %750 = arith.addf %748, %749 : vector<6x32xf32>
    %751 = arith.mulf %750, %750 : vector<6x32xf32>
    %752 = arith.mulf %750, %751 : vector<6x32xf32>
    %cst_294 = arith.constant 4.471500e-02 : f32
    %753 = vector.broadcast %cst_294 : f32 to vector<6x32xf32>
    %754 = arith.mulf %753, %752 : vector<6x32xf32>
    %755 = arith.addf %750, %754 : vector<6x32xf32>
    %cst_295 = arith.constant 0.797884583 : f32
    %756 = vector.broadcast %cst_295 : f32 to vector<6x32xf32>
    %757 = arith.mulf %756, %755 : vector<6x32xf32>
    %758 = math.tanh %757 : vector<6x32xf32>
    %cst_296 = arith.constant 1.000000e+00 : f32
    %759 = vector.broadcast %cst_296 : f32 to vector<6x32xf32>
    %760 = arith.addf %759, %758 : vector<6x32xf32>
    %cst_297 = arith.constant 5.000000e-01 : f32
    %761 = vector.broadcast %cst_297 : f32 to vector<6x32xf32>
    %762 = arith.mulf %761, %760 : vector<6x32xf32>
    %763 = arith.mulf %750, %762 : vector<6x32xf32>
    %cst_298 = arith.constant dense<0.000000e+00> : vector<6xf32>
    %764 = vector.multi_reduction <add>, %763, %cst_298 [1] : vector<6x32xf32> to vector<6xf32>
    %765 = vector.shape_cast %764 : vector<6xf32> to vector<6x1xf32>
    %c1_299 = arith.constant 1 : index
    %c0_300 = arith.constant 0 : index
    %c0_301 = arith.constant 0 : index
    %766 = vector.load %arg1[%c1_299, %c0_300, %c0_301] : memref<3x6x6xf32, #tpu.memory_space<vmem>>, vector<1x6x6xf32>
    %767 = vector.shape_cast %766 : vector<1x6x6xf32> to vector<6x6xf32>
    %cst_302 = arith.constant dense<0.000000e+00> : vector<6x1xf32>
    %768 = tpu.matmul %767, %765, %cst_302 {dimension_numbers = #tpu.dot_dimension_numbers<[1], [0], [0], [1], [0, 0, 1, 1], [], []>} : vector<6x6xf32>, vector<6x1xf32>, vector<6x1xf32> -> vector<6x1xf32>
    %769 = vector.broadcast %768 : vector<6x1xf32> to vector<6x32xf32>
    %770 = arith.subf %763, %769 : vector<6x32xf32>
    %c1_303 = arith.constant 1 : index
    %c0_304 = arith.constant 0 : index
    %c0_305 = arith.constant 0 : index
    %771 = vector.load %arg1[%c1_303, %c0_304, %c0_305] : memref<3x6x6xf32, #tpu.memory_space<vmem>>, vector<1x6x6xf32>
    %772 = vector.shape_cast %771 : vector<1x6x6xf32> to vector<6x6xf32>
    %773 = arith.mulf %770, %770 : vector<6x32xf32>
    %cst_306 = arith.constant dense<0.000000e+00> : vector<6xf32>
    %774 = vector.multi_reduction <add>, %773, %cst_306 [1] : vector<6x32xf32> to vector<6xf32>
    %775 = vector.shape_cast %774 : vector<6xf32> to vector<6x1xf32>
    %cst_307 = arith.constant dense<0.000000e+00> : vector<6x1xf32>
    %776 = tpu.matmul %772, %775, %cst_307 {dimension_numbers = #tpu.dot_dimension_numbers<[1], [0], [0], [1], [0, 0, 1, 1], [], []>} : vector<6x6xf32>, vector<6x1xf32>, vector<6x1xf32> -> vector<6x1xf32>
    %cst_308 = arith.constant 9.99999974E-6 : f32
    %777 = vector.broadcast %cst_308 : f32 to vector<6x1xf32>
    %778 = arith.addf %776, %777 : vector<6x1xf32>
    %779 = math.rsqrt %778 : vector<6x1xf32>
    %780 = vector.broadcast %779 : vector<6x1xf32> to vector<6x32xf32>
    %781 = arith.mulf %770, %780 : vector<6x32xf32>
    %c2_309 = arith.constant 2 : index
    %c0_310 = arith.constant 0 : index
    %782 = vector.load %arg11[%c2_309, %c0_310] : memref<15x32xf32, #tpu.memory_space<vmem>>, vector<6x32xf32>
    %783 = arith.mulf %781, %782 : vector<6x32xf32>
    %c8 = arith.constant 8 : index
    %c0_311 = arith.constant 0 : index
    %784 = vector.load %arg11[%c8, %c0_311] : memref<15x32xf32, #tpu.memory_space<vmem>>, vector<6x32xf32>
    %785 = arith.addf %783, %784 : vector<6x32xf32>
    %786 = arith.truncf %785 : vector<6x32xf32> to vector<6x32xbf16>
    %c0_312 = arith.constant 0 : index
    %c0_313 = arith.constant 0 : index
    %787 = vector.load %arg12[%c0_312, %c0_313] : memref<32x9xbf16, #tpu.memory_space<vmem>>, vector<32x9xbf16>
    %cst_314 = arith.constant dense<0.000000e+00> : vector<6x9xf32>
    %788 = tpu.matmul %786, %787, %cst_314 {dimension_numbers = #tpu.dot_dimension_numbers<[1], [0], [0], [1], [0, 0, 1, 1], [], []>} : vector<6x32xbf16>, vector<32x9xbf16>, vector<6x9xf32> -> vector<6x9xf32>
    %c0_315 = arith.constant 0 : index
    %c0_316 = arith.constant 0 : index
    %789 = vector.load %arg13[%c0_315, %c0_316] : memref<6x9xf32, #tpu.memory_space<vmem>>, vector<6x9xf32>
    %790 = arith.mulf %788, %789 : vector<6x9xf32>
    %c0_317 = arith.constant 0 : index
    %c0_318 = arith.constant 0 : index
    %791 = vector.load %arg14[%c0_317, %c0_318] : memref<9x3xf32, #tpu.memory_space<vmem>>, vector<9x3xf32>
    %cst_319 = arith.constant dense<0.000000e+00> : vector<6x3xf32>
    %792 = tpu.matmul %790, %791, %cst_319 {dimension_numbers = #tpu.dot_dimension_numbers<[1], [0], [0], [1], [0, 0, 1, 1], [], []>} : vector<6x9xf32>, vector<9x3xf32>, vector<6x3xf32> -> vector<6x3xf32>
    %c2_320 = arith.constant 2 : index
    %c0_321 = arith.constant 0 : index
    %c0_322 = arith.constant 0 : index
    %793 = vector.load %arg1[%c2_320, %c0_321, %c0_322] : memref<3x6x6xf32, #tpu.memory_space<vmem>>, vector<1x6x6xf32>
    %794 = vector.shape_cast %793 : vector<1x6x6xf32> to vector<6x6xf32>
    %cst_323 = arith.constant dense<0.000000e+00> : vector<6x3xf32>
    %795 = tpu.matmul %794, %792, %cst_323 {dimension_numbers = #tpu.dot_dimension_numbers<[1], [0], [0], [1], [0, 0, 1, 1], [], []>} : vector<6x6xf32>, vector<6x3xf32>, vector<6x3xf32> -> vector<6x3xf32>
    %796 = vector.extract_strided_slice %795 {offsets = [0, 0], sizes = [2, 3], strides = [1, 1]} : vector<6x3xf32> to vector<2x3xf32>
    %c14 = arith.constant 14 : index
    %c0_324 = arith.constant 0 : index
    %797 = vector.load %arg11[%c14, %c0_324] : memref<15x32xf32, #tpu.memory_space<vmem>>, vector<1x3xf32>
    %798 = vector.broadcast %797 : vector<1x3xf32> to vector<2x3xf32>
    %799 = arith.addf %796, %798 : vector<2x3xf32>
    %c0_325 = arith.constant 0 : index
    %c0_326 = arith.constant 0 : index
    %800 = vector.load %arg15[%c0_325, %c0_326] : memref<2x3xf32, #tpu.memory_space<vmem>>, vector<2x3xf32>
    tpu.vector_store %arg15[%c0_325, %c0_326], %799 {strides = array<i32>} : memref<2x3xf32, #tpu.memory_space<vmem>>, vector<2x3xf32>,
    return
  }
}

</mosaic_0001>

<llo_original>
// kernel: forward.1
$region0: #{forward.1}
  #allocation0 [shape = 'u32[]', space=smem, size = 0x4, offset = 0x4, fixed_abs, tag = 'smem constant byte address 0x4 - core index']
  #allocation1 [shape = 'u32[72,128]{1,0:T(1,128)}', space=vmem, size = 0x9000, scoped, tag = 'internal scratch']
  %s0 = inlined_call_operand.vmem [shape: bf16[6,32], index: 0, kind: input, shape index: {}]
  %s1 = inlined_call_operand.vmem [shape: f32[3,6,6], index: 1, kind: input, shape index: {}]
  %s2 = inlined_call_operand.vmem [shape: f32[6,32], index: 2, kind: input, shape index: {}]
  %s3 = inlined_call_operand.vmem [shape: bf16[32,32], index: 3, kind: input, shape index: {}]
  %s4 = inlined_call_operand.vmem [shape: bf16[6,12,32,8], index: 4, kind: input, shape index: {}]
  %s5 = inlined_call_operand.vmem [shape: f32[6,12,6,8], index: 5, kind: input, shape index: {}]
  %s6 = inlined_call_operand.vmem [shape: bf16[6,4,8,32], index: 6, kind: input, shape index: {}]
  %s7 = inlined_call_operand.vmem [shape: bf16[6,32,128], index: 7, kind: input, shape index: {}]
  %s8 = inlined_call_operand.vmem [shape: f32[6,1,128], index: 8, kind: input, shape index: {}]
  %s9 = inlined_call_operand.vmem [shape: bf16[6,128,32], index: 9, kind: input, shape index: {}]
  %s10 = inlined_call_operand.vmem [shape: f32[6,6,32], index: 10, kind: input, shape index: {}]
  %s11 = inlined_call_operand.vmem [shape: f32[15,32], index: 11, kind: input, shape index: {}]
  %s12 = inlined_call_operand.vmem [shape: bf16[32,9], index: 12, kind: input, shape index: {}]
  %s13 = inlined_call_operand.vmem [shape: f32[6,9], index: 13, kind: input, shape index: {}]
  %s14 = inlined_call_operand.vmem [shape: f32[9,3], index: 14, kind: input, shape index: {}]
  %s15 = inlined_call_operand.hbm [shape: f32[2,3], index: 15, kind: output, shape index: {}]
  %s16 = sld [smem:[#allocation0]]
  $region70: #{forward.1} parent=0
    _
  %s18 = ssub.s32 1, %s16
  %s19 = scalar_select 0, %s18, %s16
  $region1: #{forward.1} parent=0
    #allocation2 [shape = 'u8[1024]{0}', space=vmem, size = 0x400, scoped, tag = 'output window, operand 0, single buffered']
    #allocation3 [shape = 's32[1]{0}', space=sflag, size = 0x4, scoped, tag = 'scoped memory for forward.1']
    %20 = vsyncpa [#allocation3], 0
    // Predicated region
    $region2: #{forward.1} parent=1 // pred_check
      _
    $region3: #{forward.1} parent=1 // pred_check_branch
      %22 = sbr.rel (0) target = $region5
    $region4: #{forward.1} parent=1 // pred_region
      _
    $region5: #{forward.1} parent=1 // pred_fallthru
      _
    // Predicated region
    $region6: #{forward.1} parent=1 // pred_check
      _
    $region7: #{forward.1} parent=1 // pred_check_branch
      %24 = sbr.rel (0) target = $region9
    $region8: #{forward.1} parent=1 // pred_region
      _
    $region9: #{forward.1} parent=1 // pred_fallthru
      _
    // Predicated region
    $region10: #{forward.1} parent=1 // pred_check
      _
    $region11: #{forward.1} parent=1 // pred_check_branch
      %26 = sbr.rel (0) target = $region13
    $region12: #{forward.1} parent=1 // pred_region
      _
    $region13: #{forward.1} parent=1 // pred_fallthru
      _
    // Predicated region
    $region14: #{forward.1} parent=1 // pred_check
      _
    $region15: #{forward.1} parent=1 // pred_check_branch
      %28 = sbr.rel (0) target = $region17
    $region16: #{forward.1} parent=1 // pred_region
      _
    $region17: #{forward.1} parent=1 // pred_fallthru
      _
    // Predicated region
    $region18: #{forward.1} parent=1 // pred_check
      _
    $region19: #{forward.1} parent=1 // pred_check_branch
      %30 = sbr.rel (0) target = $region21
    $region20: #{forward.1} parent=1 // pred_region
      _
    $region21: #{forward.1} parent=1 // pred_fallthru
      _
    // Predicated region
    $region22: #{forward.1} parent=1 // pred_check
      _
    $region23: #{forward.1} parent=1 // pred_check_branch
      %32 = sbr.rel (0) target = $region25
    $region24: #{forward.1} parent=1 // pred_region
      _
    $region25: #{forward.1} parent=1 // pred_fallthru
      _
    // Predicated region
    $region26: #{forward.1} parent=1 // pred_check
      _
    $region27: #{forward.1} parent=1 // pred_check_branch
      %34 = sbr.rel (0) target = $region29
    $region28: #{forward.1} parent=1 // pred_region
      _
    $region29: #{forward.1} parent=1 // pred_fallthru
      _
    // Predicated region
    $region30: #{forward.1} parent=1 // pred_check
      _
    $region31: #{forward.1} parent=1 // pred_check_branch
      %36 = sbr.rel (0) target = $region33
    $region32: #{forward.1} parent=1 // pred_region
      _
    $region33: #{forward.1} parent=1 // pred_fallthru
      _
    // Predicated region
    $region34: #{forward.1} parent=1 // pred_check
      _
    $region35: #{forward.1} parent=1 // pred_check_branch
      %38 = sbr.rel (0) target = $region37
    $region36: #{forward.1} parent=1 // pred_region
      _
    $region37: #{forward.1} parent=1 // pred_fallthru
      _
    // Predicated region
    $region38: #{forward.1} parent=1 // pred_check
      _
    $region39: #{forward.1} parent=1 // pred_check_branch
      %40 = sbr.rel (0) target = $region41
    $region40: #{forward.1} parent=1 // pred_region
      _
    $region41: #{forward.1} parent=1 // pred_fallthru
      _
    // Predicated region
    $region42: #{forward.1} parent=1 // pred_check
      _
    $region43: #{forward.1} parent=1 // pred_check_branch
      %42 = sbr.rel (0) target = $region45
    $region44: #{forward.1} parent=1 // pred_region
      _
    $region45: #{forward.1} parent=1 // pred_fallthru
      _
    // Predicated region
    $region46: #{forward.1} parent=1 // pred_check
      _
    $region47: #{forward.1} parent=1 // pred_check_branch
      %44 = sbr.rel (0) target = $region49
    $region48: #{forward.1} parent=1 // pred_region
      _
    $region49: #{forward.1} parent=1 // pred_fallthru
      _
    // Predicated region
    $region50: #{forward.1} parent=1 // pred_check
      _
    $region51: #{forward.1} parent=1 // pred_check_branch
      %46 = sbr.rel (0) target = $region53
    $region52: #{forward.1} parent=1 // pred_region
      _
    $region53: #{forward.1} parent=1 // pred_fallthru
      _
    // Predicated region
    $region54: #{forward.1} parent=1 // pred_check
      _
    $region55: #{forward.1} parent=1 // pred_check_branch
      %48 = sbr.rel (0) target = $region57
    $region56: #{forward.1} parent=1 // pred_region
      _
    $region57: #{forward.1} parent=1 // pred_fallthru
      _
    // Predicated region
    $region58: #{forward.1} parent=1 // pred_check
      _
    $region59: #{forward.1} parent=1 // pred_check_branch
      %50 = sbr.rel (0) target = $region61
    $region60: #{forward.1} parent=1 // pred_region
      _
    $region61: #{forward.1} parent=1 // pred_fallthru
      _
    %v52 = vld [vmem:[%s0] sm:$0x7]
    %v53 = vld [vmem:[%s3] sm:$0xf]
    %v54 = vld [vmem:[%s3 + $0x4] sm:$0xf]
    %v55 = vld [vmem:[%s3 + $0x8] sm:$0xf]
    %v56 = vld [vmem:[%s3 + $0xc] sm:$0xf]
    %v57 = vld [vmem:[%s2] sm:$0x3f]
    %v62 = vunpack.c.l.b16 %v53
    %v63 = vunpack.c.l.b16 %v54
    %v64 = vunpack.c.l.b16 %v55
    %v65 = vunpack.c.l.b16 %v56
    %v66 = vpack.c.b16 %v63, %v62
    %v67 = vpack.c.b16 %v65, %v64
    %vm70 = vcmask 261120
    %v72 = vsel %vm70, %v52, 0
    %74 = vmatpush.bf16.msra.mxu0 0
    %75 = vmatpush.bf16.msra.mxu0 0
    %76 = vmatpush.bf16.msra.mxu0 0
    %77 = vmatpush.bf16.msra.mxu0 0
    %78 = vmatpush.bf16.msra.mxu0 0
    %79 = vmatpush.bf16.msra.mxu0 0
    %80 = vmatpush.bf16.msra.mxu0 %v67
    %81 = vmatpush.bf16.msra.mxu0 %v66
    %82 = vmatmul.bf16.gmra.mxu0 %v72
    %v83 = vpop.f32.mrf.mxu0
    %v84 = vadd.f32 %v57, %v83
    %v85 = vpop.f32.mrf.mxu0
    %86 = vdwg.mxu0
    %v87 = vld [vmem:[%s1] sm:$0x3f]
    %v88 = vld [vmem:[%s10] sm:$0x3f]
    %vm89 = vcmask 259072
    %v90 = vsel %vm89, %v84, 0.0
    %91 = vadd.xlane.f32.xlu0 %v90
    %v92 = vpop.xlane.xlu0 %91
    %v93 = vrcp.pop 32.0
    %v94 = vmul.f32 32.0, %v93
    %v95 = vsub.f32 1.0, %v94
    %v96 = vmul.f32 %v93, %v95
    %v97 = vadd.f32 %v93, %v96
    %vm98 = vweird.f32 %v93
    %v99 = vsel %vm98, %v93, %v97
    %v100 = vmul.f32 %v92, %v99
    %v101 = vsub.f32 %v84, %v100
    %v102 = vmul.f32 %v101, %v101
    %v103 = vsel %vm89, %v102, 0.0
    %104 = vadd.xlane.f32.xlu0 %v103
    %v105 = vpop.xlane.xlu0 %104
    %v106 = vmul.f32 %v105, %v99
    %v107 = vadd.f32 %v106, 1e-05
    %v108 = vrsqrt.pop %v107
    %v109 = vmul.f32 %v108, %v107
    %v110 = vmul.f32 %v109, %v108
    %v111 = vmul.f32 0.5, %v110
    %v112 = vsub.f32 1.5, %v111
    %v113 = vmul.f32 %v108, %v112
    %vm114 = vweird.f32 %v107
    %vm115 = vweird.f32 %v108
    %vm116 = vmor %vm114, %vm115
    %v117 = vsel %vm116, %v108, %v113
    %v118 = vmul.f32 %v101, %v117
    %v119 = vperm.slane %v88, 0
    %v120 = vmul.f32 %v118, %v119
    %v121 = vperm.slane %v88, 1
    %v122 = vadd.f32 %v120, %v121
    %v123 = vpack.c.bf16 %v122, %v122
    %v124 = vld [vmem:[%s4] sm:$0xf]
    %v125 = vld [vmem:[%s4 + $0x4] sm:$0xf]
    %v126 = vld [vmem:[%s4 + $0x8] sm:$0xf]
    %v127 = vld [vmem:[%s4 + $0xc] sm:$0xf]
    %v128 = vld [vmem:[%s4 + $0x10] sm:$0xf]
    %v129 = vld [vmem:[%s4 + $0x14] sm:$0xf]
    %v130 = vld [vmem:[%s4 + $0x18] sm:$0xf]
    %v131 = vld [vmem:[%s4 + $0x1c] sm:$0xf]
    %v132 = vld [vmem:[%s4 + $0x20] sm:$0xf]
    %v133 = vld [vmem:[%s4 + $0x24] sm:$0xf]
    %v134 = vld [vmem:[%s4 + $0x28] sm:$0xf]
    %v135 = vld [vmem:[%s4 + $0x2c] sm:$0xf]
    %v136 = vld [vmem:[%s4 + $0x30] sm:$0xf]
    %v137 = vld [vmem:[%s4 + $0x34] sm:$0xf]
    %v138 = vld [vmem:[%s4 + $0x38] sm:$0xf]
    %v139 = vld [vmem:[%s4 + $0x3c] sm:$0xf]
    %v140 = vld [vmem:[%s4 + $0x40] sm:$0xf]
    %v141 = vld [vmem:[%s4 + $0x44] sm:$0xf]
    %v142 = vld [vmem:[%s4 + $0x48] sm:$0xf]
    %v143 = vld [vmem:[%s4 + $0x4c] sm:$0xf]
    %v144 = vld [vmem:[%s4 + $0x50] sm:$0xf]
    %v145 = vld [vmem:[%s4 + $0x54] sm:$0xf]
    %v146 = vld [vmem:[%s4 + $0x58] sm:$0xf]
    %v147 = vld [vmem:[%s4 + $0x5c] sm:$0xf]
    %v148 = vld [vmem:[%s4 + $0x60] sm:$0xf]
    %v149 = vld [vmem:[%s4 + $0x64] sm:$0xf]
    %v150 = vld [vmem:[%s4 + $0x68] sm:$0xf]
    %v151 = vld [vmem:[%s4 + $0x6c] sm:$0xf]
    %v152 = vld [vmem:[%s4 + $0x70] sm:$0xf]
    %v153 = vld [vmem:[%s4 + $0x74] sm:$0xf]
    %v154 = vld [vmem:[%s4 + $0x78] sm:$0xf]
    %v155 = vld [vmem:[%s4 + $0x7c] sm:$0xf]
    %v156 = vld [vmem:[%s4 + $0x80] sm:$0xf]
    %v157 = vld [vmem:[%s4 + $0x84] sm:$0xf]
    %v158 = vld [vmem:[%s4 + $0x88] sm:$0xf]
    %v159 = vld [vmem:[%s4 + $0x8c] sm:$0xf]
    %v160 = vld [vmem:[%s4 + $0x90] sm:$0xf]
    %v161 = vld [vmem:[%s4 + $0x94] sm:$0xf]
    %v162 = vld [vmem:[%s4 + $0x98] sm:$0xf]
    %v163 = vld [vmem:[%s4 + $0x9c] sm:$0xf]
    %v164 = vld [vmem:[%s4 + $0xa0] sm:$0xf]
    %v165 = vld [vmem:[%s4 + $0xa4] sm:$0xf]
    %v166 = vld [vmem:[%s4 + $0xa8] sm:$0xf]
    %v167 = vld [vmem:[%s4 + $0xac] sm:$0xf]
    %v168 = vld [vmem:[%s4 + $0xb0] sm:$0xf]
    %v169 = vld [vmem:[%s4 + $0xb4] sm:$0xf]
    %v170 = vld [vmem:[%s4 + $0xb8] sm:$0xf]
    %v171 = vld [vmem:[%s4 + $0xbc] sm:$0xf]
    %v172 = vld [vmem:[%s5] sm:$0x3f]
    %v173 = vld [vmem:[%s5 + $0x8] sm:$0x3f]
    %v174 = vld [vmem:[%s5 + $0x10] sm:$0x3f]
    %v175 = vld [vmem:[%s5 + $0x18] sm:$0x3f]
    %v176 = vld [vmem:[%s5 + $0x20] sm:$0x3f]
    %v177 = vld [vmem:[%s5 + $0x28] sm:$0x3f]
    %v178 = vld [vmem:[%s5 + $0x30] sm:$0x3f]
    %v179 = vld [vmem:[%s5 + $0x38] sm:$0x3f]
    %v180 = vld [vmem:[%s5 + $0x40] sm:$0x3f]
    %v181 = vld [vmem:[%s5 + $0x48] sm:$0x3f]
    %v182 = vld [vmem:[%s5 + $0x50] sm:$0x3f]
    %v183 = vld [vmem:[%s5 + $0x58] sm:$0x3f]
    %v188 = vunpack.c.l.b16 %v124
    %v189 = vunpack.c.l.b16 %v125
    %v190 = vunpack.c.l.b16 %v126
    %v191 = vunpack.c.l.b16 %v127
    %v192 = vpack.c.b16 %v189, %v188
    %v193 = vpack.c.b16 %v191, %v190
    %v197 = vsel %vm70, %v123, 0
    %199 = vmatpush.bf16.msra.mxu0 0
    %200 = vmatpush.bf16.msra.mxu0 0
    %201 = vmatpush.bf16.msra.mxu0 0
    %202 = vmatpush.bf16.msra.mxu0 0
    %203 = vmatpush.bf16.msra.mxu0 0
    %204 = vmatpush.bf16.msra.mxu0 0
    %205 = vmatpush.bf16.msra.mxu0 %v193
    %206 = vmatpush.bf16.msra.mxu0 %v192
    %207 = vmatmul.bf16.gmra.mxu0 %v197
    %v208 = vpop.f32.mrf.mxu0
    %v209 = vadd.f32 %v172, %v208
    %v210 = vpop.f32.mrf.mxu0
    %211 = vdwg.mxu0
    %v216 = vunpack.c.l.b16 %v128
    %v217 = vunpack.c.l.b16 %v129
    %v218 = vunpack.c.l.b16 %v130
    %v219 = vunpack.c.l.b16 %v131
    %v220 = vpack.c.b16 %v217, %v216
    %v221 = vpack.c.b16 %v219, %v218
    %224 = vmatpush.bf16.msra.mxu0 0
    %225 = vmatpush.bf16.msra.mxu0 0
    %226 = vmatpush.bf16.msra.mxu0 0
    %227 = vmatpush.bf16.msra.mxu0 0
    %228 = vmatpush.bf16.msra.mxu0 0
    %229 = vmatpush.bf16.msra.mxu0 0
    %230 = vmatpush.bf16.msra.mxu0 %v221
    %231 = vmatpush.bf16.msra.mxu0 %v220
    %232 = vmatmul.bf16.gmra.mxu0 %v197
    %v233 = vpop.f32.mrf.mxu0
    %v234 = vadd.f32 %v173, %v233
    %v235 = vpop.f32.mrf.mxu0
    %236 = vdwg.mxu0
    %v241 = vunpack.c.l.b16 %v132
    %v242 = vunpack.c.l.b16 %v133
    %v243 = vunpack.c.l.b16 %v134
    %v244 = vunpack.c.l.b16 %v135
    %v245 = vpack.c.b16 %v242, %v241
    %v246 = vpack.c.b16 %v244, %v243
    %249 = vmatpush.bf16.msra.mxu0 0
    %250 = vmatpush.bf16.msra.mxu0 0
    %251 = vmatpush.bf16.msra.mxu0 0
    %252 = vmatpush.bf16.msra.mxu0 0
    %253 = vmatpush.bf16.msra.mxu0 0
    %254 = vmatpush.bf16.msra.mxu0 0
    %255 = vmatpush.bf16.msra.mxu0 %v246
    %256 = vmatpush.bf16.msra.mxu0 %v245
    %257 = vmatmul.bf16.gmra.mxu0 %v197
    %v258 = vpop.f32.mrf.mxu0
    %v259 = vadd.f32 %v174, %v258
    %v260 = vpop.f32.mrf.mxu0
    %261 = vdwg.mxu0
    %v266 = vunpack.c.l.b16 %v136
    %v267 = vunpack.c.l.b16 %v137
    %v268 = vunpack.c.l.b16 %v138
    %v269 = vunpack.c.l.b16 %v139
    %v270 = vpack.c.b16 %v267, %v266
    %v271 = vpack.c.b16 %v269, %v268
    %274 = vmatpush.bf16.msra.mxu0 0
    %275 = vmatpush.bf16.msra.mxu0 0
    %276 = vmatpush.bf16.msra.mxu0 0
    %277 = vmatpush.bf16.msra.mxu0 0
    %278 = vmatpush.bf16.msra.mxu0 0
    %279 = vmatpush.bf16.msra.mxu0 0
    %280 = vmatpush.bf16.msra.mxu0 %v271
    %281 = vmatpush.bf16.msra.mxu0 %v270
    %282 = vmatmul.bf16.gmra.mxu0 %v197
    %v283 = vpop.f32.mrf.mxu0
    %v284 = vadd.f32 %v175, %v283
    %v285 = vpop.f32.mrf.mxu0
    %286 = vdwg.mxu0
    %v291 = vunpack.c.l.b16 %v140
    %v292 = vunpack.c.l.b16 %v141
    %v293 = vunpack.c.l.b16 %v142
    %v294 = vunpack.c.l.b16 %v143
    %v295 = vpack.c.b16 %v292, %v291
    %v296 = vpack.c.b16 %v294, %v293
    %299 = vmatpush.bf16.msra.mxu0 0
    %300 = vmatpush.bf16.msra.mxu0 0
    %301 = vmatpush.bf16.msra.mxu0 0
    %302 = vmatpush.bf16.msra.mxu0 0
    %303 = vmatpush.bf16.msra.mxu0 0
    %304 = vmatpush.bf16.msra.mxu0 0
    %305 = vmatpush.bf16.msra.mxu0 %v296
    %306 = vmatpush.bf16.msra.mxu0 %v295
    %307 = vmatmul.bf16.gmra.mxu0 %v197
    %v308 = vpop.f32.mrf.mxu0
    %v309 = vadd.f32 %v176, %v308
    %v310 = vpop.f32.mrf.mxu0
    %311 = vdwg.mxu0
    %v316 = vunpack.c.l.b16 %v144
    %v317 = vunpack.c.l.b16 %v145
    %v318 = vunpack.c.l.b16 %v146
    %v319 = vunpack.c.l.b16 %v147
    %v320 = vpack.c.b16 %v317, %v316
    %v321 = vpack.c.b16 %v319, %v318
    %324 = vmatpush.bf16.msra.mxu0 0
    %325 = vmatpush.bf16.msra.mxu0 0
    %326 = vmatpush.bf16.msra.mxu0 0
    %327 = vmatpush.bf16.msra.mxu0 0
    %328 = vmatpush.bf16.msra.mxu0 0
    %329 = vmatpush.bf16.msra.mxu0 0
    %330 = vmatpush.bf16.msra.mxu0 %v321
    %331 = vmatpush.bf16.msra.mxu0 %v320
    %332 = vmatmul.bf16.gmra.mxu0 %v197
    %v333 = vpop.f32.mrf.mxu0
    %v334 = vadd.f32 %v177, %v333
    %v335 = vpop.f32.mrf.mxu0
    %336 = vdwg.mxu0
    %v341 = vunpack.c.l.b16 %v148
    %v342 = vunpack.c.l.b16 %v149
    %v343 = vunpack.c.l.b16 %v150
    %v344 = vunpack.c.l.b16 %v151
    %v345 = vpack.c.b16 %v342, %v341
    %v346 = vpack.c.b16 %v344, %v343
    %349 = vmatpush.bf16.msra.mxu0 0
    %350 = vmatpush.bf16.msra.mxu0 0
    %351 = vmatpush.bf16.msra.mxu0 0
    %352 = vmatpush.bf16.msra.mxu0 0
    %353 = vmatpush.bf16.msra.mxu0 0
    %354 = vmatpush.bf16.msra.mxu0 0
    %355 = vmatpush.bf16.msra.mxu0 %v346
    %356 = vmatpush.bf16.msra.mxu0 %v345
    %357 = vmatmul.bf16.gmra.mxu0 %v197
    %v358 = vpop.f32.mrf.mxu0
    %v359 = vadd.f32 %v178, %v358
    %v360 = vpop.f32.mrf.mxu0
    %361 = vdwg.mxu0
    %v366 = vunpack.c.l.b16 %v152
    %v367 = vunpack.c.l.b16 %v153
    %v368 = vunpack.c.l.b16 %v154
    %v369 = vunpack.c.l.b16 %v155
    %v370 = vpack.c.b16 %v367, %v366
    %v371 = vpack.c.b16 %v369, %v368
    %374 = vmatpush.bf16.msra.mxu0 0
    %375 = vmatpush.bf16.msra.mxu0 0
    %376 = vmatpush.bf16.msra.mxu0 0
    %377 = vmatpush.bf16.msra.mxu0 0
    %378 = vmatpush.bf16.msra.mxu0 0
    %379 = vmatpush.bf16.msra.mxu0 0
    %380 = vmatpush.bf16.msra.mxu0 %v371
    %381 = vmatpush.bf16.msra.mxu0 %v370
    %382 = vmatmul.bf16.gmra.mxu0 %v197
    %v383 = vpop.f32.mrf.mxu0
    %v384 = vadd.f32 %v179, %v383
    %v385 = vpop.f32.mrf.mxu0
    %386 = vdwg.mxu0
    %v391 = vunpack.c.l.b16 %v156
    %v392 = vunpack.c.l.b16 %v157
    %v393 = vunpack.c.l.b16 %v158
    %v394 = vunpack.c.l.b16 %v159
    %v395 = vpack.c.b16 %v392, %v391
    %v396 = vpack.c.b16 %v394, %v393
    %399 = vmatpush.bf16.msra.mxu0 0
    %400 = vmatpush.bf16.msra.mxu0 0
    %401 = vmatpush.bf16.msra.mxu0 0
    %402 = vmatpush.bf16.msra.mxu0 0
    %403 = vmatpush.bf16.msra.mxu0 0
    %404 = vmatpush.bf16.msra.mxu0 0
    %405 = vmatpush.bf16.msra.mxu0 %v396
    %406 = vmatpush.bf16.msra.mxu0 %v395
    %407 = vmatmul.bf16.gmra.mxu0 %v197
    %v408 = vpop.f32.mrf.mxu0
    %v409 = vadd.f32 %v180, %v408
    %v410 = vpop.f32.mrf.mxu0
    %411 = vdwg.mxu0
    %v416 = vunpack.c.l.b16 %v160
    %v417 = vunpack.c.l.b16 %v161
    %v418 = vunpack.c.l.b16 %v162
    %v419 = vunpack.c.l.b16 %v163
    %v420 = vpack.c.b16 %v417, %v416
    %v421 = vpack.c.b16 %v419, %v418
    %424 = vmatpush.bf16.msra.mxu0 0
    %425 = vmatpush.bf16.msra.mxu0 0
    %426 = vmatpush.bf16.msra.mxu0 0
    %427 = vmatpush.bf16.msra.mxu0 0
    %428 = vmatpush.bf16.msra.mxu0 0
    %429 = vmatpush.bf16.msra.mxu0 0
    %430 = vmatpush.bf16.msra.mxu0 %v421
    %431 = vmatpush.bf16.msra.mxu0 %v420
    %432 = vmatmul.bf16.gmra.mxu0 %v197
    %v433 = vpop.f32.mrf.mxu0
    %v434 = vadd.f32 %v181, %v433
    %v435 = vpop.f32.mrf.mxu0
    %436 = vdwg.mxu0
    %v441 = vunpack.c.l.b16 %v164
    %v442 = vunpack.c.l.b16 %v165
    %v443 = vunpack.c.l.b16 %v166
    %v444 = vunpack.c.l.b16 %v167
    %v445 = vpack.c.b16 %v442, %v441
    %v446 = vpack.c.b16 %v444, %v443
    %449 = vmatpush.bf16.msra.mxu0 0
    %450 = vmatpush.bf16.msra.mxu0 0
    %451 = vmatpush.bf16.msra.mxu0 0
    %452 = vmatpush.bf16.msra.mxu0 0
    %453 = vmatpush.bf16.msra.mxu0 0
    %454 = vmatpush.bf16.msra.mxu0 0
    %455 = vmatpush.bf16.msra.mxu0 %v446
    %456 = vmatpush.bf16.msra.mxu0 %v445
    %457 = vmatmul.bf16.gmra.mxu0 %v197
    %v458 = vpop.f32.mrf.mxu0
    %v459 = vadd.f32 %v182, %v458
    %v460 = vpop.f32.mrf.mxu0
    %461 = vdwg.mxu0
    %v466 = vunpack.c.l.b16 %v168
    %v467 = vunpack.c.l.b16 %v169
    %v468 = vunpack.c.l.b16 %v170
    %v469 = vunpack.c.l.b16 %v171
    %v470 = vpack.c.b16 %v467, %v466
    %v471 = vpack.c.b16 %v469, %v468
    %474 = vmatpush.bf16.msra.mxu0 0
    %475 = vmatpush.bf16.msra.mxu0 0
    %476 = vmatpush.bf16.msra.mxu0 0
    %477 = vmatpush.bf16.msra.mxu0 0
    %478 = vmatpush.bf16.msra.mxu0 0
    %479 = vmatpush.bf16.msra.mxu0 0
    %480 = vmatpush.bf16.msra.mxu0 %v471
    %481 = vmatpush.bf16.msra.mxu0 %v470
    %482 = vmatmul.bf16.gmra.mxu0 %v197
    %v483 = vpop.f32.mrf.mxu0
    %v484 = vadd.f32 %v183, %v483
    %v485 = vpop.f32.mrf.mxu0
    %486 = vdwg.mxu0
    %v487 = vpack.c.bf16 %v209, %v209
    %v488 = vpack.c.bf16 %v234, %v234
    %v489 = vpack.c.bf16 %v259, %v259
    %v490 = vpack.c.bf16 %v284, %v284
    %v491 = vpack.c.bf16 %v309, %v309
    %v492 = vpack.c.bf16 %v334, %v334
    %v493 = vpack.c.bf16 %v359, %v359
    %v494 = vpack.c.bf16 %v384, %v384
    %v495 = vpack.c.bf16 %v409, %v409
    %v496 = vpack.c.bf16 %v434, %v434
    %v497 = vpack.c.bf16 %v459, %v459
    %v498 = vpack.c.bf16 %v484, %v484
    %vm499 = vcmask 64512
    %v501 = vsel %vm499, %v487, 0
    %v504 = vsel %vm499, %v491, 0
    %506 = vmatpush.bf16.xpose.msra.mxu0 0
    %507 = vmatpush.bf16.xpose.msra.mxu0 0
    %508 = vmatpush.bf16.xpose.msra.mxu0 0
    %509 = vmatpush.bf16.xpose.msra.mxu0 0
    %510 = vmatpush.bf16.xpose.msra.mxu0 0
    %511 = vmatpush.bf16.xpose.msra.mxu0 0
    %512 = vmatpush.bf16.xpose.msra.mxu0 0
    %513 = vmatpush.bf16.xpose.msra.mxu0 %v504
    %514 = vmatmul.bf16.gmra.mxu0 %v501
    %v515 = vpop.f32.mrf.mxu0
    %v516 = vadd.f32 %v87, %v515
    %v517 = vpop.f32.mrf.mxu0
    %518 = vdwg.mxu0
    %v520 = vsel %vm499, %v488, 0
    %v523 = vsel %vm499, %v492, 0
    %525 = vmatpush.bf16.xpose.msra.mxu0 0
    %526 = vmatpush.bf16.xpose.msra.mxu0 0
    %527 = vmatpush.bf16.xpose.msra.mxu0 0
    %528 = vmatpush.bf16.xpose.msra.mxu0 0
    %529 = vmatpush.bf16.xpose.msra.mxu0 0
    %530 = vmatpush.bf16.xpose.msra.mxu0 0
    %531 = vmatpush.bf16.xpose.msra.mxu0 0
    %532 = vmatpush.bf16.xpose.msra.mxu0 %v523
    %533 = vmatmul.bf16.gmra.mxu0 %v520
    %v534 = vpop.f32.mrf.mxu0
    %v535 = vadd.f32 %v87, %v534
    %v536 = vpop.f32.mrf.mxu0
    %537 = vdwg.mxu0
    %v539 = vsel %vm499, %v489, 0
    %v542 = vsel %vm499, %v493, 0
    %544 = vmatpush.bf16.xpose.msra.mxu0 0
    %545 = vmatpush.bf16.xpose.msra.mxu0 0
    %546 = vmatpush.bf16.xpose.msra.mxu0 0
    %547 = vmatpush.bf16.xpose.msra.mxu0 0
    %548 = vmatpush.bf16.xpose.msra.mxu0 0
    %549 = vmatpush.bf16.xpose.msra.mxu0 0
    %550 = vmatpush.bf16.xpose.msra.mxu0 0
    %551 = vmatpush.bf16.xpose.msra.mxu0 %v542
    %552 = vmatmul.bf16.gmra.mxu0 %v539
    %v553 = vpop.f32.mrf.mxu0
    %v554 = vadd.f32 %v87, %v553
    %v555 = vpop.f32.mrf.mxu0
    %556 = vdwg.mxu0
    %v558 = vsel %vm499, %v490, 0
    %v561 = vsel %vm499, %v494, 0
    %563 = vmatpush.bf16.xpose.msra.mxu0 0
    %564 = vmatpush.bf16.xpose.msra.mxu0 0
    %565 = vmatpush.bf16.xpose.msra.mxu0 0
    %566 = vmatpush.bf16.xpose.msra.mxu0 0
    %567 = vmatpush.bf16.xpose.msra.mxu0 0
    %568 = vmatpush.bf16.xpose.msra.mxu0 0
    %569 = vmatpush.bf16.xpose.msra.mxu0 0
    %570 = vmatpush.bf16.xpose.msra.mxu0 %v561
    %571 = vmatmul.bf16.gmra.mxu0 %v558
    %v572 = vpop.f32.mrf.mxu0
    %v573 = vadd.f32 %v87, %v572
    %v574 = vpop.f32.mrf.mxu0
    %575 = vdwg.mxu0
    %vm576 = vcmask 46080
    %v577 = vsel %vm576, %v516, -inf
    %578 = vmax.xlane.f32.xlu0 %v577
    %v579 = vpop.xlane.xlu0 %578
    %v580 = vsel %vm576, %v535, -inf
    %581 = vmax.xlane.f32.xlu0 %v580
    %v582 = vpop.xlane.xlu0 %581
    %v583 = vsel %vm576, %v554, -inf
    %584 = vmax.xlane.f32.xlu0 %v583
    %v585 = vpop.xlane.xlu0 %584
    %v586 = vsel %vm576, %v573, -inf
    %587 = vmax.xlane.f32.xlu0 %v586
    %v588 = vpop.xlane.xlu0 %587
    %v589 = vsub.f32 %v516, %v579
    %v590 = vsub.f32 %v535, %v582
    %v591 = vsub.f32 %v554, %v585
    %v592 = vsub.f32 %v573, %v588
    %v593 = vmul.f32 %v589, 1.442695
    %v594 = vpow.pop %v593
    %v595 = vmul.f32 %v590, 1.442695
    %v596 = vpow.pop %v595
    %v597 = vmul.f32 %v591, 1.442695
    %v598 = vpow.pop %v597
    %v599 = vmul.f32 %v592, 1.442695
    %v600 = vpow.pop %v599
    %v601 = vsel %vm576, %v594, 0.0
    %602 = vadd.xlane.f32.xlu0 %v601
    %v603 = vpop.xlane.xlu0 %602
    %v604 = vsel %vm576, %v596, 0.0
    %605 = vadd.xlane.f32.xlu0 %v604
    %v606 = vpop.xlane.xlu0 %605
    %v607 = vsel %vm576, %v598, 0.0
    %608 = vadd.xlane.f32.xlu0 %v607
    %v609 = vpop.xlane.xlu0 %608
    %v610 = vsel %vm576, %v600, 0.0
    %611 = vadd.xlane.f32.xlu0 %v610
    %v612 = vpop.xlane.xlu0 %611
    %v613 = vrcp.pop %v603
    %v614 = vrcp.pop %v606
    %v615 = vrcp.pop %v609
    %v616 = vrcp.pop %v612
    %v617 = vmul.f32 %v594, %v613
    %v618 = vmul.f32 %v596, %v614
    %v619 = vmul.f32 %v598, %v615
    %v620 = vmul.f32 %v600, %v616
    %v621 = vpack.c.bf16 %v617, %v617
    %v622 = vpack.c.bf16 %v618, %v618
    %v623 = vpack.c.bf16 %v619, %v619
    %v624 = vpack.c.bf16 %v620, %v620
    %vm625 = vcmask 48128
    %v627 = vsel %vm625, %v621, 0
    %vm629 = vcmask 1042432
    %v631 = vsel %vm629, %v495, 0
    %633 = vmatpush.bf16.msra.mxu0 0
    %634 = vmatpush.bf16.msra.mxu0 0
    %635 = vmatpush.bf16.msra.mxu0 0
    %636 = vmatpush.bf16.msra.mxu0 0
    %637 = vmatpush.bf16.msra.mxu0 0
    %638 = vmatpush.bf16.msra.mxu0 0
    %639 = vmatpush.bf16.msra.mxu0 0
    %640 = vmatpush.bf16.msra.mxu0 %v631
    %641 = vmatmul.bf16.gmra.mxu0 %v627
    %v642 = vpop.f32.mrf.mxu0
    %v643 = vadd.f32 0.0, %v642
    %v644 = vpop.f32.mrf.mxu0
    %645 = vdwg.mxu0
    %v647 = vsel %vm625, %v622, 0
    %v650 = vsel %vm629, %v496, 0
    %652 = vmatpush.bf16.msra.mxu0 0
    %653 = vmatpush.bf16.msra.mxu0 0
    %654 = vmatpush.bf16.msra.mxu0 0
    %655 = vmatpush.bf16.msra.mxu0 0
    %656 = vmatpush.bf16.msra.mxu0 0
    %657 = vmatpush.bf16.msra.mxu0 0
    %658 = vmatpush.bf16.msra.mxu0 0
    %659 = vmatpush.bf16.msra.mxu0 %v650
    %660 = vmatmul.bf16.gmra.mxu0 %v647
    %v661 = vpop.f32.mrf.mxu0
    %v662 = vadd.f32 0.0, %v661
    %v663 = vpop.f32.mrf.mxu0
    %664 = vdwg.mxu0
    %v666 = vsel %vm625, %v623, 0
    %v669 = vsel %vm629, %v497, 0
    %671 = vmatpush.bf16.msra.mxu0 0
    %672 = vmatpush.bf16.msra.mxu0 0
    %673 = vmatpush.bf16.msra.mxu0 0
    %674 = vmatpush.bf16.msra.mxu0 0
    %675 = vmatpush.bf16.msra.mxu0 0
    %676 = vmatpush.bf16.msra.mxu0 0
    %677 = vmatpush.bf16.msra.mxu0 0
    %678 = vmatpush.bf16.msra.mxu0 %v669
    %679 = vmatmul.bf16.gmra.mxu0 %v666
    %v680 = vpop.f32.mrf.mxu0
    %v681 = vadd.f32 0.0, %v680
    %v682 = vpop.f32.mrf.mxu0
    %683 = vdwg.mxu0
    %v685 = vsel %vm625, %v624, 0
    %v688 = vsel %vm629, %v498, 0
    %690 = vmatpush.bf16.msra.mxu0 0
    %691 = vmatpush.bf16.msra.mxu0 0
    %692 = vmatpush.bf16.msra.mxu0 0
    %693 = vmatpush.bf16.msra.mxu0 0
    %694 = vmatpush.bf16.msra.mxu0 0
    %695 = vmatpush.bf16.msra.mxu0 0
    %696 = vmatpush.bf16.msra.mxu0 0
    %697 = vmatpush.bf16.msra.mxu0 %v688
    %698 = vmatmul.bf16.gmra.mxu0 %v685
    %v699 = vpop.f32.mrf.mxu0
    %v700 = vadd.f32 0.0, %v699
    %v701 = vpop.f32.mrf.mxu0
    %702 = vdwg.mxu0
    %v703 = vpack.c.bf16 %v643, %v643
    %v704 = vpack.c.bf16 %v662, %v662
    %v705 = vpack.c.bf16 %v681, %v681
    %v706 = vpack.c.bf16 %v700, %v700
    %v707 = vld [vmem:[%s6] sm:$0xf]
    %v708 = vld [vmem:[%s6 + $0x4] sm:$0xf]
    %v709 = vld [vmem:[%s6 + $0x8] sm:$0xf]
    %v710 = vld [vmem:[%s6 + $0xc] sm:$0xf]
    %v712 = vsel %vm499, %v703, 0
    %vm714 = vcmask 1043456
    %v716 = vsel %vm714, %v707, 0
    %718 = vmatpush.bf16.msra.mxu0 0
    %719 = vmatpush.bf16.msra.mxu0 0
    %720 = vmatpush.bf16.msra.mxu0 0
    %721 = vmatpush.bf16.msra.mxu0 0
    %722 = vmatpush.bf16.msra.mxu0 0
    %723 = vmatpush.bf16.msra.mxu0 0
    %724 = vmatpush.bf16.msra.mxu0 0
    %725 = vmatpush.bf16.msra.mxu0 %v716
    %726 = vmatmul.bf16.gmra.mxu0 %v712
    %v727 = vpop.f32.mrf.mxu0
    %v728 = vadd.f32 0.0, %v727
    %v729 = vpop.f32.mrf.mxu0
    %730 = vdwg.mxu0
    %v732 = vsel %vm499, %v704, 0
    %v735 = vsel %vm714, %v708, 0
    %737 = vmatpush.bf16.msra.mxu0 0
    %738 = vmatpush.bf16.msra.mxu0 0
    %739 = vmatpush.bf16.msra.mxu0 0
    %740 = vmatpush.bf16.msra.mxu0 0
    %741 = vmatpush.bf16.msra.mxu0 0
    %742 = vmatpush.bf16.msra.mxu0 0
    %743 = vmatpush.bf16.msra.mxu0 0
    %744 = vmatpush.bf16.msra.mxu0 %v735
    %745 = vmatmul.bf16.gmra.mxu0 %v732
    %v746 = vpop.f32.mrf.mxu0
    %v747 = vadd.f32 0.0, %v746
    %v748 = vpop.f32.mrf.mxu0
    %749 = vdwg.mxu0
    %v751 = vsel %vm499, %v705, 0
    %v754 = vsel %vm714, %v709, 0
    %756 = vmatpush.bf16.msra.mxu0 0
    %757 = vmatpush.bf16.msra.mxu0 0
    %758 = vmatpush.bf16.msra.mxu0 0
    %759 = vmatpush.bf16.msra.mxu0 0
    %760 = vmatpush.bf16.msra.mxu0 0
    %761 = vmatpush.bf16.msra.mxu0 0
    %762 = vmatpush.bf16.msra.mxu0 0
    %763 = vmatpush.bf16.msra.mxu0 %v754
    %764 = vmatmul.bf16.gmra.mxu0 %v751
    %v765 = vpop.f32.mrf.mxu0
    %v766 = vadd.f32 0.0, %v765
    %v767 = vpop.f32.mrf.mxu0
    %768 = vdwg.mxu0
    %v770 = vsel %vm499, %v706, 0
    %v773 = vsel %vm714, %v710, 0
    %775 = vmatpush.bf16.msra.mxu0 0
    %776 = vmatpush.bf16.msra.mxu0 0
    %777 = vmatpush.bf16.msra.mxu0 0
    %778 = vmatpush.bf16.msra.mxu0 0
    %779 = vmatpush.bf16.msra.mxu0 0
    %780 = vmatpush.bf16.msra.mxu0 0
    %781 = vmatpush.bf16.msra.mxu0 0
    %782 = vmatpush.bf16.msra.mxu0 %v773
    %783 = vmatmul.bf16.gmra.mxu0 %v770
    %v784 = vpop.f32.mrf.mxu0
    %v785 = vadd.f32 0.0, %v784
    %v786 = vpop.f32.mrf.mxu0
    %787 = vdwg.mxu0
    %v788 = vsel %vm89, %v728, 0.0
    %v789 = vsel %vm89, %v747, 0.0
    %v790 = vadd.f32 %v788, %v789
    %v791 = vsel %vm89, %v766, 0.0
    %v792 = vadd.f32 %v790, %v791
    %v793 = vsel %vm89, %v785, 0.0
    %v794 = vadd.f32 %v792, %v793
    %v795 = vadd.f32 %v84, %v794
    %v796 = vperm.slane %v88, 4
    %v797 = vadd.f32 %v795, %v796
    %v798 = vsel %vm89, %v797, 0.0
    %799 = vadd.xlane.f32.xlu0 %v798
    %v800 = vpop.xlane.xlu0 %799
    %v801 = vmul.f32 %v800, %v99
    %v802 = vsub.f32 %v797, %v801
    %v803 = vmul.f32 %v802, %v802
    %v804 = vsel %vm89, %v803, 0.0
    %805 = vadd.xlane.f32.xlu0 %v804
    %v806 = vpop.xlane.xlu0 %805
    %v807 = vmul.f32 %v806, %v99
    %v808 = vadd.f32 %v807, 1e-05
    %v809 = vrsqrt.pop %v808
    %v810 = vmul.f32 %v809, %v808
    %v811 = vmul.f32 %v810, %v809
    %v812 = vmul.f32 0.5, %v811
    %v813 = vsub.f32 1.5, %v812
    %v814 = vmul.f32 %v809, %v813
    %vm815 = vweird.f32 %v808
    %vm816 = vweird.f32 %v809
    %vm817 = vmor %vm815, %vm816
    %v818 = vsel %vm817, %v809, %v814
    %v819 = vmul.f32 %v802, %v818
    %v820 = vperm.slane %v88, 2
    %v821 = vmul.f32 %v819, %v820
    %v822 = vperm.slane %v88, 3
    %v823 = vadd.f32 %v821, %v822
    %v824 = vpack.c.bf16 %v823, %v823
    %v825 = vld [vmem:[%s7] sm:$0xf]
    %v826 = vld [vmem:[%s7 + $0x4] sm:$0xf]
    %v827 = vld [vmem:[%s7 + $0x8] sm:$0xf]
    %v828 = vld [vmem:[%s7 + $0xc] sm:$0xf]
    %v829 = vld [vmem:[%s8] sm:$0x1]
    %v831 = vperm.slane %v829, 0
    %v837 = vunpack.c.l.b16 %v825
    %v838 = vunpack.c.l.b16 %v826
    %v839 = vunpack.c.l.b16 %v827
    %v840 = vunpack.c.l.b16 %v828
    %v841 = vpack.c.b16 %v838, %v837
    %v842 = vpack.c.b16 %v840, %v839
    %v846 = vsel %vm70, %v824, 0
    %848 = vmatpush.bf16.msra.mxu0 0
    %849 = vmatpush.bf16.msra.mxu0 0
    %850 = vmatpush.bf16.msra.mxu0 0
    %851 = vmatpush.bf16.msra.mxu0 0
    %852 = vmatpush.bf16.msra.mxu0 0
    %853 = vmatpush.bf16.msra.mxu0 0
    %854 = vmatpush.bf16.msra.mxu0 %v842
    %855 = vmatpush.bf16.msra.mxu0 %v841
    %856 = vmatmul.bf16.gmra.mxu0 %v846
    %v857 = vpop.f32.mrf.mxu0
    %v858 = vadd.f32 %v831, %v857
    %v859 = vpop.f32.mrf.mxu0
    %860 = vdwg.mxu0
    %v861 = vmul.f32 %v858, %v858
    %v862 = vmul.f32 %v858, %v861
    %v863 = vmul.f32 %v862, 0.044715
    %v864 = vadd.f32 %v858, %v863
    %v865 = vmul.f32 %v864, 0.7978846
    %v866 = vtanh.pop %v865
    %v867 = vadd.f32 %v866, 1.0
    %v868 = vmul.f32 %v867, 0.5
    %v869 = vmul.f32 %v858, %v868
    %v870 = vpack.c.bf16 %v869, %v869
    %v871 = vld [vmem:[%s9] sm:$0xf]
    %v872 = vld [vmem:[%s9 + $0x4] sm:$0xf]
    %v873 = vld [vmem:[%s9 + $0x8] sm:$0xf]
    %v874 = vld [vmem:[%s9 + $0xc] sm:$0xf]
    %v875 = vld [vmem:[%s9 + $0x10] sm:$0xf]
    %v876 = vld [vmem:[%s9 + $0x14] sm:$0xf]
    %v877 = vld [vmem:[%s9 + $0x18] sm:$0xf]
    %v878 = vld [vmem:[%s9 + $0x1c] sm:$0xf]
    %v879 = vld [vmem:[%s9 + $0x20] sm:$0xf]
    %v880 = vld [vmem:[%s9 + $0x24] sm:$0xf]
    %v881 = vld [vmem:[%s9 + $0x28] sm:$0xf]
    %v882 = vld [vmem:[%s9 + $0x2c] sm:$0xf]
    %v883 = vld [vmem:[%s9 + $0x30] sm:$0xf]
    %v884 = vld [vmem:[%s9 + $0x34] sm:$0xf]
    %v885 = vld [vmem:[%s9 + $0x38] sm:$0xf]
    %v886 = vld [vmem:[%s9 + $0x3c] sm:$0xf]
    %v903 = vunpack.c.l.b16 %v871
    %v904 = vunpack.c.l.b16 %v872
    %v905 = vunpack.c.l.b16 %v873
    %v906 = vunpack.c.l.b16 %v874
    %v907 = vunpack.c.l.b16 %v875
    %v908 = vunpack.c.l.b16 %v876
    %v909 = vunpack.c.l.b16 %v877
    %v910 = vunpack.c.l.b16 %v878
    %v911 = vunpack.c.l.b16 %v879
    %v912 = vunpack.c.l.b16 %v880
    %v913 = vunpack.c.l.b16 %v881
    %v914 = vunpack.c.l.b16 %v882
    %v915 = vunpack.c.l.b16 %v883
    %v916 = vunpack.c.l.b16 %v884
    %v917 = vunpack.c.l.b16 %v885
    %v918 = vunpack.c.l.b16 %v886
    %v919 = vpack.c.b16 %v904, %v903
    %v920 = vpack.c.b16 %v906, %v905
    %v921 = vpack.c.b16 %v908, %v907
    %v922 = vpack.c.b16 %v910, %v909
    %v923 = vpack.c.b16 %v912, %v911
    %v924 = vpack.c.b16 %v914, %v913
    %v925 = vpack.c.b16 %v916, %v915
    %v926 = vpack.c.b16 %v918, %v917
    %935 = vmatpush.bf16.msra.mxu0 %v926
    %936 = vmatpush.bf16.msra.mxu0 %v925
    %937 = vmatpush.bf16.msra.mxu0 %v924
    %938 = vmatpush.bf16.msra.mxu0 %v923
    %939 = vmatpush.bf16.msra.mxu0 %v922
    %940 = vmatpush.bf16.msra.mxu0 %v921
    %941 = vmatpush.bf16.msra.mxu0 %v920
    %942 = vmatpush.bf16.msra.mxu0 %v919
    %943 = vmatmul.bf16.gmra.mxu0 %v870
    %v944 = vpop.f32.mrf.mxu0
    %v945 = vadd.f32 0.0, %v944
    %v946 = vpop.f32.mrf.mxu0
    %947 = vdwg.mxu0
    %v948 = vadd.f32 %v797, %v945
    %v949 = vperm.slane %v88, 5
    %v950 = vadd.f32 %v948, %v949
    %s951 = scalar_lea.vmem %s10, 8
    %v952 = vld [vmem:[%s951] sm:$0x3f]
    %v953 = vsel %vm89, %v950, 0.0
    %954 = vadd.xlane.f32.xlu0 %v953
    %v955 = vpop.xlane.xlu0 %954
    %v956 = vmul.f32 %v955, %v99
    %v957 = vsub.f32 %v950, %v956
    %v958 = vmul.f32 %v957, %v957
    %v959 = vsel %vm89, %v958, 0.0
    %960 = vadd.xlane.f32.xlu0 %v959
    %v961 = vpop.xlane.xlu0 %960
    %v962 = vmul.f32 %v961, %v99
    %v963 = vadd.f32 %v962, 1e-05
    %v964 = vrsqrt.pop %v963
    %v965 = vmul.f32 %v964, %v963
    %v966 = vmul.f32 %v965, %v964
    %v967 = vmul.f32 0.5, %v966
    %v968 = vsub.f32 1.5, %v967
    %v969 = vmul.f32 %v964, %v968
    %vm970 = vweird.f32 %v963
    %vm971 = vweird.f32 %v964
    %vm972 = vmor %vm970, %vm971
    %v973 = vsel %vm972, %v964, %v969
    %v974 = vmul.f32 %v957, %v973
    %v975 = vperm.slane %v952, 0
    %v976 = vmul.f32 %v974, %v975
    %v977 = vperm.slane %v952, 1
    %v978 = vadd.f32 %v976, %v977
    %v979 = vpack.c.bf16 %v978, %v978
    %s980 = scalar_lea.vmem %s4, 192
    %v981 = vld [vmem:[%s980] sm:$0xf]
    %v982 = vld [vmem:[%s980 + $0x4] sm:$0xf]
    %v983 = vld [vmem:[%s980 + $0x8] sm:$0xf]
    %v984 = vld [vmem:[%s980 + $0xc] sm:$0xf]
    %v985 = vld [vmem:[%s980 + $0x10] sm:$0xf]
    %v986 = vld [vmem:[%s980 + $0x14] sm:$0xf]
    %v987 = vld [vmem:[%s980 + $0x18] sm:$0xf]
    %v988 = vld [vmem:[%s980 + $0x1c] sm:$0xf]
    %v989 = vld [vmem:[%s980 + $0x20] sm:$0xf]
    %v990 = vld [vmem:[%s980 + $0x24] sm:$0xf]
    %v991 = vld [vmem:[%s980 + $0x28] sm:$0xf]
    %v992 = vld [vmem:[%s980 + $0x2c] sm:$0xf]
    %v993 = vld [vmem:[%s980 + $0x30] sm:$0xf]
    %v994 = vld [vmem:[%s980 + $0x34] sm:$0xf]
    %v995 = vld [vmem:[%s980 + $0x38] sm:$0xf]
    %v996 = vld [vmem:[%s980 + $0x3c] sm:$0xf]
    %v997 = vld [vmem:[%s980 + $0x40] sm:$0xf]
    %v998 = vld [vmem:[%s980 + $0x44] sm:$0xf]
    %v999 = vld [vmem:[%s980 + $0x48] sm:$0xf]
    %v1000 = vld [vmem:[%s980 + $0x4c] sm:$0xf]
    %v1001 = vld [vmem:[%s980 + $0x50] sm:$0xf]
    %v1002 = vld [vmem:[%s980 + $0x54] sm:$0xf]
    %v1003 = vld [vmem:[%s980 + $0x58] sm:$0xf]
    %v1004 = vld [vmem:[%s980 + $0x5c] sm:$0xf]
    %v1005 = vld [vmem:[%s980 + $0x60] sm:$0xf]
    %v1006 = vld [vmem:[%s980 + $0x64] sm:$0xf]
    %v1007 = vld [vmem:[%s980 + $0x68] sm:$0xf]
    %v1008 = vld [vmem:[%s980 + $0x6c] sm:$0xf]
    %v1009 = vld [vmem:[%s980 + $0x70] sm:$0xf]
    %v1010 = vld [vmem:[%s980 + $0x74] sm:$0xf]
    %v1011 = vld [vmem:[%s980 + $0x78] sm:$0xf]
    %v1012 = vld [vmem:[%s980 + $0x7c] sm:$0xf]
    %v1013 = vld [vmem:[%s980 + $0x80] sm:$0xf]
    %v1014 = vld [vmem:[%s980 + $0x84] sm:$0xf]
    %v1015 = vld [vmem:[%s980 + $0x88] sm:$0xf]
    %v1016 = vld [vmem:[%s980 + $0x8c] sm:$0xf]
    %v1017 = vld [vmem:[%s980 + $0x90] sm:$0xf]
    %v1018 = vld [vmem:[%s980 + $0x94] sm:$0xf]
    %v1019 = vld [vmem:[%s980 + $0x98] sm:$0xf]
    %v1020 = vld [vmem:[%s980 + $0x9c] sm:$0xf]
    %v1021 = vld [vmem:[%s980 + $0xa0] sm:$0xf]
    %v1022 = vld [vmem:[%s980 + $0xa4] sm:$0xf]
    %v1023 = vld [vmem:[%s980 + $0xa8] sm:$0xf]
    %v1024 = vld [vmem:[%s980 + $0xac] sm:$0xf]
    %v1025 = vld [vmem:[%s980 + $0xb0] sm:$0xf]
    %v1026 = vld [vmem:[%s980 + $0xb4] sm:$0xf]
    %v1027 = vld [vmem:[%s980 + $0xb8] sm:$0xf]
    %v1028 = vld [vmem:[%s980 + $0xbc] sm:$0xf]
    %s1029 = scalar_lea.vmem %s5, 96
    %v1030 = vld [vmem:[%s1029] sm:$0x3f]
    %v1031 = vld [vmem:[%s1029 + $0x8] sm:$0x3f]
    %v1032 = vld [vmem:[%s1029 + $0x10] sm:$0x3f]
    %v1033 = vld [vmem:[%s1029 + $0x18] sm:$0x3f]
    %v1034 = vld [vmem:[%s1029 + $0x20] sm:$0x3f]
    %v1035 = vld [vmem:[%s1029 + $0x28] sm:$0x3f]
    %v1036 = vld [vmem:[%s1029 + $0x30] sm:$0x3f]
    %v1037 = vld [vmem:[%s1029 + $0x38] sm:$0x3f]
    %v1038 = vld [vmem:[%s1029 + $0x40] sm:$0x3f]
    %v1039 = vld [vmem:[%s1029 + $0x48] sm:$0x3f]
    %v1040 = vld [vmem:[%s1029 + $0x50] sm:$0x3f]
    %v1041 = vld [vmem:[%s1029 + $0x58] sm:$0x3f]
    %v1046 = vunpack.c.l.b16 %v981
    %v1047 = vunpack.c.l.b16 %v982
    %v1048 = vunpack.c.l.b16 %v983
    %v1049 = vunpack.c.l.b16 %v984
    %v1050 = vpack.c.b16 %v1047, %v1046
    %v1051 = vpack.c.b16 %v1049, %v1048
    %v1055 = vsel %vm70, %v979, 0
    %1057 = vmatpush.bf16.msra.mxu0 0
    %1058 = vmatpush.bf16.msra.mxu0 0
    %1059 = vmatpush.bf16.msra.mxu0 0
    %1060 = vmatpush.bf16.msra.mxu0 0
    %1061 = vmatpush.bf16.msra.mxu0 0
    %1062 = vmatpush.bf16.msra.mxu0 0
    %1063 = vmatpush.bf16.msra.mxu0 %v1051
    %1064 = vmatpush.bf16.msra.mxu0 %v1050
    %1065 = vmatmul.bf16.gmra.mxu0 %v1055
    %v1066 = vpop.f32.mrf.mxu0
    %v1067 = vadd.f32 %v1030, %v1066
    %v1068 = vpop.f32.mrf.mxu0
    %1069 = vdwg.mxu0
    %v1074 = vunpack.c.l.b16 %v985
    %v1075 = vunpack.c.l.b16 %v986
    %v1076 = vunpack.c.l.b16 %v987
    %v1077 = vunpack.c.l.b16 %v988
    %v1078 = vpack.c.b16 %v1075, %v1074
    %v1079 = vpack.c.b16 %v1077, %v1076
    %1082 = vmatpush.bf16.msra.mxu0 0
    %1083 = vmatpush.bf16.msra.mxu0 0
    %1084 = vmatpush.bf16.msra.mxu0 0
    %1085 = vmatpush.bf16.msra.mxu0 0
    %1086 = vmatpush.bf16.msra.mxu0 0
    %1087 = vmatpush.bf16.msra.mxu0 0
    %1088 = vmatpush.bf16.msra.mxu0 %v1079
    %1089 = vmatpush.bf16.msra.mxu0 %v1078
    %1090 = vmatmul.bf16.gmra.mxu0 %v1055
    %v1091 = vpop.f32.mrf.mxu0
    %v1092 = vadd.f32 %v1031, %v1091
    %v1093 = vpop.f32.mrf.mxu0
    %1094 = vdwg.mxu0
    %v1099 = vunpack.c.l.b16 %v989
    %v1100 = vunpack.c.l.b16 %v990
    %v1101 = vunpack.c.l.b16 %v991
    %v1102 = vunpack.c.l.b16 %v992
    %v1103 = vpack.c.b16 %v1100, %v1099
    %v1104 = vpack.c.b16 %v1102, %v1101
    %1107 = vmatpush.bf16.msra.mxu0 0
    %1108 = vmatpush.bf16.msra.mxu0 0
    %1109 = vmatpush.bf16.msra.mxu0 0
    %1110 = vmatpush.bf16.msra.mxu0 0
    %1111 = vmatpush.bf16.msra.mxu0 0
    %1112 = vmatpush.bf16.msra.mxu0 0
    %1113 = vmatpush.bf16.msra.mxu0 %v1104
    %1114 = vmatpush.bf16.msra.mxu0 %v1103
    %1115 = vmatmul.bf16.gmra.mxu0 %v1055
    %v1116 = vpop.f32.mrf.mxu0
    %v1117 = vadd.f32 %v1032, %v1116
    %v1118 = vpop.f32.mrf.mxu0
    %1119 = vdwg.mxu0
    %v1124 = vunpack.c.l.b16 %v993
    %v1125 = vunpack.c.l.b16 %v994
    %v1126 = vunpack.c.l.b16 %v995
    %v1127 = vunpack.c.l.b16 %v996
    %v1128 = vpack.c.b16 %v1125, %v1124
    %v1129 = vpack.c.b16 %v1127, %v1126
    %1132 = vmatpush.bf16.msra.mxu0 0
    %1133 = vmatpush.bf16.msra.mxu0 0
    %1134 = vmatpush.bf16.msra.mxu0 0
    %1135 = vmatpush.bf16.msra.mxu0 0
    %1136 = vmatpush.bf16.msra.mxu0 0
    %1137 = vmatpush.bf16.msra.mxu0 0
    %1138 = vmatpush.bf16.msra.mxu0 %v1129
    %1139 = vmatpush.bf16.msra.mxu0 %v1128
    %1140 = vmatmul.bf16.gmra.mxu0 %v1055
    %v1141 = vpop.f32.mrf.mxu0
    %v1142 = vadd.f32 %v1033, %v1141
    %v1143 = vpop.f32.mrf.mxu0
    %1144 = vdwg.mxu0
    %v1149 = vunpack.c.l.b16 %v997
    %v1150 = vunpack.c.l.b16 %v998
    %v1151 = vunpack.c.l.b16 %v999
    %v1152 = vunpack.c.l.b16 %v1000
    %v1153 = vpack.c.b16 %v1150, %v1149
    %v1154 = vpack.c.b16 %v1152, %v1151
    %1157 = vmatpush.bf16.msra.mxu0 0
    %1158 = vmatpush.bf16.msra.mxu0 0
    %1159 = vmatpush.bf16.msra.mxu0 0
    %1160 = vmatpush.bf16.msra.mxu0 0
    %1161 = vmatpush.bf16.msra.mxu0 0
    %1162 = vmatpush.bf16.msra.mxu0 0
    %1163 = vmatpush.bf16.msra.mxu0 %v1154
    %1164 = vmatpush.bf16.msra.mxu0 %v1153
    %1165 = vmatmul.bf16.gmra.mxu0 %v1055
    %v1166 = vpop.f32.mrf.mxu0
    %v1167 = vadd.f32 %v1034, %v1166
    %v1168 = vpop.f32.mrf.mxu0
    %1169 = vdwg.mxu0
    %v1174 = vunpack.c.l.b16 %v1001
    %v1175 = vunpack.c.l.b16 %v1002
    %v1176 = vunpack.c.l.b16 %v1003
    %v1177 = vunpack.c.l.b16 %v1004
    %v1178 = vpack.c.b16 %v1175, %v1174
    %v1179 = vpack.c.b16 %v1177, %v1176
    %1182 = vmatpush.bf16.msra.mxu0 0
    %1183 = vmatpush.bf16.msra.mxu0 0
    %1184 = vmatpush.bf16.msra.mxu0 0
    %1185 = vmatpush.bf16.msra.mxu0 0
    %1186 = vmatpush.bf16.msra.mxu0 0
    %1187 = vmatpush.bf16.msra.mxu0 0
    %1188 = vmatpush.bf16.msra.mxu0 %v1179
    %1189 = vmatpush.bf16.msra.mxu0 %v1178
    %1190 = vmatmul.bf16.gmra.mxu0 %v1055
    %v1191 = vpop.f32.mrf.mxu0
    %v1192 = vadd.f32 %v1035, %v1191
    %v1193 = vpop.f32.mrf.mxu0
    %1194 = vdwg.mxu0
    %v1199 = vunpack.c.l.b16 %v1005
    %v1200 = vunpack.c.l.b16 %v1006
    %v1201 = vunpack.c.l.b16 %v1007
    %v1202 = vunpack.c.l.b16 %v1008
    %v1203 = vpack.c.b16 %v1200, %v1199
    %v1204 = vpack.c.b16 %v1202, %v1201
    %1207 = vmatpush.bf16.msra.mxu0 0
    %1208 = vmatpush.bf16.msra.mxu0 0
    %1209 = vmatpush.bf16.msra.mxu0 0
    %1210 = vmatpush.bf16.msra.mxu0 0
    %1211 = vmatpush.bf16.msra.mxu0 0
    %1212 = vmatpush.bf16.msra.mxu0 0
    %1213 = vmatpush.bf16.msra.mxu0 %v1204
    %1214 = vmatpush.bf16.msra.mxu0 %v1203
    %1215 = vmatmul.bf16.gmra.mxu0 %v1055
    %v1216 = vpop.f32.mrf.mxu0
    %v1217 = vadd.f32 %v1036, %v1216
    %v1218 = vpop.f32.mrf.mxu0
    %1219 = vdwg.mxu0
    %v1224 = vunpack.c.l.b16 %v1009
    %v1225 = vunpack.c.l.b16 %v1010
    %v1226 = vunpack.c.l.b16 %v1011
    %v1227 = vunpack.c.l.b16 %v1012
    %v1228 = vpack.c.b16 %v1225, %v1224
    %v1229 = vpack.c.b16 %v1227, %v1226
    %1232 = vmatpush.bf16.msra.mxu0 0
    %1233 = vmatpush.bf16.msra.mxu0 0
    %1234 = vmatpush.bf16.msra.mxu0 0
    %1235 = vmatpush.bf16.msra.mxu0 0
    %1236 = vmatpush.bf16.msra.mxu0 0
    %1237 = vmatpush.bf16.msra.mxu0 0
    %1238 = vmatpush.bf16.msra.mxu0 %v1229
    %1239 = vmatpush.bf16.msra.mxu0 %v1228
    %1240 = vmatmul.bf16.gmra.mxu0 %v1055
    %v1241 = vpop.f32.mrf.mxu0
    %v1242 = vadd.f32 %v1037, %v1241
    %v1243 = vpop.f32.mrf.mxu0
    %1244 = vdwg.mxu0
    %v1249 = vunpack.c.l.b16 %v1013
    %v1250 = vunpack.c.l.b16 %v1014
    %v1251 = vunpack.c.l.b16 %v1015
    %v1252 = vunpack.c.l.b16 %v1016
    %v1253 = vpack.c.b16 %v1250, %v1249
    %v1254 = vpack.c.b16 %v1252, %v1251
    %1257 = vmatpush.bf16.msra.mxu0 0
    %1258 = vmatpush.bf16.msra.mxu0 0
    %1259 = vmatpush.bf16.msra.mxu0 0
    %1260 = vmatpush.bf16.msra.mxu0 0
    %1261 = vmatpush.bf16.msra.mxu0 0
    %1262 = vmatpush.bf16.msra.mxu0 0
    %1263 = vmatpush.bf16.msra.mxu0 %v1254
    %1264 = vmatpush.bf16.msra.mxu0 %v1253
    %1265 = vmatmul.bf16.gmra.mxu0 %v1055
    %v1266 = vpop.f32.mrf.mxu0
    %v1267 = vadd.f32 %v1038, %v1266
    %v1268 = vpop.f32.mrf.mxu0
    %1269 = vdwg.mxu0
    %v1274 = vunpack.c.l.b16 %v1017
    %v1275 = vunpack.c.l.b16 %v1018
    %v1276 = vunpack.c.l.b16 %v1019
    %v1277 = vunpack.c.l.b16 %v1020
    %v1278 = vpack.c.b16 %v1275, %v1274
    %v1279 = vpack.c.b16 %v1277, %v1276
    %1282 = vmatpush.bf16.msra.mxu0 0
    %1283 = vmatpush.bf16.msra.mxu0 0
    %1284 = vmatpush.bf16.msra.mxu0 0
    %1285 = vmatpush.bf16.msra.mxu0 0
    %1286 = vmatpush.bf16.msra.mxu0 0
    %1287 = vmatpush.bf16.msra.mxu0 0
    %1288 = vmatpush.bf16.msra.mxu0 %v1279
    %1289 = vmatpush.bf16.msra.mxu0 %v1278
    %1290 = vmatmul.bf16.gmra.mxu0 %v1055
    %v1291 = vpop.f32.mrf.mxu0
    %v1292 = vadd.f32 %v1039, %v1291
    %v1293 = vpop.f32.mrf.mxu0
    %1294 = vdwg.mxu0
    %v1299 = vunpack.c.l.b16 %v1021
    %v1300 = vunpack.c.l.b16 %v1022
    %v1301 = vunpack.c.l.b16 %v1023
    %v1302 = vunpack.c.l.b16 %v1024
    %v1303 = vpack.c.b16 %v1300, %v1299
    %v1304 = vpack.c.b16 %v1302, %v1301
    %1307 = vmatpush.bf16.msra.mxu0 0
    %1308 = vmatpush.bf16.msra.mxu0 0
    %1309 = vmatpush.bf16.msra.mxu0 0
    %1310 = vmatpush.bf16.msra.mxu0 0
    %1311 = vmatpush.bf16.msra.mxu0 0
    %1312 = vmatpush.bf16.msra.mxu0 0
    %1313 = vmatpush.bf16.msra.mxu0 %v1304
    %1314 = vmatpush.bf16.msra.mxu0 %v1303
    %1315 = vmatmul.bf16.gmra.mxu0 %v1055
    %v1316 = vpop.f32.mrf.mxu0
    %v1317 = vadd.f32 %v1040, %v1316
    %v1318 = vpop.f32.mrf.mxu0
    %1319 = vdwg.mxu0
    %v1324 = vunpack.c.l.b16 %v1025
    %v1325 = vunpack.c.l.b16 %v1026
    %v1326 = vunpack.c.l.b16 %v1027
    %v1327 = vunpack.c.l.b16 %v1028
    %v1328 = vpack.c.b16 %v1325, %v1324
    %v1329 = vpack.c.b16 %v1327, %v1326
    %1332 = vmatpush.bf16.msra.mxu0 0
    %1333 = vmatpush.bf16.msra.mxu0 0
    %1334 = vmatpush.bf16.msra.mxu0 0
    %1335 = vmatpush.bf16.msra.mxu0 0
    %1336 = vmatpush.bf16.msra.mxu0 0
    %1337 = vmatpush.bf16.msra.mxu0 0
    %1338 = vmatpush.bf16.msra.mxu0 %v1329
    %1339 = vmatpush.bf16.msra.mxu0 %v1328
    %1340 = vmatmul.bf16.gmra.mxu0 %v1055
    %v1341 = vpop.f32.mrf.mxu0
    %v1342 = vadd.f32 %v1041, %v1341
    %v1343 = vpop.f32.mrf.mxu0
    %1344 = vdwg.mxu0
    %v1345 = vpack.c.bf16 %v1067, %v1067
    %v1346 = vpack.c.bf16 %v1092, %v1092
    %v1347 = vpack.c.bf16 %v1117, %v1117
    %v1348 = vpack.c.bf16 %v1142, %v1142
    %v1349 = vpack.c.bf16 %v1167, %v1167
    %v1350 = vpack.c.bf16 %v1192, %v1192
    %v1351 = vpack.c.bf16 %v1217, %v1217
    %v1352 = vpack.c.bf16 %v1242, %v1242
    %v1353 = vpack.c.bf16 %v1267, %v1267
    %v1354 = vpack.c.bf16 %v1292, %v1292
    %v1355 = vpack.c.bf16 %v1317, %v1317
    %v1356 = vpack.c.bf16 %v1342, %v1342
    %v1358 = vsel %vm499, %v1345, 0
    %v1361 = vsel %vm499, %v1349, 0
    %1363 = vmatpush.bf16.xpose.msra.mxu0 0
    %1364 = vmatpush.bf16.xpose.msra.mxu0 0
    %1365 = vmatpush.bf16.xpose.msra.mxu0 0
    %1366 = vmatpush.bf16.xpose.msra.mxu0 0
    %1367 = vmatpush.bf16.xpose.msra.mxu0 0
    %1368 = vmatpush.bf16.xpose.msra.mxu0 0
    %1369 = vmatpush.bf16.xpose.msra.mxu0 0
    %1370 = vmatpush.bf16.xpose.msra.mxu0 %v1361
    %1371 = vmatmul.bf16.gmra.mxu0 %v1358
    %v1372 = vpop.f32.mrf.mxu0
    %v1373 = vadd.f32 %v87, %v1372
    %v1374 = vpop.f32.mrf.mxu0
    %1375 = vdwg.mxu0
    %v1377 = vsel %vm499, %v1346, 0
    %v1380 = vsel %vm499, %v1350, 0
    %1382 = vmatpush.bf16.xpose.msra.mxu0 0
    %1383 = vmatpush.bf16.xpose.msra.mxu0 0
    %1384 = vmatpush.bf16.xpose.msra.mxu0 0
    %1385 = vmatpush.bf16.xpose.msra.mxu0 0
    %1386 = vmatpush.bf16.xpose.msra.mxu0 0
    %1387 = vmatpush.bf16.xpose.msra.mxu0 0
    %1388 = vmatpush.bf16.xpose.msra.mxu0 0
    %1389 = vmatpush.bf16.xpose.msra.mxu0 %v1380
    %1390 = vmatmul.bf16.gmra.mxu0 %v1377
    %v1391 = vpop.f32.mrf.mxu0
    %v1392 = vadd.f32 %v87, %v1391
    %v1393 = vpop.f32.mrf.mxu0
    %1394 = vdwg.mxu0
    %v1396 = vsel %vm499, %v1347, 0
    %v1399 = vsel %vm499, %v1351, 0
    %1401 = vmatpush.bf16.xpose.msra.mxu0 0
    %1402 = vmatpush.bf16.xpose.msra.mxu0 0
    %1403 = vmatpush.bf16.xpose.msra.mxu0 0
    %1404 = vmatpush.bf16.xpose.msra.mxu0 0
    %1405 = vmatpush.bf16.xpose.msra.mxu0 0
    %1406 = vmatpush.bf16.xpose.msra.mxu0 0
    %1407 = vmatpush.bf16.xpose.msra.mxu0 0
    %1408 = vmatpush.bf16.xpose.msra.mxu0 %v1399
    %1409 = vmatmul.bf16.gmra.mxu0 %v1396
    %v1410 = vpop.f32.mrf.mxu0
    %v1411 = vadd.f32 %v87, %v1410
    %v1412 = vpop.f32.mrf.mxu0
    %1413 = vdwg.mxu0
    %v1415 = vsel %vm499, %v1348, 0
    %v1418 = vsel %vm499, %v1352, 0
    %1420 = vmatpush.bf16.xpose.msra.mxu0 0
    %1421 = vmatpush.bf16.xpose.msra.mxu0 0
    %1422 = vmatpush.bf16.xpose.msra.mxu0 0
    %1423 = vmatpush.bf16.xpose.msra.mxu0 0
    %1424 = vmatpush.bf16.xpose.msra.mxu0 0
    %1425 = vmatpush.bf16.xpose.msra.mxu0 0
    %1426 = vmatpush.bf16.xpose.msra.mxu0 0
    %1427 = vmatpush.bf16.xpose.msra.mxu0 %v1418
    %1428 = vmatmul.bf16.gmra.mxu0 %v1415
    %v1429 = vpop.f32.mrf.mxu0
    %v1430 = vadd.f32 %v87, %v1429
    %v1431 = vpop.f32.mrf.mxu0
    %1432 = vdwg.mxu0
    %v1433 = vsel %vm576, %v1373, -inf
    %1434 = vmax.xlane.f32.xlu0 %v1433
    %v1435 = vpop.xlane.xlu0 %1434
    %v1436 = vsel %vm576, %v1392, -inf
    %1437 = vmax.xlane.f32.xlu0 %v1436
    %v1438 = vpop.xlane.xlu0 %1437
    %v1439 = vsel %vm576, %v1411, -inf
    %1440 = vmax.xlane.f32.xlu0 %v1439
    %v1441 = vpop.xlane.xlu0 %1440
    %v1442 = vsel %vm576, %v1430, -inf
    %1443 = vmax.xlane.f32.xlu0 %v1442
    %v1444 = vpop.xlane.xlu0 %1443
    %v1445 = vsub.f32 %v1373, %v1435
    %v1446 = vsub.f32 %v1392, %v1438
    %v1447 = vsub.f32 %v1411, %v1441
    %v1448 = vsub.f32 %v1430, %v1444
    %v1449 = vmul.f32 %v1445, 1.442695
    %v1450 = vpow.pop %v1449
    %v1451 = vmul.f32 %v1446, 1.442695
    %v1452 = vpow.pop %v1451
    %v1453 = vmul.f32 %v1447, 1.442695
    %v1454 = vpow.pop %v1453
    %v1455 = vmul.f32 %v1448, 1.442695
    %v1456 = vpow.pop %v1455
    %v1457 = vsel %vm576, %v1450, 0.0
    %1458 = vadd.xlane.f32.xlu0 %v1457
    %v1459 = vpop.xlane.xlu0 %1458
    %v1460 = vsel %vm576, %v1452, 0.0
    %1461 = vadd.xlane.f32.xlu0 %v1460
    %v1462 = vpop.xlane.xlu0 %1461
    %v1463 = vsel %vm576, %v1454, 0.0
    %1464 = vadd.xlane.f32.xlu0 %v1463
    %v1465 = vpop.xlane.xlu0 %1464
    %v1466 = vsel %vm576, %v1456, 0.0
    %1467 = vadd.xlane.f32.xlu0 %v1466
    %v1468 = vpop.xlane.xlu0 %1467
    %v1469 = vrcp.pop %v1459
    %v1470 = vrcp.pop %v1462
    %v1471 = vrcp.pop %v1465
    %v1472 = vrcp.pop %v1468
    %v1473 = vmul.f32 %v1450, %v1469
    %v1474 = vmul.f32 %v1452, %v1470
    %v1475 = vmul.f32 %v1454, %v1471
    %v1476 = vmul.f32 %v1456, %v1472
    %v1477 = vpack.c.bf16 %v1473, %v1473
    %v1478 = vpack.c.bf16 %v1474, %v1474
    %v1479 = vpack.c.bf16 %v1475, %v1475
    %v1480 = vpack.c.bf16 %v1476, %v1476
    %v1482 = vsel %vm625, %v1477, 0
    %v1485 = vsel %vm629, %v1353, 0
    %1487 = vmatpush.bf16.msra.mxu0 0
    %1488 = vmatpush.bf16.msra.mxu0 0
    %1489 = vmatpush.bf16.msra.mxu0 0
    %1490 = vmatpush.bf16.msra.mxu0 0
    %1491 = vmatpush.bf16.msra.mxu0 0
    %1492 = vmatpush.bf16.msra.mxu0 0
    %1493 = vmatpush.bf16.msra.mxu0 0
    %1494 = vmatpush.bf16.msra.mxu0 %v1485
    %1495 = vmatmul.bf16.gmra.mxu0 %v1482
    %v1496 = vpop.f32.mrf.mxu0
    %v1497 = vadd.f32 0.0, %v1496
    %v1498 = vpop.f32.mrf.mxu0
    %1499 = vdwg.mxu0
    %v1501 = vsel %vm625, %v1478, 0
    %v1504 = vsel %vm629, %v1354, 0
    %1506 = vmatpush.bf16.msra.mxu0 0
    %1507 = vmatpush.bf16.msra.mxu0 0
    %1508 = vmatpush.bf16.msra.mxu0 0
    %1509 = vmatpush.bf16.msra.mxu0 0
    %1510 = vmatpush.bf16.msra.mxu0 0
    %1511 = vmatpush.bf16.msra.mxu0 0
    %1512 = vmatpush.bf16.msra.mxu0 0
    %1513 = vmatpush.bf16.msra.mxu0 %v1504
    %1514 = vmatmul.bf16.gmra.mxu0 %v1501
    %v1515 = vpop.f32.mrf.mxu0
    %v1516 = vadd.f32 0.0, %v1515
    %v1517 = vpop.f32.mrf.mxu0
    %1518 = vdwg.mxu0
    %v1520 = vsel %vm625, %v1479, 0
    %v1523 = vsel %vm629, %v1355, 0
    %1525 = vmatpush.bf16.msra.mxu0 0
    %1526 = vmatpush.bf16.msra.mxu0 0
    %1527 = vmatpush.bf16.msra.mxu0 0
    %1528 = vmatpush.bf16.msra.mxu0 0
    %1529 = vmatpush.bf16.msra.mxu0 0
    %1530 = vmatpush.bf16.msra.mxu0 0
    %1531 = vmatpush.bf16.msra.mxu0 0
    %1532 = vmatpush.bf16.msra.mxu0 %v1523
    %1533 = vmatmul.bf16.gmra.mxu0 %v1520
    %v1534 = vpop.f32.mrf.mxu0
    %v1535 = vadd.f32 0.0, %v1534
    %v1536 = vpop.f32.mrf.mxu0
    %1537 = vdwg.mxu0
    %v1539 = vsel %vm625, %v1480, 0
    %v1542 = vsel %vm629, %v1356, 0
    %1544 = vmatpush.bf16.msra.mxu0 0
    %1545 = vmatpush.bf16.msra.mxu0 0
    %1546 = vmatpush.bf16.msra.mxu0 0
    %1547 = vmatpush.bf16.msra.mxu0 0
    %1548 = vmatpush.bf16.msra.mxu0 0
    %1549 = vmatpush.bf16.msra.mxu0 0
    %1550 = vmatpush.bf16.msra.mxu0 0
    %1551 = vmatpush.bf16.msra.mxu0 %v1542
    %1552 = vmatmul.bf16.gmra.mxu0 %v1539
    %v1553 = vpop.f32.mrf.mxu0
    %v1554 = vadd.f32 0.0, %v1553
    %v1555 = vpop.f32.mrf.mxu0
    %1556 = vdwg.mxu0
    %v1557 = vpack.c.bf16 %v1497, %v1497
    %v1558 = vpack.c.bf16 %v1516, %v1516
    %v1559 = vpack.c.bf16 %v1535, %v1535
    %v1560 = vpack.c.bf16 %v1554, %v1554
    %s1561 = scalar_lea.vmem %s6, 16
    %v1562 = vld [vmem:[%s1561] sm:$0xf]
    %v1563 = vld [vmem:[%s1561 + $0x4] sm:$0xf]
    %v1564 = vld [vmem:[%s1561 + $0x8] sm:$0xf]
    %v1565 = vld [vmem:[%s1561 + $0xc] sm:$0xf]
    %v1567 = vsel %vm499, %v1557, 0
    %v1570 = vsel %vm714, %v1562, 0
    %1572 = vmatpush.bf16.msra.mxu0 0
    %1573 = vmatpush.bf16.msra.mxu0 0
    %1574 = vmatpush.bf16.msra.mxu0 0
    %1575 = vmatpush.bf16.msra.mxu0 0
    %1576 = vmatpush.bf16.msra.mxu0 0
    %1577 = vmatpush.bf16.msra.mxu0 0
    %1578 = vmatpush.bf16.msra.mxu0 0
    %1579 = vmatpush.bf16.msra.mxu0 %v1570
    %1580 = vmatmul.bf16.gmra.mxu0 %v1567
    %v1581 = vpop.f32.mrf.mxu0
    %v1582 = vadd.f32 0.0, %v1581
    %v1583 = vpop.f32.mrf.mxu0
    %1584 = vdwg.mxu0
    %v1586 = vsel %vm499, %v1558, 0
    %v1589 = vsel %vm714, %v1563, 0
    %1591 = vmatpush.bf16.msra.mxu0 0
    %1592 = vmatpush.bf16.msra.mxu0 0
    %1593 = vmatpush.bf16.msra.mxu0 0
    %1594 = vmatpush.bf16.msra.mxu0 0
    %1595 = vmatpush.bf16.msra.mxu0 0
    %1596 = vmatpush.bf16.msra.mxu0 0
    %1597 = vmatpush.bf16.msra.mxu0 0
    %1598 = vmatpush.bf16.msra.mxu0 %v1589
    %1599 = vmatmul.bf16.gmra.mxu0 %v1586
    %v1600 = vpop.f32.mrf.mxu0
    %v1601 = vadd.f32 0.0, %v1600
    %v1602 = vpop.f32.mrf.mxu0
    %1603 = vdwg.mxu0
    %v1605 = vsel %vm499, %v1559, 0
    %v1608 = vsel %vm714, %v1564, 0
    %1610 = vmatpush.bf16.msra.mxu0 0
    %1611 = vmatpush.bf16.msra.mxu0 0
    %1612 = vmatpush.bf16.msra.mxu0 0
    %1613 = vmatpush.bf16.msra.mxu0 0
    %1614 = vmatpush.bf16.msra.mxu0 0
    %1615 = vmatpush.bf16.msra.mxu0 0
    %1616 = vmatpush.bf16.msra.mxu0 0
    %1617 = vmatpush.bf16.msra.mxu0 %v1608
    %1618 = vmatmul.bf16.gmra.mxu0 %v1605
    %v1619 = vpop.f32.mrf.mxu0
    %v1620 = vadd.f32 0.0, %v1619
    %v1621 = vpop.f32.mrf.mxu0
    %1622 = vdwg.mxu0
    %v1624 = vsel %vm499, %v1560, 0
    %v1627 = vsel %vm714, %v1565, 0
    %1629 = vmatpush.bf16.msra.mxu0 0
    %1630 = vmatpush.bf16.msra.mxu0 0
    %1631 = vmatpush.bf16.msra.mxu0 0
    %1632 = vmatpush.bf16.msra.mxu0 0
    %1633 = vmatpush.bf16.msra.mxu0 0
    %1634 = vmatpush.bf16.msra.mxu0 0
    %1635 = vmatpush.bf16.msra.mxu0 0
    %1636 = vmatpush.bf16.msra.mxu0 %v1627
    %1637 = vmatmul.bf16.gmra.mxu0 %v1624
    %v1638 = vpop.f32.mrf.mxu0
    %v1639 = vadd.f32 0.0, %v1638
    %v1640 = vpop.f32.mrf.mxu0
    %1641 = vdwg.mxu0
    %v1642 = vsel %vm89, %v1582, 0.0
    %v1643 = vsel %vm89, %v1601, 0.0
    %v1644 = vadd.f32 %v1642, %v1643
    %v1645 = vsel %vm89, %v1620, 0.0
    %v1646 = vadd.f32 %v1644, %v1645
    %v1647 = vsel %vm89, %v1639, 0.0
    %v1648 = vadd.f32 %v1646, %v1647
    %v1649 = vadd.f32 %v950, %v1648
    %v1650 = vperm.slane %v952, 4
    %v1651 = vadd.f32 %v1649, %v1650
    %v1652 = vsel %vm89, %v1651, 0.0
    %1653 = vadd.xlane.f32.xlu0 %v1652
    %v1654 = vpop.xlane.xlu0 %1653
    %v1655 = vmul.f32 %v1654, %v99
    %v1656 = vsub.f32 %v1651, %v1655
    %v1657 = vmul.f32 %v1656, %v1656
    %v1658 = vsel %vm89, %v1657, 0.0
    %1659 = vadd.xlane.f32.xlu0 %v1658
    %v1660 = vpop.xlane.xlu0 %1659
    %v1661 = vmul.f32 %v1660, %v99
    %v1662 = vadd.f32 %v1661, 1e-05
    %v1663 = vrsqrt.pop %v1662
    %v1664 = vmul.f32 %v1663, %v1662
    %v1665 = vmul.f32 %v1664, %v1663
    %v1666 = vmul.f32 0.5, %v1665
    %v1667 = vsub.f32 1.5, %v1666
    %v1668 = vmul.f32 %v1663, %v1667
    %vm1669 = vweird.f32 %v1662
    %vm1670 = vweird.f32 %v1663
    %vm1671 = vmor %vm1669, %vm1670
    %v1672 = vsel %vm1671, %v1663, %v1668
    %v1673 = vmul.f32 %v1656, %v1672
    %v1674 = vperm.slane %v952, 2
    %v1675 = vmul.f32 %v1673, %v1674
    %v1676 = vperm.slane %v952, 3
    %v1677 = vadd.f32 %v1675, %v1676
    %v1678 = vpack.c.bf16 %v1677, %v1677
    %s1679 = scalar_lea.vmem %s7, 16
    %v1680 = vld [vmem:[%s1679] sm:$0xf]
    %v1681 = vld [vmem:[%s1679 + $0x4] sm:$0xf]
    %v1682 = vld [vmem:[%s1679 + $0x8] sm:$0xf]
    %v1683 = vld [vmem:[%s1679 + $0xc] sm:$0xf]
    %s1684 = scalar_lea.vmem %s8, 1
    %v1685 = vld [vmem:[%s1684] sm:$0x1]
    %v1687 = vperm.slane %v1685, 0
    %v1693 = vunpack.c.l.b16 %v1680
    %v1694 = vunpack.c.l.b16 %v1681
    %v1695 = vunpack.c.l.b16 %v1682
    %v1696 = vunpack.c.l.b16 %v1683
    %v1697 = vpack.c.b16 %v1694, %v1693
    %v1698 = vpack.c.b16 %v1696, %v1695
    %v1702 = vsel %vm70, %v1678, 0
    %1704 = vmatpush.bf16.msra.mxu0 0
    %1705 = vmatpush.bf16.msra.mxu0 0
    %1706 = vmatpush.bf16.msra.mxu0 0
    %1707 = vmatpush.bf16.msra.mxu0 0
    %1708 = vmatpush.bf16.msra.mxu0 0
    %1709 = vmatpush.bf16.msra.mxu0 0
    %1710 = vmatpush.bf16.msra.mxu0 %v1698
    %1711 = vmatpush.bf16.msra.mxu0 %v1697
    %1712 = vmatmul.bf16.gmra.mxu0 %v1702
    %v1713 = vpop.f32.mrf.mxu0
    %v1714 = vadd.f32 %v1687, %v1713
    %v1715 = vpop.f32.mrf.mxu0
    %1716 = vdwg.mxu0
    %v1717 = vmul.f32 %v1714, %v1714
    %v1718 = vmul.f32 %v1714, %v1717
    %v1719 = vmul.f32 %v1718, 0.044715
    %v1720 = vadd.f32 %v1714, %v1719
    %v1721 = vmul.f32 %v1720, 0.7978846
    %v1722 = vtanh.pop %v1721
    %v1723 = vadd.f32 %v1722, 1.0
    %v1724 = vmul.f32 %v1723, 0.5
    %v1725 = vmul.f32 %v1714, %v1724
    %v1726 = vpack.c.bf16 %v1725, %v1725
    %s1727 = scalar_lea.vmem %s9, 64
    %v1728 = vld [vmem:[%s1727] sm:$0xf]
    %v1729 = vld [vmem:[%s1727 + $0x4] sm:$0xf]
    %v1730 = vld [vmem:[%s1727 + $0x8] sm:$0xf]
    %v1731 = vld [vmem:[%s1727 + $0xc] sm:$0xf]
    %v1732 = vld [vmem:[%s1727 + $0x10] sm:$0xf]
    %v1733 = vld [vmem:[%s1727 + $0x14] sm:$0xf]
    %v1734 = vld [vmem:[%s1727 + $0x18] sm:$0xf]
    %v1735 = vld [vmem:[%s1727 + $0x1c] sm:$0xf]
    %v1736 = vld [vmem:[%s1727 + $0x20] sm:$0xf]
    %v1737 = vld [vmem:[%s1727 + $0x24] sm:$0xf]
    %v1738 = vld [vmem:[%s1727 + $0x28] sm:$0xf]
    %v1739 = vld [vmem:[%s1727 + $0x2c] sm:$0xf]
    %v1740 = vld [vmem:[%s1727 + $0x30] sm:$0xf]
    %v1741 = vld [vmem:[%s1727 + $0x34] sm:$0xf]
    %v1742 = vld [vmem:[%s1727 + $0x38] sm:$0xf]
    %v1743 = vld [vmem:[%s1727 + $0x3c] sm:$0xf]
    %v1760 = vunpack.c.l.b16 %v1728
    %v1761 = vunpack.c.l.b16 %v1729
    %v1762 = vunpack.c.l.b16 %v1730
    %v1763 = vunpack.c.l.b16 %v1731
    %v1764 = vunpack.c.l.b16 %v1732
    %v1765 = vunpack.c.l.b16 %v1733
    %v1766 = vunpack.c.l.b16 %v1734
    %v1767 = vunpack.c.l.b16 %v1735
    %v1768 = vunpack.c.l.b16 %v1736
    %v1769 = vunpack.c.l.b16 %v1737
    %v1770 = vunpack.c.l.b16 %v1738
    %v1771 = vunpack.c.l.b16 %v1739
    %v1772 = vunpack.c.l.b16 %v1740
    %v1773 = vunpack.c.l.b16 %v1741
    %v1774 = vunpack.c.l.b16 %v1742
    %v1775 = vunpack.c.l.b16 %v1743
    %v1776 = vpack.c.b16 %v1761, %v1760
    %v1777 = vpack.c.b16 %v1763, %v1762
    %v1778 = vpack.c.b16 %v1765, %v1764
    %v1779 = vpack.c.b16 %v1767, %v1766
    %v1780 = vpack.c.b16 %v1769, %v1768
    %v1781 = vpack.c.b16 %v1771, %v1770
    %v1782 = vpack.c.b16 %v1773, %v1772
    %v1783 = vpack.c.b16 %v1775, %v1774
    %1792 = vmatpush.bf16.msra.mxu0 %v1783
    %1793 = vmatpush.bf16.msra.mxu0 %v1782
    %1794 = vmatpush.bf16.msra.mxu0 %v1781
    %1795 = vmatpush.bf16.msra.mxu0 %v1780
    %1796 = vmatpush.bf16.msra.mxu0 %v1779
    %1797 = vmatpush.bf16.msra.mxu0 %v1778
    %1798 = vmatpush.bf16.msra.mxu0 %v1777
    %1799 = vmatpush.bf16.msra.mxu0 %v1776
    %1800 = vmatmul.bf16.gmra.mxu0 %v1726
    %v1801 = vpop.f32.mrf.mxu0
    %v1802 = vadd.f32 0.0, %v1801
    %v1803 = vpop.f32.mrf.mxu0
    %1804 = vdwg.mxu0
    %v1805 = vadd.f32 %v1651, %v1802
    %v1806 = vperm.slane %v952, 5
    %v1807 = vadd.f32 %v1805, %v1806
    %s1808 = scalar_lea.vmem %s10, 16
    %v1809 = vld [vmem:[%s1808] sm:$0x3f]
    %v1810 = vsel %vm89, %v1807, 0.0
    %1811 = vadd.xlane.f32.xlu0 %v1810
    %v1812 = vpop.xlane.xlu0 %1811
    %v1813 = vmul.f32 %v1812, %v99
    %v1814 = vsub.f32 %v1807, %v1813
    %v1815 = vmul.f32 %v1814, %v1814
    %v1816 = vsel %vm89, %v1815, 0.0
    %1817 = vadd.xlane.f32.xlu0 %v1816
    %v1818 = vpop.xlane.xlu0 %1817
    %v1819 = vmul.f32 %v1818, %v99
    %v1820 = vadd.f32 %v1819, 1e-05
    %v1821 = vrsqrt.pop %v1820
    %v1822 = vmul.f32 %v1821, %v1820
    %v1823 = vmul.f32 %v1822, %v1821
    %v1824 = vmul.f32 0.5, %v1823
    %v1825 = vsub.f32 1.5, %v1824
    %v1826 = vmul.f32 %v1821, %v1825
    %vm1827 = vweird.f32 %v1820
    %vm1828 = vweird.f32 %v1821
    %vm1829 = vmor %vm1827, %vm1828
    %v1830 = vsel %vm1829, %v1821, %v1826
    %v1831 = vmul.f32 %v1814, %v1830
    %v1832 = vperm.slane %v1809, 0
    %v1833 = vmul.f32 %v1831, %v1832
    %v1834 = vperm.slane %v1809, 1
    %v1835 = vadd.f32 %v1833, %v1834
    %v1836 = vpack.c.bf16 %v1835, %v1835
    %s1837 = scalar_lea.vmem %s4, 384
    %v1838 = vld [vmem:[%s1837] sm:$0xf]
    %v1839 = vld [vmem:[%s1837 + $0x4] sm:$0xf]
    %v1840 = vld [vmem:[%s1837 + $0x8] sm:$0xf]
    %v1841 = vld [vmem:[%s1837 + $0xc] sm:$0xf]
    %v1842 = vld [vmem:[%s1837 + $0x10] sm:$0xf]
    %v1843 = vld [vmem:[%s1837 + $0x14] sm:$0xf]
    %v1844 = vld [vmem:[%s1837 + $0x18] sm:$0xf]
    %v1845 = vld [vmem:[%s1837 + $0x1c] sm:$0xf]
    %v1846 = vld [vmem:[%s1837 + $0x20] sm:$0xf]
    %v1847 = vld [vmem:[%s1837 + $0x24] sm:$0xf]
    %v1848 = vld [vmem:[%s1837 + $0x28] sm:$0xf]
    %v1849 = vld [vmem:[%s1837 + $0x2c] sm:$0xf]
    %v1850 = vld [vmem:[%s1837 + $0x30] sm:$0xf]
    %v1851 = vld [vmem:[%s1837 + $0x34] sm:$0xf]
    %v1852 = vld [vmem:[%s1837 + $0x38] sm:$0xf]
    %v1853 = vld [vmem:[%s1837 + $0x3c] sm:$0xf]
    %v1854 = vld [vmem:[%s1837 + $0x40] sm:$0xf]
    %v1855 = vld [vmem:[%s1837 + $0x44] sm:$0xf]
    %v1856 = vld [vmem:[%s1837 + $0x48] sm:$0xf]
    %v1857 = vld [vmem:[%s1837 + $0x4c] sm:$0xf]
    %v1858 = vld [vmem:[%s1837 + $0x50] sm:$0xf]
    %v1859 = vld [vmem:[%s1837 + $0x54] sm:$0xf]
    %v1860 = vld [vmem:[%s1837 + $0x58] sm:$0xf]
    %v1861 = vld [vmem:[%s1837 + $0x5c] sm:$0xf]
    %v1862 = vld [vmem:[%s1837 + $0x60] sm:$0xf]
    %v1863 = vld [vmem:[%s1837 + $0x64] sm:$0xf]
    %v1864 = vld [vmem:[%s1837 + $0x68] sm:$0xf]
    %v1865 = vld [vmem:[%s1837 + $0x6c] sm:$0xf]
    %v1866 = vld [vmem:[%s1837 + $0x70] sm:$0xf]
    %v1867 = vld [vmem:[%s1837 + $0x74] sm:$0xf]
    %v1868 = vld [vmem:[%s1837 + $0x78] sm:$0xf]
    %v1869 = vld [vmem:[%s1837 + $0x7c] sm:$0xf]
    %v1870 = vld [vmem:[%s1837 + $0x80] sm:$0xf]
    %v1871 = vld [vmem:[%s1837 + $0x84] sm:$0xf]
    %v1872 = vld [vmem:[%s1837 + $0x88] sm:$0xf]
    %v1873 = vld [vmem:[%s1837 + $0x8c] sm:$0xf]
    %v1874 = vld [vmem:[%s1837 + $0x90] sm:$0xf]
    %v1875 = vld [vmem:[%s1837 + $0x94] sm:$0xf]
    %v1876 = vld [vmem:[%s1837 + $0x98] sm:$0xf]
    %v1877 = vld [vmem:[%s1837 + $0x9c] sm:$0xf]
    %v1878 = vld [vmem:[%s1837 + $0xa0] sm:$0xf]
    %v1879 = vld [vmem:[%s1837 + $0xa4] sm:$0xf]
    %v1880 = vld [vmem:[%s1837 + $0xa8] sm:$0xf]
    %v1881 = vld [vmem:[%s1837 + $0xac] sm:$0xf]
    %v1882 = vld [vmem:[%s1837 + $0xb0] sm:$0xf]
    %v1883 = vld [vmem:[%s1837 + $0xb4] sm:$0xf]
    %v1884 = vld [vmem:[%s1837 + $0xb8] sm:$0xf]
    %v1885 = vld [vmem:[%s1837 + $0xbc] sm:$0xf]
    %s1886 = scalar_lea.vmem %s5, 192
    %v1887 = vld [vmem:[%s1886] sm:$0x3f]
    %v1888 = vld [vmem:[%s1886 + $0x8] sm:$0x3f]
    %v1889 = vld [vmem:[%s1886 + $0x10] sm:$0x3f]
    %v1890 = vld [vmem:[%s1886 + $0x18] sm:$0x3f]
    %v1891 = vld [vmem:[%s1886 + $0x20] sm:$0x3f]
    %v1892 = vld [vmem:[%s1886 + $0x28] sm:$0x3f]
    %v1893 = vld [vmem:[%s1886 + $0x30] sm:$0x3f]
    %v1894 = vld [vmem:[%s1886 + $0x38] sm:$0x3f]
    %v1895 = vld [vmem:[%s1886 + $0x40] sm:$0x3f]
    %v1896 = vld [vmem:[%s1886 + $0x48] sm:$0x3f]
    %v1897 = vld [vmem:[%s1886 + $0x50] sm:$0x3f]
    %v1898 = vld [vmem:[%s1886 + $0x58] sm:$0x3f]
    %v1903 = vunpack.c.l.b16 %v1838
    %v1904 = vunpack.c.l.b16 %v1839
    %v1905 = vunpack.c.l.b16 %v1840
    %v1906 = vunpack.c.l.b16 %v1841
    %v1907 = vpack.c.b16 %v1904, %v1903
    %v1908 = vpack.c.b16 %v1906, %v1905
    %v1912 = vsel %vm70, %v1836, 0
    %1914 = vmatpush.bf16.msra.mxu0 0
    %1915 = vmatpush.bf16.msra.mxu0 0
    %1916 = vmatpush.bf16.msra.mxu0 0
    %1917 = vmatpush.bf16.msra.mxu0 0
    %1918 = vmatpush.bf16.msra.mxu0 0
    %1919 = vmatpush.bf16.msra.mxu0 0
    %1920 = vmatpush.bf16.msra.mxu0 %v1908
    %1921 = vmatpush.bf16.msra.mxu0 %v1907
    %1922 = vmatmul.bf16.gmra.mxu0 %v1912
    %v1923 = vpop.f32.mrf.mxu0
    %v1924 = vadd.f32 %v1887, %v1923
    %v1925 = vpop.f32.mrf.mxu0
    %1926 = vdwg.mxu0
    %v1931 = vunpack.c.l.b16 %v1842
    %v1932 = vunpack.c.l.b16 %v1843
    %v1933 = vunpack.c.l.b16 %v1844
    %v1934 = vunpack.c.l.b16 %v1845
    %v1935 = vpack.c.b16 %v1932, %v1931
    %v1936 = vpack.c.b16 %v1934, %v1933
    %1939 = vmatpush.bf16.msra.mxu0 0
    %1940 = vmatpush.bf16.msra.mxu0 0
    %1941 = vmatpush.bf16.msra.mxu0 0
    %1942 = vmatpush.bf16.msra.mxu0 0
    %1943 = vmatpush.bf16.msra.mxu0 0
    %1944 = vmatpush.bf16.msra.mxu0 0
    %1945 = vmatpush.bf16.msra.mxu0 %v1936
    %1946 = vmatpush.bf16.msra.mxu0 %v1935
    %1947 = vmatmul.bf16.gmra.mxu0 %v1912
    %v1948 = vpop.f32.mrf.mxu0
    %v1949 = vadd.f32 %v1888, %v1948
    %v1950 = vpop.f32.mrf.mxu0
    %1951 = vdwg.mxu0
    %v1956 = vunpack.c.l.b16 %v1846
    %v1957 = vunpack.c.l.b16 %v1847
    %v1958 = vunpack.c.l.b16 %v1848
    %v1959 = vunpack.c.l.b16 %v1849
    %v1960 = vpack.c.b16 %v1957, %v1956
    %v1961 = vpack.c.b16 %v1959, %v1958
    %1964 = vmatpush.bf16.msra.mxu0 0
    %1965 = vmatpush.bf16.msra.mxu0 0
    %1966 = vmatpush.bf16.msra.mxu0 0
    %1967 = vmatpush.bf16.msra.mxu0 0
    %1968 = vmatpush.bf16.msra.mxu0 0
    %1969 = vmatpush.bf16.msra.mxu0 0
    %1970 = vmatpush.bf16.msra.mxu0 %v1961
    %1971 = vmatpush.bf16.msra.mxu0 %v1960
    %1972 = vmatmul.bf16.gmra.mxu0 %v1912
    %v1973 = vpop.f32.mrf.mxu0
    %v1974 = vadd.f32 %v1889, %v1973
    %v1975 = vpop.f32.mrf.mxu0
    %1976 = vdwg.mxu0
    %v1981 = vunpack.c.l.b16 %v1850
    %v1982 = vunpack.c.l.b16 %v1851
    %v1983 = vunpack.c.l.b16 %v1852
    %v1984 = vunpack.c.l.b16 %v1853
    %v1985 = vpack.c.b16 %v1982, %v1981
    %v1986 = vpack.c.b16 %v1984, %v1983
    %1989 = vmatpush.bf16.msra.mxu0 0
    %1990 = vmatpush.bf16.msra.mxu0 0
    %1991 = vmatpush.bf16.msra.mxu0 0
    %1992 = vmatpush.bf16.msra.mxu0 0
    %1993 = vmatpush.bf16.msra.mxu0 0
    %1994 = vmatpush.bf16.msra.mxu0 0
    %1995 = vmatpush.bf16.msra.mxu0 %v1986
    %1996 = vmatpush.bf16.msra.mxu0 %v1985
    %1997 = vmatmul.bf16.gmra.mxu0 %v1912
    %v1998 = vpop.f32.mrf.mxu0
    %v1999 = vadd.f32 %v1890, %v1998
    %v2000 = vpop.f32.mrf.mxu0
    %2001 = vdwg.mxu0
    %v2006 = vunpack.c.l.b16 %v1854
    %v2007 = vunpack.c.l.b16 %v1855
    %v2008 = vunpack.c.l.b16 %v1856
    %v2009 = vunpack.c.l.b16 %v1857
    %v2010 = vpack.c.b16 %v2007, %v2006
    %v2011 = vpack.c.b16 %v2009, %v2008
    %2014 = vmatpush.bf16.msra.mxu0 0
    %2015 = vmatpush.bf16.msra.mxu0 0
    %2016 = vmatpush.bf16.msra.mxu0 0
    %2017 = vmatpush.bf16.msra.mxu0 0
    %2018 = vmatpush.bf16.msra.mxu0 0
    %2019 = vmatpush.bf16.msra.mxu0 0
    %2020 = vmatpush.bf16.msra.mxu0 %v2011
    %2021 = vmatpush.bf16.msra.mxu0 %v2010
    %2022 = vmatmul.bf16.gmra.mxu0 %v1912
    %v2023 = vpop.f32.mrf.mxu0
    %v2024 = vadd.f32 %v1891, %v2023
    %v2025 = vpop.f32.mrf.mxu0
    %2026 = vdwg.mxu0
    %v2031 = vunpack.c.l.b16 %v1858
    %v2032 = vunpack.c.l.b16 %v1859
    %v2033 = vunpack.c.l.b16 %v1860
    %v2034 = vunpack.c.l.b16 %v1861
    %v2035 = vpack.c.b16 %v2032, %v2031
    %v2036 = vpack.c.b16 %v2034, %v2033
    %2039 = vmatpush.bf16.msra.mxu0 0
    %2040 = vmatpush.bf16.msra.mxu0 0
    %2041 = vmatpush.bf16.msra.mxu0 0
    %2042 = vmatpush.bf16.msra.mxu0 0
    %2043 = vmatpush.bf16.msra.mxu0 0
    %2044 = vmatpush.bf16.msra.mxu0 0
    %2045 = vmatpush.bf16.msra.mxu0 %v2036
    %2046 = vmatpush.bf16.msra.mxu0 %v2035
    %2047 = vmatmul.bf16.gmra.mxu0 %v1912
    %v2048 = vpop.f32.mrf.mxu0
    %v2049 = vadd.f32 %v1892, %v2048
    %v2050 = vpop.f32.mrf.mxu0
    %2051 = vdwg.mxu0
    %v2056 = vunpack.c.l.b16 %v1862
    %v2057 = vunpack.c.l.b16 %v1863
    %v2058 = vunpack.c.l.b16 %v1864
    %v2059 = vunpack.c.l.b16 %v1865
    %v2060 = vpack.c.b16 %v2057, %v2056
    %v2061 = vpack.c.b16 %v2059, %v2058
    %2064 = vmatpush.bf16.msra.mxu0 0
    %2065 = vmatpush.bf16.msra.mxu0 0
    %2066 = vmatpush.bf16.msra.mxu0 0
    %2067 = vmatpush.bf16.msra.mxu0 0
    %2068 = vmatpush.bf16.msra.mxu0 0
    %2069 = vmatpush.bf16.msra.mxu0 0
    %2070 = vmatpush.bf16.msra.mxu0 %v2061
    %2071 = vmatpush.bf16.msra.mxu0 %v2060
    %2072 = vmatmul.bf16.gmra.mxu0 %v1912
    %v2073 = vpop.f32.mrf.mxu0
    %v2074 = vadd.f32 %v1893, %v2073
    %v2075 = vpop.f32.mrf.mxu0
    %2076 = vdwg.mxu0
    %v2081 = vunpack.c.l.b16 %v1866
    %v2082 = vunpack.c.l.b16 %v1867
    %v2083 = vunpack.c.l.b16 %v1868
    %v2084 = vunpack.c.l.b16 %v1869
    %v2085 = vpack.c.b16 %v2082, %v2081
    %v2086 = vpack.c.b16 %v2084, %v2083
    %2089 = vmatpush.bf16.msra.mxu0 0
    %2090 = vmatpush.bf16.msra.mxu0 0
    %2091 = vmatpush.bf16.msra.mxu0 0
    %2092 = vmatpush.bf16.msra.mxu0 0
    %2093 = vmatpush.bf16.msra.mxu0 0
    %2094 = vmatpush.bf16.msra.mxu0 0
    %2095 = vmatpush.bf16.msra.mxu0 %v2086
    %2096 = vmatpush.bf16.msra.mxu0 %v2085
    %2097 = vmatmul.bf16.gmra.mxu0 %v1912
    %v2098 = vpop.f32.mrf.mxu0
    %v2099 = vadd.f32 %v1894, %v2098
    %v2100 = vpop.f32.mrf.mxu0
    %2101 = vdwg.mxu0
    %v2106 = vunpack.c.l.b16 %v1870
    %v2107 = vunpack.c.l.b16 %v1871
    %v2108 = vunpack.c.l.b16 %v1872
    %v2109 = vunpack.c.l.b16 %v1873
    %v2110 = vpack.c.b16 %v2107, %v2106
    %v2111 = vpack.c.b16 %v2109, %v2108
    %2114 = vmatpush.bf16.msra.mxu0 0
    %2115 = vmatpush.bf16.msra.mxu0 0
    %2116 = vmatpush.bf16.msra.mxu0 0
    %2117 = vmatpush.bf16.msra.mxu0 0
    %2118 = vmatpush.bf16.msra.mxu0 0
    %2119 = vmatpush.bf16.msra.mxu0 0
    %2120 = vmatpush.bf16.msra.mxu0 %v2111
    %2121 = vmatpush.bf16.msra.mxu0 %v2110
    %2122 = vmatmul.bf16.gmra.mxu0 %v1912
    %v2123 = vpop.f32.mrf.mxu0
    %v2124 = vadd.f32 %v1895, %v2123
    %v2125 = vpop.f32.mrf.mxu0
    %2126 = vdwg.mxu0
    %v2131 = vunpack.c.l.b16 %v1874
    %v2132 = vunpack.c.l.b16 %v1875
    %v2133 = vunpack.c.l.b16 %v1876
    %v2134 = vunpack.c.l.b16 %v1877
    %v2135 = vpack.c.b16 %v2132, %v2131
    %v2136 = vpack.c.b16 %v2134, %v2133
    %2139 = vmatpush.bf16.msra.mxu0 0
    %2140 = vmatpush.bf16.msra.mxu0 0
    %2141 = vmatpush.bf16.msra.mxu0 0
    %2142 = vmatpush.bf16.msra.mxu0 0
    %2143 = vmatpush.bf16.msra.mxu0 0
    %2144 = vmatpush.bf16.msra.mxu0 0
    %2145 = vmatpush.bf16.msra.mxu0 %v2136
    %2146 = vmatpush.bf16.msra.mxu0 %v2135
    %2147 = vmatmul.bf16.gmra.mxu0 %v1912
    %v2148 = vpop.f32.mrf.mxu0
    %v2149 = vadd.f32 %v1896, %v2148
    %v2150 = vpop.f32.mrf.mxu0
    %2151 = vdwg.mxu0
    %v2156 = vunpack.c.l.b16 %v1878
    %v2157 = vunpack.c.l.b16 %v1879
    %v2158 = vunpack.c.l.b16 %v1880
    %v2159 = vunpack.c.l.b16 %v1881
    %v2160 = vpack.c.b16 %v2157, %v2156
    %v2161 = vpack.c.b16 %v2159, %v2158
    %2164 = vmatpush.bf16.msra.mxu0 0
    %2165 = vmatpush.bf16.msra.mxu0 0
    %2166 = vmatpush.bf16.msra.mxu0 0
    %2167 = vmatpush.bf16.msra.mxu0 0
    %2168 = vmatpush.bf16.msra.mxu0 0
    %2169 = vmatpush.bf16.msra.mxu0 0
    %2170 = vmatpush.bf16.msra.mxu0 %v2161
    %2171 = vmatpush.bf16.msra.mxu0 %v2160
    %2172 = vmatmul.bf16.gmra.mxu0 %v1912
    %v2173 = vpop.f32.mrf.mxu0
    %v2174 = vadd.f32 %v1897, %v2173
    %v2175 = vpop.f32.mrf.mxu0
    %2176 = vdwg.mxu0
    %v2181 = vunpack.c.l.b16 %v1882
    %v2182 = vunpack.c.l.b16 %v1883
    %v2183 = vunpack.c.l.b16 %v1884
    %v2184 = vunpack.c.l.b16 %v1885
    %v2185 = vpack.c.b16 %v2182, %v2181
    %v2186 = vpack.c.b16 %v2184, %v2183
    %2189 = vmatpush.bf16.msra.mxu0 0
    %2190 = vmatpush.bf16.msra.mxu0 0
    %2191 = vmatpush.bf16.msra.mxu0 0
    %2192 = vmatpush.bf16.msra.mxu0 0
    %2193 = vmatpush.bf16.msra.mxu0 0
    %2194 = vmatpush.bf16.msra.mxu0 0
    %2195 = vmatpush.bf16.msra.mxu0 %v2186
    %2196 = vmatpush.bf16.msra.mxu0 %v2185
    %2197 = vmatmul.bf16.gmra.mxu0 %v1912
    %v2198 = vpop.f32.mrf.mxu0
    %v2199 = vadd.f32 %v1898, %v2198
    %v2200 = vpop.f32.mrf.mxu0
    %2201 = vdwg.mxu0
    %v2202 = vpack.c.bf16 %v1924, %v1924
    %v2203 = vpack.c.bf16 %v1949, %v1949
    %v2204 = vpack.c.bf16 %v1974, %v1974
    %v2205 = vpack.c.bf16 %v1999, %v1999
    %v2206 = vpack.c.bf16 %v2024, %v2024
    %v2207 = vpack.c.bf16 %v2049, %v2049
    %v2208 = vpack.c.bf16 %v2074, %v2074
    %v2209 = vpack.c.bf16 %v2099, %v2099
    %v2210 = vpack.c.bf16 %v2124, %v2124
    %v2211 = vpack.c.bf16 %v2149, %v2149
    %v2212 = vpack.c.bf16 %v2174, %v2174
    %v2213 = vpack.c.bf16 %v2199, %v2199
    %v2215 = vsel %vm499, %v2202, 0
    %v2218 = vsel %vm499, %v2206, 0
    %2220 = vmatpush.bf16.xpose.msra.mxu0 0
    %2221 = vmatpush.bf16.xpose.msra.mxu0 0
    %2222 = vmatpush.bf16.xpose.msra.mxu0 0
    %2223 = vmatpush.bf16.xpose.msra.mxu0 0
    %2224 = vmatpush.bf16.xpose.msra.mxu0 0
    %2225 = vmatpush.bf16.xpose.msra.mxu0 0
    %2226 = vmatpush.bf16.xpose.msra.mxu0 0
    %2227 = vmatpush.bf16.xpose.msra.mxu0 %v2218
    %2228 = vmatmul.bf16.gmra.mxu0 %v2215
    %v2229 = vpop.f32.mrf.mxu0
    %v2230 = vadd.f32 %v87, %v2229
    %v2231 = vpop.f32.mrf.mxu0
    %2232 = vdwg.mxu0
    %v2234 = vsel %vm499, %v2203, 0
    %v2237 = vsel %vm499, %v2207, 0
    %2239 = vmatpush.bf16.xpose.msra.mxu0 0
    %2240 = vmatpush.bf16.xpose.msra.mxu0 0
    %2241 = vmatpush.bf16.xpose.msra.mxu0 0
    %2242 = vmatpush.bf16.xpose.msra.mxu0 0
    %2243 = vmatpush.bf16.xpose.msra.mxu0 0
    %2244 = vmatpush.bf16.xpose.msra.mxu0 0
    %2245 = vmatpush.bf16.xpose.msra.mxu0 0
    %2246 = vmatpush.bf16.xpose.msra.mxu0 %v2237
    %2247 = vmatmul.bf16.gmra.mxu0 %v2234
    %v2248 = vpop.f32.mrf.mxu0
    %v2249 = vadd.f32 %v87, %v2248
    %v2250 = vpop.f32.mrf.mxu0
    %2251 = vdwg.mxu0
    %v2253 = vsel %vm499, %v2204, 0
    %v2256 = vsel %vm499, %v2208, 0
    %2258 = vmatpush.bf16.xpose.msra.mxu0 0
    %2259 = vmatpush.bf16.xpose.msra.mxu0 0
    %2260 = vmatpush.bf16.xpose.msra.mxu0 0
    %2261 = vmatpush.bf16.xpose.msra.mxu0 0
    %2262 = vmatpush.bf16.xpose.msra.mxu0 0
    %2263 = vmatpush.bf16.xpose.msra.mxu0 0
    %2264 = vmatpush.bf16.xpose.msra.mxu0 0
    %2265 = vmatpush.bf16.xpose.msra.mxu0 %v2256
    %2266 = vmatmul.bf16.gmra.mxu0 %v2253
    %v2267 = vpop.f32.mrf.mxu0
    %v2268 = vadd.f32 %v87, %v2267
    %v2269 = vpop.f32.mrf.mxu0
    %2270 = vdwg.mxu0
    %v2272 = vsel %vm499, %v2205, 0
    %v2275 = vsel %vm499, %v2209, 0
    %2277 = vmatpush.bf16.xpose.msra.mxu0 0
    %2278 = vmatpush.bf16.xpose.msra.mxu0 0
    %2279 = vmatpush.bf16.xpose.msra.mxu0 0
    %2280 = vmatpush.bf16.xpose.msra.mxu0 0
    %2281 = vmatpush.bf16.xpose.msra.mxu0 0
    %2282 = vmatpush.bf16.xpose.msra.mxu0 0
    %2283 = vmatpush.bf16.xpose.msra.mxu0 0
    %2284 = vmatpush.bf16.xpose.msra.mxu0 %v2275
    %2285 = vmatmul.bf16.gmra.mxu0 %v2272
    %v2286 = vpop.f32.mrf.mxu0
    %v2287 = vadd.f32 %v87, %v2286
    %v2288 = vpop.f32.mrf.mxu0
    %2289 = vdwg.mxu0
    %v2290 = vsel %vm576, %v2230, -inf
    %2291 = vmax.xlane.f32.xlu0 %v2290
    %v2292 = vpop.xlane.xlu0 %2291
    %v2293 = vsel %vm576, %v2249, -inf
    %2294 = vmax.xlane.f32.xlu0 %v2293
    %v2295 = vpop.xlane.xlu0 %2294
    %v2296 = vsel %vm576, %v2268, -inf
    %2297 = vmax.xlane.f32.xlu0 %v2296
    %v2298 = vpop.xlane.xlu0 %2297
    %v2299 = vsel %vm576, %v2287, -inf
    %2300 = vmax.xlane.f32.xlu0 %v2299
    %v2301 = vpop.xlane.xlu0 %2300
    %v2302 = vsub.f32 %v2230, %v2292
    %v2303 = vsub.f32 %v2249, %v2295
    %v2304 = vsub.f32 %v2268, %v2298
    %v2305 = vsub.f32 %v2287, %v2301
    %v2306 = vmul.f32 %v2302, 1.442695
    %v2307 = vpow.pop %v2306
    %v2308 = vmul.f32 %v2303, 1.442695
    %v2309 = vpow.pop %v2308
    %v2310 = vmul.f32 %v2304, 1.442695
    %v2311 = vpow.pop %v2310
    %v2312 = vmul.f32 %v2305, 1.442695
    %v2313 = vpow.pop %v2312
    %v2314 = vsel %vm576, %v2307, 0.0
    %2315 = vadd.xlane.f32.xlu0 %v2314
    %v2316 = vpop.xlane.xlu0 %2315
    %v2317 = vsel %vm576, %v2309, 0.0
    %2318 = vadd.xlane.f32.xlu0 %v2317
    %v2319 = vpop.xlane.xlu0 %2318
    %v2320 = vsel %vm576, %v2311, 0.0
    %2321 = vadd.xlane.f32.xlu0 %v2320
    %v2322 = vpop.xlane.xlu0 %2321
    %v2323 = vsel %vm576, %v2313, 0.0
    %2324 = vadd.xlane.f32.xlu0 %v2323
    %v2325 = vpop.xlane.xlu0 %2324
    %v2326 = vrcp.pop %v2316
    %v2327 = vrcp.pop %v2319
    %v2328 = vrcp.pop %v2322
    %v2329 = vrcp.pop %v2325
    %v2330 = vmul.f32 %v2307, %v2326
    %v2331 = vmul.f32 %v2309, %v2327
    %v2332 = vmul.f32 %v2311, %v2328
    %v2333 = vmul.f32 %v2313, %v2329
    %v2334 = vpack.c.bf16 %v2330, %v2330
    %v2335 = vpack.c.bf16 %v2331, %v2331
    %v2336 = vpack.c.bf16 %v2332, %v2332
    %v2337 = vpack.c.bf16 %v2333, %v2333
    %v2339 = vsel %vm625, %v2334, 0
    %v2342 = vsel %vm629, %v2210, 0
    %2344 = vmatpush.bf16.msra.mxu0 0
    %2345 = vmatpush.bf16.msra.mxu0 0
    %2346 = vmatpush.bf16.msra.mxu0 0
    %2347 = vmatpush.bf16.msra.mxu0 0
    %2348 = vmatpush.bf16.msra.mxu0 0
    %2349 = vmatpush.bf16.msra.mxu0 0
    %2350 = vmatpush.bf16.msra.mxu0 0
    %2351 = vmatpush.bf16.msra.mxu0 %v2342
    %2352 = vmatmul.bf16.gmra.mxu0 %v2339
    %v2353 = vpop.f32.mrf.mxu0
    %v2354 = vadd.f32 0.0, %v2353
    %v2355 = vpop.f32.mrf.mxu0
    %2356 = vdwg.mxu0
    %v2358 = vsel %vm625, %v2335, 0
    %v2361 = vsel %vm629, %v2211, 0
    %2363 = vmatpush.bf16.msra.mxu0 0
    %2364 = vmatpush.bf16.msra.mxu0 0
    %2365 = vmatpush.bf16.msra.mxu0 0
    %2366 = vmatpush.bf16.msra.mxu0 0
    %2367 = vmatpush.bf16.msra.mxu0 0
    %2368 = vmatpush.bf16.msra.mxu0 0
    %2369 = vmatpush.bf16.msra.mxu0 0
    %2370 = vmatpush.bf16.msra.mxu0 %v2361
    %2371 = vmatmul.bf16.gmra.mxu0 %v2358
    %v2372 = vpop.f32.mrf.mxu0
    %v2373 = vadd.f32 0.0, %v2372
    %v2374 = vpop.f32.mrf.mxu0
    %2375 = vdwg.mxu0
    %v2377 = vsel %vm625, %v2336, 0
    %v2380 = vsel %vm629, %v2212, 0
    %2382 = vmatpush.bf16.msra.mxu0 0
    %2383 = vmatpush.bf16.msra.mxu0 0
    %2384 = vmatpush.bf16.msra.mxu0 0
    %2385 = vmatpush.bf16.msra.mxu0 0
    %2386 = vmatpush.bf16.msra.mxu0 0
    %2387 = vmatpush.bf16.msra.mxu0 0
    %2388 = vmatpush.bf16.msra.mxu0 0
    %2389 = vmatpush.bf16.msra.mxu0 %v2380
    %2390 = vmatmul.bf16.gmra.mxu0 %v2377
    %v2391 = vpop.f32.mrf.mxu0
    %v2392 = vadd.f32 0.0, %v2391
    %v2393 = vpop.f32.mrf.mxu0
    %2394 = vdwg.mxu0
    %v2396 = vsel %vm625, %v2337, 0
    %v2399 = vsel %vm629, %v2213, 0
    %2401 = vmatpush.bf16.msra.mxu0 0
    %2402 = vmatpush.bf16.msra.mxu0 0
    %2403 = vmatpush.bf16.msra.mxu0 0
    %2404 = vmatpush.bf16.msra.mxu0 0
    %2405 = vmatpush.bf16.msra.mxu0 0
    %2406 = vmatpush.bf16.msra.mxu0 0
    %2407 = vmatpush.bf16.msra.mxu0 0
    %2408 = vmatpush.bf16.msra.mxu0 %v2399
    %2409 = vmatmul.bf16.gmra.mxu0 %v2396
    %v2410 = vpop.f32.mrf.mxu0
    %v2411 = vadd.f32 0.0, %v2410
    %v2412 = vpop.f32.mrf.mxu0
    %2413 = vdwg.mxu0
    %v2414 = vpack.c.bf16 %v2354, %v2354
    %v2415 = vpack.c.bf16 %v2373, %v2373
    %v2416 = vpack.c.bf16 %v2392, %v2392
    %v2417 = vpack.c.bf16 %v2411, %v2411
    %s2418 = scalar_lea.vmem %s6, 32
    %v2419 = vld [vmem:[%s2418] sm:$0xf]
    %v2420 = vld [vmem:[%s2418 + $0x4] sm:$0xf]
    %v2421 = vld [vmem:[%s2418 + $0x8] sm:$0xf]
    %v2422 = vld [vmem:[%s2418 + $0xc] sm:$0xf]
    %v2424 = vsel %vm499, %v2414, 0
    %v2427 = vsel %vm714, %v2419, 0
    %2429 = vmatpush.bf16.msra.mxu0 0
    %2430 = vmatpush.bf16.msra.mxu0 0
    %2431 = vmatpush.bf16.msra.mxu0 0
    %2432 = vmatpush.bf16.msra.mxu0 0
    %2433 = vmatpush.bf16.msra.mxu0 0
    %2434 = vmatpush.bf16.msra.mxu0 0
    %2435 = vmatpush.bf16.msra.mxu0 0
    %2436 = vmatpush.bf16.msra.mxu0 %v2427
    %2437 = vmatmul.bf16.gmra.mxu0 %v2424
    %v2438 = vpop.f32.mrf.mxu0
    %v2439 = vadd.f32 0.0, %v2438
    %v2440 = vpop.f32.mrf.mxu0
    %2441 = vdwg.mxu0
    %v2443 = vsel %vm499, %v2415, 0
    %v2446 = vsel %vm714, %v2420, 0
    %2448 = vmatpush.bf16.msra.mxu0 0
    %2449 = vmatpush.bf16.msra.mxu0 0
    %2450 = vmatpush.bf16.msra.mxu0 0
    %2451 = vmatpush.bf16.msra.mxu0 0
    %2452 = vmatpush.bf16.msra.mxu0 0
    %2453 = vmatpush.bf16.msra.mxu0 0
    %2454 = vmatpush.bf16.msra.mxu0 0
    %2455 = vmatpush.bf16.msra.mxu0 %v2446
    %2456 = vmatmul.bf16.gmra.mxu0 %v2443
    %v2457 = vpop.f32.mrf.mxu0
    %v2458 = vadd.f32 0.0, %v2457
    %v2459 = vpop.f32.mrf.mxu0
    %2460 = vdwg.mxu0
    %v2462 = vsel %vm499, %v2416, 0
    %v2465 = vsel %vm714, %v2421, 0
    %2467 = vmatpush.bf16.msra.mxu0 0
    %2468 = vmatpush.bf16.msra.mxu0 0
    %2469 = vmatpush.bf16.msra.mxu0 0
    %2470 = vmatpush.bf16.msra.mxu0 0
    %2471 = vmatpush.bf16.msra.mxu0 0
    %2472 = vmatpush.bf16.msra.mxu0 0
    %2473 = vmatpush.bf16.msra.mxu0 0
    %2474 = vmatpush.bf16.msra.mxu0 %v2465
    %2475 = vmatmul.bf16.gmra.mxu0 %v2462
    %v2476 = vpop.f32.mrf.mxu0
    %v2477 = vadd.f32 0.0, %v2476
    %v2478 = vpop.f32.mrf.mxu0
    %2479 = vdwg.mxu0
    %v2481 = vsel %vm499, %v2417, 0
    %v2484 = vsel %vm714, %v2422, 0
    %2486 = vmatpush.bf16.msra.mxu0 0
    %2487 = vmatpush.bf16.msra.mxu0 0
    %2488 = vmatpush.bf16.msra.mxu0 0
    %2489 = vmatpush.bf16.msra.mxu0 0
    %2490 = vmatpush.bf16.msra.mxu0 0
    %2491 = vmatpush.bf16.msra.mxu0 0
    %2492 = vmatpush.bf16.msra.mxu0 0
    %2493 = vmatpush.bf16.msra.mxu0 %v2484
    %2494 = vmatmul.bf16.gmra.mxu0 %v2481
    %v2495 = vpop.f32.mrf.mxu0
    %v2496 = vadd.f32 0.0, %v2495
    %v2497 = vpop.f32.mrf.mxu0
    %2498 = vdwg.mxu0
    %v2499 = vsel %vm89, %v2439, 0.0
    %v2500 = vsel %vm89, %v2458, 0.0
    %v2501 = vadd.f32 %v2499, %v2500
    %v2502 = vsel %vm89, %v2477, 0.0
    %v2503 = vadd.f32 %v2501, %v2502
    %v2504 = vsel %vm89, %v2496, 0.0
    %v2505 = vadd.f32 %v2503, %v2504
    %v2506 = vadd.f32 %v1807, %v2505
    %v2507 = vperm.slane %v1809, 4
    %v2508 = vadd.f32 %v2506, %v2507
    %v2509 = vsel %vm89, %v2508, 0.0
    %2510 = vadd.xlane.f32.xlu0 %v2509
    %v2511 = vpop.xlane.xlu0 %2510
    %v2512 = vmul.f32 %v2511, %v99
    %v2513 = vsub.f32 %v2508, %v2512
    %v2514 = vmul.f32 %v2513, %v2513
    %v2515 = vsel %vm89, %v2514, 0.0
    %2516 = vadd.xlane.f32.xlu0 %v2515
    %v2517 = vpop.xlane.xlu0 %2516
    %v2518 = vmul.f32 %v2517, %v99
    %v2519 = vadd.f32 %v2518, 1e-05
    %v2520 = vrsqrt.pop %v2519
    %v2521 = vmul.f32 %v2520, %v2519
    %v2522 = vmul.f32 %v2521, %v2520
    %v2523 = vmul.f32 0.5, %v2522
    %v2524 = vsub.f32 1.5, %v2523
    %v2525 = vmul.f32 %v2520, %v2524
    %vm2526 = vweird.f32 %v2519
    %vm2527 = vweird.f32 %v2520
    %vm2528 = vmor %vm2526, %vm2527
    %v2529 = vsel %vm2528, %v2520, %v2525
    %v2530 = vmul.f32 %v2513, %v2529
    %v2531 = vperm.slane %v1809, 2
    %v2532 = vmul.f32 %v2530, %v2531
    %v2533 = vperm.slane %v1809, 3
    %v2534 = vadd.f32 %v2532, %v2533
    %v2535 = vpack.c.bf16 %v2534, %v2534
    %s2536 = scalar_lea.vmem %s7, 32
    %v2537 = vld [vmem:[%s2536] sm:$0xf]
    %v2538 = vld [vmem:[%s2536 + $0x4] sm:$0xf]
    %v2539 = vld [vmem:[%s2536 + $0x8] sm:$0xf]
    %v2540 = vld [vmem:[%s2536 + $0xc] sm:$0xf]
    %s2541 = scalar_lea.vmem %s8, 2
    %v2542 = vld [vmem:[%s2541] sm:$0x1]
    %v2544 = vperm.slane %v2542, 0
    %v2550 = vunpack.c.l.b16 %v2537
    %v2551 = vunpack.c.l.b16 %v2538
    %v2552 = vunpack.c.l.b16 %v2539
    %v2553 = vunpack.c.l.b16 %v2540
    %v2554 = vpack.c.b16 %v2551, %v2550
    %v2555 = vpack.c.b16 %v2553, %v2552
    %v2559 = vsel %vm70, %v2535, 0
    %2561 = vmatpush.bf16.msra.mxu0 0
    %2562 = vmatpush.bf16.msra.mxu0 0
    %2563 = vmatpush.bf16.msra.mxu0 0
    %2564 = vmatpush.bf16.msra.mxu0 0
    %2565 = vmatpush.bf16.msra.mxu0 0
    %2566 = vmatpush.bf16.msra.mxu0 0
    %2567 = vmatpush.bf16.msra.mxu0 %v2555
    %2568 = vmatpush.bf16.msra.mxu0 %v2554
    %2569 = vmatmul.bf16.gmra.mxu0 %v2559
    %v2570 = vpop.f32.mrf.mxu0
    %v2571 = vadd.f32 %v2544, %v2570
    %v2572 = vpop.f32.mrf.mxu0
    %2573 = vdwg.mxu0
    %v2574 = vmul.f32 %v2571, %v2571
    %v2575 = vmul.f32 %v2571, %v2574
    %v2576 = vmul.f32 %v2575, 0.044715
    %v2577 = vadd.f32 %v2571, %v2576
    %v2578 = vmul.f32 %v2577, 0.7978846
    %v2579 = vtanh.pop %v2578
    %v2580 = vadd.f32 %v2579, 1.0
    %v2581 = vmul.f32 %v2580, 0.5
    %v2582 = vmul.f32 %v2571, %v2581
    %v2583 = vpack.c.bf16 %v2582, %v2582
    %s2584 = scalar_lea.vmem %s9, 128
    %v2585 = vld [vmem:[%s2584] sm:$0xf]
    %v2586 = vld [vmem:[%s2584 + $0x4] sm:$0xf]
    %v2587 = vld [vmem:[%s2584 + $0x8] sm:$0xf]
    %v2588 = vld [vmem:[%s2584 + $0xc] sm:$0xf]
    %v2589 = vld [vmem:[%s2584 + $0x10] sm:$0xf]
    %v2590 = vld [vmem:[%s2584 + $0x14] sm:$0xf]
    %v2591 = vld [vmem:[%s2584 + $0x18] sm:$0xf]
    %v2592 = vld [vmem:[%s2584 + $0x1c] sm:$0xf]
    %v2593 = vld [vmem:[%s2584 + $0x20] sm:$0xf]
    %v2594 = vld [vmem:[%s2584 + $0x24] sm:$0xf]
    %v2595 = vld [vmem:[%s2584 + $0x28] sm:$0xf]
    %v2596 = vld [vmem:[%s2584 + $0x2c] sm:$0xf]
    %v2597 = vld [vmem:[%s2584 + $0x30] sm:$0xf]
    %v2598 = vld [vmem:[%s2584 + $0x34] sm:$0xf]
    %v2599 = vld [vmem:[%s2584 + $0x38] sm:$0xf]
    %v2600 = vld [vmem:[%s2584 + $0x3c] sm:$0xf]
    %v2617 = vunpack.c.l.b16 %v2585
    %v2618 = vunpack.c.l.b16 %v2586
    %v2619 = vunpack.c.l.b16 %v2587
    %v2620 = vunpack.c.l.b16 %v2588
    %v2621 = vunpack.c.l.b16 %v2589
    %v2622 = vunpack.c.l.b16 %v2590
    %v2623 = vunpack.c.l.b16 %v2591
    %v2624 = vunpack.c.l.b16 %v2592
    %v2625 = vunpack.c.l.b16 %v2593
    %v2626 = vunpack.c.l.b16 %v2594
    %v2627 = vunpack.c.l.b16 %v2595
    %v2628 = vunpack.c.l.b16 %v2596
    %v2629 = vunpack.c.l.b16 %v2597
    %v2630 = vunpack.c.l.b16 %v2598
    %v2631 = vunpack.c.l.b16 %v2599
    %v2632 = vunpack.c.l.b16 %v2600
    %v2633 = vpack.c.b16 %v2618, %v2617
    %v2634 = vpack.c.b16 %v2620, %v2619
    %v2635 = vpack.c.b16 %v2622, %v2621
    %v2636 = vpack.c.b16 %v2624, %v2623
    %v2637 = vpack.c.b16 %v2626, %v2625
    %v2638 = vpack.c.b16 %v2628, %v2627
    %v2639 = vpack.c.b16 %v2630, %v2629
    %v2640 = vpack.c.b16 %v2632, %v2631
    %2649 = vmatpush.bf16.msra.mxu0 %v2640
    %2650 = vmatpush.bf16.msra.mxu0 %v2639
    %2651 = vmatpush.bf16.msra.mxu0 %v2638
    %2652 = vmatpush.bf16.msra.mxu0 %v2637
    %2653 = vmatpush.bf16.msra.mxu0 %v2636
    %2654 = vmatpush.bf16.msra.mxu0 %v2635
    %2655 = vmatpush.bf16.msra.mxu0 %v2634
    %2656 = vmatpush.bf16.msra.mxu0 %v2633
    %2657 = vmatmul.bf16.gmra.mxu0 %v2583
    %v2658 = vpop.f32.mrf.mxu0
    %v2659 = vadd.f32 0.0, %v2658
    %v2660 = vpop.f32.mrf.mxu0
    %2661 = vdwg.mxu0
    %v2662 = vadd.f32 %v2508, %v2659
    %v2663 = vperm.slane %v1809, 5
    %v2664 = vadd.f32 %v2662, %v2663
    %s2665 = scalar_lea.vmem %s10, 24
    %v2666 = vld [vmem:[%s2665] sm:$0x3f]
    %v2667 = vsel %vm89, %v2664, 0.0
    %2668 = vadd.xlane.f32.xlu0 %v2667
    %v2669 = vpop.xlane.xlu0 %2668
    %v2670 = vmul.f32 %v2669, %v99
    %v2671 = vsub.f32 %v2664, %v2670
    %v2672 = vmul.f32 %v2671, %v2671
    %v2673 = vsel %vm89, %v2672, 0.0
    %2674 = vadd.xlane.f32.xlu0 %v2673
    %v2675 = vpop.xlane.xlu0 %2674
    %v2676 = vmul.f32 %v2675, %v99
    %v2677 = vadd.f32 %v2676, 1e-05
    %v2678 = vrsqrt.pop %v2677
    %v2679 = vmul.f32 %v2678, %v2677
    %v2680 = vmul.f32 %v2679, %v2678
    %v2681 = vmul.f32 0.5, %v2680
    %v2682 = vsub.f32 1.5, %v2681
    %v2683 = vmul.f32 %v2678, %v2682
    %vm2684 = vweird.f32 %v2677
    %vm2685 = vweird.f32 %v2678
    %vm2686 = vmor %vm2684, %vm2685
    %v2687 = vsel %vm2686, %v2678, %v2683
    %v2688 = vmul.f32 %v2671, %v2687
    %v2689 = vperm.slane %v2666, 0
    %v2690 = vmul.f32 %v2688, %v2689
    %v2691 = vperm.slane %v2666, 1
    %v2692 = vadd.f32 %v2690, %v2691
    %v2693 = vpack.c.bf16 %v2692, %v2692
    %s2694 = scalar_lea.vmem %s4, 576
    %v2695 = vld [vmem:[%s2694] sm:$0xf]
    %v2696 = vld [vmem:[%s2694 + $0x4] sm:$0xf]
    %v2697 = vld [vmem:[%s2694 + $0x8] sm:$0xf]
    %v2698 = vld [vmem:[%s2694 + $0xc] sm:$0xf]
    %v2699 = vld [vmem:[%s2694 + $0x10] sm:$0xf]
    %v2700 = vld [vmem:[%s2694 + $0x14] sm:$0xf]
    %v2701 = vld [vmem:[%s2694 + $0x18] sm:$0xf]
    %v2702 = vld [vmem:[%s2694 + $0x1c] sm:$0xf]
    %v2703 = vld [vmem:[%s2694 + $0x20] sm:$0xf]
    %v2704 = vld [vmem:[%s2694 + $0x24] sm:$0xf]
    %v2705 = vld [vmem:[%s2694 + $0x28] sm:$0xf]
    %v2706 = vld [vmem:[%s2694 + $0x2c] sm:$0xf]
    %v2707 = vld [vmem:[%s2694 + $0x30] sm:$0xf]
    %v2708 = vld [vmem:[%s2694 + $0x34] sm:$0xf]
    %v2709 = vld [vmem:[%s2694 + $0x38] sm:$0xf]
    %v2710 = vld [vmem:[%s2694 + $0x3c] sm:$0xf]
    %v2711 = vld [vmem:[%s2694 + $0x40] sm:$0xf]
    %v2712 = vld [vmem:[%s2694 + $0x44] sm:$0xf]
    %v2713 = vld [vmem:[%s2694 + $0x48] sm:$0xf]
    %v2714 = vld [vmem:[%s2694 + $0x4c] sm:$0xf]
    %v2715 = vld [vmem:[%s2694 + $0x50] sm:$0xf]
    %v2716 = vld [vmem:[%s2694 + $0x54] sm:$0xf]
    %v2717 = vld [vmem:[%s2694 + $0x58] sm:$0xf]
    %v2718 = vld [vmem:[%s2694 + $0x5c] sm:$0xf]
    %v2719 = vld [vmem:[%s2694 + $0x60] sm:$0xf]
    %v2720 = vld [vmem:[%s2694 + $0x64] sm:$0xf]
    %v2721 = vld [vmem:[%s2694 + $0x68] sm:$0xf]
    %v2722 = vld [vmem:[%s2694 + $0x6c] sm:$0xf]
    %v2723 = vld [vmem:[%s2694 + $0x70] sm:$0xf]
    %v2724 = vld [vmem:[%s2694 + $0x74] sm:$0xf]
    %v2725 = vld [vmem:[%s2694 + $0x78] sm:$0xf]
    %v2726 = vld [vmem:[%s2694 + $0x7c] sm:$0xf]
    %v2727 = vld [vmem:[%s2694 + $0x80] sm:$0xf]
    %v2728 = vld [vmem:[%s2694 + $0x84] sm:$0xf]
    %v2729 = vld [vmem:[%s2694 + $0x88] sm:$0xf]
    %v2730 = vld [vmem:[%s2694 + $0x8c] sm:$0xf]
    %v2731 = vld [vmem:[%s2694 + $0x90] sm:$0xf]
    %v2732 = vld [vmem:[%s2694 + $0x94] sm:$0xf]
    %v2733 = vld [vmem:[%s2694 + $0x98] sm:$0xf]
    %v2734 = vld [vmem:[%s2694 + $0x9c] sm:$0xf]
    %v2735 = vld [vmem:[%s2694 + $0xa0] sm:$0xf]
    %v2736 = vld [vmem:[%s2694 + $0xa4] sm:$0xf]
    %v2737 = vld [vmem:[%s2694 + $0xa8] sm:$0xf]
    %v2738 = vld [vmem:[%s2694 + $0xac] sm:$0xf]
    %v2739 = vld [vmem:[%s2694 + $0xb0] sm:$0xf]
    %v2740 = vld [vmem:[%s2694 + $0xb4] sm:$0xf]
    %v2741 = vld [vmem:[%s2694 + $0xb8] sm:$0xf]
    %v2742 = vld [vmem:[%s2694 + $0xbc] sm:$0xf]
    %s2743 = scalar_lea.vmem %s5, 288
    %v2744 = vld [vmem:[%s2743] sm:$0x3f]
    %v2745 = vld [vmem:[%s2743 + $0x8] sm:$0x3f]
    %v2746 = vld [vmem:[%s2743 + $0x10] sm:$0x3f]
    %v2747 = vld [vmem:[%s2743 + $0x18] sm:$0x3f]
    %v2748 = vld [vmem:[%s2743 + $0x20] sm:$0x3f]
    %v2749 = vld [vmem:[%s2743 + $0x28] sm:$0x3f]
    %v2750 = vld [vmem:[%s2743 + $0x30] sm:$0x3f]
    %v2751 = vld [vmem:[%s2743 + $0x38] sm:$0x3f]
    %v2752 = vld [vmem:[%s2743 + $0x40] sm:$0x3f]
    %v2753 = vld [vmem:[%s2743 + $0x48] sm:$0x3f]
    %v2754 = vld [vmem:[%s2743 + $0x50] sm:$0x3f]
    %v2755 = vld [vmem:[%s2743 + $0x58] sm:$0x3f]
    %v2760 = vunpack.c.l.b16 %v2695
    %v2761 = vunpack.c.l.b16 %v2696
    %v2762 = vunpack.c.l.b16 %v2697
    %v2763 = vunpack.c.l.b16 %v2698
    %v2764 = vpack.c.b16 %v2761, %v2760
    %v2765 = vpack.c.b16 %v2763, %v2762
    %v2769 = vsel %vm70, %v2693, 0
    %2771 = vmatpush.bf16.msra.mxu0 0
    %2772 = vmatpush.bf16.msra.mxu0 0
    %2773 = vmatpush.bf16.msra.mxu0 0
    %2774 = vmatpush.bf16.msra.mxu0 0
    %2775 = vmatpush.bf16.msra.mxu0 0
    %2776 = vmatpush.bf16.msra.mxu0 0
    %2777 = vmatpush.bf16.msra.mxu0 %v2765
    %2778 = vmatpush.bf16.msra.mxu0 %v2764
    %2779 = vmatmul.bf16.gmra.mxu0 %v2769
    %v2780 = vpop.f32.mrf.mxu0
    %v2781 = vadd.f32 %v2744, %v2780
    %v2782 = vpop.f32.mrf.mxu0
    %2783 = vdwg.mxu0
    %v2788 = vunpack.c.l.b16 %v2699
    %v2789 = vunpack.c.l.b16 %v2700
    %v2790 = vunpack.c.l.b16 %v2701
    %v2791 = vunpack.c.l.b16 %v2702
    %v2792 = vpack.c.b16 %v2789, %v2788
    %v2793 = vpack.c.b16 %v2791, %v2790
    %2796 = vmatpush.bf16.msra.mxu0 0
    %2797 = vmatpush.bf16.msra.mxu0 0
    %2798 = vmatpush.bf16.msra.mxu0 0
    %2799 = vmatpush.bf16.msra.mxu0 0
    %2800 = vmatpush.bf16.msra.mxu0 0
    %2801 = vmatpush.bf16.msra.mxu0 0
    %2802 = vmatpush.bf16.msra.mxu0 %v2793
    %2803 = vmatpush.bf16.msra.mxu0 %v2792
    %2804 = vmatmul.bf16.gmra.mxu0 %v2769
    %v2805 = vpop.f32.mrf.mxu0
    %v2806 = vadd.f32 %v2745, %v2805
    %v2807 = vpop.f32.mrf.mxu0
    %2808 = vdwg.mxu0
    %v2813 = vunpack.c.l.b16 %v2703
    %v2814 = vunpack.c.l.b16 %v2704
    %v2815 = vunpack.c.l.b16 %v2705
    %v2816 = vunpack.c.l.b16 %v2706
    %v2817 = vpack.c.b16 %v2814, %v2813
    %v2818 = vpack.c.b16 %v2816, %v2815
    %2821 = vmatpush.bf16.msra.mxu0 0
    %2822 = vmatpush.bf16.msra.mxu0 0
    %2823 = vmatpush.bf16.msra.mxu0 0
    %2824 = vmatpush.bf16.msra.mxu0 0
    %2825 = vmatpush.bf16.msra.mxu0 0
    %2826 = vmatpush.bf16.msra.mxu0 0
    %2827 = vmatpush.bf16.msra.mxu0 %v2818
    %2828 = vmatpush.bf16.msra.mxu0 %v2817
    %2829 = vmatmul.bf16.gmra.mxu0 %v2769
    %v2830 = vpop.f32.mrf.mxu0
    %v2831 = vadd.f32 %v2746, %v2830
    %v2832 = vpop.f32.mrf.mxu0
    %2833 = vdwg.mxu0
    %v2838 = vunpack.c.l.b16 %v2707
    %v2839 = vunpack.c.l.b16 %v2708
    %v2840 = vunpack.c.l.b16 %v2709
    %v2841 = vunpack.c.l.b16 %v2710
    %v2842 = vpack.c.b16 %v2839, %v2838
    %v2843 = vpack.c.b16 %v2841, %v2840
    %2846 = vmatpush.bf16.msra.mxu0 0
    %2847 = vmatpush.bf16.msra.mxu0 0
    %2848 = vmatpush.bf16.msra.mxu0 0
    %2849 = vmatpush.bf16.msra.mxu0 0
    %2850 = vmatpush.bf16.msra.mxu0 0
    %2851 = vmatpush.bf16.msra.mxu0 0
    %2852 = vmatpush.bf16.msra.mxu0 %v2843
    %2853 = vmatpush.bf16.msra.mxu0 %v2842
    %2854 = vmatmul.bf16.gmra.mxu0 %v2769
    %v2855 = vpop.f32.mrf.mxu0
    %v2856 = vadd.f32 %v2747, %v2855
    %v2857 = vpop.f32.mrf.mxu0
    %2858 = vdwg.mxu0
    %v2863 = vunpack.c.l.b16 %v2711
    %v2864 = vunpack.c.l.b16 %v2712
    %v2865 = vunpack.c.l.b16 %v2713
    %v2866 = vunpack.c.l.b16 %v2714
    %v2867 = vpack.c.b16 %v2864, %v2863
    %v2868 = vpack.c.b16 %v2866, %v2865
    %2871 = vmatpush.bf16.msra.mxu0 0
    %2872 = vmatpush.bf16.msra.mxu0 0
    %2873 = vmatpush.bf16.msra.mxu0 0
    %2874 = vmatpush.bf16.msra.mxu0 0
    %2875 = vmatpush.bf16.msra.mxu0 0
    %2876 = vmatpush.bf16.msra.mxu0 0
    %2877 = vmatpush.bf16.msra.mxu0 %v2868
    %2878 = vmatpush.bf16.msra.mxu0 %v2867
    %2879 = vmatmul.bf16.gmra.mxu0 %v2769
    %v2880 = vpop.f32.mrf.mxu0
    %v2881 = vadd.f32 %v2748, %v2880
    %v2882 = vpop.f32.mrf.mxu0
    %2883 = vdwg.mxu0
    %v2888 = vunpack.c.l.b16 %v2715
    %v2889 = vunpack.c.l.b16 %v2716
    %v2890 = vunpack.c.l.b16 %v2717
    %v2891 = vunpack.c.l.b16 %v2718
    %v2892 = vpack.c.b16 %v2889, %v2888
    %v2893 = vpack.c.b16 %v2891, %v2890
    %2896 = vmatpush.bf16.msra.mxu0 0
    %2897 = vmatpush.bf16.msra.mxu0 0
    %2898 = vmatpush.bf16.msra.mxu0 0
    %2899 = vmatpush.bf16.msra.mxu0 0
    %2900 = vmatpush.bf16.msra.mxu0 0
    %2901 = vmatpush.bf16.msra.mxu0 0
    %2902 = vmatpush.bf16.msra.mxu0 %v2893
    %2903 = vmatpush.bf16.msra.mxu0 %v2892
    %2904 = vmatmul.bf16.gmra.mxu0 %v2769
    %v2905 = vpop.f32.mrf.mxu0
    %v2906 = vadd.f32 %v2749, %v2905
    %v2907 = vpop.f32.mrf.mxu0
    %2908 = vdwg.mxu0
    %v2913 = vunpack.c.l.b16 %v2719
    %v2914 = vunpack.c.l.b16 %v2720
    %v2915 = vunpack.c.l.b16 %v2721
    %v2916 = vunpack.c.l.b16 %v2722
    %v2917 = vpack.c.b16 %v2914, %v2913
    %v2918 = vpack.c.b16 %v2916, %v2915
    %2921 = vmatpush.bf16.msra.mxu0 0
    %2922 = vmatpush.bf16.msra.mxu0 0
    %2923 = vmatpush.bf16.msra.mxu0 0
    %2924 = vmatpush.bf16.msra.mxu0 0
    %2925 = vmatpush.bf16.msra.mxu0 0
    %2926 = vmatpush.bf16.msra.mxu0 0
    %2927 = vmatpush.bf16.msra.mxu0 %v2918
    %2928 = vmatpush.bf16.msra.mxu0 %v2917
    %2929 = vmatmul.bf16.gmra.mxu0 %v2769
    %v2930 = vpop.f32.mrf.mxu0
    %v2931 = vadd.f32 %v2750, %v2930
    %v2932 = vpop.f32.mrf.mxu0
    %2933 = vdwg.mxu0
    %v2938 = vunpack.c.l.b16 %v2723
    %v2939 = vunpack.c.l.b16 %v2724
    %v2940 = vunpack.c.l.b16 %v2725
    %v2941 = vunpack.c.l.b16 %v2726
    %v2942 = vpack.c.b16 %v2939, %v2938
    %v2943 = vpack.c.b16 %v2941, %v2940
    %2946 = vmatpush.bf16.msra.mxu0 0
    %2947 = vmatpush.bf16.msra.mxu0 0
    %2948 = vmatpush.bf16.msra.mxu0 0
    %2949 = vmatpush.bf16.msra.mxu0 0
    %2950 = vmatpush.bf16.msra.mxu0 0
    %2951 = vmatpush.bf16.msra.mxu0 0
    %2952 = vmatpush.bf16.msra.mxu0 %v2943
    %2953 = vmatpush.bf16.msra.mxu0 %v2942
    %2954 = vmatmul.bf16.gmra.mxu0 %v2769
    %v2955 = vpop.f32.mrf.mxu0
    %v2956 = vadd.f32 %v2751, %v2955
    %v2957 = vpop.f32.mrf.mxu0
    %2958 = vdwg.mxu0
    %v2963 = vunpack.c.l.b16 %v2727
    %v2964 = vunpack.c.l.b16 %v2728
    %v2965 = vunpack.c.l.b16 %v2729
    %v2966 = vunpack.c.l.b16 %v2730
    %v2967 = vpack.c.b16 %v2964, %v2963
    %v2968 = vpack.c.b16 %v2966, %v2965
    %2971 = vmatpush.bf16.msra.mxu0 0
    %2972 = vmatpush.bf16.msra.mxu0 0
    %2973 = vmatpush.bf16.msra.mxu0 0
    %2974 = vmatpush.bf16.msra.mxu0 0
    %2975 = vmatpush.bf16.msra.mxu0 0
    %2976 = vmatpush.bf16.msra.mxu0 0
    %2977 = vmatpush.bf16.msra.mxu0 %v2968
    %2978 = vmatpush.bf16.msra.mxu0 %v2967
    %2979 = vmatmul.bf16.gmra.mxu0 %v2769
    %v2980 = vpop.f32.mrf.mxu0
    %v2981 = vadd.f32 %v2752, %v2980
    %v2982 = vpop.f32.mrf.mxu0
    %2983 = vdwg.mxu0
    %v2988 = vunpack.c.l.b16 %v2731
    %v2989 = vunpack.c.l.b16 %v2732
    %v2990 = vunpack.c.l.b16 %v2733
    %v2991 = vunpack.c.l.b16 %v2734
    %v2992 = vpack.c.b16 %v2989, %v2988
    %v2993 = vpack.c.b16 %v2991, %v2990
    %2996 = vmatpush.bf16.msra.mxu0 0
    %2997 = vmatpush.bf16.msra.mxu0 0
    %2998 = vmatpush.bf16.msra.mxu0 0
    %2999 = vmatpush.bf16.msra.mxu0 0
    %3000 = vmatpush.bf16.msra.mxu0 0
    %3001 = vmatpush.bf16.msra.mxu0 0
    %3002 = vmatpush.bf16.msra.mxu0 %v2993
    %3003 = vmatpush.bf16.msra.mxu0 %v2992
    %3004 = vmatmul.bf16.gmra.mxu0 %v2769
    %v3005 = vpop.f32.mrf.mxu0
    %v3006 = vadd.f32 %v2753, %v3005
    %v3007 = vpop.f32.mrf.mxu0
    %3008 = vdwg.mxu0
    %v3013 = vunpack.c.l.b16 %v2735
    %v3014 = vunpack.c.l.b16 %v2736
    %v3015 = vunpack.c.l.b16 %v2737
    %v3016 = vunpack.c.l.b16 %v2738
    %v3017 = vpack.c.b16 %v3014, %v3013
    %v3018 = vpack.c.b16 %v3016, %v3015
    %3021 = vmatpush.bf16.msra.mxu0 0
    %3022 = vmatpush.bf16.msra.mxu0 0
    %3023 = vmatpush.bf16.msra.mxu0 0
    %3024 = vmatpush.bf16.msra.mxu0 0
    %3025 = vmatpush.bf16.msra.mxu0 0
    %3026 = vmatpush.bf16.msra.mxu0 0
    %3027 = vmatpush.bf16.msra.mxu0 %v3018
    %3028 = vmatpush.bf16.msra.mxu0 %v3017
    %3029 = vmatmul.bf16.gmra.mxu0 %v2769
    %v3030 = vpop.f32.mrf.mxu0
    %v3031 = vadd.f32 %v2754, %v3030
    %v3032 = vpop.f32.mrf.mxu0
    %3033 = vdwg.mxu0
    %v3038 = vunpack.c.l.b16 %v2739
    %v3039 = vunpack.c.l.b16 %v2740
    %v3040 = vunpack.c.l.b16 %v2741
    %v3041 = vunpack.c.l.b16 %v2742
    %v3042 = vpack.c.b16 %v3039, %v3038
    %v3043 = vpack.c.b16 %v3041, %v3040
    %3046 = vmatpush.bf16.msra.mxu0 0
    %3047 = vmatpush.bf16.msra.mxu0 0
    %3048 = vmatpush.bf16.msra.mxu0 0
    %3049 = vmatpush.bf16.msra.mxu0 0
    %3050 = vmatpush.bf16.msra.mxu0 0
    %3051 = vmatpush.bf16.msra.mxu0 0
    %3052 = vmatpush.bf16.msra.mxu0 %v3043
    %3053 = vmatpush.bf16.msra.mxu0 %v3042
    %3054 = vmatmul.bf16.gmra.mxu0 %v2769
    %v3055 = vpop.f32.mrf.mxu0
    %v3056 = vadd.f32 %v2755, %v3055
    %v3057 = vpop.f32.mrf.mxu0
    %3058 = vdwg.mxu0
    %v3059 = vpack.c.bf16 %v2781, %v2781
    %v3060 = vpack.c.bf16 %v2806, %v2806
    %v3061 = vpack.c.bf16 %v2831, %v2831
    %v3062 = vpack.c.bf16 %v2856, %v2856
    %v3063 = vpack.c.bf16 %v2881, %v2881
    %v3064 = vpack.c.bf16 %v2906, %v2906
    %v3065 = vpack.c.bf16 %v2931, %v2931
    %v3066 = vpack.c.bf16 %v2956, %v2956
    %v3067 = vpack.c.bf16 %v2981, %v2981
    %v3068 = vpack.c.bf16 %v3006, %v3006
    %v3069 = vpack.c.bf16 %v3031, %v3031
    %v3070 = vpack.c.bf16 %v3056, %v3056
    %v3072 = vsel %vm499, %v3059, 0
    %v3075 = vsel %vm499, %v3063, 0
    %3077 = vmatpush.bf16.xpose.msra.mxu0 0
    %3078 = vmatpush.bf16.xpose.msra.mxu0 0
    %3079 = vmatpush.bf16.xpose.msra.mxu0 0
    %3080 = vmatpush.bf16.xpose.msra.mxu0 0
    %3081 = vmatpush.bf16.xpose.msra.mxu0 0
    %3082 = vmatpush.bf16.xpose.msra.mxu0 0
    %3083 = vmatpush.bf16.xpose.msra.mxu0 0
    %3084 = vmatpush.bf16.xpose.msra.mxu0 %v3075
    %3085 = vmatmul.bf16.gmra.mxu0 %v3072
    %v3086 = vpop.f32.mrf.mxu0
    %v3087 = vadd.f32 %v87, %v3086
    %v3088 = vpop.f32.mrf.mxu0
    %3089 = vdwg.mxu0
    %v3091 = vsel %vm499, %v3060, 0
    %v3094 = vsel %vm499, %v3064, 0
    %3096 = vmatpush.bf16.xpose.msra.mxu0 0
    %3097 = vmatpush.bf16.xpose.msra.mxu0 0
    %3098 = vmatpush.bf16.xpose.msra.mxu0 0
    %3099 = vmatpush.bf16.xpose.msra.mxu0 0
    %3100 = vmatpush.bf16.xpose.msra.mxu0 0
    %3101 = vmatpush.bf16.xpose.msra.mxu0 0
    %3102 = vmatpush.bf16.xpose.msra.mxu0 0
    %3103 = vmatpush.bf16.xpose.msra.mxu0 %v3094
    %3104 = vmatmul.bf16.gmra.mxu0 %v3091
    %v3105 = vpop.f32.mrf.mxu0
    %v3106 = vadd.f32 %v87, %v3105
    %v3107 = vpop.f32.mrf.mxu0
    %3108 = vdwg.mxu0
    %v3110 = vsel %vm499, %v3061, 0
    %v3113 = vsel %vm499, %v3065, 0
    %3115 = vmatpush.bf16.xpose.msra.mxu0 0
    %3116 = vmatpush.bf16.xpose.msra.mxu0 0
    %3117 = vmatpush.bf16.xpose.msra.mxu0 0
    %3118 = vmatpush.bf16.xpose.msra.mxu0 0
    %3119 = vmatpush.bf16.xpose.msra.mxu0 0
    %3120 = vmatpush.bf16.xpose.msra.mxu0 0
    %3121 = vmatpush.bf16.xpose.msra.mxu0 0
    %3122 = vmatpush.bf16.xpose.msra.mxu0 %v3113
    %3123 = vmatmul.bf16.gmra.mxu0 %v3110
    %v3124 = vpop.f32.mrf.mxu0
    %v3125 = vadd.f32 %v87, %v3124
    %v3126 = vpop.f32.mrf.mxu0
    %3127 = vdwg.mxu0
    %v3129 = vsel %vm499, %v3062, 0
    %v3132 = vsel %vm499, %v3066, 0
    %3134 = vmatpush.bf16.xpose.msra.mxu0 0
    %3135 = vmatpush.bf16.xpose.msra.mxu0 0
    %3136 = vmatpush.bf16.xpose.msra.mxu0 0
    %3137 = vmatpush.bf16.xpose.msra.mxu0 0
    %3138 = vmatpush.bf16.xpose.msra.mxu0 0
    %3139 = vmatpush.bf16.xpose.msra.mxu0 0
    %3140 = vmatpush.bf16.xpose.msra.mxu0 0
    %3141 = vmatpush.bf16.xpose.msra.mxu0 %v3132
    %3142 = vmatmul.bf16.gmra.mxu0 %v3129
    %v3143 = vpop.f32.mrf.mxu0
    %v3144 = vadd.f32 %v87, %v3143
    %v3145 = vpop.f32.mrf.mxu0
    %3146 = vdwg.mxu0
    %v3147 = vsel %vm576, %v3087, -inf
    %3148 = vmax.xlane.f32.xlu0 %v3147
    %v3149 = vpop.xlane.xlu0 %3148
    %v3150 = vsel %vm576, %v3106, -inf
    %3151 = vmax.xlane.f32.xlu0 %v3150
    %v3152 = vpop.xlane.xlu0 %3151
    %v3153 = vsel %vm576, %v3125, -inf
    %3154 = vmax.xlane.f32.xlu0 %v3153
    %v3155 = vpop.xlane.xlu0 %3154
    %v3156 = vsel %vm576, %v3144, -inf
    %3157 = vmax.xlane.f32.xlu0 %v3156
    %v3158 = vpop.xlane.xlu0 %3157
    %v3159 = vsub.f32 %v3087, %v3149
    %v3160 = vsub.f32 %v3106, %v3152
    %v3161 = vsub.f32 %v3125, %v3155
    %v3162 = vsub.f32 %v3144, %v3158
    %v3163 = vmul.f32 %v3159, 1.442695
    %v3164 = vpow.pop %v3163
    %v3165 = vmul.f32 %v3160, 1.442695
    %v3166 = vpow.pop %v3165
    %v3167 = vmul.f32 %v3161, 1.442695
    %v3168 = vpow.pop %v3167
    %v3169 = vmul.f32 %v3162, 1.442695
    %v3170 = vpow.pop %v3169
    %v3171 = vsel %vm576, %v3164, 0.0
    %3172 = vadd.xlane.f32.xlu0 %v3171
    %v3173 = vpop.xlane.xlu0 %3172
    %v3174 = vsel %vm576, %v3166, 0.0
    %3175 = vadd.xlane.f32.xlu0 %v3174
    %v3176 = vpop.xlane.xlu0 %3175
    %v3177 = vsel %vm576, %v3168, 0.0
    %3178 = vadd.xlane.f32.xlu0 %v3177
    %v3179 = vpop.xlane.xlu0 %3178
    %v3180 = vsel %vm576, %v3170, 0.0
    %3181 = vadd.xlane.f32.xlu0 %v3180
    %v3182 = vpop.xlane.xlu0 %3181
    %v3183 = vrcp.pop %v3173
    %v3184 = vrcp.pop %v3176
    %v3185 = vrcp.pop %v3179
    %v3186 = vrcp.pop %v3182
    %v3187 = vmul.f32 %v3164, %v3183
    %v3188 = vmul.f32 %v3166, %v3184
    %v3189 = vmul.f32 %v3168, %v3185
    %v3190 = vmul.f32 %v3170, %v3186
    %v3191 = vpack.c.bf16 %v3187, %v3187
    %v3192 = vpack.c.bf16 %v3188, %v3188
    %v3193 = vpack.c.bf16 %v3189, %v3189
    %v3194 = vpack.c.bf16 %v3190, %v3190
    %v3196 = vsel %vm625, %v3191, 0
    %v3199 = vsel %vm629, %v3067, 0
    %3201 = vmatpush.bf16.msra.mxu0 0
    %3202 = vmatpush.bf16.msra.mxu0 0
    %3203 = vmatpush.bf16.msra.mxu0 0
    %3204 = vmatpush.bf16.msra.mxu0 0
    %3205 = vmatpush.bf16.msra.mxu0 0
    %3206 = vmatpush.bf16.msra.mxu0 0
    %3207 = vmatpush.bf16.msra.mxu0 0
    %3208 = vmatpush.bf16.msra.mxu0 %v3199
    %3209 = vmatmul.bf16.gmra.mxu0 %v3196
    %v3210 = vpop.f32.mrf.mxu0
    %v3211 = vadd.f32 0.0, %v3210
    %v3212 = vpop.f32.mrf.mxu0
    %3213 = vdwg.mxu0
    %v3215 = vsel %vm625, %v3192, 0
    %v3218 = vsel %vm629, %v3068, 0
    %3220 = vmatpush.bf16.msra.mxu0 0
    %3221 = vmatpush.bf16.msra.mxu0 0
    %3222 = vmatpush.bf16.msra.mxu0 0
    %3223 = vmatpush.bf16.msra.mxu0 0
    %3224 = vmatpush.bf16.msra.mxu0 0
    %3225 = vmatpush.bf16.msra.mxu0 0
    %3226 = vmatpush.bf16.msra.mxu0 0
    %3227 = vmatpush.bf16.msra.mxu0 %v3218
    %3228 = vmatmul.bf16.gmra.mxu0 %v3215
    %v3229 = vpop.f32.mrf.mxu0
    %v3230 = vadd.f32 0.0, %v3229
    %v3231 = vpop.f32.mrf.mxu0
    %3232 = vdwg.mxu0
    %v3234 = vsel %vm625, %v3193, 0
    %v3237 = vsel %vm629, %v3069, 0
    %3239 = vmatpush.bf16.msra.mxu0 0
    %3240 = vmatpush.bf16.msra.mxu0 0
    %3241 = vmatpush.bf16.msra.mxu0 0
    %3242 = vmatpush.bf16.msra.mxu0 0
    %3243 = vmatpush.bf16.msra.mxu0 0
    %3244 = vmatpush.bf16.msra.mxu0 0
    %3245 = vmatpush.bf16.msra.mxu0 0
    %3246 = vmatpush.bf16.msra.mxu0 %v3237
    %3247 = vmatmul.bf16.gmra.mxu0 %v3234
    %v3248 = vpop.f32.mrf.mxu0
    %v3249 = vadd.f32 0.0, %v3248
    %v3250 = vpop.f32.mrf.mxu0
    %3251 = vdwg.mxu0
    %v3253 = vsel %vm625, %v3194, 0
    %v3256 = vsel %vm629, %v3070, 0
    %3258 = vmatpush.bf16.msra.mxu0 0
    %3259 = vmatpush.bf16.msra.mxu0 0
    %3260 = vmatpush.bf16.msra.mxu0 0
    %3261 = vmatpush.bf16.msra.mxu0 0
    %3262 = vmatpush.bf16.msra.mxu0 0
    %3263 = vmatpush.bf16.msra.mxu0 0
    %3264 = vmatpush.bf16.msra.mxu0 0
    %3265 = vmatpush.bf16.msra.mxu0 %v3256
    %3266 = vmatmul.bf16.gmra.mxu0 %v3253
    %v3267 = vpop.f32.mrf.mxu0
    %v3268 = vadd.f32 0.0, %v3267
    %v3269 = vpop.f32.mrf.mxu0
    %3270 = vdwg.mxu0
    %v3271 = vpack.c.bf16 %v3211, %v3211
    %v3272 = vpack.c.bf16 %v3230, %v3230
    %v3273 = vpack.c.bf16 %v3249, %v3249
    %v3274 = vpack.c.bf16 %v3268, %v3268
    %s3275 = scalar_lea.vmem %s6, 48
    %v3276 = vld [vmem:[%s3275] sm:$0xf]
    %v3277 = vld [vmem:[%s3275 + $0x4] sm:$0xf]
    %v3278 = vld [vmem:[%s3275 + $0x8] sm:$0xf]
    %v3279 = vld [vmem:[%s3275 + $0xc] sm:$0xf]
    %v3281 = vsel %vm499, %v3271, 0
    %v3284 = vsel %vm714, %v3276, 0
    %3286 = vmatpush.bf16.msra.mxu0 0
    %3287 = vmatpush.bf16.msra.mxu0 0
    %3288 = vmatpush.bf16.msra.mxu0 0
    %3289 = vmatpush.bf16.msra.mxu0 0
    %3290 = vmatpush.bf16.msra.mxu0 0
    %3291 = vmatpush.bf16.msra.mxu0 0
    %3292 = vmatpush.bf16.msra.mxu0 0
    %3293 = vmatpush.bf16.msra.mxu0 %v3284
    %3294 = vmatmul.bf16.gmra.mxu0 %v3281
    %v3295 = vpop.f32.mrf.mxu0
    %v3296 = vadd.f32 0.0, %v3295
    %v3297 = vpop.f32.mrf.mxu0
    %3298 = vdwg.mxu0
    %v3300 = vsel %vm499, %v3272, 0
    %v3303 = vsel %vm714, %v3277, 0
    %3305 = vmatpush.bf16.msra.mxu0 0
    %3306 = vmatpush.bf16.msra.mxu0 0
    %3307 = vmatpush.bf16.msra.mxu0 0
    %3308 = vmatpush.bf16.msra.mxu0 0
    %3309 = vmatpush.bf16.msra.mxu0 0
    %3310 = vmatpush.bf16.msra.mxu0 0
    %3311 = vmatpush.bf16.msra.mxu0 0
    %3312 = vmatpush.bf16.msra.mxu0 %v3303
    %3313 = vmatmul.bf16.gmra.mxu0 %v3300
    %v3314 = vpop.f32.mrf.mxu0
    %v3315 = vadd.f32 0.0, %v3314
    %v3316 = vpop.f32.mrf.mxu0
    %3317 = vdwg.mxu0
    %v3319 = vsel %vm499, %v3273, 0
    %v3322 = vsel %vm714, %v3278, 0
    %3324 = vmatpush.bf16.msra.mxu0 0
    %3325 = vmatpush.bf16.msra.mxu0 0
    %3326 = vmatpush.bf16.msra.mxu0 0
    %3327 = vmatpush.bf16.msra.mxu0 0
    %3328 = vmatpush.bf16.msra.mxu0 0
    %3329 = vmatpush.bf16.msra.mxu0 0
    %3330 = vmatpush.bf16.msra.mxu0 0
    %3331 = vmatpush.bf16.msra.mxu0 %v3322
    %3332 = vmatmul.bf16.gmra.mxu0 %v3319
    %v3333 = vpop.f32.mrf.mxu0
    %v3334 = vadd.f32 0.0, %v3333
    %v3335 = vpop.f32.mrf.mxu0
    %3336 = vdwg.mxu0
    %v3338 = vsel %vm499, %v3274, 0
    %v3341 = vsel %vm714, %v3279, 0
    %3343 = vmatpush.bf16.msra.mxu0 0
    %3344 = vmatpush.bf16.msra.mxu0 0
    %3345 = vmatpush.bf16.msra.mxu0 0
    %3346 = vmatpush.bf16.msra.mxu0 0
    %3347 = vmatpush.bf16.msra.mxu0 0
    %3348 = vmatpush.bf16.msra.mxu0 0
    %3349 = vmatpush.bf16.msra.mxu0 0
    %3350 = vmatpush.bf16.msra.mxu0 %v3341
    %3351 = vmatmul.bf16.gmra.mxu0 %v3338
    %v3352 = vpop.f32.mrf.mxu0
    %v3353 = vadd.f32 0.0, %v3352
    %v3354 = vpop.f32.mrf.mxu0
    %3355 = vdwg.mxu0
    %v3356 = vsel %vm89, %v3296, 0.0
    %v3357 = vsel %vm89, %v3315, 0.0
    %v3358 = vadd.f32 %v3356, %v3357
    %v3359 = vsel %vm89, %v3334, 0.0
    %v3360 = vadd.f32 %v3358, %v3359
    %v3361 = vsel %vm89, %v3353, 0.0
    %v3362 = vadd.f32 %v3360, %v3361
    %v3363 = vadd.f32 %v2664, %v3362
    %v3364 = vperm.slane %v2666, 4
    %v3365 = vadd.f32 %v3363, %v3364
    %v3366 = vsel %vm89, %v3365, 0.0
    %3367 = vadd.xlane.f32.xlu0 %v3366
    %v3368 = vpop.xlane.xlu0 %3367
    %v3369 = vmul.f32 %v3368, %v99
    %v3370 = vsub.f32 %v3365, %v3369
    %v3371 = vmul.f32 %v3370, %v3370
    %v3372 = vsel %vm89, %v3371, 0.0
    %3373 = vadd.xlane.f32.xlu0 %v3372
    %v3374 = vpop.xlane.xlu0 %3373
    %v3375 = vmul.f32 %v3374, %v99
    %v3376 = vadd.f32 %v3375, 1e-05
    %v3377 = vrsqrt.pop %v3376
    %v3378 = vmul.f32 %v3377, %v3376
    %v3379 = vmul.f32 %v3378, %v3377
    %v3380 = vmul.f32 0.5, %v3379
    %v3381 = vsub.f32 1.5, %v3380
    %v3382 = vmul.f32 %v3377, %v3381
    %vm3383 = vweird.f32 %v3376
    %vm3384 = vweird.f32 %v3377
    %vm3385 = vmor %vm3383, %vm3384
    %v3386 = vsel %vm3385, %v3377, %v3382
    %v3387 = vmul.f32 %v3370, %v3386
    %v3388 = vperm.slane %v2666, 2
    %v3389 = vmul.f32 %v3387, %v3388
    %v3390 = vperm.slane %v2666, 3
    %v3391 = vadd.f32 %v3389, %v3390
    %v3392 = vpack.c.bf16 %v3391, %v3391
    %s3393 = scalar_lea.vmem %s7, 48
    %v3394 = vld [vmem:[%s3393] sm:$0xf]
    %v3395 = vld [vmem:[%s3393 + $0x4] sm:$0xf]
    %v3396 = vld [vmem:[%s3393 + $0x8] sm:$0xf]
    %v3397 = vld [vmem:[%s3393 + $0xc] sm:$0xf]
    %s3398 = scalar_lea.vmem %s8, 3
    %v3399 = vld [vmem:[%s3398] sm:$0x1]
    %v3401 = vperm.slane %v3399, 0
    %v3407 = vunpack.c.l.b16 %v3394
    %v3408 = vunpack.c.l.b16 %v3395
    %v3409 = vunpack.c.l.b16 %v3396
    %v3410 = vunpack.c.l.b16 %v3397
    %v3411 = vpack.c.b16 %v3408, %v3407
    %v3412 = vpack.c.b16 %v3410, %v3409
    %v3416 = vsel %vm70, %v3392, 0
    %3418 = vmatpush.bf16.msra.mxu0 0
    %3419 = vmatpush.bf16.msra.mxu0 0
    %3420 = vmatpush.bf16.msra.mxu0 0
    %3421 = vmatpush.bf16.msra.mxu0 0
    %3422 = vmatpush.bf16.msra.mxu0 0
    %3423 = vmatpush.bf16.msra.mxu0 0
    %3424 = vmatpush.bf16.msra.mxu0 %v3412
    %3425 = vmatpush.bf16.msra.mxu0 %v3411
    %3426 = vmatmul.bf16.gmra.mxu0 %v3416
    %v3427 = vpop.f32.mrf.mxu0
    %v3428 = vadd.f32 %v3401, %v3427
    %v3429 = vpop.f32.mrf.mxu0
    %3430 = vdwg.mxu0
    %v3431 = vmul.f32 %v3428, %v3428
    %v3432 = vmul.f32 %v3428, %v3431
    %v3433 = vmul.f32 %v3432, 0.044715
    %v3434 = vadd.f32 %v3428, %v3433
    %v3435 = vmul.f32 %v3434, 0.7978846
    %v3436 = vtanh.pop %v3435
    %v3437 = vadd.f32 %v3436, 1.0
    %v3438 = vmul.f32 %v3437, 0.5
    %v3439 = vmul.f32 %v3428, %v3438
    %v3440 = vpack.c.bf16 %v3439, %v3439
    %s3441 = scalar_lea.vmem %s9, 192
    %v3442 = vld [vmem:[%s3441] sm:$0xf]
    %v3443 = vld [vmem:[%s3441 + $0x4] sm:$0xf]
    %v3444 = vld [vmem:[%s3441 + $0x8] sm:$0xf]
    %v3445 = vld [vmem:[%s3441 + $0xc] sm:$0xf]
    %v3446 = vld [vmem:[%s3441 + $0x10] sm:$0xf]
    %v3447 = vld [vmem:[%s3441 + $0x14] sm:$0xf]
    %v3448 = vld [vmem:[%s3441 + $0x18] sm:$0xf]
    %v3449 = vld [vmem:[%s3441 + $0x1c] sm:$0xf]
    %v3450 = vld [vmem:[%s3441 + $0x20] sm:$0xf]
    %v3451 = vld [vmem:[%s3441 + $0x24] sm:$0xf]
    %v3452 = vld [vmem:[%s3441 + $0x28] sm:$0xf]
    %v3453 = vld [vmem:[%s3441 + $0x2c] sm:$0xf]
    %v3454 = vld [vmem:[%s3441 + $0x30] sm:$0xf]
    %v3455 = vld [vmem:[%s3441 + $0x34] sm:$0xf]
    %v3456 = vld [vmem:[%s3441 + $0x38] sm:$0xf]
    %v3457 = vld [vmem:[%s3441 + $0x3c] sm:$0xf]
    %v3474 = vunpack.c.l.b16 %v3442
    %v3475 = vunpack.c.l.b16 %v3443
    %v3476 = vunpack.c.l.b16 %v3444
    %v3477 = vunpack.c.l.b16 %v3445
    %v3478 = vunpack.c.l.b16 %v3446
    %v3479 = vunpack.c.l.b16 %v3447
    %v3480 = vunpack.c.l.b16 %v3448
    %v3481 = vunpack.c.l.b16 %v3449
    %v3482 = vunpack.c.l.b16 %v3450
    %v3483 = vunpack.c.l.b16 %v3451
    %v3484 = vunpack.c.l.b16 %v3452
    %v3485 = vunpack.c.l.b16 %v3453
    %v3486 = vunpack.c.l.b16 %v3454
    %v3487 = vunpack.c.l.b16 %v3455
    %v3488 = vunpack.c.l.b16 %v3456
    %v3489 = vunpack.c.l.b16 %v3457
    %v3490 = vpack.c.b16 %v3475, %v3474
    %v3491 = vpack.c.b16 %v3477, %v3476
    %v3492 = vpack.c.b16 %v3479, %v3478
    %v3493 = vpack.c.b16 %v3481, %v3480
    %v3494 = vpack.c.b16 %v3483, %v3482
    %v3495 = vpack.c.b16 %v3485, %v3484
    %v3496 = vpack.c.b16 %v3487, %v3486
    %v3497 = vpack.c.b16 %v3489, %v3488
    %3506 = vmatpush.bf16.msra.mxu0 %v3497
    %3507 = vmatpush.bf16.msra.mxu0 %v3496
    %3508 = vmatpush.bf16.msra.mxu0 %v3495
    %3509 = vmatpush.bf16.msra.mxu0 %v3494
    %3510 = vmatpush.bf16.msra.mxu0 %v3493
    %3511 = vmatpush.bf16.msra.mxu0 %v3492
    %3512 = vmatpush.bf16.msra.mxu0 %v3491
    %3513 = vmatpush.bf16.msra.mxu0 %v3490
    %3514 = vmatmul.bf16.gmra.mxu0 %v3440
    %v3515 = vpop.f32.mrf.mxu0
    %v3516 = vadd.f32 0.0, %v3515
    %v3517 = vpop.f32.mrf.mxu0
    %3518 = vdwg.mxu0
    %v3519 = vadd.f32 %v3365, %v3516
    %v3520 = vperm.slane %v2666, 5
    %v3521 = vadd.f32 %v3519, %v3520
    %s3522 = scalar_lea.vmem %s10, 32
    %v3523 = vld [vmem:[%s3522] sm:$0x3f]
    %v3524 = vsel %vm89, %v3521, 0.0
    %3525 = vadd.xlane.f32.xlu0 %v3524
    %v3526 = vpop.xlane.xlu0 %3525
    %v3527 = vmul.f32 %v3526, %v99
    %v3528 = vsub.f32 %v3521, %v3527
    %v3529 = vmul.f32 %v3528, %v3528
    %v3530 = vsel %vm89, %v3529, 0.0
    %3531 = vadd.xlane.f32.xlu0 %v3530
    %v3532 = vpop.xlane.xlu0 %3531
    %v3533 = vmul.f32 %v3532, %v99
    %v3534 = vadd.f32 %v3533, 1e-05
    %v3535 = vrsqrt.pop %v3534
    %v3536 = vmul.f32 %v3535, %v3534
    %v3537 = vmul.f32 %v3536, %v3535
    %v3538 = vmul.f32 0.5, %v3537
    %v3539 = vsub.f32 1.5, %v3538
    %v3540 = vmul.f32 %v3535, %v3539
    %vm3541 = vweird.f32 %v3534
    %vm3542 = vweird.f32 %v3535
    %vm3543 = vmor %vm3541, %vm3542
    %v3544 = vsel %vm3543, %v3535, %v3540
    %v3545 = vmul.f32 %v3528, %v3544
    %v3546 = vperm.slane %v3523, 0
    %v3547 = vmul.f32 %v3545, %v3546
    %v3548 = vperm.slane %v3523, 1
    %v3549 = vadd.f32 %v3547, %v3548
    %v3550 = vpack.c.bf16 %v3549, %v3549
    %s3551 = scalar_lea.vmem %s4, 768
    %v3552 = vld [vmem:[%s3551] sm:$0xf]
    %v3553 = vld [vmem:[%s3551 + $0x4] sm:$0xf]
    %v3554 = vld [vmem:[%s3551 + $0x8] sm:$0xf]
    %v3555 = vld [vmem:[%s3551 + $0xc] sm:$0xf]
    %v3556 = vld [vmem:[%s3551 + $0x10] sm:$0xf]
    %v3557 = vld [vmem:[%s3551 + $0x14] sm:$0xf]
    %v3558 = vld [vmem:[%s3551 + $0x18] sm:$0xf]
    %v3559 = vld [vmem:[%s3551 + $0x1c] sm:$0xf]
    %v3560 = vld [vmem:[%s3551 + $0x20] sm:$0xf]
    %v3561 = vld [vmem:[%s3551 + $0x24] sm:$0xf]
    %v3562 = vld [vmem:[%s3551 + $0x28] sm:$0xf]
    %v3563 = vld [vmem:[%s3551 + $0x2c] sm:$0xf]
    %v3564 = vld [vmem:[%s3551 + $0x30] sm:$0xf]
    %v3565 = vld [vmem:[%s3551 + $0x34] sm:$0xf]
    %v3566 = vld [vmem:[%s3551 + $0x38] sm:$0xf]
    %v3567 = vld [vmem:[%s3551 + $0x3c] sm:$0xf]
    %v3568 = vld [vmem:[%s3551 + $0x40] sm:$0xf]
    %v3569 = vld [vmem:[%s3551 + $0x44] sm:$0xf]
    %v3570 = vld [vmem:[%s3551 + $0x48] sm:$0xf]
    %v3571 = vld [vmem:[%s3551 + $0x4c] sm:$0xf]
    %v3572 = vld [vmem:[%s3551 + $0x50] sm:$0xf]
    %v3573 = vld [vmem:[%s3551 + $0x54] sm:$0xf]
    %v3574 = vld [vmem:[%s3551 + $0x58] sm:$0xf]
    %v3575 = vld [vmem:[%s3551 + $0x5c] sm:$0xf]
    %v3576 = vld [vmem:[%s3551 + $0x60] sm:$0xf]
    %v3577 = vld [vmem:[%s3551 + $0x64] sm:$0xf]
    %v3578 = vld [vmem:[%s3551 + $0x68] sm:$0xf]
    %v3579 = vld [vmem:[%s3551 + $0x6c] sm:$0xf]
    %v3580 = vld [vmem:[%s3551 + $0x70] sm:$0xf]
    %v3581 = vld [vmem:[%s3551 + $0x74] sm:$0xf]
    %v3582 = vld [vmem:[%s3551 + $0x78] sm:$0xf]
    %v3583 = vld [vmem:[%s3551 + $0x7c] sm:$0xf]
    %v3584 = vld [vmem:[%s3551 + $0x80] sm:$0xf]
    %v3585 = vld [vmem:[%s3551 + $0x84] sm:$0xf]
    %v3586 = vld [vmem:[%s3551 + $0x88] sm:$0xf]
    %v3587 = vld [vmem:[%s3551 + $0x8c] sm:$0xf]
    %v3588 = vld [vmem:[%s3551 + $0x90] sm:$0xf]
    %v3589 = vld [vmem:[%s3551 + $0x94] sm:$0xf]
    %v3590 = vld [vmem:[%s3551 + $0x98] sm:$0xf]
    %v3591 = vld [vmem:[%s3551 + $0x9c] sm:$0xf]
    %v3592 = vld [vmem:[%s3551 + $0xa0] sm:$0xf]
    %v3593 = vld [vmem:[%s3551 + $0xa4] sm:$0xf]
    %v3594 = vld [vmem:[%s3551 + $0xa8] sm:$0xf]
    %v3595 = vld [vmem:[%s3551 + $0xac] sm:$0xf]
    %v3596 = vld [vmem:[%s3551 + $0xb0] sm:$0xf]
    %v3597 = vld [vmem:[%s3551 + $0xb4] sm:$0xf]
    %v3598 = vld [vmem:[%s3551 + $0xb8] sm:$0xf]
    %v3599 = vld [vmem:[%s3551 + $0xbc] sm:$0xf]
    %s3600 = scalar_lea.vmem %s5, 384
    %v3601 = vld [vmem:[%s3600] sm:$0x3f]
    %v3602 = vld [vmem:[%s3600 + $0x8] sm:$0x3f]
    %v3603 = vld [vmem:[%s3600 + $0x10] sm:$0x3f]
    %v3604 = vld [vmem:[%s3600 + $0x18] sm:$0x3f]
    %v3605 = vld [vmem:[%s3600 + $0x20] sm:$0x3f]
    %v3606 = vld [vmem:[%s3600 + $0x28] sm:$0x3f]
    %v3607 = vld [vmem:[%s3600 + $0x30] sm:$0x3f]
    %v3608 = vld [vmem:[%s3600 + $0x38] sm:$0x3f]
    %v3609 = vld [vmem:[%s3600 + $0x40] sm:$0x3f]
    %v3610 = vld [vmem:[%s3600 + $0x48] sm:$0x3f]
    %v3611 = vld [vmem:[%s3600 + $0x50] sm:$0x3f]
    %v3612 = vld [vmem:[%s3600 + $0x58] sm:$0x3f]
    %v3617 = vunpack.c.l.b16 %v3552
    %v3618 = vunpack.c.l.b16 %v3553
    %v3619 = vunpack.c.l.b16 %v3554
    %v3620 = vunpack.c.l.b16 %v3555
    %v3621 = vpack.c.b16 %v3618, %v3617
    %v3622 = vpack.c.b16 %v3620, %v3619
    %v3626 = vsel %vm70, %v3550, 0
    %3628 = vmatpush.bf16.msra.mxu0 0
    %3629 = vmatpush.bf16.msra.mxu0 0
    %3630 = vmatpush.bf16.msra.mxu0 0
    %3631 = vmatpush.bf16.msra.mxu0 0
    %3632 = vmatpush.bf16.msra.mxu0 0
    %3633 = vmatpush.bf16.msra.mxu0 0
    %3634 = vmatpush.bf16.msra.mxu0 %v3622
    %3635 = vmatpush.bf16.msra.mxu0 %v3621
    %3636 = vmatmul.bf16.gmra.mxu0 %v3626
    %v3637 = vpop.f32.mrf.mxu0
    %v3638 = vadd.f32 %v3601, %v3637
    %v3639 = vpop.f32.mrf.mxu0
    %3640 = vdwg.mxu0
    %v3645 = vunpack.c.l.b16 %v3556
    %v3646 = vunpack.c.l.b16 %v3557
    %v3647 = vunpack.c.l.b16 %v3558
    %v3648 = vunpack.c.l.b16 %v3559
    %v3649 = vpack.c.b16 %v3646, %v3645
    %v3650 = vpack.c.b16 %v3648, %v3647
    %3653 = vmatpush.bf16.msra.mxu0 0
    %3654 = vmatpush.bf16.msra.mxu0 0
    %3655 = vmatpush.bf16.msra.mxu0 0
    %3656 = vmatpush.bf16.msra.mxu0 0
    %3657 = vmatpush.bf16.msra.mxu0 0
    %3658 = vmatpush.bf16.msra.mxu0 0
    %3659 = vmatpush.bf16.msra.mxu0 %v3650
    %3660 = vmatpush.bf16.msra.mxu0 %v3649
    %3661 = vmatmul.bf16.gmra.mxu0 %v3626
    %v3662 = vpop.f32.mrf.mxu0
    %v3663 = vadd.f32 %v3602, %v3662
    %v3664 = vpop.f32.mrf.mxu0
    %3665 = vdwg.mxu0
    %v3670 = vunpack.c.l.b16 %v3560
    %v3671 = vunpack.c.l.b16 %v3561
    %v3672 = vunpack.c.l.b16 %v3562
    %v3673 = vunpack.c.l.b16 %v3563
    %v3674 = vpack.c.b16 %v3671, %v3670
    %v3675 = vpack.c.b16 %v3673, %v3672
    %3678 = vmatpush.bf16.msra.mxu0 0
    %3679 = vmatpush.bf16.msra.mxu0 0
    %3680 = vmatpush.bf16.msra.mxu0 0
    %3681 = vmatpush.bf16.msra.mxu0 0
    %3682 = vmatpush.bf16.msra.mxu0 0
    %3683 = vmatpush.bf16.msra.mxu0 0
    %3684 = vmatpush.bf16.msra.mxu0 %v3675
    %3685 = vmatpush.bf16.msra.mxu0 %v3674
    %3686 = vmatmul.bf16.gmra.mxu0 %v3626
    %v3687 = vpop.f32.mrf.mxu0
    %v3688 = vadd.f32 %v3603, %v3687
    %v3689 = vpop.f32.mrf.mxu0
    %3690 = vdwg.mxu0
    %v3695 = vunpack.c.l.b16 %v3564
    %v3696 = vunpack.c.l.b16 %v3565
    %v3697 = vunpack.c.l.b16 %v3566
    %v3698 = vunpack.c.l.b16 %v3567
    %v3699 = vpack.c.b16 %v3696, %v3695
    %v3700 = vpack.c.b16 %v3698, %v3697
    %3703 = vmatpush.bf16.msra.mxu0 0
    %3704 = vmatpush.bf16.msra.mxu0 0
    %3705 = vmatpush.bf16.msra.mxu0 0
    %3706 = vmatpush.bf16.msra.mxu0 0
    %3707 = vmatpush.bf16.msra.mxu0 0
    %3708 = vmatpush.bf16.msra.mxu0 0
    %3709 = vmatpush.bf16.msra.mxu0 %v3700
    %3710 = vmatpush.bf16.msra.mxu0 %v3699
    %3711 = vmatmul.bf16.gmra.mxu0 %v3626
    %v3712 = vpop.f32.mrf.mxu0
    %v3713 = vadd.f32 %v3604, %v3712
    %v3714 = vpop.f32.mrf.mxu0
    %3715 = vdwg.mxu0
    %v3720 = vunpack.c.l.b16 %v3568
    %v3721 = vunpack.c.l.b16 %v3569
    %v3722 = vunpack.c.l.b16 %v3570
    %v3723 = vunpack.c.l.b16 %v3571
    %v3724 = vpack.c.b16 %v3721, %v3720
    %v3725 = vpack.c.b16 %v3723, %v3722
    %3728 = vmatpush.bf16.msra.mxu0 0
    %3729 = vmatpush.bf16.msra.mxu0 0
    %3730 = vmatpush.bf16.msra.mxu0 0
    %3731 = vmatpush.bf16.msra.mxu0 0
    %3732 = vmatpush.bf16.msra.mxu0 0
    %3733 = vmatpush.bf16.msra.mxu0 0
    %3734 = vmatpush.bf16.msra.mxu0 %v3725
    %3735 = vmatpush.bf16.msra.mxu0 %v3724
    %3736 = vmatmul.bf16.gmra.mxu0 %v3626
    %v3737 = vpop.f32.mrf.mxu0
    %v3738 = vadd.f32 %v3605, %v3737
    %v3739 = vpop.f32.mrf.mxu0
    %3740 = vdwg.mxu0
    %v3745 = vunpack.c.l.b16 %v3572
    %v3746 = vunpack.c.l.b16 %v3573
    %v3747 = vunpack.c.l.b16 %v3574
    %v3748 = vunpack.c.l.b16 %v3575
    %v3749 = vpack.c.b16 %v3746, %v3745
    %v3750 = vpack.c.b16 %v3748, %v3747
    %3753 = vmatpush.bf16.msra.mxu0 0
    %3754 = vmatpush.bf16.msra.mxu0 0
    %3755 = vmatpush.bf16.msra.mxu0 0
    %3756 = vmatpush.bf16.msra.mxu0 0
    %3757 = vmatpush.bf16.msra.mxu0 0
    %3758 = vmatpush.bf16.msra.mxu0 0
    %3759 = vmatpush.bf16.msra.mxu0 %v3750
    %3760 = vmatpush.bf16.msra.mxu0 %v3749
    %3761 = vmatmul.bf16.gmra.mxu0 %v3626
    %v3762 = vpop.f32.mrf.mxu0
    %v3763 = vadd.f32 %v3606, %v3762
    %v3764 = vpop.f32.mrf.mxu0
    %3765 = vdwg.mxu0
    %v3770 = vunpack.c.l.b16 %v3576
    %v3771 = vunpack.c.l.b16 %v3577
    %v3772 = vunpack.c.l.b16 %v3578
    %v3773 = vunpack.c.l.b16 %v3579
    %v3774 = vpack.c.b16 %v3771, %v3770
    %v3775 = vpack.c.b16 %v3773, %v3772
    %3778 = vmatpush.bf16.msra.mxu0 0
    %3779 = vmatpush.bf16.msra.mxu0 0
    %3780 = vmatpush.bf16.msra.mxu0 0
    %3781 = vmatpush.bf16.msra.mxu0 0
    %3782 = vmatpush.bf16.msra.mxu0 0
    %3783 = vmatpush.bf16.msra.mxu0 0
    %3784 = vmatpush.bf16.msra.mxu0 %v3775
    %3785 = vmatpush.bf16.msra.mxu0 %v3774
    %3786 = vmatmul.bf16.gmra.mxu0 %v3626
    %v3787 = vpop.f32.mrf.mxu0
    %v3788 = vadd.f32 %v3607, %v3787
    %v3789 = vpop.f32.mrf.mxu0
    %3790 = vdwg.mxu0
    %v3795 = vunpack.c.l.b16 %v3580
    %v3796 = vunpack.c.l.b16 %v3581
    %v3797 = vunpack.c.l.b16 %v3582
    %v3798 = vunpack.c.l.b16 %v3583
    %v3799 = vpack.c.b16 %v3796, %v3795
    %v3800 = vpack.c.b16 %v3798, %v3797
    %3803 = vmatpush.bf16.msra.mxu0 0
    %3804 = vmatpush.bf16.msra.mxu0 0
    %3805 = vmatpush.bf16.msra.mxu0 0
    %3806 = vmatpush.bf16.msra.mxu0 0
    %3807 = vmatpush.bf16.msra.mxu0 0
    %3808 = vmatpush.bf16.msra.mxu0 0
    %3809 = vmatpush.bf16.msra.mxu0 %v3800
    %3810 = vmatpush.bf16.msra.mxu0 %v3799
    %3811 = vmatmul.bf16.gmra.mxu0 %v3626
    %v3812 = vpop.f32.mrf.mxu0
    %v3813 = vadd.f32 %v3608, %v3812
    %v3814 = vpop.f32.mrf.mxu0
    %3815 = vdwg.mxu0
    %v3820 = vunpack.c.l.b16 %v3584
    %v3821 = vunpack.c.l.b16 %v3585
    %v3822 = vunpack.c.l.b16 %v3586
    %v3823 = vunpack.c.l.b16 %v3587
    %v3824 = vpack.c.b16 %v3821, %v3820
    %v3825 = vpack.c.b16 %v3823, %v3822
    %3828 = vmatpush.bf16.msra.mxu0 0
    %3829 = vmatpush.bf16.msra.mxu0 0
    %3830 = vmatpush.bf16.msra.mxu0 0
    %3831 = vmatpush.bf16.msra.mxu0 0
    %3832 = vmatpush.bf16.msra.mxu0 0
    %3833 = vmatpush.bf16.msra.mxu0 0
    %3834 = vmatpush.bf16.msra.mxu0 %v3825
    %3835 = vmatpush.bf16.msra.mxu0 %v3824
    %3836 = vmatmul.bf16.gmra.mxu0 %v3626
    %v3837 = vpop.f32.mrf.mxu0
    %v3838 = vadd.f32 %v3609, %v3837
    %v3839 = vpop.f32.mrf.mxu0
    %3840 = vdwg.mxu0
    %v3845 = vunpack.c.l.b16 %v3588
    %v3846 = vunpack.c.l.b16 %v3589
    %v3847 = vunpack.c.l.b16 %v3590
    %v3848 = vunpack.c.l.b16 %v3591
    %v3849 = vpack.c.b16 %v3846, %v3845
    %v3850 = vpack.c.b16 %v3848, %v3847
    %3853 = vmatpush.bf16.msra.mxu0 0
    %3854 = vmatpush.bf16.msra.mxu0 0
    %3855 = vmatpush.bf16.msra.mxu0 0
    %3856 = vmatpush.bf16.msra.mxu0 0
    %3857 = vmatpush.bf16.msra.mxu0 0
    %3858 = vmatpush.bf16.msra.mxu0 0
    %3859 = vmatpush.bf16.msra.mxu0 %v3850
    %3860 = vmatpush.bf16.msra.mxu0 %v3849
    %3861 = vmatmul.bf16.gmra.mxu0 %v3626
    %v3862 = vpop.f32.mrf.mxu0
    %v3863 = vadd.f32 %v3610, %v3862
    %v3864 = vpop.f32.mrf.mxu0
    %3865 = vdwg.mxu0
    %v3870 = vunpack.c.l.b16 %v3592
    %v3871 = vunpack.c.l.b16 %v3593
    %v3872 = vunpack.c.l.b16 %v3594
    %v3873 = vunpack.c.l.b16 %v3595
    %v3874 = vpack.c.b16 %v3871, %v3870
    %v3875 = vpack.c.b16 %v3873, %v3872
    %3878 = vmatpush.bf16.msra.mxu0 0
    %3879 = vmatpush.bf16.msra.mxu0 0
    %3880 = vmatpush.bf16.msra.mxu0 0
    %3881 = vmatpush.bf16.msra.mxu0 0
    %3882 = vmatpush.bf16.msra.mxu0 0
    %3883 = vmatpush.bf16.msra.mxu0 0
    %3884 = vmatpush.bf16.msra.mxu0 %v3875
    %3885 = vmatpush.bf16.msra.mxu0 %v3874
    %3886 = vmatmul.bf16.gmra.mxu0 %v3626
    %v3887 = vpop.f32.mrf.mxu0
    %v3888 = vadd.f32 %v3611, %v3887
    %v3889 = vpop.f32.mrf.mxu0
    %3890 = vdwg.mxu0
    %v3895 = vunpack.c.l.b16 %v3596
    %v3896 = vunpack.c.l.b16 %v3597
    %v3897 = vunpack.c.l.b16 %v3598
    %v3898 = vunpack.c.l.b16 %v3599
    %v3899 = vpack.c.b16 %v3896, %v3895
    %v3900 = vpack.c.b16 %v3898, %v3897
    %3903 = vmatpush.bf16.msra.mxu0 0
    %3904 = vmatpush.bf16.msra.mxu0 0
    %3905 = vmatpush.bf16.msra.mxu0 0
    %3906 = vmatpush.bf16.msra.mxu0 0
    %3907 = vmatpush.bf16.msra.mxu0 0
    %3908 = vmatpush.bf16.msra.mxu0 0
    %3909 = vmatpush.bf16.msra.mxu0 %v3900
    %3910 = vmatpush.bf16.msra.mxu0 %v3899
    %3911 = vmatmul.bf16.gmra.mxu0 %v3626
    %v3912 = vpop.f32.mrf.mxu0
    %v3913 = vadd.f32 %v3612, %v3912
    %v3914 = vpop.f32.mrf.mxu0
    %3915 = vdwg.mxu0
    %v3916 = vpack.c.bf16 %v3638, %v3638
    %v3917 = vpack.c.bf16 %v3663, %v3663
    %v3918 = vpack.c.bf16 %v3688, %v3688
    %v3919 = vpack.c.bf16 %v3713, %v3713
    %v3920 = vpack.c.bf16 %v3738, %v3738
    %v3921 = vpack.c.bf16 %v3763, %v3763
    %v3922 = vpack.c.bf16 %v3788, %v3788
    %v3923 = vpack.c.bf16 %v3813, %v3813
    %v3924 = vpack.c.bf16 %v3838, %v3838
    %v3925 = vpack.c.bf16 %v3863, %v3863
    %v3926 = vpack.c.bf16 %v3888, %v3888
    %v3927 = vpack.c.bf16 %v3913, %v3913
    %v3929 = vsel %vm499, %v3916, 0
    %v3932 = vsel %vm499, %v3920, 0
    %3934 = vmatpush.bf16.xpose.msra.mxu0 0
    %3935 = vmatpush.bf16.xpose.msra.mxu0 0
    %3936 = vmatpush.bf16.xpose.msra.mxu0 0
    %3937 = vmatpush.bf16.xpose.msra.mxu0 0
    %3938 = vmatpush.bf16.xpose.msra.mxu0 0
    %3939 = vmatpush.bf16.xpose.msra.mxu0 0
    %3940 = vmatpush.bf16.xpose.msra.mxu0 0
    %3941 = vmatpush.bf16.xpose.msra.mxu0 %v3932
    %3942 = vmatmul.bf16.gmra.mxu0 %v3929
    %v3943 = vpop.f32.mrf.mxu0
    %v3944 = vadd.f32 %v87, %v3943
    %v3945 = vpop.f32.mrf.mxu0
    %3946 = vdwg.mxu0
    %v3948 = vsel %vm499, %v3917, 0
    %v3951 = vsel %vm499, %v3921, 0
    %3953 = vmatpush.bf16.xpose.msra.mxu0 0
    %3954 = vmatpush.bf16.xpose.msra.mxu0 0
    %3955 = vmatpush.bf16.xpose.msra.mxu0 0
    %3956 = vmatpush.bf16.xpose.msra.mxu0 0
    %3957 = vmatpush.bf16.xpose.msra.mxu0 0
    %3958 = vmatpush.bf16.xpose.msra.mxu0 0
    %3959 = vmatpush.bf16.xpose.msra.mxu0 0
    %3960 = vmatpush.bf16.xpose.msra.mxu0 %v3951
    %3961 = vmatmul.bf16.gmra.mxu0 %v3948
    %v3962 = vpop.f32.mrf.mxu0
    %v3963 = vadd.f32 %v87, %v3962
    %v3964 = vpop.f32.mrf.mxu0
    %3965 = vdwg.mxu0
    %v3967 = vsel %vm499, %v3918, 0
    %v3970 = vsel %vm499, %v3922, 0
    %3972 = vmatpush.bf16.xpose.msra.mxu0 0
    %3973 = vmatpush.bf16.xpose.msra.mxu0 0
    %3974 = vmatpush.bf16.xpose.msra.mxu0 0
    %3975 = vmatpush.bf16.xpose.msra.mxu0 0
    %3976 = vmatpush.bf16.xpose.msra.mxu0 0
    %3977 = vmatpush.bf16.xpose.msra.mxu0 0
    %3978 = vmatpush.bf16.xpose.msra.mxu0 0
    %3979 = vmatpush.bf16.xpose.msra.mxu0 %v3970
    %3980 = vmatmul.bf16.gmra.mxu0 %v3967
    %v3981 = vpop.f32.mrf.mxu0
    %v3982 = vadd.f32 %v87, %v3981
    %v3983 = vpop.f32.mrf.mxu0
    %3984 = vdwg.mxu0
    %v3986 = vsel %vm499, %v3919, 0
    %v3989 = vsel %vm499, %v3923, 0
    %3991 = vmatpush.bf16.xpose.msra.mxu0 0
    %3992 = vmatpush.bf16.xpose.msra.mxu0 0
    %3993 = vmatpush.bf16.xpose.msra.mxu0 0
    %3994 = vmatpush.bf16.xpose.msra.mxu0 0
    %3995 = vmatpush.bf16.xpose.msra.mxu0 0
    %3996 = vmatpush.bf16.xpose.msra.mxu0 0
    %3997 = vmatpush.bf16.xpose.msra.mxu0 0
    %3998 = vmatpush.bf16.xpose.msra.mxu0 %v3989
    %3999 = vmatmul.bf16.gmra.mxu0 %v3986
    %v4000 = vpop.f32.mrf.mxu0
    %v4001 = vadd.f32 %v87, %v4000
    %v4002 = vpop.f32.mrf.mxu0
    %4003 = vdwg.mxu0
    %v4004 = vsel %vm576, %v3944, -inf
    %4005 = vmax.xlane.f32.xlu0 %v4004
    %v4006 = vpop.xlane.xlu0 %4005
    %v4007 = vsel %vm576, %v3963, -inf
    %4008 = vmax.xlane.f32.xlu0 %v4007
    %v4009 = vpop.xlane.xlu0 %4008
    %v4010 = vsel %vm576, %v3982, -inf
    %4011 = vmax.xlane.f32.xlu0 %v4010
    %v4012 = vpop.xlane.xlu0 %4011
    %v4013 = vsel %vm576, %v4001, -inf
    %4014 = vmax.xlane.f32.xlu0 %v4013
    %v4015 = vpop.xlane.xlu0 %4014
    %v4016 = vsub.f32 %v3944, %v4006
    %v4017 = vsub.f32 %v3963, %v4009
    %v4018 = vsub.f32 %v3982, %v4012
    %v4019 = vsub.f32 %v4001, %v4015
    %v4020 = vmul.f32 %v4016, 1.442695
    %v4021 = vpow.pop %v4020
    %v4022 = vmul.f32 %v4017, 1.442695
    %v4023 = vpow.pop %v4022
    %v4024 = vmul.f32 %v4018, 1.442695
    %v4025 = vpow.pop %v4024
    %v4026 = vmul.f32 %v4019, 1.442695
    %v4027 = vpow.pop %v4026
    %v4028 = vsel %vm576, %v4021, 0.0
    %4029 = vadd.xlane.f32.xlu0 %v4028
    %v4030 = vpop.xlane.xlu0 %4029
    %v4031 = vsel %vm576, %v4023, 0.0
    %4032 = vadd.xlane.f32.xlu0 %v4031
    %v4033 = vpop.xlane.xlu0 %4032
    %v4034 = vsel %vm576, %v4025, 0.0
    %4035 = vadd.xlane.f32.xlu0 %v4034
    %v4036 = vpop.xlane.xlu0 %4035
    %v4037 = vsel %vm576, %v4027, 0.0
    %4038 = vadd.xlane.f32.xlu0 %v4037
    %v4039 = vpop.xlane.xlu0 %4038
    %v4040 = vrcp.pop %v4030
    %v4041 = vrcp.pop %v4033
    %v4042 = vrcp.pop %v4036
    %v4043 = vrcp.pop %v4039
    %v4044 = vmul.f32 %v4021, %v4040
    %v4045 = vmul.f32 %v4023, %v4041
    %v4046 = vmul.f32 %v4025, %v4042
    %v4047 = vmul.f32 %v4027, %v4043
    %v4048 = vpack.c.bf16 %v4044, %v4044
    %v4049 = vpack.c.bf16 %v4045, %v4045
    %v4050 = vpack.c.bf16 %v4046, %v4046
    %v4051 = vpack.c.bf16 %v4047, %v4047
    %v4053 = vsel %vm625, %v4048, 0
    %v4056 = vsel %vm629, %v3924, 0
    %4058 = vmatpush.bf16.msra.mxu0 0
    %4059 = vmatpush.bf16.msra.mxu0 0
    %4060 = vmatpush.bf16.msra.mxu0 0
    %4061 = vmatpush.bf16.msra.mxu0 0
    %4062 = vmatpush.bf16.msra.mxu0 0
    %4063 = vmatpush.bf16.msra.mxu0 0
    %4064 = vmatpush.bf16.msra.mxu0 0
    %4065 = vmatpush.bf16.msra.mxu0 %v4056
    %4066 = vmatmul.bf16.gmra.mxu0 %v4053
    %v4067 = vpop.f32.mrf.mxu0
    %v4068 = vadd.f32 0.0, %v4067
    %v4069 = vpop.f32.mrf.mxu0
    %4070 = vdwg.mxu0
    %v4072 = vsel %vm625, %v4049, 0
    %v4075 = vsel %vm629, %v3925, 0
    %4077 = vmatpush.bf16.msra.mxu0 0
    %4078 = vmatpush.bf16.msra.mxu0 0
    %4079 = vmatpush.bf16.msra.mxu0 0
    %4080 = vmatpush.bf16.msra.mxu0 0
    %4081 = vmatpush.bf16.msra.mxu0 0
    %4082 = vmatpush.bf16.msra.mxu0 0
    %4083 = vmatpush.bf16.msra.mxu0 0
    %4084 = vmatpush.bf16.msra.mxu0 %v4075
    %4085 = vmatmul.bf16.gmra.mxu0 %v4072
    %v4086 = vpop.f32.mrf.mxu0
    %v4087 = vadd.f32 0.0, %v4086
    %v4088 = vpop.f32.mrf.mxu0
    %4089 = vdwg.mxu0
    %v4091 = vsel %vm625, %v4050, 0
    %v4094 = vsel %vm629, %v3926, 0
    %4096 = vmatpush.bf16.msra.mxu0 0
    %4097 = vmatpush.bf16.msra.mxu0 0
    %4098 = vmatpush.bf16.msra.mxu0 0
    %4099 = vmatpush.bf16.msra.mxu0 0
    %4100 = vmatpush.bf16.msra.mxu0 0
    %4101 = vmatpush.bf16.msra.mxu0 0
    %4102 = vmatpush.bf16.msra.mxu0 0
    %4103 = vmatpush.bf16.msra.mxu0 %v4094
    %4104 = vmatmul.bf16.gmra.mxu0 %v4091
    %v4105 = vpop.f32.mrf.mxu0
    %v4106 = vadd.f32 0.0, %v4105
    %v4107 = vpop.f32.mrf.mxu0
    %4108 = vdwg.mxu0
    %v4110 = vsel %vm625, %v4051, 0
    %v4113 = vsel %vm629, %v3927, 0
    %4115 = vmatpush.bf16.msra.mxu0 0
    %4116 = vmatpush.bf16.msra.mxu0 0
    %4117 = vmatpush.bf16.msra.mxu0 0
    %4118 = vmatpush.bf16.msra.mxu0 0
    %4119 = vmatpush.bf16.msra.mxu0 0
    %4120 = vmatpush.bf16.msra.mxu0 0
    %4121 = vmatpush.bf16.msra.mxu0 0
    %4122 = vmatpush.bf16.msra.mxu0 %v4113
    %4123 = vmatmul.bf16.gmra.mxu0 %v4110
    %v4124 = vpop.f32.mrf.mxu0
    %v4125 = vadd.f32 0.0, %v4124
    %v4126 = vpop.f32.mrf.mxu0
    %4127 = vdwg.mxu0
    %v4128 = vpack.c.bf16 %v4068, %v4068
    %v4129 = vpack.c.bf16 %v4087, %v4087
    %v4130 = vpack.c.bf16 %v4106, %v4106
    %v4131 = vpack.c.bf16 %v4125, %v4125
    %s4132 = scalar_lea.vmem %s6, 64
    %v4133 = vld [vmem:[%s4132] sm:$0xf]
    %v4134 = vld [vmem:[%s4132 + $0x4] sm:$0xf]
    %v4135 = vld [vmem:[%s4132 + $0x8] sm:$0xf]
    %v4136 = vld [vmem:[%s4132 + $0xc] sm:$0xf]
    %v4138 = vsel %vm499, %v4128, 0
    %v4141 = vsel %vm714, %v4133, 0
    %4143 = vmatpush.bf16.msra.mxu0 0
    %4144 = vmatpush.bf16.msra.mxu0 0
    %4145 = vmatpush.bf16.msra.mxu0 0
    %4146 = vmatpush.bf16.msra.mxu0 0
    %4147 = vmatpush.bf16.msra.mxu0 0
    %4148 = vmatpush.bf16.msra.mxu0 0
    %4149 = vmatpush.bf16.msra.mxu0 0
    %4150 = vmatpush.bf16.msra.mxu0 %v4141
    %4151 = vmatmul.bf16.gmra.mxu0 %v4138
    %v4152 = vpop.f32.mrf.mxu0
    %v4153 = vadd.f32 0.0, %v4152
    %v4154 = vpop.f32.mrf.mxu0
    %4155 = vdwg.mxu0
    %v4157 = vsel %vm499, %v4129, 0
    %v4160 = vsel %vm714, %v4134, 0
    %4162 = vmatpush.bf16.msra.mxu0 0
    %4163 = vmatpush.bf16.msra.mxu0 0
    %4164 = vmatpush.bf16.msra.mxu0 0
    %4165 = vmatpush.bf16.msra.mxu0 0
    %4166 = vmatpush.bf16.msra.mxu0 0
    %4167 = vmatpush.bf16.msra.mxu0 0
    %4168 = vmatpush.bf16.msra.mxu0 0
    %4169 = vmatpush.bf16.msra.mxu0 %v4160
    %4170 = vmatmul.bf16.gmra.mxu0 %v4157
    %v4171 = vpop.f32.mrf.mxu0
    %v4172 = vadd.f32 0.0, %v4171
    %v4173 = vpop.f32.mrf.mxu0
    %4174 = vdwg.mxu0
    %v4176 = vsel %vm499, %v4130, 0
    %v4179 = vsel %vm714, %v4135, 0
    %4181 = vmatpush.bf16.msra.mxu0 0
    %4182 = vmatpush.bf16.msra.mxu0 0
    %4183 = vmatpush.bf16.msra.mxu0 0
    %4184 = vmatpush.bf16.msra.mxu0 0
    %4185 = vmatpush.bf16.msra.mxu0 0
    %4186 = vmatpush.bf16.msra.mxu0 0
    %4187 = vmatpush.bf16.msra.mxu0 0
    %4188 = vmatpush.bf16.msra.mxu0 %v4179
    %4189 = vmatmul.bf16.gmra.mxu0 %v4176
    %v4190 = vpop.f32.mrf.mxu0
    %v4191 = vadd.f32 0.0, %v4190
    %v4192 = vpop.f32.mrf.mxu0
    %4193 = vdwg.mxu0
    %v4195 = vsel %vm499, %v4131, 0
    %v4198 = vsel %vm714, %v4136, 0
    %4200 = vmatpush.bf16.msra.mxu0 0
    %4201 = vmatpush.bf16.msra.mxu0 0
    %4202 = vmatpush.bf16.msra.mxu0 0
    %4203 = vmatpush.bf16.msra.mxu0 0
    %4204 = vmatpush.bf16.msra.mxu0 0
    %4205 = vmatpush.bf16.msra.mxu0 0
    %4206 = vmatpush.bf16.msra.mxu0 0
    %4207 = vmatpush.bf16.msra.mxu0 %v4198
    %4208 = vmatmul.bf16.gmra.mxu0 %v4195
    %v4209 = vpop.f32.mrf.mxu0
    %v4210 = vadd.f32 0.0, %v4209
    %v4211 = vpop.f32.mrf.mxu0
    %4212 = vdwg.mxu0
    %v4213 = vsel %vm89, %v4153, 0.0
    %v4214 = vsel %vm89, %v4172, 0.0
    %v4215 = vadd.f32 %v4213, %v4214
    %v4216 = vsel %vm89, %v4191, 0.0
    %v4217 = vadd.f32 %v4215, %v4216
    %v4218 = vsel %vm89, %v4210, 0.0
    %v4219 = vadd.f32 %v4217, %v4218
    %v4220 = vadd.f32 %v3521, %v4219
    %v4221 = vperm.slane %v3523, 4
    %v4222 = vadd.f32 %v4220, %v4221
    %v4223 = vsel %vm89, %v4222, 0.0
    %4224 = vadd.xlane.f32.xlu0 %v4223
    %v4225 = vpop.xlane.xlu0 %4224
    %v4226 = vmul.f32 %v4225, %v99
    %v4227 = vsub.f32 %v4222, %v4226
    %v4228 = vmul.f32 %v4227, %v4227
    %v4229 = vsel %vm89, %v4228, 0.0
    %4230 = vadd.xlane.f32.xlu0 %v4229
    %v4231 = vpop.xlane.xlu0 %4230
    %v4232 = vmul.f32 %v4231, %v99
    %v4233 = vadd.f32 %v4232, 1e-05
    %v4234 = vrsqrt.pop %v4233
    %v4235 = vmul.f32 %v4234, %v4233
    %v4236 = vmul.f32 %v4235, %v4234
    %v4237 = vmul.f32 0.5, %v4236
    %v4238 = vsub.f32 1.5, %v4237
    %v4239 = vmul.f32 %v4234, %v4238
    %vm4240 = vweird.f32 %v4233
    %vm4241 = vweird.f32 %v4234
    %vm4242 = vmor %vm4240, %vm4241
    %v4243 = vsel %vm4242, %v4234, %v4239
    %v4244 = vmul.f32 %v4227, %v4243
    %v4245 = vperm.slane %v3523, 2
    %v4246 = vmul.f32 %v4244, %v4245
    %v4247 = vperm.slane %v3523, 3
    %v4248 = vadd.f32 %v4246, %v4247
    %v4249 = vpack.c.bf16 %v4248, %v4248
    %s4250 = scalar_lea.vmem %s7, 64
    %v4251 = vld [vmem:[%s4250] sm:$0xf]
    %v4252 = vld [vmem:[%s4250 + $0x4] sm:$0xf]
    %v4253 = vld [vmem:[%s4250 + $0x8] sm:$0xf]
    %v4254 = vld [vmem:[%s4250 + $0xc] sm:$0xf]
    %s4255 = scalar_lea.vmem %s8, 4
    %v4256 = vld [vmem:[%s4255] sm:$0x1]
    %v4258 = vperm.slane %v4256, 0
    %v4264 = vunpack.c.l.b16 %v4251
    %v4265 = vunpack.c.l.b16 %v4252
    %v4266 = vunpack.c.l.b16 %v4253
    %v4267 = vunpack.c.l.b16 %v4254
    %v4268 = vpack.c.b16 %v4265, %v4264
    %v4269 = vpack.c.b16 %v4267, %v4266
    %v4273 = vsel %vm70, %v4249, 0
    %4275 = vmatpush.bf16.msra.mxu0 0
    %4276 = vmatpush.bf16.msra.mxu0 0
    %4277 = vmatpush.bf16.msra.mxu0 0
    %4278 = vmatpush.bf16.msra.mxu0 0
    %4279 = vmatpush.bf16.msra.mxu0 0
    %4280 = vmatpush.bf16.msra.mxu0 0
    %4281 = vmatpush.bf16.msra.mxu0 %v4269
    %4282 = vmatpush.bf16.msra.mxu0 %v4268
    %4283 = vmatmul.bf16.gmra.mxu0 %v4273
    %v4284 = vpop.f32.mrf.mxu0
    %v4285 = vadd.f32 %v4258, %v4284
    %v4286 = vpop.f32.mrf.mxu0
    %4287 = vdwg.mxu0
    %v4288 = vmul.f32 %v4285, %v4285
    %v4289 = vmul.f32 %v4285, %v4288
    %v4290 = vmul.f32 %v4289, 0.044715
    %v4291 = vadd.f32 %v4285, %v4290
    %v4292 = vmul.f32 %v4291, 0.7978846
    %v4293 = vtanh.pop %v4292
    %v4294 = vadd.f32 %v4293, 1.0
    %v4295 = vmul.f32 %v4294, 0.5
    %v4296 = vmul.f32 %v4285, %v4295
    %v4297 = vpack.c.bf16 %v4296, %v4296
    %s4298 = scalar_lea.vmem %s9, 256
    %v4299 = vld [vmem:[%s4298] sm:$0xf]
    %v4300 = vld [vmem:[%s4298 + $0x4] sm:$0xf]
    %v4301 = vld [vmem:[%s4298 + $0x8] sm:$0xf]
    %v4302 = vld [vmem:[%s4298 + $0xc] sm:$0xf]
    %v4303 = vld [vmem:[%s4298 + $0x10] sm:$0xf]
    %v4304 = vld [vmem:[%s4298 + $0x14] sm:$0xf]
    %v4305 = vld [vmem:[%s4298 + $0x18] sm:$0xf]
    %v4306 = vld [vmem:[%s4298 + $0x1c] sm:$0xf]
    %v4307 = vld [vmem:[%s4298 + $0x20] sm:$0xf]
    %v4308 = vld [vmem:[%s4298 + $0x24] sm:$0xf]
    %v4309 = vld [vmem:[%s4298 + $0x28] sm:$0xf]
    %v4310 = vld [vmem:[%s4298 + $0x2c] sm:$0xf]
    %v4311 = vld [vmem:[%s4298 + $0x30] sm:$0xf]
    %v4312 = vld [vmem:[%s4298 + $0x34] sm:$0xf]
    %v4313 = vld [vmem:[%s4298 + $0x38] sm:$0xf]
    %v4314 = vld [vmem:[%s4298 + $0x3c] sm:$0xf]
    %v4331 = vunpack.c.l.b16 %v4299
    %v4332 = vunpack.c.l.b16 %v4300
    %v4333 = vunpack.c.l.b16 %v4301
    %v4334 = vunpack.c.l.b16 %v4302
    %v4335 = vunpack.c.l.b16 %v4303
    %v4336 = vunpack.c.l.b16 %v4304
    %v4337 = vunpack.c.l.b16 %v4305
    %v4338 = vunpack.c.l.b16 %v4306
    %v4339 = vunpack.c.l.b16 %v4307
    %v4340 = vunpack.c.l.b16 %v4308
    %v4341 = vunpack.c.l.b16 %v4309
    %v4342 = vunpack.c.l.b16 %v4310
    %v4343 = vunpack.c.l.b16 %v4311
    %v4344 = vunpack.c.l.b16 %v4312
    %v4345 = vunpack.c.l.b16 %v4313
    %v4346 = vunpack.c.l.b16 %v4314
    %v4347 = vpack.c.b16 %v4332, %v4331
    %v4348 = vpack.c.b16 %v4334, %v4333
    %v4349 = vpack.c.b16 %v4336, %v4335
    %v4350 = vpack.c.b16 %v4338, %v4337
    %v4351 = vpack.c.b16 %v4340, %v4339
    %v4352 = vpack.c.b16 %v4342, %v4341
    %v4353 = vpack.c.b16 %v4344, %v4343
    %v4354 = vpack.c.b16 %v4346, %v4345
    %4363 = vmatpush.bf16.msra.mxu0 %v4354
    %4364 = vmatpush.bf16.msra.mxu0 %v4353
    %4365 = vmatpush.bf16.msra.mxu0 %v4352
    %4366 = vmatpush.bf16.msra.mxu0 %v4351
    %4367 = vmatpush.bf16.msra.mxu0 %v4350
    %4368 = vmatpush.bf16.msra.mxu0 %v4349
    %4369 = vmatpush.bf16.msra.mxu0 %v4348
    %4370 = vmatpush.bf16.msra.mxu0 %v4347
    %4371 = vmatmul.bf16.gmra.mxu0 %v4297
    %v4372 = vpop.f32.mrf.mxu0
    %v4373 = vadd.f32 0.0, %v4372
    %v4374 = vpop.f32.mrf.mxu0
    %4375 = vdwg.mxu0
    %v4376 = vadd.f32 %v4222, %v4373
    %v4377 = vperm.slane %v3523, 5
    %v4378 = vadd.f32 %v4376, %v4377
    %s4379 = scalar_lea.vmem %s10, 40
    %v4380 = vld [vmem:[%s4379] sm:$0x3f]
    %v4381 = vsel %vm89, %v4378, 0.0
    %4382 = vadd.xlane.f32.xlu0 %v4381
    %v4383 = vpop.xlane.xlu0 %4382
    %v4384 = vmul.f32 %v4383, %v99
    %v4385 = vsub.f32 %v4378, %v4384
    %v4386 = vmul.f32 %v4385, %v4385
    %v4387 = vsel %vm89, %v4386, 0.0
    %4388 = vadd.xlane.f32.xlu0 %v4387
    %v4389 = vpop.xlane.xlu0 %4388
    %v4390 = vmul.f32 %v4389, %v99
    %v4391 = vadd.f32 %v4390, 1e-05
    %v4392 = vrsqrt.pop %v4391
    %v4393 = vmul.f32 %v4392, %v4391
    %v4394 = vmul.f32 %v4393, %v4392
    %v4395 = vmul.f32 0.5, %v4394
    %v4396 = vsub.f32 1.5, %v4395
    %v4397 = vmul.f32 %v4392, %v4396
    %vm4398 = vweird.f32 %v4391
    %vm4399 = vweird.f32 %v4392
    %vm4400 = vmor %vm4398, %vm4399
    %v4401 = vsel %vm4400, %v4392, %v4397
    %v4402 = vmul.f32 %v4385, %v4401
    %v4403 = vperm.slane %v4380, 0
    %v4404 = vmul.f32 %v4402, %v4403
    %v4405 = vperm.slane %v4380, 1
    %v4406 = vadd.f32 %v4404, %v4405
    %v4407 = vpack.c.bf16 %v4406, %v4406
    %s4408 = scalar_lea.vmem %s4, 960
    %v4409 = vld [vmem:[%s4408] sm:$0xf]
    %v4410 = vld [vmem:[%s4408 + $0x4] sm:$0xf]
    %v4411 = vld [vmem:[%s4408 + $0x8] sm:$0xf]
    %v4412 = vld [vmem:[%s4408 + $0xc] sm:$0xf]
    %v4413 = vld [vmem:[%s4408 + $0x10] sm:$0xf]
    %v4414 = vld [vmem:[%s4408 + $0x14] sm:$0xf]
    %v4415 = vld [vmem:[%s4408 + $0x18] sm:$0xf]
    %v4416 = vld [vmem:[%s4408 + $0x1c] sm:$0xf]
    %v4417 = vld [vmem:[%s4408 + $0x20] sm:$0xf]
    %v4418 = vld [vmem:[%s4408 + $0x24] sm:$0xf]
    %v4419 = vld [vmem:[%s4408 + $0x28] sm:$0xf]
    %v4420 = vld [vmem:[%s4408 + $0x2c] sm:$0xf]
    %v4421 = vld [vmem:[%s4408 + $0x30] sm:$0xf]
    %v4422 = vld [vmem:[%s4408 + $0x34] sm:$0xf]
    %v4423 = vld [vmem:[%s4408 + $0x38] sm:$0xf]
    %v4424 = vld [vmem:[%s4408 + $0x3c] sm:$0xf]
    %v4425 = vld [vmem:[%s4408 + $0x40] sm:$0xf]
    %v4426 = vld [vmem:[%s4408 + $0x44] sm:$0xf]
    %v4427 = vld [vmem:[%s4408 + $0x48] sm:$0xf]
    %v4428 = vld [vmem:[%s4408 + $0x4c] sm:$0xf]
    %v4429 = vld [vmem:[%s4408 + $0x50] sm:$0xf]
    %v4430 = vld [vmem:[%s4408 + $0x54] sm:$0xf]
    %v4431 = vld [vmem:[%s4408 + $0x58] sm:$0xf]
    %v4432 = vld [vmem:[%s4408 + $0x5c] sm:$0xf]
    %v4433 = vld [vmem:[%s4408 + $0x60] sm:$0xf]
    %v4434 = vld [vmem:[%s4408 + $0x64] sm:$0xf]
    %v4435 = vld [vmem:[%s4408 + $0x68] sm:$0xf]
    %v4436 = vld [vmem:[%s4408 + $0x6c] sm:$0xf]
    %v4437 = vld [vmem:[%s4408 + $0x70] sm:$0xf]
    %v4438 = vld [vmem:[%s4408 + $0x74] sm:$0xf]
    %v4439 = vld [vmem:[%s4408 + $0x78] sm:$0xf]
    %v4440 = vld [vmem:[%s4408 + $0x7c] sm:$0xf]
    %v4441 = vld [vmem:[%s4408 + $0x80] sm:$0xf]
    %v4442 = vld [vmem:[%s4408 + $0x84] sm:$0xf]
    %v4443 = vld [vmem:[%s4408 + $0x88] sm:$0xf]
    %v4444 = vld [vmem:[%s4408 + $0x8c] sm:$0xf]
    %v4445 = vld [vmem:[%s4408 + $0x90] sm:$0xf]
    %v4446 = vld [vmem:[%s4408 + $0x94] sm:$0xf]
    %v4447 = vld [vmem:[%s4408 + $0x98] sm:$0xf]
    %v4448 = vld [vmem:[%s4408 + $0x9c] sm:$0xf]
    %v4449 = vld [vmem:[%s4408 + $0xa0] sm:$0xf]
    %v4450 = vld [vmem:[%s4408 + $0xa4] sm:$0xf]
    %v4451 = vld [vmem:[%s4408 + $0xa8] sm:$0xf]
    %v4452 = vld [vmem:[%s4408 + $0xac] sm:$0xf]
    %v4453 = vld [vmem:[%s4408 + $0xb0] sm:$0xf]
    %v4454 = vld [vmem:[%s4408 + $0xb4] sm:$0xf]
    %v4455 = vld [vmem:[%s4408 + $0xb8] sm:$0xf]
    %v4456 = vld [vmem:[%s4408 + $0xbc] sm:$0xf]
    %s4457 = scalar_lea.vmem %s5, 480
    %v4458 = vld [vmem:[%s4457] sm:$0x3f]
    %v4459 = vld [vmem:[%s4457 + $0x8] sm:$0x3f]
    %v4460 = vld [vmem:[%s4457 + $0x10] sm:$0x3f]
    %v4461 = vld [vmem:[%s4457 + $0x18] sm:$0x3f]
    %v4462 = vld [vmem:[%s4457 + $0x20] sm:$0x3f]
    %v4463 = vld [vmem:[%s4457 + $0x28] sm:$0x3f]
    %v4464 = vld [vmem:[%s4457 + $0x30] sm:$0x3f]
    %v4465 = vld [vmem:[%s4457 + $0x38] sm:$0x3f]
    %v4466 = vld [vmem:[%s4457 + $0x40] sm:$0x3f]
    %v4467 = vld [vmem:[%s4457 + $0x48] sm:$0x3f]
    %v4468 = vld [vmem:[%s4457 + $0x50] sm:$0x3f]
    %v4469 = vld [vmem:[%s4457 + $0x58] sm:$0x3f]
    %v4474 = vunpack.c.l.b16 %v4409
    %v4475 = vunpack.c.l.b16 %v4410
    %v4476 = vunpack.c.l.b16 %v4411
    %v4477 = vunpack.c.l.b16 %v4412
    %v4478 = vpack.c.b16 %v4475, %v4474
    %v4479 = vpack.c.b16 %v4477, %v4476
    %v4483 = vsel %vm70, %v4407, 0
    %4485 = vmatpush.bf16.msra.mxu0 0
    %4486 = vmatpush.bf16.msra.mxu0 0
    %4487 = vmatpush.bf16.msra.mxu0 0
    %4488 = vmatpush.bf16.msra.mxu0 0
    %4489 = vmatpush.bf16.msra.mxu0 0
    %4490 = vmatpush.bf16.msra.mxu0 0
    %4491 = vmatpush.bf16.msra.mxu0 %v4479
    %4492 = vmatpush.bf16.msra.mxu0 %v4478
    %4493 = vmatmul.bf16.gmra.mxu0 %v4483
    %v4494 = vpop.f32.mrf.mxu0
    %v4495 = vadd.f32 %v4458, %v4494
    %v4496 = vpop.f32.mrf.mxu0
    %4497 = vdwg.mxu0
    %v4502 = vunpack.c.l.b16 %v4413
    %v4503 = vunpack.c.l.b16 %v4414
    %v4504 = vunpack.c.l.b16 %v4415
    %v4505 = vunpack.c.l.b16 %v4416
    %v4506 = vpack.c.b16 %v4503, %v4502
    %v4507 = vpack.c.b16 %v4505, %v4504
    %4510 = vmatpush.bf16.msra.mxu0 0
    %4511 = vmatpush.bf16.msra.mxu0 0
    %4512 = vmatpush.bf16.msra.mxu0 0
    %4513 = vmatpush.bf16.msra.mxu0 0
    %4514 = vmatpush.bf16.msra.mxu0 0
    %4515 = vmatpush.bf16.msra.mxu0 0
    %4516 = vmatpush.bf16.msra.mxu0 %v4507
    %4517 = vmatpush.bf16.msra.mxu0 %v4506
    %4518 = vmatmul.bf16.gmra.mxu0 %v4483
    %v4519 = vpop.f32.mrf.mxu0
    %v4520 = vadd.f32 %v4459, %v4519
    %v4521 = vpop.f32.mrf.mxu0
    %4522 = vdwg.mxu0
    %v4527 = vunpack.c.l.b16 %v4417
    %v4528 = vunpack.c.l.b16 %v4418
    %v4529 = vunpack.c.l.b16 %v4419
    %v4530 = vunpack.c.l.b16 %v4420
    %v4531 = vpack.c.b16 %v4528, %v4527
    %v4532 = vpack.c.b16 %v4530, %v4529
    %4535 = vmatpush.bf16.msra.mxu0 0
    %4536 = vmatpush.bf16.msra.mxu0 0
    %4537 = vmatpush.bf16.msra.mxu0 0
    %4538 = vmatpush.bf16.msra.mxu0 0
    %4539 = vmatpush.bf16.msra.mxu0 0
    %4540 = vmatpush.bf16.msra.mxu0 0
    %4541 = vmatpush.bf16.msra.mxu0 %v4532
    %4542 = vmatpush.bf16.msra.mxu0 %v4531
    %4543 = vmatmul.bf16.gmra.mxu0 %v4483
    %v4544 = vpop.f32.mrf.mxu0
    %v4545 = vadd.f32 %v4460, %v4544
    %v4546 = vpop.f32.mrf.mxu0
    %4547 = vdwg.mxu0
    %v4552 = vunpack.c.l.b16 %v4421
    %v4553 = vunpack.c.l.b16 %v4422
    %v4554 = vunpack.c.l.b16 %v4423
    %v4555 = vunpack.c.l.b16 %v4424
    %v4556 = vpack.c.b16 %v4553, %v4552
    %v4557 = vpack.c.b16 %v4555, %v4554
    %4560 = vmatpush.bf16.msra.mxu0 0
    %4561 = vmatpush.bf16.msra.mxu0 0
    %4562 = vmatpush.bf16.msra.mxu0 0
    %4563 = vmatpush.bf16.msra.mxu0 0
    %4564 = vmatpush.bf16.msra.mxu0 0
    %4565 = vmatpush.bf16.msra.mxu0 0
    %4566 = vmatpush.bf16.msra.mxu0 %v4557
    %4567 = vmatpush.bf16.msra.mxu0 %v4556
    %4568 = vmatmul.bf16.gmra.mxu0 %v4483
    %v4569 = vpop.f32.mrf.mxu0
    %v4570 = vadd.f32 %v4461, %v4569
    %v4571 = vpop.f32.mrf.mxu0
    %4572 = vdwg.mxu0
    %v4577 = vunpack.c.l.b16 %v4425
    %v4578 = vunpack.c.l.b16 %v4426
    %v4579 = vunpack.c.l.b16 %v4427
    %v4580 = vunpack.c.l.b16 %v4428
    %v4581 = vpack.c.b16 %v4578, %v4577
    %v4582 = vpack.c.b16 %v4580, %v4579
    %4585 = vmatpush.bf16.msra.mxu0 0
    %4586 = vmatpush.bf16.msra.mxu0 0
    %4587 = vmatpush.bf16.msra.mxu0 0
    %4588 = vmatpush.bf16.msra.mxu0 0
    %4589 = vmatpush.bf16.msra.mxu0 0
    %4590 = vmatpush.bf16.msra.mxu0 0
    %4591 = vmatpush.bf16.msra.mxu0 %v4582
    %4592 = vmatpush.bf16.msra.mxu0 %v4581
    %4593 = vmatmul.bf16.gmra.mxu0 %v4483
    %v4594 = vpop.f32.mrf.mxu0
    %v4595 = vadd.f32 %v4462, %v4594
    %v4596 = vpop.f32.mrf.mxu0
    %4597 = vdwg.mxu0
    %v4602 = vunpack.c.l.b16 %v4429
    %v4603 = vunpack.c.l.b16 %v4430
    %v4604 = vunpack.c.l.b16 %v4431
    %v4605 = vunpack.c.l.b16 %v4432
    %v4606 = vpack.c.b16 %v4603, %v4602
    %v4607 = vpack.c.b16 %v4605, %v4604
    %4610 = vmatpush.bf16.msra.mxu0 0
    %4611 = vmatpush.bf16.msra.mxu0 0
    %4612 = vmatpush.bf16.msra.mxu0 0
    %4613 = vmatpush.bf16.msra.mxu0 0
    %4614 = vmatpush.bf16.msra.mxu0 0
    %4615 = vmatpush.bf16.msra.mxu0 0
    %4616 = vmatpush.bf16.msra.mxu0 %v4607
    %4617 = vmatpush.bf16.msra.mxu0 %v4606
    %4618 = vmatmul.bf16.gmra.mxu0 %v4483
    %v4619 = vpop.f32.mrf.mxu0
    %v4620 = vadd.f32 %v4463, %v4619
    %v4621 = vpop.f32.mrf.mxu0
    %4622 = vdwg.mxu0
    %v4627 = vunpack.c.l.b16 %v4433
    %v4628 = vunpack.c.l.b16 %v4434
    %v4629 = vunpack.c.l.b16 %v4435
    %v4630 = vunpack.c.l.b16 %v4436
    %v4631 = vpack.c.b16 %v4628, %v4627
    %v4632 = vpack.c.b16 %v4630, %v4629
    %4635 = vmatpush.bf16.msra.mxu0 0
    %4636 = vmatpush.bf16.msra.mxu0 0
    %4637 = vmatpush.bf16.msra.mxu0 0
    %4638 = vmatpush.bf16.msra.mxu0 0
    %4639 = vmatpush.bf16.msra.mxu0 0
    %4640 = vmatpush.bf16.msra.mxu0 0
    %4641 = vmatpush.bf16.msra.mxu0 %v4632
    %4642 = vmatpush.bf16.msra.mxu0 %v4631
    %4643 = vmatmul.bf16.gmra.mxu0 %v4483
    %v4644 = vpop.f32.mrf.mxu0
    %v4645 = vadd.f32 %v4464, %v4644
    %v4646 = vpop.f32.mrf.mxu0
    %4647 = vdwg.mxu0
    %v4652 = vunpack.c.l.b16 %v4437
    %v4653 = vunpack.c.l.b16 %v4438
    %v4654 = vunpack.c.l.b16 %v4439
    %v4655 = vunpack.c.l.b16 %v4440
    %v4656 = vpack.c.b16 %v4653, %v4652
    %v4657 = vpack.c.b16 %v4655, %v4654
    %4660 = vmatpush.bf16.msra.mxu0 0
    %4661 = vmatpush.bf16.msra.mxu0 0
    %4662 = vmatpush.bf16.msra.mxu0 0
    %4663 = vmatpush.bf16.msra.mxu0 0
    %4664 = vmatpush.bf16.msra.mxu0 0
    %4665 = vmatpush.bf16.msra.mxu0 0
    %4666 = vmatpush.bf16.msra.mxu0 %v4657
    %4667 = vmatpush.bf16.msra.mxu0 %v4656
    %4668 = vmatmul.bf16.gmra.mxu0 %v4483
    %v4669 = vpop.f32.mrf.mxu0
    %v4670 = vadd.f32 %v4465, %v4669
    %v4671 = vpop.f32.mrf.mxu0
    %4672 = vdwg.mxu0
    %v4677 = vunpack.c.l.b16 %v4441
    %v4678 = vunpack.c.l.b16 %v4442
    %v4679 = vunpack.c.l.b16 %v4443
    %v4680 = vunpack.c.l.b16 %v4444
    %v4681 = vpack.c.b16 %v4678, %v4677
    %v4682 = vpack.c.b16 %v4680, %v4679
    %4685 = vmatpush.bf16.msra.mxu0 0
    %4686 = vmatpush.bf16.msra.mxu0 0
    %4687 = vmatpush.bf16.msra.mxu0 0
    %4688 = vmatpush.bf16.msra.mxu0 0
    %4689 = vmatpush.bf16.msra.mxu0 0
    %4690 = vmatpush.bf16.msra.mxu0 0
    %4691 = vmatpush.bf16.msra.mxu0 %v4682
    %4692 = vmatpush.bf16.msra.mxu0 %v4681
    %4693 = vmatmul.bf16.gmra.mxu0 %v4483
    %v4694 = vpop.f32.mrf.mxu0
    %v4695 = vadd.f32 %v4466, %v4694
    %v4696 = vpop.f32.mrf.mxu0
    %4697 = vdwg.mxu0
    %v4702 = vunpack.c.l.b16 %v4445
    %v4703 = vunpack.c.l.b16 %v4446
    %v4704 = vunpack.c.l.b16 %v4447
    %v4705 = vunpack.c.l.b16 %v4448
    %v4706 = vpack.c.b16 %v4703, %v4702
    %v4707 = vpack.c.b16 %v4705, %v4704
    %4710 = vmatpush.bf16.msra.mxu0 0
    %4711 = vmatpush.bf16.msra.mxu0 0
    %4712 = vmatpush.bf16.msra.mxu0 0
    %4713 = vmatpush.bf16.msra.mxu0 0
    %4714 = vmatpush.bf16.msra.mxu0 0
    %4715 = vmatpush.bf16.msra.mxu0 0
    %4716 = vmatpush.bf16.msra.mxu0 %v4707
    %4717 = vmatpush.bf16.msra.mxu0 %v4706
    %4718 = vmatmul.bf16.gmra.mxu0 %v4483
    %v4719 = vpop.f32.mrf.mxu0
    %v4720 = vadd.f32 %v4467, %v4719
    %v4721 = vpop.f32.mrf.mxu0
    %4722 = vdwg.mxu0
    %v4727 = vunpack.c.l.b16 %v4449
    %v4728 = vunpack.c.l.b16 %v4450
    %v4729 = vunpack.c.l.b16 %v4451
    %v4730 = vunpack.c.l.b16 %v4452
    %v4731 = vpack.c.b16 %v4728, %v4727
    %v4732 = vpack.c.b16 %v4730, %v4729
    %4735 = vmatpush.bf16.msra.mxu0 0
    %4736 = vmatpush.bf16.msra.mxu0 0
    %4737 = vmatpush.bf16.msra.mxu0 0
    %4738 = vmatpush.bf16.msra.mxu0 0
    %4739 = vmatpush.bf16.msra.mxu0 0
    %4740 = vmatpush.bf16.msra.mxu0 0
    %4741 = vmatpush.bf16.msra.mxu0 %v4732
    %4742 = vmatpush.bf16.msra.mxu0 %v4731
    %4743 = vmatmul.bf16.gmra.mxu0 %v4483
    %v4744 = vpop.f32.mrf.mxu0
    %v4745 = vadd.f32 %v4468, %v4744
    %v4746 = vpop.f32.mrf.mxu0
    %4747 = vdwg.mxu0
    %v4752 = vunpack.c.l.b16 %v4453
    %v4753 = vunpack.c.l.b16 %v4454
    %v4754 = vunpack.c.l.b16 %v4455
    %v4755 = vunpack.c.l.b16 %v4456
    %v4756 = vpack.c.b16 %v4753, %v4752
    %v4757 = vpack.c.b16 %v4755, %v4754
    %4760 = vmatpush.bf16.msra.mxu0 0
    %4761 = vmatpush.bf16.msra.mxu0 0
    %4762 = vmatpush.bf16.msra.mxu0 0
    %4763 = vmatpush.bf16.msra.mxu0 0
    %4764 = vmatpush.bf16.msra.mxu0 0
    %4765 = vmatpush.bf16.msra.mxu0 0
    %4766 = vmatpush.bf16.msra.mxu0 %v4757
    %4767 = vmatpush.bf16.msra.mxu0 %v4756
    %4768 = vmatmul.bf16.gmra.mxu0 %v4483
    %v4769 = vpop.f32.mrf.mxu0
    %v4770 = vadd.f32 %v4469, %v4769
    %v4771 = vpop.f32.mrf.mxu0
    %4772 = vdwg.mxu0
    %v4773 = vpack.c.bf16 %v4495, %v4495
    %v4774 = vpack.c.bf16 %v4520, %v4520
    %v4775 = vpack.c.bf16 %v4545, %v4545
    %v4776 = vpack.c.bf16 %v4570, %v4570
    %v4777 = vpack.c.bf16 %v4595, %v4595
    %v4778 = vpack.c.bf16 %v4620, %v4620
    %v4779 = vpack.c.bf16 %v4645, %v4645
    %v4780 = vpack.c.bf16 %v4670, %v4670
    %v4781 = vpack.c.bf16 %v4695, %v4695
    %v4782 = vpack.c.bf16 %v4720, %v4720
    %v4783 = vpack.c.bf16 %v4745, %v4745
    %v4784 = vpack.c.bf16 %v4770, %v4770
    %v4786 = vsel %vm499, %v4773, 0
    %v4789 = vsel %vm499, %v4777, 0
    %4791 = vmatpush.bf16.xpose.msra.mxu0 0
    %4792 = vmatpush.bf16.xpose.msra.mxu0 0
    %4793 = vmatpush.bf16.xpose.msra.mxu0 0
    %4794 = vmatpush.bf16.xpose.msra.mxu0 0
    %4795 = vmatpush.bf16.xpose.msra.mxu0 0
    %4796 = vmatpush.bf16.xpose.msra.mxu0 0
    %4797 = vmatpush.bf16.xpose.msra.mxu0 0
    %4798 = vmatpush.bf16.xpose.msra.mxu0 %v4789
    %4799 = vmatmul.bf16.gmra.mxu0 %v4786
    %v4800 = vpop.f32.mrf.mxu0
    %v4801 = vadd.f32 %v87, %v4800
    %v4802 = vpop.f32.mrf.mxu0
    %4803 = vdwg.mxu0
    %v4805 = vsel %vm499, %v4774, 0
    %v4808 = vsel %vm499, %v4778, 0
    %4810 = vmatpush.bf16.xpose.msra.mxu0 0
    %4811 = vmatpush.bf16.xpose.msra.mxu0 0
    %4812 = vmatpush.bf16.xpose.msra.mxu0 0
    %4813 = vmatpush.bf16.xpose.msra.mxu0 0
    %4814 = vmatpush.bf16.xpose.msra.mxu0 0
    %4815 = vmatpush.bf16.xpose.msra.mxu0 0
    %4816 = vmatpush.bf16.xpose.msra.mxu0 0
    %4817 = vmatpush.bf16.xpose.msra.mxu0 %v4808
    %4818 = vmatmul.bf16.gmra.mxu0 %v4805
    %v4819 = vpop.f32.mrf.mxu0
    %v4820 = vadd.f32 %v87, %v4819
    %v4821 = vpop.f32.mrf.mxu0
    %4822 = vdwg.mxu0
    %v4824 = vsel %vm499, %v4775, 0
    %v4827 = vsel %vm499, %v4779, 0
    %4829 = vmatpush.bf16.xpose.msra.mxu0 0
    %4830 = vmatpush.bf16.xpose.msra.mxu0 0
    %4831 = vmatpush.bf16.xpose.msra.mxu0 0
    %4832 = vmatpush.bf16.xpose.msra.mxu0 0
    %4833 = vmatpush.bf16.xpose.msra.mxu0 0
    %4834 = vmatpush.bf16.xpose.msra.mxu0 0
    %4835 = vmatpush.bf16.xpose.msra.mxu0 0
    %4836 = vmatpush.bf16.xpose.msra.mxu0 %v4827
    %4837 = vmatmul.bf16.gmra.mxu0 %v4824
    %v4838 = vpop.f32.mrf.mxu0
    %v4839 = vadd.f32 %v87, %v4838
    %v4840 = vpop.f32.mrf.mxu0
    %4841 = vdwg.mxu0
    %v4843 = vsel %vm499, %v4776, 0
    %v4846 = vsel %vm499, %v4780, 0
    %4848 = vmatpush.bf16.xpose.msra.mxu0 0
    %4849 = vmatpush.bf16.xpose.msra.mxu0 0
    %4850 = vmatpush.bf16.xpose.msra.mxu0 0
    %4851 = vmatpush.bf16.xpose.msra.mxu0 0
    %4852 = vmatpush.bf16.xpose.msra.mxu0 0
    %4853 = vmatpush.bf16.xpose.msra.mxu0 0
    %4854 = vmatpush.bf16.xpose.msra.mxu0 0
    %4855 = vmatpush.bf16.xpose.msra.mxu0 %v4846
    %4856 = vmatmul.bf16.gmra.mxu0 %v4843
    %v4857 = vpop.f32.mrf.mxu0
    %v4858 = vadd.f32 %v87, %v4857
    %v4859 = vpop.f32.mrf.mxu0
    %4860 = vdwg.mxu0
    %v4861 = vsel %vm576, %v4801, -inf
    %4862 = vmax.xlane.f32.xlu0 %v4861
    %v4863 = vpop.xlane.xlu0 %4862
    %v4864 = vsel %vm576, %v4820, -inf
    %4865 = vmax.xlane.f32.xlu0 %v4864
    %v4866 = vpop.xlane.xlu0 %4865
    %v4867 = vsel %vm576, %v4839, -inf
    %4868 = vmax.xlane.f32.xlu0 %v4867
    %v4869 = vpop.xlane.xlu0 %4868
    %v4870 = vsel %vm576, %v4858, -inf
    %4871 = vmax.xlane.f32.xlu0 %v4870
    %v4872 = vpop.xlane.xlu0 %4871
    %v4873 = vsub.f32 %v4801, %v4863
    %v4874 = vsub.f32 %v4820, %v4866
    %v4875 = vsub.f32 %v4839, %v4869
    %v4876 = vsub.f32 %v4858, %v4872
    %v4877 = vmul.f32 %v4873, 1.442695
    %v4878 = vpow.pop %v4877
    %v4879 = vmul.f32 %v4874, 1.442695
    %v4880 = vpow.pop %v4879
    %v4881 = vmul.f32 %v4875, 1.442695
    %v4882 = vpow.pop %v4881
    %v4883 = vmul.f32 %v4876, 1.442695
    %v4884 = vpow.pop %v4883
    %v4885 = vsel %vm576, %v4878, 0.0
    %4886 = vadd.xlane.f32.xlu0 %v4885
    %v4887 = vpop.xlane.xlu0 %4886
    %v4888 = vsel %vm576, %v4880, 0.0
    %4889 = vadd.xlane.f32.xlu0 %v4888
    %v4890 = vpop.xlane.xlu0 %4889
    %v4891 = vsel %vm576, %v4882, 0.0
    %4892 = vadd.xlane.f32.xlu0 %v4891
    %v4893 = vpop.xlane.xlu0 %4892
    %v4894 = vsel %vm576, %v4884, 0.0
    %4895 = vadd.xlane.f32.xlu0 %v4894
    %v4896 = vpop.xlane.xlu0 %4895
    %v4897 = vrcp.pop %v4887
    %v4898 = vrcp.pop %v4890
    %v4899 = vrcp.pop %v4893
    %v4900 = vrcp.pop %v4896
    %v4901 = vmul.f32 %v4878, %v4897
    %v4902 = vmul.f32 %v4880, %v4898
    %v4903 = vmul.f32 %v4882, %v4899
    %v4904 = vmul.f32 %v4884, %v4900
    %v4905 = vpack.c.bf16 %v4901, %v4901
    %v4906 = vpack.c.bf16 %v4902, %v4902
    %v4907 = vpack.c.bf16 %v4903, %v4903
    %v4908 = vpack.c.bf16 %v4904, %v4904
    %v4910 = vsel %vm625, %v4905, 0
    %v4913 = vsel %vm629, %v4781, 0
    %4915 = vmatpush.bf16.msra.mxu0 0
    %4916 = vmatpush.bf16.msra.mxu0 0
    %4917 = vmatpush.bf16.msra.mxu0 0
    %4918 = vmatpush.bf16.msra.mxu0 0
    %4919 = vmatpush.bf16.msra.mxu0 0
    %4920 = vmatpush.bf16.msra.mxu0 0
    %4921 = vmatpush.bf16.msra.mxu0 0
    %4922 = vmatpush.bf16.msra.mxu0 %v4913
    %4923 = vmatmul.bf16.gmra.mxu0 %v4910
    %v4924 = vpop.f32.mrf.mxu0
    %v4925 = vadd.f32 0.0, %v4924
    %v4926 = vpop.f32.mrf.mxu0
    %4927 = vdwg.mxu0
    %v4929 = vsel %vm625, %v4906, 0
    %v4932 = vsel %vm629, %v4782, 0
    %4934 = vmatpush.bf16.msra.mxu0 0
    %4935 = vmatpush.bf16.msra.mxu0 0
    %4936 = vmatpush.bf16.msra.mxu0 0
    %4937 = vmatpush.bf16.msra.mxu0 0
    %4938 = vmatpush.bf16.msra.mxu0 0
    %4939 = vmatpush.bf16.msra.mxu0 0
    %4940 = vmatpush.bf16.msra.mxu0 0
    %4941 = vmatpush.bf16.msra.mxu0 %v4932
    %4942 = vmatmul.bf16.gmra.mxu0 %v4929
    %v4943 = vpop.f32.mrf.mxu0
    %v4944 = vadd.f32 0.0, %v4943
    %v4945 = vpop.f32.mrf.mxu0
    %4946 = vdwg.mxu0
    %v4948 = vsel %vm625, %v4907, 0
    %v4951 = vsel %vm629, %v4783, 0
    %4953 = vmatpush.bf16.msra.mxu0 0
    %4954 = vmatpush.bf16.msra.mxu0 0
    %4955 = vmatpush.bf16.msra.mxu0 0
    %4956 = vmatpush.bf16.msra.mxu0 0
    %4957 = vmatpush.bf16.msra.mxu0 0
    %4958 = vmatpush.bf16.msra.mxu0 0
    %4959 = vmatpush.bf16.msra.mxu0 0
    %4960 = vmatpush.bf16.msra.mxu0 %v4951
    %4961 = vmatmul.bf16.gmra.mxu0 %v4948
    %v4962 = vpop.f32.mrf.mxu0
    %v4963 = vadd.f32 0.0, %v4962
    %v4964 = vpop.f32.mrf.mxu0
    %4965 = vdwg.mxu0
    %v4967 = vsel %vm625, %v4908, 0
    %v4970 = vsel %vm629, %v4784, 0
    %4972 = vmatpush.bf16.msra.mxu0 0
    %4973 = vmatpush.bf16.msra.mxu0 0
    %4974 = vmatpush.bf16.msra.mxu0 0
    %4975 = vmatpush.bf16.msra.mxu0 0
    %4976 = vmatpush.bf16.msra.mxu0 0
    %4977 = vmatpush.bf16.msra.mxu0 0
    %4978 = vmatpush.bf16.msra.mxu0 0
    %4979 = vmatpush.bf16.msra.mxu0 %v4970
    %4980 = vmatmul.bf16.gmra.mxu0 %v4967
    %v4981 = vpop.f32.mrf.mxu0
    %v4982 = vadd.f32 0.0, %v4981
    %v4983 = vpop.f32.mrf.mxu0
    %4984 = vdwg.mxu0
    %v4985 = vpack.c.bf16 %v4925, %v4925
    %v4986 = vpack.c.bf16 %v4944, %v4944
    %v4987 = vpack.c.bf16 %v4963, %v4963
    %v4988 = vpack.c.bf16 %v4982, %v4982
    %s4989 = scalar_lea.vmem %s6, 80
    %v4990 = vld [vmem:[%s4989] sm:$0xf]
    %v4991 = vld [vmem:[%s4989 + $0x4] sm:$0xf]
    %v4992 = vld [vmem:[%s4989 + $0x8] sm:$0xf]
    %v4993 = vld [vmem:[%s4989 + $0xc] sm:$0xf]
    %v4995 = vsel %vm499, %v4985, 0
    %v4998 = vsel %vm714, %v4990, 0
    %5000 = vmatpush.bf16.msra.mxu0 0
    %5001 = vmatpush.bf16.msra.mxu0 0
    %5002 = vmatpush.bf16.msra.mxu0 0
    %5003 = vmatpush.bf16.msra.mxu0 0
    %5004 = vmatpush.bf16.msra.mxu0 0
    %5005 = vmatpush.bf16.msra.mxu0 0
    %5006 = vmatpush.bf16.msra.mxu0 0
    %5007 = vmatpush.bf16.msra.mxu0 %v4998
    %5008 = vmatmul.bf16.gmra.mxu0 %v4995
    %v5009 = vpop.f32.mrf.mxu0
    %v5010 = vadd.f32 0.0, %v5009
    %v5011 = vpop.f32.mrf.mxu0
    %5012 = vdwg.mxu0
    %v5014 = vsel %vm499, %v4986, 0
    %v5017 = vsel %vm714, %v4991, 0
    %5019 = vmatpush.bf16.msra.mxu0 0
    %5020 = vmatpush.bf16.msra.mxu0 0
    %5021 = vmatpush.bf16.msra.mxu0 0
    %5022 = vmatpush.bf16.msra.mxu0 0
    %5023 = vmatpush.bf16.msra.mxu0 0
    %5024 = vmatpush.bf16.msra.mxu0 0
    %5025 = vmatpush.bf16.msra.mxu0 0
    %5026 = vmatpush.bf16.msra.mxu0 %v5017
    %5027 = vmatmul.bf16.gmra.mxu0 %v5014
    %v5028 = vpop.f32.mrf.mxu0
    %v5029 = vadd.f32 0.0, %v5028
    %v5030 = vpop.f32.mrf.mxu0
    %5031 = vdwg.mxu0
    %v5033 = vsel %vm499, %v4987, 0
    %v5036 = vsel %vm714, %v4992, 0
    %5038 = vmatpush.bf16.msra.mxu0 0
    %5039 = vmatpush.bf16.msra.mxu0 0
    %5040 = vmatpush.bf16.msra.mxu0 0
    %5041 = vmatpush.bf16.msra.mxu0 0
    %5042 = vmatpush.bf16.msra.mxu0 0
    %5043 = vmatpush.bf16.msra.mxu0 0
    %5044 = vmatpush.bf16.msra.mxu0 0
    %5045 = vmatpush.bf16.msra.mxu0 %v5036
    %5046 = vmatmul.bf16.gmra.mxu0 %v5033
    %v5047 = vpop.f32.mrf.mxu0
    %v5048 = vadd.f32 0.0, %v5047
    %v5049 = vpop.f32.mrf.mxu0
    %5050 = vdwg.mxu0
    %v5052 = vsel %vm499, %v4988, 0
    %v5055 = vsel %vm714, %v4993, 0
    %5057 = vmatpush.bf16.msra.mxu0 0
    %5058 = vmatpush.bf16.msra.mxu0 0
    %5059 = vmatpush.bf16.msra.mxu0 0
    %5060 = vmatpush.bf16.msra.mxu0 0
    %5061 = vmatpush.bf16.msra.mxu0 0
    %5062 = vmatpush.bf16.msra.mxu0 0
    %5063 = vmatpush.bf16.msra.mxu0 0
    %5064 = vmatpush.bf16.msra.mxu0 %v5055
    %5065 = vmatmul.bf16.gmra.mxu0 %v5052
    %v5066 = vpop.f32.mrf.mxu0
    %v5067 = vadd.f32 0.0, %v5066
    %v5068 = vpop.f32.mrf.mxu0
    %5069 = vdwg.mxu0
    %v5070 = vsel %vm89, %v5010, 0.0
    %v5071 = vsel %vm89, %v5029, 0.0
    %v5072 = vadd.f32 %v5070, %v5071
    %v5073 = vsel %vm89, %v5048, 0.0
    %v5074 = vadd.f32 %v5072, %v5073
    %v5075 = vsel %vm89, %v5067, 0.0
    %v5076 = vadd.f32 %v5074, %v5075
    %v5077 = vadd.f32 %v4378, %v5076
    %v5078 = vperm.slane %v4380, 4
    %v5079 = vadd.f32 %v5077, %v5078
    %v5080 = vsel %vm89, %v5079, 0.0
    %5081 = vadd.xlane.f32.xlu0 %v5080
    %v5082 = vpop.xlane.xlu0 %5081
    %v5083 = vmul.f32 %v5082, %v99
    %v5084 = vsub.f32 %v5079, %v5083
    %v5085 = vmul.f32 %v5084, %v5084
    %v5086 = vsel %vm89, %v5085, 0.0
    %5087 = vadd.xlane.f32.xlu0 %v5086
    %v5088 = vpop.xlane.xlu0 %5087
    %v5089 = vmul.f32 %v5088, %v99
    %v5090 = vadd.f32 %v5089, 1e-05
    %v5091 = vrsqrt.pop %v5090
    %v5092 = vmul.f32 %v5091, %v5090
    %v5093 = vmul.f32 %v5092, %v5091
    %v5094 = vmul.f32 0.5, %v5093
    %v5095 = vsub.f32 1.5, %v5094
    %v5096 = vmul.f32 %v5091, %v5095
    %vm5097 = vweird.f32 %v5090
    %vm5098 = vweird.f32 %v5091
    %vm5099 = vmor %vm5097, %vm5098
    %v5100 = vsel %vm5099, %v5091, %v5096
    %v5101 = vmul.f32 %v5084, %v5100
    %v5102 = vperm.slane %v4380, 2
    %v5103 = vmul.f32 %v5101, %v5102
    %v5104 = vperm.slane %v4380, 3
    %v5105 = vadd.f32 %v5103, %v5104
    %v5106 = vpack.c.bf16 %v5105, %v5105
    %s5107 = scalar_lea.vmem %s7, 80
    %v5108 = vld [vmem:[%s5107] sm:$0xf]
    %v5109 = vld [vmem:[%s5107 + $0x4] sm:$0xf]
    %v5110 = vld [vmem:[%s5107 + $0x8] sm:$0xf]
    %v5111 = vld [vmem:[%s5107 + $0xc] sm:$0xf]
    %s5112 = scalar_lea.vmem %s8, 5
    %v5113 = vld [vmem:[%s5112] sm:$0x1]
    %v5115 = vperm.slane %v5113, 0
    %v5121 = vunpack.c.l.b16 %v5108
    %v5122 = vunpack.c.l.b16 %v5109
    %v5123 = vunpack.c.l.b16 %v5110
    %v5124 = vunpack.c.l.b16 %v5111
    %v5125 = vpack.c.b16 %v5122, %v5121
    %v5126 = vpack.c.b16 %v5124, %v5123
    %v5130 = vsel %vm70, %v5106, 0
    %5132 = vmatpush.bf16.msra.mxu0 0
    %5133 = vmatpush.bf16.msra.mxu0 0
    %5134 = vmatpush.bf16.msra.mxu0 0
    %5135 = vmatpush.bf16.msra.mxu0 0
    %5136 = vmatpush.bf16.msra.mxu0 0
    %5137 = vmatpush.bf16.msra.mxu0 0
    %5138 = vmatpush.bf16.msra.mxu0 %v5126
    %5139 = vmatpush.bf16.msra.mxu0 %v5125
    %5140 = vmatmul.bf16.gmra.mxu0 %v5130
    %v5141 = vpop.f32.mrf.mxu0
    %v5142 = vadd.f32 %v5115, %v5141
    %v5143 = vpop.f32.mrf.mxu0
    %5144 = vdwg.mxu0
    %v5145 = vmul.f32 %v5142, %v5142
    %v5146 = vmul.f32 %v5142, %v5145
    %v5147 = vmul.f32 %v5146, 0.044715
    %v5148 = vadd.f32 %v5142, %v5147
    %v5149 = vmul.f32 %v5148, 0.7978846
    %v5150 = vtanh.pop %v5149
    %v5151 = vadd.f32 %v5150, 1.0
    %v5152 = vmul.f32 %v5151, 0.5
    %v5153 = vmul.f32 %v5142, %v5152
    %v5154 = vpack.c.bf16 %v5153, %v5153
    %s5155 = scalar_lea.vmem %s9, 320
    %v5156 = vld [vmem:[%s5155] sm:$0xf]
    %v5157 = vld [vmem:[%s5155 + $0x4] sm:$0xf]
    %v5158 = vld [vmem:[%s5155 + $0x8] sm:$0xf]
    %v5159 = vld [vmem:[%s5155 + $0xc] sm:$0xf]
    %v5160 = vld [vmem:[%s5155 + $0x10] sm:$0xf]
    %v5161 = vld [vmem:[%s5155 + $0x14] sm:$0xf]
    %v5162 = vld [vmem:[%s5155 + $0x18] sm:$0xf]
    %v5163 = vld [vmem:[%s5155 + $0x1c] sm:$0xf]
    %v5164 = vld [vmem:[%s5155 + $0x20] sm:$0xf]
    %v5165 = vld [vmem:[%s5155 + $0x24] sm:$0xf]
    %v5166 = vld [vmem:[%s5155 + $0x28] sm:$0xf]
    %v5167 = vld [vmem:[%s5155 + $0x2c] sm:$0xf]
    %v5168 = vld [vmem:[%s5155 + $0x30] sm:$0xf]
    %v5169 = vld [vmem:[%s5155 + $0x34] sm:$0xf]
    %v5170 = vld [vmem:[%s5155 + $0x38] sm:$0xf]
    %v5171 = vld [vmem:[%s5155 + $0x3c] sm:$0xf]
    %v5188 = vunpack.c.l.b16 %v5156
    %v5189 = vunpack.c.l.b16 %v5157
    %v5190 = vunpack.c.l.b16 %v5158
    %v5191 = vunpack.c.l.b16 %v5159
    %v5192 = vunpack.c.l.b16 %v5160
    %v5193 = vunpack.c.l.b16 %v5161
    %v5194 = vunpack.c.l.b16 %v5162
    %v5195 = vunpack.c.l.b16 %v5163
    %v5196 = vunpack.c.l.b16 %v5164
    %v5197 = vunpack.c.l.b16 %v5165
    %v5198 = vunpack.c.l.b16 %v5166
    %v5199 = vunpack.c.l.b16 %v5167
    %v5200 = vunpack.c.l.b16 %v5168
    %v5201 = vunpack.c.l.b16 %v5169
    %v5202 = vunpack.c.l.b16 %v5170
    %v5203 = vunpack.c.l.b16 %v5171
    %v5204 = vpack.c.b16 %v5189, %v5188
    %v5205 = vpack.c.b16 %v5191, %v5190
    %v5206 = vpack.c.b16 %v5193, %v5192
    %v5207 = vpack.c.b16 %v5195, %v5194
    %v5208 = vpack.c.b16 %v5197, %v5196
    %v5209 = vpack.c.b16 %v5199, %v5198
    %v5210 = vpack.c.b16 %v5201, %v5200
    %v5211 = vpack.c.b16 %v5203, %v5202
    %5220 = vmatpush.bf16.msra.mxu0 %v5211
    %5221 = vmatpush.bf16.msra.mxu0 %v5210
    %5222 = vmatpush.bf16.msra.mxu0 %v5209
    %5223 = vmatpush.bf16.msra.mxu0 %v5208
    %5224 = vmatpush.bf16.msra.mxu0 %v5207
    %5225 = vmatpush.bf16.msra.mxu0 %v5206
    %5226 = vmatpush.bf16.msra.mxu0 %v5205
    %5227 = vmatpush.bf16.msra.mxu0 %v5204
    %5228 = vmatmul.bf16.gmra.mxu0 %v5154
    %v5229 = vpop.f32.mrf.mxu0
    %v5230 = vadd.f32 0.0, %v5229
    %v5231 = vpop.f32.mrf.mxu0
    %5232 = vdwg.mxu0
    %v5233 = vadd.f32 %v5079, %v5230
    %v5234 = vperm.slane %v4380, 5
    %v5235 = vadd.f32 %v5233, %v5234
    %v5236 = vld [vmem:[%s11] sm:$0x1]
    %v5237 = vld [vmem:[%s11 + $0x1] sm:$0x1]
    %v5238 = vsel %vm89, %v5235, 0.0
    %5239 = vadd.xlane.f32.xlu0 %v5238
    %v5240 = vpop.xlane.xlu0 %5239
    %v5241 = vmul.f32 %v5240, %v99
    %v5242 = vsub.f32 %v5235, %v5241
    %v5243 = vmul.f32 %v5242, %v5242
    %v5244 = vsel %vm89, %v5243, 0.0
    %5245 = vadd.xlane.f32.xlu0 %v5244
    %v5246 = vpop.xlane.xlu0 %5245
    %v5247 = vmul.f32 %v5246, %v99
    %v5248 = vadd.f32 %v5247, 1e-05
    %v5249 = vrsqrt.pop %v5248
    %v5250 = vmul.f32 %v5249, %v5248
    %v5251 = vmul.f32 %v5250, %v5249
    %v5252 = vmul.f32 0.5, %v5251
    %v5253 = vsub.f32 1.5, %v5252
    %v5254 = vmul.f32 %v5249, %v5253
    %vm5255 = vweird.f32 %v5248
    %vm5256 = vweird.f32 %v5249
    %vm5257 = vmor %vm5255, %vm5256
    %v5258 = vsel %vm5257, %v5249, %v5254
    %v5259 = vmul.f32 %v5242, %v5258
    %v5260 = vperm.slane %v5236, 0
    %v5261 = vmul.f32 %v5259, %v5260
    %v5262 = vperm.slane %v5237, 0
    %v5263 = vadd.f32 %v5261, %v5262
    %v5264 = vmul.f32 %v5263, %v5263
    %v5265 = vmul.f32 %v5263, %v5264
    %v5266 = vmul.f32 %v5265, 0.044715
    %v5267 = vadd.f32 %v5263, %v5266
    %v5268 = vmul.f32 %v5267, 0.7978846
    %v5269 = vtanh.pop %v5268
    %v5270 = vadd.f32 %v5269, 1.0
    %v5271 = vmul.f32 %v5270, 0.5
    %v5272 = vmul.f32 %v5263, %v5271
    %v5273 = vsel %vm89, %v5272, 0.0
    %5274 = vadd.xlane.f32.xlu0 %v5273
    %v5275 = vpop.xlane.xlu0 %5274
    %s5276 = scalar_lea.vmem %s1, 8
    %v5277 = vld [vmem:[%s5276] sm:$0x3f]
    %v5279 = vsel %vm625, %v5277, 0
    %vm5281 = vcmask 1045504
    %v5283 = vsel %vm5281, %v5275, 0
    %5285 = vmatpush.msra.mxu0 0.0
    %5286 = vmatpush.msra.mxu0 0.0
    %5287 = vmatpush.msra.mxu0 0.0
    %5288 = vmatpush.msra.mxu0 0.0
    %5289 = vmatpush.msra.mxu0 0.0
    %5290 = vmatpush.msra.mxu0 0.0
    %5291 = vmatpush.msra.mxu0 0.0
    %5292 = vmatpush.msra.mxu0 0.0
    %5293 = vmatpush.msra.mxu0 0.0
    %5294 = vmatpush.msra.mxu0 0.0
    %5295 = vmatpush.msra.mxu0 0.0
    %5296 = vmatpush.msra.mxu0 0.0
    %5297 = vmatpush.msra.mxu0 0.0
    %5298 = vmatpush.msra.mxu0 0.0
    %5299 = vmatpush.msra.mxu0 0.0
    %5300 = vmatpush.msra.mxu0 %v5283
    %5301 = vmatmul.f32.gmra.mxu0 %v5279
    %v5302 = vpop.f32.mrf.mxu0
    %v5303 = vadd.f32 0.0, %v5302
    %5304 = vdwg.mxu0
    %5306 = vset.pattern.permute.xlu0 0
    %5307 = vperm.xlu0 %5306, %v5303
    %v5308 = vpop.permute.xlu0 %5307
    %v5310 = vsub.f32 %v5272, %v5308
    %v5311 = vmul.f32 %v5310, %v5310
    %v5312 = vsel %vm89, %v5311, 0.0
    %5313 = vadd.xlane.f32.xlu0 %v5312
    %v5314 = vpop.xlane.xlu0 %5313
    %v5316 = vsel %vm5281, %v5314, 0
    %5318 = vmatpush.msra.mxu0 0.0
    %5319 = vmatpush.msra.mxu0 0.0
    %5320 = vmatpush.msra.mxu0 0.0
    %5321 = vmatpush.msra.mxu0 0.0
    %5322 = vmatpush.msra.mxu0 0.0
    %5323 = vmatpush.msra.mxu0 0.0
    %5324 = vmatpush.msra.mxu0 0.0
    %5325 = vmatpush.msra.mxu0 0.0
    %5326 = vmatpush.msra.mxu0 0.0
    %5327 = vmatpush.msra.mxu0 0.0
    %5328 = vmatpush.msra.mxu0 0.0
    %5329 = vmatpush.msra.mxu0 0.0
    %5330 = vmatpush.msra.mxu0 0.0
    %5331 = vmatpush.msra.mxu0 0.0
    %5332 = vmatpush.msra.mxu0 0.0
    %5333 = vmatpush.msra.mxu0 %v5316
    %5334 = vmatmul.f32.gmra.mxu0 %v5279
    %v5335 = vpop.f32.mrf.mxu0
    %v5336 = vadd.f32 1e-05, %v5335
    %5337 = vdwg.mxu0
    %v5338 = vrsqrt.pop %v5336
    %v5339 = vmul.f32 %v5338, %v5336
    %v5340 = vmul.f32 %v5339, %v5338
    %v5341 = vmul.f32 0.5, %v5340
    %v5342 = vsub.f32 1.5, %v5341
    %v5343 = vmul.f32 %v5338, %v5342
    %vm5344 = vweird.f32 %v5336
    %vm5345 = vweird.f32 %v5338
    %vm5346 = vmor %vm5344, %vm5345
    %v5347 = vsel %vm5346, %v5338, %v5343
    %5349 = vset.pattern.permute.xlu0 0
    %5350 = vperm.xlu0 %5349, %v5347
    %v5351 = vpop.permute.xlu0 %5350
    %v5353 = vmul.f32 %v5310, %v5351
    %v5354 = vld [vmem:[%s11 + $0x2] sm:$0x3f]
    %v5355 = vmul.f32 %v5353, %v5354
    %v5356 = vld [vmem:[%s11 + $0x8] sm:$0x3f]
    %v5357 = vadd.f32 %v5355, %v5356
    %v5358 = vpack.c.bf16 %v5357, %v5357
    %v5359 = vld [vmem:[%s12] sm:$0xf]
    %v5360 = vld [vmem:[%s12 + $0x4] sm:$0xf]
    %v5361 = vld [vmem:[%s12 + $0x8] sm:$0xf]
    %v5362 = vld [vmem:[%s12 + $0xc] sm:$0xf]
    %v5367 = vunpack.c.l.b16 %v5359
    %v5368 = vunpack.c.l.b16 %v5360
    %v5369 = vunpack.c.l.b16 %v5361
    %v5370 = vunpack.c.l.b16 %v5362
    %v5371 = vpack.c.b16 %v5368, %v5367
    %v5372 = vpack.c.b16 %v5370, %v5369
    %v5376 = vsel %vm70, %v5358, 0
    %5378 = vmatpush.bf16.msra.mxu0 0
    %5379 = vmatpush.bf16.msra.mxu0 0
    %5380 = vmatpush.bf16.msra.mxu0 0
    %5381 = vmatpush.bf16.msra.mxu0 0
    %5382 = vmatpush.bf16.msra.mxu0 0
    %5383 = vmatpush.bf16.msra.mxu0 0
    %5384 = vmatpush.bf16.msra.mxu0 %v5372
    %5385 = vmatpush.bf16.msra.mxu0 %v5371
    %5386 = vmatmul.bf16.gmra.mxu0 %v5376
    %v5387 = vpop.f32.mrf.mxu0
    %v5388 = vadd.f32 0.0, %v5387
    %v5389 = vpop.f32.mrf.mxu0
    %5390 = vdwg.mxu0
    %v5391 = vld [vmem:[%s13] sm:$0x3f]
    %v5392 = vmul.f32 %v5388, %v5391
    %v5393 = vld [vmem:[%s14] sm:$0xff]
    %v5394 = vld [vmem:[%s14 + $0x8] sm:$0x1]
    %vm5395 = vcmask 72704
    %v5397 = vsel %vm5395, %v5392, 0
    %vm5399 = vcmask 1040384
    %v5401 = vsel %vm5399, %v5394, 0
    %5403 = vmatpush.msra.mxu0 0.0
    %5404 = vmatpush.msra.mxu0 0.0
    %5405 = vmatpush.msra.mxu0 0.0
    %5406 = vmatpush.msra.mxu0 0.0
    %5407 = vmatpush.msra.mxu0 0.0
    %5408 = vmatpush.msra.mxu0 0.0
    %5409 = vmatpush.msra.mxu0 0.0
    %5410 = vmatpush.msra.mxu0 0.0
    %5411 = vmatpush.msra.mxu0 0.0
    %5412 = vmatpush.msra.mxu0 0.0
    %5413 = vmatpush.msra.mxu0 0.0
    %5414 = vmatpush.msra.mxu0 0.0
    %5415 = vmatpush.msra.mxu0 0.0
    %5416 = vmatpush.msra.mxu0 0.0
    %5417 = vmatpush.msra.mxu0 %v5401
    %5418 = vmatpush.msra.mxu0 %v5393
    %5419 = vmatmul.f32.gmra.mxu0 %v5397
    %v5420 = vpop.f32.mrf.mxu0
    %v5421 = vadd.f32 0.0, %v5420
    %5422 = vdwg.mxu0
    %s5423 = scalar_lea.vmem %s1, 16
    %v5424 = vld [vmem:[%s5423] sm:$0x3f]
    %v5426 = vsel %vm625, %v5424, 0
    %v5429 = vsel %vm5281, %v5421, 0
    %5431 = vmatpush.msra.mxu0 0.0
    %5432 = vmatpush.msra.mxu0 0.0
    %5433 = vmatpush.msra.mxu0 0.0
    %5434 = vmatpush.msra.mxu0 0.0
    %5435 = vmatpush.msra.mxu0 0.0
    %5436 = vmatpush.msra.mxu0 0.0
    %5437 = vmatpush.msra.mxu0 0.0
    %5438 = vmatpush.msra.mxu0 0.0
    %5439 = vmatpush.msra.mxu0 0.0
    %5440 = vmatpush.msra.mxu0 0.0
    %5441 = vmatpush.msra.mxu0 0.0
    %5442 = vmatpush.msra.mxu0 0.0
    %5443 = vmatpush.msra.mxu0 0.0
    %5444 = vmatpush.msra.mxu0 0.0
    %5445 = vmatpush.msra.mxu0 0.0
    %5446 = vmatpush.msra.mxu0 %v5429
    %5447 = vmatmul.f32.gmra.mxu0 %v5426
    %v5448 = vpop.f32.mrf.mxu0
    %v5449 = vadd.f32 0.0, %v5448
    %5450 = vdwg.mxu0
    %v5451 = vld [vmem:[%s11 + $0xe] sm:$0x1]
    %v5452 = vperm.slane %v5451, 0
    %v5453 = vadd.f32 %v5449, %v5452
    %vm5454 = vcmask 17408
    %5455 = vst.msk [vmem:[#allocation2] sm:$0x3] %vm5454, %v5453
    // Predicated region
    $region62: #{forward.1} parent=1 // pred_check
      _
    $region63: #{forward.1} parent=1 // pred_check_branch
      %5457 = sbr.rel (0) target = $region65
    $region64: #{forward.1} parent=1 // pred_region
      %5459 = vsyncadd [#allocation3], 0
      %s5461 = sshll.u32 [#allocation2], 4
      %s5462 = int_to_ptr.vmem [resolvable:$true] %s5461
      %s5463 = sshll.u32 %s15, 4
      %s5464 = int_to_ptr.hbm [resolvable:$true] %s5463
      %5466 = dma.vmem_to_hbm [thread:$0]  %s5462, 32, %s5464, [#allocation3]
    $region65: #{forward.1} parent=1 // pred_fallthru
      _
    // Predicated region
    $region66: #{forward.1} parent=1 // pred_check
      _
    $region67: #{forward.1} parent=1 // pred_check_branch
      %5468 = sbr.rel (0) target = $region69
    $region68: #{forward.1} parent=1 // pred_region
      %5470 = dma.done [#allocation3], 32
    $region69: #{forward.1} parent=1 // pred_fallthru
      _
    %5471 = vsyncpa [#allocation3], 1

</llo_original>
